<compile_context>
chip_gen: v7x
topology: tpu7x:2x2x1
jax: 0.10.0
libtpu: 0.0.40
codegen_flags: <defaults>
</compile_context>

<pallas_src>
import functools

import jax
import jax.numpy as jnp
from jax.experimental import pallas as pl
from jax.experimental.pallas import tpu as pltpu

C_PAD = 128   # matmul / BN output columns padded to a full 128-lane vreg (lane-dense stores)
CHUNK = 128   # rows per in-kernel pass; a (128,128) f32 tile is 16 vregs, so each pass stays
              # far below the 64-vreg file while the whole activation lives in VMEM scratch.


def _round_up(x, m):
    return (x + m - 1) // m * m


# ----------------------------- Pallas kernels -------------------------------

def _fused_conv_bn_lrelu_kernel(x_ref, w_ref, gamma_ref, beta_ref, amat_ref,
                                o_ref, y_scr, *, m, eps, slope):
    """One fused call per conv block:
         y = x @ w   (bf16 in, f32 acc)  -> kept in a VMEM scratch, never hits HBM
         exact two-pass BatchNorm batch statistics (train mode, biased variance)
         z = y * scale + shift ; LeakyReLU(slope) ; bf16 store.
       `amat` (C_PAD x C_PAD, f32) folds the 1/count and the BN column grouping:
       identity/m for plain convs, 4-columns-per-channel/(4m) for the transpose conv
       whose matmul emits (kh, kw, cout)-ordered columns."""
    m_pad = x_ref.shape[0]
    n_chunks = m_pad // CHUNK
    w = w_ref[...]
    amat = amat_ref[...]

    # Pass A: matmul chunks into the VMEM scratch, accumulate per-column sums.
    ssum = jnp.zeros((1, C_PAD), jnp.float32)
    for i in range(n_chunks):
        lo, hi = i * CHUNK, (i + 1) * CHUNK
        y = jnp.dot(x_ref[lo:hi, :], w, preferred_element_type=jnp.float32)
        y_scr[lo:hi, :] = y
        ssum = ssum + jnp.sum(y, axis=0, keepdims=True)
    mean = jnp.dot(jnp.broadcast_to(ssum, (8, C_PAD)), amat,
                   preferred_element_type=jnp.float32)[0:1, :]

    # Pass B: exact centered sum of squares (y stays VMEM-resident).
    css = jnp.zeros((1, C_PAD), jnp.float32)
    for i in range(n_chunks):
        lo, hi = i * CHUNK, (i + 1) * CHUNK
        d = y_scr[lo:hi, :] - mean
        if m_pad != m:  # zero-padded tail rows: y == 0 but (0 - mean)^2 != 0 -> mask them
            row = lo + jax.lax.broadcasted_iota(jnp.int32, (CHUNK, 1), 0)
            d = jnp.where(row < m, d, 0.0)
        css = css + jnp.sum(d * d, axis=0, keepdims=True)
    var = jnp.dot(jnp.broadcast_to(css, (8, C_PAD)), amat,
                  preferred_element_type=jnp.float32)[0:1, :]

    inv = jax.lax.rsqrt(var + eps)
    scale = gamma_ref[...] * inv
    shift = beta_ref[...] - mean * scale
    scale_b = jnp.broadcast_to(scale, (CHUNK, C_PAD))   # hoisted out of the apply loop
    shift_b = jnp.broadcast_to(shift, (CHUNK, C_PAD))

    # Pass C: BatchNorm apply + LeakyReLU, bf16 store (consumers re-load as bf16).
    for i in range(n_chunks):
        lo, hi = i * CHUNK, (i + 1) * CHUNK
        z = y_scr[lo:hi, :] * scale_b + shift_b
        z = jnp.where(z >= 0, z, slope * z)
        o_ref[lo:hi, :] = z.astype(o_ref.dtype)


def _cos_matmul_bias_kernel(x_ref, w_ref, b_ref, o_ref):
    """Final 1x1 conv: cos (fused -> EUP slot) -> matmul -> + bias. No BN afterwards."""
    m_pad = x_ref.shape[0]
    n_chunks = m_pad // CHUNK
    w = w_ref[...]
    b = jnp.broadcast_to(b_ref[...], (CHUNK, C_PAD))
    for i in range(n_chunks):
        lo, hi = i * CHUNK, (i + 1) * CHUNK
        xc = jnp.cos(x_ref[lo:hi, :].astype(jnp.float32)).astype(jnp.bfloat16)
        o_ref[lo:hi, :] = jnp.dot(xc, w, preferred_element_type=jnp.float32) + b


# ----------------------------- pallas_call wrappers --------------------------

def _pallas_fused_conv_bn_lrelu(x_bf16, w_bf16, gamma_row, beta_row, amat, m, eps, slope):
    m_pad, k = x_bf16.shape
    kern = functools.partial(_fused_conv_bn_lrelu_kernel, m=m, eps=eps, slope=slope)
    return pl.pallas_call(
        kern,
        out_shape=jax.ShapeDtypeStruct((m_pad, C_PAD), jnp.bfloat16),
        grid=(1,),                                   # whole block resident in VMEM (~1 MiB)
        in_specs=[
            pl.BlockSpec((m_pad, k), lambda i: (0, 0)),        # bf16 patches / activations
            pl.BlockSpec((k, C_PAD), lambda i: (0, 0)),        # weight matrix (bf16)
            pl.BlockSpec((1, C_PAD), lambda i: (0, 0)),        # gamma (per matmul column)
            pl.BlockSpec((1, C_PAD), lambda i: (0, 0)),        # beta
            pl.BlockSpec((C_PAD, C_PAD), lambda i: (0, 0)),    # BN grouping / 1/count matrix
        ],
        out_specs=pl.BlockSpec((m_pad, C_PAD), lambda i: (0, 0)),
        scratch_shapes=[pltpu.VMEM((m_pad, C_PAD), jnp.float32)],   # pre-BN activation
        compiler_params=pltpu.CompilerParams(dimension_semantics=("arbitrary",)),
    )(x_bf16, w_bf16, gamma_row, beta_row, amat)


def _pallas_cos_matmul_bias(x_bf16, w_bf16, b_row):
    m_pad, k = x_bf16.shape
    return pl.pallas_call(
        _cos_matmul_bias_kernel,
        out_shape=jax.ShapeDtypeStruct((m_pad, C_PAD), jnp.float32),
        grid=(1,),
        in_specs=[
            pl.BlockSpec((m_pad, k), lambda i: (0, 0)),
            pl.BlockSpec((k, C_PAD), lambda i: (0, 0)),
            pl.BlockSpec((1, C_PAD), lambda i: (0, 0)),
        ],
        out_specs=pl.BlockSpec((m_pad, C_PAD), lambda i: (0, 0)),
        compiler_params=pltpu.CompilerParams(dimension_semantics=("arbitrary",)),
    )(x_bf16, w_bf16, b_row)


# ----------------------------- building blocks (NHWC) ------------------------

def _im2col_3x3(x_nhwc):
    """3x3 same-padded patches; rows ordered (n,h,w), columns ordered (kh,kw,cin)."""
    n, h, w, c = x_nhwc.shape
    xp = jnp.pad(x_nhwc, ((0, 0), (1, 1), (1, 1), (0, 0)))
    cols = [xp[:, kh:kh + h, kw:kw + w, :] for kh in range(3) for kw in range(3)]
    return jnp.stack(cols, axis=3).reshape(n * h * w, 9 * c)


def conv3x3_bn_lrelu(x_nhwc, w_oihw, gamma, beta, eps=1e-5, slope=0.2):
    """Conv2d(3x3, pad=1) -> BatchNorm2d (train-mode stats) -> LeakyReLU(0.2), one fused
    pallas_call. cos is applied here (not in-kernel): the conv's zero padding must pad
    cos(x) (cos(0)=1 would corrupt the halo). Conv bias dropped: train-mode BN's mean
    subtraction cancels it exactly. Returns bf16 NHWC."""
    n, h, w, cin = x_nhwc.shape
    cout = w_oihw.shape[0]
    m = n * h * w
    m_pad = _round_up(m, CHUNK)

    patches = _im2col_3x3(jnp.cos(x_nhwc).astype(jnp.bfloat16))        # [M, 9*cin] bf16
    if m_pad != m:
        patches = jnp.pad(patches, ((0, m_pad - m), (0, 0)))

    wm = jnp.transpose(w_oihw, (2, 3, 1, 0)).reshape(9 * cin, cout)    # (kh,kw,cin) x cout
    wm = jnp.pad(wm, ((0, 0), (0, C_PAD - cout))).astype(jnp.bfloat16)
    gamma_row = jnp.pad(gamma, (0, C_PAD - cout)).reshape(1, C_PAD).astype(jnp.float32)
    beta_row = jnp.pad(beta, (0, C_PAD - cout)).reshape(1, C_PAD).astype(jnp.float32)
    amat = jnp.eye(C_PAD, dtype=jnp.float32) / m                       # per-column 1/count

    out = _pallas_fused_conv_bn_lrelu(patches, wm, gamma_row, beta_row, amat, m, eps, slope)
    return out[:m, :cout].reshape(n, h, w, cout)


def tconv2x2_s2_bn_lrelu(x_nhwc, w_iohw, gamma, beta, eps=1e-5, slope=0.2):
    """ConvTranspose2d(k=2, s=2) -> BatchNorm2d(train) -> LeakyReLU(0.2), one fused call.
    stride == kernel => no overlap, so it is a single matmul to 4*cout columns ordered
    (kh,kw,cout), followed by a pixel rearrangement. BN statistics reduce over the 4
    columns of each real channel via `amat`. Bias dropped (BN cancels). Returns bf16."""
    n, h, w, cin = x_nhwc.shape
    cout = w_iohw.shape[1]
    cexp = 4 * cout
    m = n * h * w
    m_pad = _round_up(m, CHUNK)
    k = _round_up(cin, 8)

    x2 = jnp.pad(x_nhwc.astype(jnp.bfloat16).reshape(m, cin),
                 ((0, m_pad - m), (0, k - cin)))
    wm = jnp.transpose(w_iohw, (0, 2, 3, 1)).reshape(cin, cexp)        # cin x (kh,kw,cout)
    wm = jnp.pad(wm, ((0, k - cin), (0, C_PAD - cexp))).astype(jnp.bfloat16)
    gamma_row = jnp.pad(jnp.tile(gamma, 4), (0, C_PAD - cexp)).reshape(1, C_PAD)
    beta_row = jnp.pad(jnp.tile(beta, 4), (0, C_PAD - cexp)).reshape(1, C_PAD)
    col = jnp.arange(C_PAD)
    same_group = ((col[:, None] % cout) == (col[None, :] % cout)) \
        & (col[:, None] < cexp) & (col[None, :] < cexp)
    amat = jnp.where(same_group, 1.0 / (4.0 * m), 0.0).astype(jnp.float32)

    z = _pallas_fused_conv_bn_lrelu(x2, wm, gamma_row.astype(jnp.float32),
                                    beta_row.astype(jnp.float32), amat, m, eps, slope)
    z = z[:m, :cexp].reshape(n, h, w, 2, 2, cout)
    z = jnp.transpose(z, (0, 1, 3, 2, 4, 5)).reshape(n, 2 * h, 2 * w, cout)
    return z


def cos_conv1x1_bias(x_nhwc, w_oihw, bias):
    """cos -> Conv2d(1x1) with bias (no BN afterwards). cos fused into the kernel."""
    n, h, w, cin = x_nhwc.shape
    cout = w_oihw.shape[0]
    m = n * h * w
    m_pad = _round_up(m, CHUNK)
    k = _round_up(cin, 8)

    x2 = jnp.pad(x_nhwc.astype(jnp.bfloat16).reshape(m, cin),
                 ((0, m_pad - m), (0, k - cin)))
    wm = jnp.pad(w_oihw.reshape(cout, cin).T, ((0, k - cin), (0, C_PAD - cout)))
    wm = wm.astype(jnp.bfloat16)
    b_row = jnp.pad(bias, (0, C_PAD - cout)).reshape(1, C_PAD).astype(jnp.float32)

    y = _pallas_cos_matmul_bias(x2, wm, b_row)
    return y[:m, :cout].reshape(n, h, w, cout)


# ----------------------------- NHWC glue (data movement) ---------------------

def _pixel_unshuffle_nhwc(x, r=2):
    n, h, w, c = x.shape
    x = x.reshape(n, h // r, r, w // r, r, c)
    x = jnp.transpose(x, (0, 1, 3, 5, 2, 4))            # channel order (c, kh, kw)
    return x.reshape(n, h // r, w // r, c * r * r)


def _pixel_shuffle_nhwc(x, r=2):
    n, h, w, c = x.shape
    co = c // (r * r)
    x = x.reshape(n, h, w, co, r, r)
    x = jnp.transpose(x, (0, 1, 4, 2, 5, 3))
    return x.reshape(n, h * r, w * r, co)


def _maxpool2_nhwc(x):
    n, h, w, c = x.shape
    return jnp.max(x.reshape(n, h // 2, 2, w // 2, 2, c), axis=(2, 4))


def _avgpool2_nhwc(x):
    n, h, w, c = x.shape
    return jnp.mean(x.reshape(n, h // 2, 2, w // 2, 2, c), axis=(2, 4))


# ----------------------------- FAN_cos forward -------------------------------

def fan_cos_forward(x_complex, params):
    """Pallas implementation of FAN_cos.forward. Input: complex64 NCHW [N, 1, H, W];
    output: float32 NCHW [N, 1, H, W]. One NCHW<->NHWC relayout at each boundary."""
    info = jnp.concatenate([jnp.real(x_complex), jnp.imag(x_complex)],
                           axis=1).astype(jnp.float32)
    info = jnp.transpose(info, (0, 2, 3, 1))                       # -> NHWC (once)
    x = _pixel_unshuffle_nhwc(info, 2)                             # [N, H/2, W/2, 8] f32

    o0 = conv3x3_bn_lrelu(x, params["conv0_0_w"],
                          params["bn0_0_g"], params["bn0_0_b"])    # bf16
    o0_f32 = o0.astype(jnp.float32)
    i10 = jnp.concatenate([_maxpool2_nhwc(o0_f32), _avgpool2_nhwc(o0_f32)], axis=-1)
    o10 = conv3x3_bn_lrelu(i10, params["conv1_0_w"],
                           params["bn1_0_g"], params["bn1_0_b"])   # bf16
    t10 = tconv2x2_s2_bn_lrelu(o10, params["tconv1_0_w"],
                               params["tbn1_0_g"], params["tbn1_0_b"])  # bf16
    i99 = jnp.concatenate([o0, t10], axis=-1)                      # bf16
    out = cos_conv1x1_bias(i99, params["conv9_9_w"], params["conv9_9_b"])   # f32
    out = _pixel_shuffle_nhwc(out, 2)
    return jnp.transpose(out, (0, 3, 1, 2))                        # -> NCHW


# ----------------------------- parameter init --------------------------------

def init_params(key, in_ch=8, out_ch=4):
    n1 = 4
    f0, f1 = n1, n1 * 2                    # filters[0]=4, filters[1]=8
    ks = jax.random.split(key, 6)

    def kaiming(k, cout, cin, kh, kw):     # kaiming_normal_(fan_in, leaky_relu, a=0)
        std = (2.0 / (cin * kh * kw)) ** 0.5
        return std * jax.random.normal(k, (cout, cin, kh, kw), jnp.float32)

    return {
        "conv0_0_w": kaiming(ks[0], f0, in_ch, 3, 3),
        "conv0_0_b": jnp.zeros((f0,), jnp.float32),          # zero per _initialize_weights
        "bn0_0_g": jnp.ones((f0,), jnp.float32),
        "bn0_0_b": jnp.zeros((f0,), jnp.float32),
        "conv1_0_w": kaiming(ks[1], f0, f1, 3, 3),
        "conv1_0_b": jnp.zeros((f0,), jnp.float32),
        "bn1_0_g": jnp.ones((f0,), jnp.float32),
        "bn1_0_b": jnp.zeros((f0,), jnp.float32),
        "tconv1_0_w": 0.25 * jax.random.normal(ks[2], (f0, f0, 2, 2), jnp.float32),
        "tconv1_0_b": 0.1 * jax.random.normal(ks[3], (f0,), jnp.float32),
        "tbn1_0_g": jnp.ones((f0,), jnp.float32),
        "tbn1_0_b": jnp.zeros((f0,), jnp.float32),
        "conv9_9_w": 0.3 * jax.random.normal(ks[4], (out_ch, f1, 1, 1), jnp.float32),
        "conv9_9_b": 0.1 * jax.random.normal(ks[5], (out_ch,), jnp.float32),
    }


# ----------------------------- pure-JAX reference ----------------------------

def _reference_forward(x_complex, params, eps=1e-5, slope=0.2):
    """XLA mirror of FAN_cos.forward (train-mode BN). Matmul inputs and conv-block
    outputs are rounded to bf16 precision to mirror the Pallas path's MXU inputs and
    bf16 activation storage (accumulation stays f32 in both paths)."""
    def rb(v):  # round to bf16 precision, keep f32
        return v.astype(jnp.bfloat16).astype(jnp.float32)

    def conv(x, w, b, pad):
        y = jax.lax.conv_general_dilated(
            rb(x), rb(w), (1, 1), ((pad, pad), (pad, pad)),
            dimension_numbers=("NCHW", "OIHW", "NCHW"))
        return y + b[None, :, None, None]

    def bn_lrelu(y, g, b):
        mean = jnp.mean(y, axis=(0, 2, 3), keepdims=True)
        var = jnp.mean((y - mean) ** 2, axis=(0, 2, 3), keepdims=True)
        z = (y - mean) * jax.lax.rsqrt(var + eps)
        z = z * g[None, :, None, None] + b[None, :, None, None]
        return rb(jnp.where(z >= 0, z, slope * z))    # block outputs stored as bf16

    def tconv(x, w_iohw, b):                # ConvTranspose2d(k=2, s=2, p=0)
        y = jnp.einsum("nihw,iokl->nohwkl", rb(x), rb(w_iohw))
        nb, co, hh, ww = y.shape[:4]
        y = jnp.transpose(y, (0, 1, 2, 4, 3, 5)).reshape(nb, co, 2 * hh, 2 * ww)
        return y + b[None, :, None, None]

    def maxpool(x):
        nb, c, hh, ww = x.shape
        return jnp.max(x.reshape(nb, c, hh // 2, 2, ww // 2, 2), axis=(3, 5))

    def avgpool(x):
        nb, c, hh, ww = x.shape
        return jnp.mean(x.reshape(nb, c, hh // 2, 2, ww // 2, 2), axis=(3, 5))

    def unshuffle(x, r=2):
        nb, c, hh, ww = x.shape
        x = x.reshape(nb, c, hh // r, r, ww // r, r)
        return jnp.transpose(x, (0, 1, 3, 5, 2, 4)).reshape(nb, c * r * r, hh // r, ww // r)

    def shuffle(x, r=2):
        nb, c, hh, ww = x.shape
        co = c // (r * r)
        x = x.reshape(nb, co, r, r, hh, ww)
        return jnp.transpose(x, (0, 1, 4, 2, 5, 3)).reshape(nb, co, hh * r, ww * r)

    info = jnp.concatenate([jnp.real(x_complex), jnp.imag(x_complex)],
                           axis=1).astype(jnp.float32)
    xin = unshuffle(info)
    o0 = bn_lrelu(conv(jnp.cos(xin), params["conv0_0_w"], params["conv0_0_b"], 1),
                  params["bn0_0_g"], params["bn0_0_b"])
    i10 = jnp.concatenate([maxpool(o0), avgpool(o0)], axis=1)
    o10 = bn_lrelu(conv(jnp.cos(i10), params["conv1_0_w"], params["conv1_0_b"], 1),
                   params["bn1_0_g"], params["bn1_0_b"])
    t10 = bn_lrelu(tconv(o10, params["tconv1_0_w"], params["tconv1_0_b"]),
                   params["tbn1_0_g"], params["tbn1_0_b"])
    i99 = jnp.concatenate([o0, t10], axis=1)
    out = conv(jnp.cos(i99), params["conv9_9_w"], params["conv9_9_b"], 0)
    return shuffle(out)


# --------------------------------- main ---------------------------------------

if __name__ == "__main__":
    key = jax.random.PRNGKey(0)
    kr, ki, kp = jax.random.split(key, 3)

    # FAN_cos(in_ch=8): complex input with 1 channel (cat(real,imag)=2ch, unshuffle x4 -> 8).
    N, H, W = 2, 32, 32
    xr = jax.random.normal(kr, (N, 1, H, W), jnp.float32)
    xi = jax.random.normal(ki, (N, 1, H, W), jnp.float32)
    x = jax.lax.complex(xr, xi)
    params = init_params(kp, in_ch=8, out_ch=4)

    out = jax.block_until_ready(jax.jit(fan_cos_forward)(x, params))
    ref = jax.block_until_ready(_reference_forward(x, params))

    assert out.shape == (N, 1, H, W), out.shape
    max_err = float(jnp.max(jnp.abs(out - ref)))
    assert jnp.allclose(out, ref, rtol=1e-2, atol=1e-2), f"mismatch vs reference: {max_err}"
    print("KERNEL_OK")
</pallas_src>

<mosaic_0001>
module attributes {stable_mosaic.version = 11 : i64} {
  func.func @_fused_conv_bn_lrelu_kernel(%arg0: i32, %arg1: memref<512x72xbf16, #tpu.memory_space<vmem>>, %arg2: memref<72x128xbf16, #tpu.memory_space<vmem>>, %arg3: memref<1x128xf32, #tpu.memory_space<vmem>>, %arg4: memref<1x128xf32, #tpu.memory_space<vmem>>, %arg5: memref<128x128xf32, #tpu.memory_space<vmem>>, %arg6: memref<512x128xbf16, #tpu.memory_space<vmem>>, %arg7: memref<512x128xf32, #tpu.memory_space<vmem>>) attributes {dimension_semantics = [#tpu.dimension_semantics<arbitrary>], iteration_bounds = array<i64: 1>, scalar_prefetch = 0 : i64, scratch_operands = 1 : i64, tpu.core_type = #tpu.core_type<tc>, window_params = [{pipeline_mode = #tpu.pipeline_mode<synchronous>, transform_indices = @transform_0, window_bounds = array<i64: 512, 72>}, {pipeline_mode = #tpu.pipeline_mode<synchronous>, transform_indices = @transform_1, window_bounds = array<i64: 72, 128>}, {pipeline_mode = #tpu.pipeline_mode<synchronous>, transform_indices = @transform_2, window_bounds = array<i64: 1, 128>}, {pipeline_mode = #tpu.pipeline_mode<synchronous>, transform_indices = @transform_3, window_bounds = array<i64: 1, 128>}, {pipeline_mode = #tpu.pipeline_mode<synchronous>, transform_indices = @transform_4, window_bounds = array<i64: 128, 128>}, {pipeline_mode = #tpu.pipeline_mode<synchronous>, transform_indices = @transform_5, window_bounds = array<i64: 512, 128>}]} {
    %c0 = arith.constant 0 : index
    %c0_0 = arith.constant 0 : index
    %0 = vector.load %arg2[%c0, %c0_0] : memref<72x128xbf16, #tpu.memory_space<vmem>>, vector<72x128xbf16>
    %c0_1 = arith.constant 0 : index
    %c0_2 = arith.constant 0 : index
    %1 = vector.load %arg5[%c0_1, %c0_2] : memref<128x128xf32, #tpu.memory_space<vmem>>, vector<128x128xf32>
    %cst = arith.constant 0.000000e+00 : f32
    %2 = vector.broadcast %cst : f32 to vector<1x128xf32>
    %c0_3 = arith.constant 0 : index
    %c0_4 = arith.constant 0 : index
    %3 = vector.load %arg1[%c0_3, %c0_4] : memref<512x72xbf16, #tpu.memory_space<vmem>>, vector<128x72xbf16>
    %cst_5 = arith.constant dense<0.000000e+00> : vector<128x128xf32>
    %4 = tpu.matmul %3, %0, %cst_5 {dimension_numbers = #tpu.dot_dimension_numbers<[1], [0], [0], [1], [0, 0, 1, 1], [], []>} : vector<128x72xbf16>, vector<72x128xbf16>, vector<128x128xf32> -> vector<128x128xf32>
    %c0_6 = arith.constant 0 : index
    %c0_7 = arith.constant 0 : index
    %5 = vector.load %arg7[%c0_6, %c0_7] : memref<512x128xf32, #tpu.memory_space<vmem>>, vector<128x128xf32>
    tpu.vector_store %arg7[%c0_6, %c0_7], %4 {strides = array<i32>} : memref<512x128xf32, #tpu.memory_space<vmem>>, vector<128x128xf32>,
    %cst_8 = arith.constant dense<0.000000e+00> : vector<128xf32>
    %6 = vector.multi_reduction <add>, %4, %cst_8 [0] : vector<128x128xf32> to vector<128xf32>
    %7 = vector.shape_cast %6 : vector<128xf32> to vector<1x128xf32>
    %8 = arith.addf %2, %7 : vector<1x128xf32>
    %c128 = arith.constant 128 : index
    %c0_9 = arith.constant 0 : index
    %9 = vector.load %arg1[%c128, %c0_9] : memref<512x72xbf16, #tpu.memory_space<vmem>>, vector<128x72xbf16>
    %cst_10 = arith.constant dense<0.000000e+00> : vector<128x128xf32>
    %10 = tpu.matmul %9, %0, %cst_10 {dimension_numbers = #tpu.dot_dimension_numbers<[1], [0], [0], [1], [0, 0, 1, 1], [], []>} : vector<128x72xbf16>, vector<72x128xbf16>, vector<128x128xf32> -> vector<128x128xf32>
    %c128_11 = arith.constant 128 : index
    %c0_12 = arith.constant 0 : index
    %11 = vector.load %arg7[%c128_11, %c0_12] : memref<512x128xf32, #tpu.memory_space<vmem>>, vector<128x128xf32>
    tpu.vector_store %arg7[%c128_11, %c0_12], %10 {strides = array<i32>} : memref<512x128xf32, #tpu.memory_space<vmem>>, vector<128x128xf32>,
    %cst_13 = arith.constant dense<0.000000e+00> : vector<128xf32>
    %12 = vector.multi_reduction <add>, %10, %cst_13 [0] : vector<128x128xf32> to vector<128xf32>
    %13 = vector.shape_cast %12 : vector<128xf32> to vector<1x128xf32>
    %14 = arith.addf %8, %13 : vector<1x128xf32>
    %c256 = arith.constant 256 : index
    %c0_14 = arith.constant 0 : index
    %15 = vector.load %arg1[%c256, %c0_14] : memref<512x72xbf16, #tpu.memory_space<vmem>>, vector<128x72xbf16>
    %cst_15 = arith.constant dense<0.000000e+00> : vector<128x128xf32>
    %16 = tpu.matmul %15, %0, %cst_15 {dimension_numbers = #tpu.dot_dimension_numbers<[1], [0], [0], [1], [0, 0, 1, 1], [], []>} : vector<128x72xbf16>, vector<72x128xbf16>, vector<128x128xf32> -> vector<128x128xf32>
    %c256_16 = arith.constant 256 : index
    %c0_17 = arith.constant 0 : index
    %17 = vector.load %arg7[%c256_16, %c0_17] : memref<512x128xf32, #tpu.memory_space<vmem>>, vector<128x128xf32>
    tpu.vector_store %arg7[%c256_16, %c0_17], %16 {strides = array<i32>} : memref<512x128xf32, #tpu.memory_space<vmem>>, vector<128x128xf32>,
    %cst_18 = arith.constant dense<0.000000e+00> : vector<128xf32>
    %18 = vector.multi_reduction <add>, %16, %cst_18 [0] : vector<128x128xf32> to vector<128xf32>
    %19 = vector.shape_cast %18 : vector<128xf32> to vector<1x128xf32>
    %20 = arith.addf %14, %19 : vector<1x128xf32>
    %c384 = arith.constant 384 : index
    %c0_19 = arith.constant 0 : index
    %21 = vector.load %arg1[%c384, %c0_19] : memref<512x72xbf16, #tpu.memory_space<vmem>>, vector<128x72xbf16>
    %cst_20 = arith.constant dense<0.000000e+00> : vector<128x128xf32>
    %22 = tpu.matmul %21, %0, %cst_20 {dimension_numbers = #tpu.dot_dimension_numbers<[1], [0], [0], [1], [0, 0, 1, 1], [], []>} : vector<128x72xbf16>, vector<72x128xbf16>, vector<128x128xf32> -> vector<128x128xf32>
    %c384_21 = arith.constant 384 : index
    %c0_22 = arith.constant 0 : index
    %23 = vector.load %arg7[%c384_21, %c0_22] : memref<512x128xf32, #tpu.memory_space<vmem>>, vector<128x128xf32>
    tpu.vector_store %arg7[%c384_21, %c0_22], %22 {strides = array<i32>} : memref<512x128xf32, #tpu.memory_space<vmem>>, vector<128x128xf32>,
    %cst_23 = arith.constant dense<0.000000e+00> : vector<128xf32>
    %24 = vector.multi_reduction <add>, %22, %cst_23 [0] : vector<128x128xf32> to vector<128xf32>
    %25 = vector.shape_cast %24 : vector<128xf32> to vector<1x128xf32>
    %26 = arith.addf %20, %25 : vector<1x128xf32>
    %27 = vector.shape_cast %26 : vector<1x128xf32> to vector<1x128xf32>
    %28 = vector.broadcast %27 : vector<1x128xf32> to vector<8x128xf32>
    %cst_24 = arith.constant dense<0.000000e+00> : vector<8x128xf32>
    %29 = tpu.matmul %28, %1, %cst_24 {dimension_numbers = #tpu.dot_dimension_numbers<[1], [0], [0], [1], [0, 0, 1, 1], [], []>} : vector<8x128xf32>, vector<128x128xf32>, vector<8x128xf32> -> vector<8x128xf32>
    %30 = vector.extract_strided_slice %29 {offsets = [0, 0], sizes = [1, 128], strides = [1, 1]} : vector<8x128xf32> to vector<1x128xf32>
    %cst_25 = arith.constant 0.000000e+00 : f32
    %31 = vector.broadcast %cst_25 : f32 to vector<1x128xf32>
    %c0_26 = arith.constant 0 : index
    %c0_27 = arith.constant 0 : index
    %32 = vector.load %arg7[%c0_26, %c0_27] : memref<512x128xf32, #tpu.memory_space<vmem>>, vector<128x128xf32>
    %33 = vector.broadcast %30 : vector<1x128xf32> to vector<128x128xf32>
    %34 = arith.subf %32, %33 : vector<128x128xf32>
    %35 = arith.mulf %34, %34 : vector<128x128xf32>
    %cst_28 = arith.constant dense<0.000000e+00> : vector<128xf32>
    %36 = vector.multi_reduction <add>, %35, %cst_28 [0] : vector<128x128xf32> to vector<128xf32>
    %37 = vector.shape_cast %36 : vector<128xf32> to vector<1x128xf32>
    %38 = arith.addf %31, %37 : vector<1x128xf32>
    %c128_29 = arith.constant 128 : index
    %c0_30 = arith.constant 0 : index
    %39 = vector.load %arg7[%c128_29, %c0_30] : memref<512x128xf32, #tpu.memory_space<vmem>>, vector<128x128xf32>
    %40 = vector.broadcast %30 : vector<1x128xf32> to vector<128x128xf32>
    %41 = arith.subf %39, %40 : vector<128x128xf32>
    %42 = arith.mulf %41, %41 : vector<128x128xf32>
    %cst_31 = arith.constant dense<0.000000e+00> : vector<128xf32>
    %43 = vector.multi_reduction <add>, %42, %cst_31 [0] : vector<128x128xf32> to vector<128xf32>
    %44 = vector.shape_cast %43 : vector<128xf32> to vector<1x128xf32>
    %45 = arith.addf %38, %44 : vector<1x128xf32>
    %c256_32 = arith.constant 256 : index
    %c0_33 = arith.constant 0 : index
    %46 = vector.load %arg7[%c256_32, %c0_33] : memref<512x128xf32, #tpu.memory_space<vmem>>, vector<128x128xf32>
    %47 = vector.broadcast %30 : vector<1x128xf32> to vector<128x128xf32>
    %48 = arith.subf %46, %47 : vector<128x128xf32>
    %49 = arith.mulf %48, %48 : vector<128x128xf32>
    %cst_34 = arith.constant dense<0.000000e+00> : vector<128xf32>
    %50 = vector.multi_reduction <add>, %49, %cst_34 [0] : vector<128x128xf32> to vector<128xf32>
    %51 = vector.shape_cast %50 : vector<128xf32> to vector<1x128xf32>
    %52 = arith.addf %45, %51 : vector<1x128xf32>
    %c384_35 = arith.constant 384 : index
    %c0_36 = arith.constant 0 : index
    %53 = vector.load %arg7[%c384_35, %c0_36] : memref<512x128xf32, #tpu.memory_space<vmem>>, vector<128x128xf32>
    %54 = vector.broadcast %30 : vector<1x128xf32> to vector<128x128xf32>
    %55 = arith.subf %53, %54 : vector<128x128xf32>
    %56 = arith.mulf %55, %55 : vector<128x128xf32>
    %cst_37 = arith.constant dense<0.000000e+00> : vector<128xf32>
    %57 = vector.multi_reduction <add>, %56, %cst_37 [0] : vector<128x128xf32> to vector<128xf32>
    %58 = vector.shape_cast %57 : vector<128xf32> to vector<1x128xf32>
    %59 = arith.addf %52, %58 : vector<1x128xf32>
    %60 = vector.shape_cast %59 : vector<1x128xf32> to vector<1x128xf32>
    %61 = vector.broadcast %60 : vector<1x128xf32> to vector<8x128xf32>
    %cst_38 = arith.constant dense<0.000000e+00> : vector<8x128xf32>
    %62 = tpu.matmul %61, %1, %cst_38 {dimension_numbers = #tpu.dot_dimension_numbers<[1], [0], [0], [1], [0, 0, 1, 1], [], []>} : vector<8x128xf32>, vector<128x128xf32>, vector<8x128xf32> -> vector<8x128xf32>
    %63 = vector.extract_strided_slice %62 {offsets = [0, 0], sizes = [1, 128], strides = [1, 1]} : vector<8x128xf32> to vector<1x128xf32>
    %cst_39 = arith.constant 9.99999974E-6 : f32
    %64 = vector.broadcast %cst_39 : f32 to vector<1x128xf32>
    %65 = arith.addf %63, %64 : vector<1x128xf32>
    %66 = math.rsqrt %65 : vector<1x128xf32>
    %c0_40 = arith.constant 0 : index
    %c0_41 = arith.constant 0 : index
    %67 = vector.load %arg3[%c0_40, %c0_41] : memref<1x128xf32, #tpu.memory_space<vmem>>, vector<1x128xf32>
    %68 = arith.mulf %67, %66 : vector<1x128xf32>
    %c0_42 = arith.constant 0 : index
    %c0_43 = arith.constant 0 : index
    %69 = vector.load %arg4[%c0_42, %c0_43] : memref<1x128xf32, #tpu.memory_space<vmem>>, vector<1x128xf32>
    %70 = arith.mulf %30, %68 : vector<1x128xf32>
    %71 = arith.subf %69, %70 : vector<1x128xf32>
    %72 = vector.shape_cast %68 : vector<1x128xf32> to vector<1x128xf32>
    %73 = vector.broadcast %72 : vector<1x128xf32> to vector<128x128xf32>
    %74 = vector.shape_cast %71 : vector<1x128xf32> to vector<1x128xf32>
    %75 = vector.broadcast %74 : vector<1x128xf32> to vector<128x128xf32>
    %c0_44 = arith.constant 0 : index
    %c0_45 = arith.constant 0 : index
    %76 = vector.load %arg7[%c0_44, %c0_45] : memref<512x128xf32, #tpu.memory_space<vmem>>, vector<128x128xf32>
    %77 = arith.mulf %76, %73 : vector<128x128xf32>
    %78 = arith.addf %77, %75 : vector<128x128xf32>
    %cst_46 = arith.constant 0.000000e+00 : f32
    %79 = vector.broadcast %cst_46 : f32 to vector<128x128xf32>
    %80 = arith.cmpf oge, %78, %79 : vector<128x128xf32>
    %cst_47 = arith.constant 2.000000e-01 : f32
    %81 = vector.broadcast %cst_47 : f32 to vector<128x128xf32>
    %82 = arith.mulf %81, %78 : vector<128x128xf32>
    %83 = arith.select %80, %78, %82 : vector<128x128xi1>, vector<128x128xf32>
    %84 = arith.truncf %83 : vector<128x128xf32> to vector<128x128xbf16>
    %c0_48 = arith.constant 0 : index
    %c0_49 = arith.constant 0 : index
    %85 = vector.load %arg6[%c0_48, %c0_49] : memref<512x128xbf16, #tpu.memory_space<vmem>>, vector<128x128xbf16>
    tpu.vector_store %arg6[%c0_48, %c0_49], %84 {strides = array<i32>} : memref<512x128xbf16, #tpu.memory_space<vmem>>, vector<128x128xbf16>,
    %c128_50 = arith.constant 128 : index
    %c0_51 = arith.constant 0 : index
    %86 = vector.load %arg7[%c128_50, %c0_51] : memref<512x128xf32, #tpu.memory_space<vmem>>, vector<128x128xf32>
    %87 = arith.mulf %86, %73 : vector<128x128xf32>
    %88 = arith.addf %87, %75 : vector<128x128xf32>
    %cst_52 = arith.constant 0.000000e+00 : f32
    %89 = vector.broadcast %cst_52 : f32 to vector<128x128xf32>
    %90 = arith.cmpf oge, %88, %89 : vector<128x128xf32>
    %cst_53 = arith.constant 2.000000e-01 : f32
    %91 = vector.broadcast %cst_53 : f32 to vector<128x128xf32>
    %92 = arith.mulf %91, %88 : vector<128x128xf32>
    %93 = arith.select %90, %88, %92 : vector<128x128xi1>, vector<128x128xf32>
    %94 = arith.truncf %93 : vector<128x128xf32> to vector<128x128xbf16>
    %c128_54 = arith.constant 128 : index
    %c0_55 = arith.constant 0 : index
    %95 = vector.load %arg6[%c128_54, %c0_55] : memref<512x128xbf16, #tpu.memory_space<vmem>>, vector<128x128xbf16>
    tpu.vector_store %arg6[%c128_54, %c0_55], %94 {strides = array<i32>} : memref<512x128xbf16, #tpu.memory_space<vmem>>, vector<128x128xbf16>,
    %c256_56 = arith.constant 256 : index
    %c0_57 = arith.constant 0 : index
    %96 = vector.load %arg7[%c256_56, %c0_57] : memref<512x128xf32, #tpu.memory_space<vmem>>, vector<128x128xf32>
    %97 = arith.mulf %96, %73 : vector<128x128xf32>
    %98 = arith.addf %97, %75 : vector<128x128xf32>
    %cst_58 = arith.constant 0.000000e+00 : f32
    %99 = vector.broadcast %cst_58 : f32 to vector<128x128xf32>
    %100 = arith.cmpf oge, %98, %99 : vector<128x128xf32>
    %cst_59 = arith.constant 2.000000e-01 : f32
    %101 = vector.broadcast %cst_59 : f32 to vector<128x128xf32>
    %102 = arith.mulf %101, %98 : vector<128x128xf32>
    %103 = arith.select %100, %98, %102 : vector<128x128xi1>, vector<128x128xf32>
    %104 = arith.truncf %103 : vector<128x128xf32> to vector<128x128xbf16>
    %c256_60 = arith.constant 256 : index
    %c0_61 = arith.constant 0 : index
    %105 = vector.load %arg6[%c256_60, %c0_61] : memref<512x128xbf16, #tpu.memory_space<vmem>>, vector<128x128xbf16>
    tpu.vector_store %arg6[%c256_60, %c0_61], %104 {strides = array<i32>} : memref<512x128xbf16, #tpu.memory_space<vmem>>, vector<128x128xbf16>,
    %c384_62 = arith.constant 384 : index
    %c0_63 = arith.constant 0 : index
    %106 = vector.load %arg7[%c384_62, %c0_63] : memref<512x128xf32, #tpu.memory_space<vmem>>, vector<128x128xf32>
    %107 = arith.mulf %106, %73 : vector<128x128xf32>
    %108 = arith.addf %107, %75 : vector<128x128xf32>
    %cst_64 = arith.constant 0.000000e+00 : f32
    %109 = vector.broadcast %cst_64 : f32 to vector<128x128xf32>
    %110 = arith.cmpf oge, %108, %109 : vector<128x128xf32>
    %cst_65 = arith.constant 2.000000e-01 : f32
    %111 = vector.broadcast %cst_65 : f32 to vector<128x128xf32>
    %112 = arith.mulf %111, %108 : vector<128x128xf32>
    %113 = arith.select %110, %108, %112 : vector<128x128xi1>, vector<128x128xf32>
    %114 = arith.truncf %113 : vector<128x128xf32> to vector<128x128xbf16>
    %c384_66 = arith.constant 384 : index
    %c0_67 = arith.constant 0 : index
    %115 = vector.load %arg6[%c384_66, %c0_67] : memref<512x128xbf16, #tpu.memory_space<vmem>>, vector<128x128xbf16>
    tpu.vector_store %arg6[%c384_66, %c0_67], %114 {strides = array<i32>} : memref<512x128xbf16, #tpu.memory_space<vmem>>, vector<128x128xbf16>,
    return
  }
  func.func @transform_0(%arg0: i32) -> (i32, i32) {
    %c0_i32 = arith.constant 0 : i32
    %c0_i32_0 = arith.constant 0 : i32
    %c0_i32_1 = arith.constant 0 : i32
    return %c0_i32, %c0_i32_0 : i32, i32
  }
  func.func @transform_1(%arg0: i32) -> (i32, i32) {
    %c0_i32 = arith.constant 0 : i32
    %c0_i32_0 = arith.constant 0 : i32
    %c0_i32_1 = arith.constant 0 : i32
    return %c0_i32, %c0_i32_0 : i32, i32
  }
  func.func @transform_2(%arg0: i32) -> (i32, i32) {
    %c0_i32 = arith.constant 0 : i32
    %c0_i32_0 = arith.constant 0 : i32
    %c0_i32_1 = arith.constant 0 : i32
    return %c0_i32, %c0_i32_0 : i32, i32
  }
  func.func @transform_3(%arg0: i32) -> (i32, i32) {
    %c0_i32 = arith.constant 0 : i32
    %c0_i32_0 = arith.constant 0 : i32
    %c0_i32_1 = arith.constant 0 : i32
    return %c0_i32, %c0_i32_0 : i32, i32
  }
  func.func @transform_4(%arg0: i32) -> (i32, i32) {
    %c0_i32 = arith.constant 0 : i32
    %c0_i32_0 = arith.constant 0 : i32
    %c0_i32_1 = arith.constant 0 : i32
    return %c0_i32, %c0_i32_0 : i32, i32
  }
  func.func @transform_5(%arg0: i32) -> (i32, i32) {
    %c0_i32 = arith.constant 0 : i32
    %c0_i32_0 = arith.constant 0 : i32
    %c0_i32_1 = arith.constant 0 : i32
    return %c0_i32, %c0_i32_0 : i32, i32
  }
}

module attributes {stable_mosaic.version = 11 : i64} {
  func.func @_fused_conv_bn_lrelu_kernel(%arg0: i32, %arg1: memref<128x72xbf16, #tpu.memory_space<vmem>>, %arg2: memref<72x128xbf16, #tpu.memory_space<vmem>>, %arg3: memref<1x128xf32, #tpu.memory_space<vmem>>, %arg4: memref<1x128xf32, #tpu.memory_space<vmem>>, %arg5: memref<128x128xf32, #tpu.memory_space<vmem>>, %arg6: memref<128x128xbf16, #tpu.memory_space<vmem>>, %arg7: memref<128x128xf32, #tpu.memory_space<vmem>>) attributes {dimension_semantics = [#tpu.dimension_semantics<arbitrary>], iteration_bounds = array<i64: 1>, scalar_prefetch = 0 : i64, scratch_operands = 1 : i64, tpu.core_type = #tpu.core_type<tc>, window_params = [{pipeline_mode = #tpu.pipeline_mode<synchronous>, transform_indices = @transform_0, window_bounds = array<i64: 128, 72>}, {pipeline_mode = #tpu.pipeline_mode<synchronous>, transform_indices = @transform_1, window_bounds = array<i64: 72, 128>}, {pipeline_mode = #tpu.pipeline_mode<synchronous>, transform_indices = @transform_2, window_bounds = array<i64: 1, 128>}, {pipeline_mode = #tpu.pipeline_mode<synchronous>, transform_indices = @transform_3, window_bounds = array<i64: 1, 128>}, {pipeline_mode = #tpu.pipeline_mode<synchronous>, transform_indices = @transform_4, window_bounds = array<i64: 128, 128>}, {pipeline_mode = #tpu.pipeline_mode<synchronous>, transform_indices = @transform_5, window_bounds = array<i64: 128, 128>}]} {
    %c0 = arith.constant 0 : index
    %c0_0 = arith.constant 0 : index
    %0 = vector.load %arg2[%c0, %c0_0] : memref<72x128xbf16, #tpu.memory_space<vmem>>, vector<72x128xbf16>
    %c0_1 = arith.constant 0 : index
    %c0_2 = arith.constant 0 : index
    %1 = vector.load %arg5[%c0_1, %c0_2] : memref<128x128xf32, #tpu.memory_space<vmem>>, vector<128x128xf32>
    %cst = arith.constant 0.000000e+00 : f32
    %2 = vector.broadcast %cst : f32 to vector<1x128xf32>
    %c0_3 = arith.constant 0 : index
    %c0_4 = arith.constant 0 : index
    %3 = vector.load %arg1[%c0_3, %c0_4] : memref<128x72xbf16, #tpu.memory_space<vmem>>, vector<128x72xbf16>
    %cst_5 = arith.constant dense<0.000000e+00> : vector<128x128xf32>
    %4 = tpu.matmul %3, %0, %cst_5 {dimension_numbers = #tpu.dot_dimension_numbers<[1], [0], [0], [1], [0, 0, 1, 1], [], []>} : vector<128x72xbf16>, vector<72x128xbf16>, vector<128x128xf32> -> vector<128x128xf32>
    %c0_6 = arith.constant 0 : index
    %c0_7 = arith.constant 0 : index
    %5 = vector.load %arg7[%c0_6, %c0_7] : memref<128x128xf32, #tpu.memory_space<vmem>>, vector<128x128xf32>
    tpu.vector_store %arg7[%c0_6, %c0_7], %4 {strides = array<i32>} : memref<128x128xf32, #tpu.memory_space<vmem>>, vector<128x128xf32>,
    %cst_8 = arith.constant dense<0.000000e+00> : vector<128xf32>
    %6 = vector.multi_reduction <add>, %4, %cst_8 [0] : vector<128x128xf32> to vector<128xf32>
    %7 = vector.shape_cast %6 : vector<128xf32> to vector<1x128xf32>
    %8 = arith.addf %2, %7 : vector<1x128xf32>
    %9 = vector.shape_cast %8 : vector<1x128xf32> to vector<1x128xf32>
    %10 = vector.broadcast %9 : vector<1x128xf32> to vector<8x128xf32>
    %cst_9 = arith.constant dense<0.000000e+00> : vector<8x128xf32>
    %11 = tpu.matmul %10, %1, %cst_9 {dimension_numbers = #tpu.dot_dimension_numbers<[1], [0], [0], [1], [0, 0, 1, 1], [], []>} : vector<8x128xf32>, vector<128x128xf32>, vector<8x128xf32> -> vector<8x128xf32>
    %12 = vector.extract_strided_slice %11 {offsets = [0, 0], sizes = [1, 128], strides = [1, 1]} : vector<8x128xf32> to vector<1x128xf32>
    %cst_10 = arith.constant 0.000000e+00 : f32
    %13 = vector.broadcast %cst_10 : f32 to vector<1x128xf32>
    %c0_11 = arith.constant 0 : index
    %c0_12 = arith.constant 0 : index
    %14 = vector.load %arg7[%c0_11, %c0_12] : memref<128x128xf32, #tpu.memory_space<vmem>>, vector<128x128xf32>
    %15 = vector.broadcast %12 : vector<1x128xf32> to vector<128x128xf32>
    %16 = arith.subf %14, %15 : vector<128x128xf32>
    %17 = arith.mulf %16, %16 : vector<128x128xf32>
    %cst_13 = arith.constant dense<0.000000e+00> : vector<128xf32>
    %18 = vector.multi_reduction <add>, %17, %cst_13 [0] : vector<128x128xf32> to vector<128xf32>
    %19 = vector.shape_cast %18 : vector<128xf32> to vector<1x128xf32>
    %20 = arith.addf %13, %19 : vector<1x128xf32>
    %21 = vector.shape_cast %20 : vector<1x128xf32> to vector<1x128xf32>
    %22 = vector.broadcast %21 : vector<1x128xf32> to vector<8x128xf32>
    %cst_14 = arith.constant dense<0.000000e+00> : vector<8x128xf32>
    %23 = tpu.matmul %22, %1, %cst_14 {dimension_numbers = #tpu.dot_dimension_numbers<[1], [0], [0], [1], [0, 0, 1, 1], [], []>} : vector<8x128xf32>, vector<128x128xf32>, vector<8x128xf32> -> vector<8x128xf32>
    %24 = vector.extract_strided_slice %23 {offsets = [0, 0], sizes = [1, 128], strides = [1, 1]} : vector<8x128xf32> to vector<1x128xf32>
    %cst_15 = arith.constant 9.99999974E-6 : f32
    %25 = vector.broadcast %cst_15 : f32 to vector<1x128xf32>
    %26 = arith.addf %24, %25 : vector<1x128xf32>
    %27 = math.rsqrt %26 : vector<1x128xf32>
    %c0_16 = arith.constant 0 : index
    %c0_17 = arith.constant 0 : index
    %28 = vector.load %arg3[%c0_16, %c0_17] : memref<1x128xf32, #tpu.memory_space<vmem>>, vector<1x128xf32>
    %29 = arith.mulf %28, %27 : vector<1x128xf32>
    %c0_18 = arith.constant 0 : index
    %c0_19 = arith.constant 0 : index
    %30 = vector.load %arg4[%c0_18, %c0_19] : memref<1x128xf32, #tpu.memory_space<vmem>>, vector<1x128xf32>
    %31 = arith.mulf %12, %29 : vector<1x128xf32>
    %32 = arith.subf %30, %31 : vector<1x128xf32>
    %33 = vector.shape_cast %29 : vector<1x128xf32> to vector<1x128xf32>
    %34 = vector.broadcast %33 : vector<1x128xf32> to vector<128x128xf32>
    %35 = vector.shape_cast %32 : vector<1x128xf32> to vector<1x128xf32>
    %36 = vector.broadcast %35 : vector<1x128xf32> to vector<128x128xf32>
    %c0_20 = arith.constant 0 : index
    %c0_21 = arith.constant 0 : index
    %37 = vector.load %arg7[%c0_20, %c0_21] : memref<128x128xf32, #tpu.memory_space<vmem>>, vector<128x128xf32>
    %38 = arith.mulf %37, %34 : vector<128x128xf32>
    %39 = arith.addf %38, %36 : vector<128x128xf32>
    %cst_22 = arith.constant 0.000000e+00 : f32
    %40 = vector.broadcast %cst_22 : f32 to vector<128x128xf32>
    %41 = arith.cmpf oge, %39, %40 : vector<128x128xf32>
    %cst_23 = arith.constant 2.000000e-01 : f32
    %42 = vector.broadcast %cst_23 : f32 to vector<128x128xf32>
    %43 = arith.mulf %42, %39 : vector<128x128xf32>
    %44 = arith.select %41, %39, %43 : vector<128x128xi1>, vector<128x128xf32>
    %45 = arith.truncf %44 : vector<128x128xf32> to vector<128x128xbf16>
    %c0_24 = arith.constant 0 : index
    %c0_25 = arith.constant 0 : index
    %46 = vector.load %arg6[%c0_24, %c0_25] : memref<128x128xbf16, #tpu.memory_space<vmem>>, vector<128x128xbf16>
    tpu.vector_store %arg6[%c0_24, %c0_25], %45 {strides = array<i32>} : memref<128x128xbf16, #tpu.memory_space<vmem>>, vector<128x128xbf16>,
    return
  }
  func.func @transform_0(%arg0: i32) -> (i32, i32) {
    %c0_i32 = arith.constant 0 : i32
    %c0_i32_0 = arith.constant 0 : i32
    %c0_i32_1 = arith.constant 0 : i32
    return %c0_i32, %c0_i32_0 : i32, i32
  }
  func.func @transform_1(%arg0: i32) -> (i32, i32) {
    %c0_i32 = arith.constant 0 : i32
    %c0_i32_0 = arith.constant 0 : i32
    %c0_i32_1 = arith.constant 0 : i32
    return %c0_i32, %c0_i32_0 : i32, i32
  }
  func.func @transform_2(%arg0: i32) -> (i32, i32) {
    %c0_i32 = arith.constant 0 : i32
    %c0_i32_0 = arith.constant 0 : i32
    %c0_i32_1 = arith.constant 0 : i32
    return %c0_i32, %c0_i32_0 : i32, i32
  }
  func.func @transform_3(%arg0: i32) -> (i32, i32) {
    %c0_i32 = arith.constant 0 : i32
    %c0_i32_0 = arith.constant 0 : i32
    %c0_i32_1 = arith.constant 0 : i32
    return %c0_i32, %c0_i32_0 : i32, i32
  }
  func.func @transform_4(%arg0: i32) -> (i32, i32) {
    %c0_i32 = arith.constant 0 : i32
    %c0_i32_0 = arith.constant 0 : i32
    %c0_i32_1 = arith.constant 0 : i32
    return %c0_i32, %c0_i32_0 : i32, i32
  }
  func.func @transform_5(%arg0: i32) -> (i32, i32) {
    %c0_i32 = arith.constant 0 : i32
    %c0_i32_0 = arith.constant 0 : i32
    %c0_i32_1 = arith.constant 0 : i32
    return %c0_i32, %c0_i32_0 : i32, i32
  }
}

module attributes {stable_mosaic.version = 11 : i64} {
  func.func @_fused_conv_bn_lrelu_kernel(%arg0: i32, %arg1: memref<128x8xbf16, #tpu.memory_space<vmem>>, %arg2: memref<8x128xbf16, #tpu.memory_space<vmem>>, %arg3: memref<1x128xf32, #tpu.memory_space<vmem>>, %arg4: memref<1x128xf32, #tpu.memory_space<vmem>>, %arg5: memref<128x128xf32, #tpu.memory_space<vmem>>, %arg6: memref<128x128xbf16, #tpu.memory_space<vmem>>, %arg7: memref<128x128xf32, #tpu.memory_space<vmem>>) attributes {dimension_semantics = [#tpu.dimension_semantics<arbitrary>], iteration_bounds = array<i64: 1>, scalar_prefetch = 0 : i64, scratch_operands = 1 : i64, tpu.core_type = #tpu.core_type<tc>, window_params = [{pipeline_mode = #tpu.pipeline_mode<synchronous>, transform_indices = @transform_0, window_bounds = array<i64: 128, 8>}, {pipeline_mode = #tpu.pipeline_mode<synchronous>, transform_indices = @transform_1, window_bounds = array<i64: 8, 128>}, {pipeline_mode = #tpu.pipeline_mode<synchronous>, transform_indices = @transform_2, window_bounds = array<i64: 1, 128>}, {pipeline_mode = #tpu.pipeline_mode<synchronous>, transform_indices = @transform_3, window_bounds = array<i64: 1, 128>}, {pipeline_mode = #tpu.pipeline_mode<synchronous>, transform_indices = @transform_4, window_bounds = array<i64: 128, 128>}, {pipeline_mode = #tpu.pipeline_mode<synchronous>, transform_indices = @transform_5, window_bounds = array<i64: 128, 128>}]} {
    %c0 = arith.constant 0 : index
    %c0_0 = arith.constant 0 : index
    %0 = vector.load %arg2[%c0, %c0_0] : memref<8x128xbf16, #tpu.memory_space<vmem>>, vector<8x128xbf16>
    %c0_1 = arith.constant 0 : index
    %c0_2 = arith.constant 0 : index
    %1 = vector.load %arg5[%c0_1, %c0_2] : memref<128x128xf32, #tpu.memory_space<vmem>>, vector<128x128xf32>
    %cst = arith.constant 0.000000e+00 : f32
    %2 = vector.broadcast %cst : f32 to vector<1x128xf32>
    %c0_3 = arith.constant 0 : index
    %c0_4 = arith.constant 0 : index
    %3 = vector.load %arg1[%c0_3, %c0_4] : memref<128x8xbf16, #tpu.memory_space<vmem>>, vector<128x8xbf16>
    %cst_5 = arith.constant dense<0.000000e+00> : vector<128x128xf32>
    %4 = tpu.matmul %3, %0, %cst_5 {dimension_numbers = #tpu.dot_dimension_numbers<[1], [0], [0], [1], [0, 0, 1, 1], [], []>} : vector<128x8xbf16>, vector<8x128xbf16>, vector<128x128xf32> -> vector<128x128xf32>
    %c0_6 = arith.constant 0 : index
    %c0_7 = arith.constant 0 : index
    %5 = vector.load %arg7[%c0_6, %c0_7] : memref<128x128xf32, #tpu.memory_space<vmem>>, vector<128x128xf32>
    tpu.vector_store %arg7[%c0_6, %c0_7], %4 {strides = array<i32>} : memref<128x128xf32, #tpu.memory_space<vmem>>, vector<128x128xf32>,
    %cst_8 = arith.constant dense<0.000000e+00> : vector<128xf32>
    %6 = vector.multi_reduction <add>, %4, %cst_8 [0] : vector<128x128xf32> to vector<128xf32>
    %7 = vector.shape_cast %6 : vector<128xf32> to vector<1x128xf32>
    %8 = arith.addf %2, %7 : vector<1x128xf32>
    %9 = vector.shape_cast %8 : vector<1x128xf32> to vector<1x128xf32>
    %10 = vector.broadcast %9 : vector<1x128xf32> to vector<8x128xf32>
    %cst_9 = arith.constant dense<0.000000e+00> : vector<8x128xf32>
    %11 = tpu.matmul %10, %1, %cst_9 {dimension_numbers = #tpu.dot_dimension_numbers<[1], [0], [0], [1], [0, 0, 1, 1], [], []>} : vector<8x128xf32>, vector<128x128xf32>, vector<8x128xf32> -> vector<8x128xf32>
    %12 = vector.extract_strided_slice %11 {offsets = [0, 0], sizes = [1, 128], strides = [1, 1]} : vector<8x128xf32> to vector<1x128xf32>
    %cst_10 = arith.constant 0.000000e+00 : f32
    %13 = vector.broadcast %cst_10 : f32 to vector<1x128xf32>
    %c0_11 = arith.constant 0 : index
    %c0_12 = arith.constant 0 : index
    %14 = vector.load %arg7[%c0_11, %c0_12] : memref<128x128xf32, #tpu.memory_space<vmem>>, vector<128x128xf32>
    %15 = vector.broadcast %12 : vector<1x128xf32> to vector<128x128xf32>
    %16 = arith.subf %14, %15 : vector<128x128xf32>
    %17 = arith.mulf %16, %16 : vector<128x128xf32>
    %cst_13 = arith.constant dense<0.000000e+00> : vector<128xf32>
    %18 = vector.multi_reduction <add>, %17, %cst_13 [0] : vector<128x128xf32> to vector<128xf32>
    %19 = vector.shape_cast %18 : vector<128xf32> to vector<1x128xf32>
    %20 = arith.addf %13, %19 : vector<1x128xf32>
    %21 = vector.shape_cast %20 : vector<1x128xf32> to vector<1x128xf32>
    %22 = vector.broadcast %21 : vector<1x128xf32> to vector<8x128xf32>
    %cst_14 = arith.constant dense<0.000000e+00> : vector<8x128xf32>
    %23 = tpu.matmul %22, %1, %cst_14 {dimension_numbers = #tpu.dot_dimension_numbers<[1], [0], [0], [1], [0, 0, 1, 1], [], []>} : vector<8x128xf32>, vector<128x128xf32>, vector<8x128xf32> -> vector<8x128xf32>
    %24 = vector.extract_strided_slice %23 {offsets = [0, 0], sizes = [1, 128], strides = [1, 1]} : vector<8x128xf32> to vector<1x128xf32>
    %cst_15 = arith.constant 9.99999974E-6 : f32
    %25 = vector.broadcast %cst_15 : f32 to vector<1x128xf32>
    %26 = arith.addf %24, %25 : vector<1x128xf32>
    %27 = math.rsqrt %26 : vector<1x128xf32>
    %c0_16 = arith.constant 0 : index
    %c0_17 = arith.constant 0 : index
    %28 = vector.load %arg3[%c0_16, %c0_17] : memref<1x128xf32, #tpu.memory_space<vmem>>, vector<1x128xf32>
    %29 = arith.mulf %28, %27 : vector<1x128xf32>
    %c0_18 = arith.constant 0 : index
    %c0_19 = arith.constant 0 : index
    %30 = vector.load %arg4[%c0_18, %c0_19] : memref<1x128xf32, #tpu.memory_space<vmem>>, vector<1x128xf32>
    %31 = arith.mulf %12, %29 : vector<1x128xf32>
    %32 = arith.subf %30, %31 : vector<1x128xf32>
    %33 = vector.shape_cast %29 : vector<1x128xf32> to vector<1x128xf32>
    %34 = vector.broadcast %33 : vector<1x128xf32> to vector<128x128xf32>
    %35 = vector.shape_cast %32 : vector<1x128xf32> to vector<1x128xf32>
    %36 = vector.broadcast %35 : vector<1x128xf32> to vector<128x128xf32>
    %c0_20 = arith.constant 0 : index
    %c0_21 = arith.constant 0 : index
    %37 = vector.load %arg7[%c0_20, %c0_21] : memref<128x128xf32, #tpu.memory_space<vmem>>, vector<128x128xf32>
    %38 = arith.mulf %37, %34 : vector<128x128xf32>
    %39 = arith.addf %38, %36 : vector<128x128xf32>
    %cst_22 = arith.constant 0.000000e+00 : f32
    %40 = vector.broadcast %cst_22 : f32 to vector<128x128xf32>
    %41 = arith.cmpf oge, %39, %40 : vector<128x128xf32>
    %cst_23 = arith.constant 2.000000e-01 : f32
    %42 = vector.broadcast %cst_23 : f32 to vector<128x128xf32>
    %43 = arith.mulf %42, %39 : vector<128x128xf32>
    %44 = arith.select %41, %39, %43 : vector<128x128xi1>, vector<128x128xf32>
    %45 = arith.truncf %44 : vector<128x128xf32> to vector<128x128xbf16>
    %c0_24 = arith.constant 0 : index
    %c0_25 = arith.constant 0 : index
    %46 = vector.load %arg6[%c0_24, %c0_25] : memref<128x128xbf16, #tpu.memory_space<vmem>>, vector<128x128xbf16>
    tpu.vector_store %arg6[%c0_24, %c0_25], %45 {strides = array<i32>} : memref<128x128xbf16, #tpu.memory_space<vmem>>, vector<128x128xbf16>,
    return
  }
  func.func @transform_0(%arg0: i32) -> (i32, i32) {
    %c0_i32 = arith.constant 0 : i32
    %c0_i32_0 = arith.constant 0 : i32
    %c0_i32_1 = arith.constant 0 : i32
    return %c0_i32, %c0_i32_0 : i32, i32
  }
  func.func @transform_1(%arg0: i32) -> (i32, i32) {
    %c0_i32 = arith.constant 0 : i32
    %c0_i32_0 = arith.constant 0 : i32
    %c0_i32_1 = arith.constant 0 : i32
    return %c0_i32, %c0_i32_0 : i32, i32
  }
  func.func @transform_2(%arg0: i32) -> (i32, i32) {
    %c0_i32 = arith.constant 0 : i32
    %c0_i32_0 = arith.constant 0 : i32
    %c0_i32_1 = arith.constant 0 : i32
    return %c0_i32, %c0_i32_0 : i32, i32
  }
  func.func @transform_3(%arg0: i32) -> (i32, i32) {
    %c0_i32 = arith.constant 0 : i32
    %c0_i32_0 = arith.constant 0 : i32
    %c0_i32_1 = arith.constant 0 : i32
    return %c0_i32, %c0_i32_0 : i32, i32
  }
  func.func @transform_4(%arg0: i32) -> (i32, i32) {
    %c0_i32 = arith.constant 0 : i32
    %c0_i32_0 = arith.constant 0 : i32
    %c0_i32_1 = arith.constant 0 : i32
    return %c0_i32, %c0_i32_0 : i32, i32
  }
  func.func @transform_5(%arg0: i32) -> (i32, i32) {
    %c0_i32 = arith.constant 0 : i32
    %c0_i32_0 = arith.constant 0 : i32
    %c0_i32_1 = arith.constant 0 : i32
    return %c0_i32, %c0_i32_0 : i32, i32
  }
}

module attributes {stable_mosaic.version = 11 : i64} {
  func.func @_cos_matmul_bias_kernel(%arg0: i32, %arg1: memref<512x8xbf16, #tpu.memory_space<vmem>>, %arg2: memref<8x128xbf16, #tpu.memory_space<vmem>>, %arg3: memref<1x128xf32, #tpu.memory_space<vmem>>, %arg4: memref<512x128xf32, #tpu.memory_space<vmem>>) attributes {dimension_semantics = [#tpu.dimension_semantics<arbitrary>], iteration_bounds = array<i64: 1>, scalar_prefetch = 0 : i64, scratch_operands = 0 : i64, tpu.core_type = #tpu.core_type<tc>, window_params = [{pipeline_mode = #tpu.pipeline_mode<synchronous>, transform_indices = @transform_0, window_bounds = array<i64: 512, 8>}, {pipeline_mode = #tpu.pipeline_mode<synchronous>, transform_indices = @transform_1, window_bounds = array<i64: 8, 128>}, {pipeline_mode = #tpu.pipeline_mode<synchronous>, transform_indices = @transform_2, window_bounds = array<i64: 1, 128>}, {pipeline_mode = #tpu.pipeline_mode<synchronous>, transform_indices = @transform_3, window_bounds = array<i64: 512, 128>}]} {
    %c0 = arith.constant 0 : index
    %c0_0 = arith.constant 0 : index
    %0 = vector.load %arg2[%c0, %c0_0] : memref<8x128xbf16, #tpu.memory_space<vmem>>, vector<8x128xbf16>
    %c0_1 = arith.constant 0 : index
    %c0_2 = arith.constant 0 : index
    %1 = vector.load %arg3[%c0_1, %c0_2] : memref<1x128xf32, #tpu.memory_space<vmem>>, vector<1x128xf32>
    %2 = vector.shape_cast %1 : vector<1x128xf32> to vector<1x128xf32>
    %3 = vector.broadcast %2 : vector<1x128xf32> to vector<128x128xf32>
    %c0_3 = arith.constant 0 : index
    %c0_4 = arith.constant 0 : index
    %4 = vector.load %arg1[%c0_3, %c0_4] : memref<512x8xbf16, #tpu.memory_space<vmem>>, vector<128x8xbf16>
    %5 = arith.extf %4 : vector<128x8xbf16> to vector<128x8xf32>
    %6 = math.cos %5 : vector<128x8xf32>
    %7 = arith.truncf %6 : vector<128x8xf32> to vector<128x8xbf16>
    %cst = arith.constant dense<0.000000e+00> : vector<128x128xf32>
    %8 = tpu.matmul %7, %0, %cst {dimension_numbers = #tpu.dot_dimension_numbers<[1], [0], [0], [1], [0, 0, 1, 1], [], []>} : vector<128x8xbf16>, vector<8x128xbf16>, vector<128x128xf32> -> vector<128x128xf32>
    %9 = arith.addf %8, %3 : vector<128x128xf32>
    %c0_5 = arith.constant 0 : index
    %c0_6 = arith.constant 0 : index
    %10 = vector.load %arg4[%c0_5, %c0_6] : memref<512x128xf32, #tpu.memory_space<vmem>>, vector<128x128xf32>
    tpu.vector_store %arg4[%c0_5, %c0_6], %9 {strides = array<i32>} : memref<512x128xf32, #tpu.memory_space<vmem>>, vector<128x128xf32>,
    %c128 = arith.constant 128 : index
    %c0_7 = arith.constant 0 : index
    %11 = vector.load %arg1[%c128, %c0_7] : memref<512x8xbf16, #tpu.memory_space<vmem>>, vector<128x8xbf16>
    %12 = arith.extf %11 : vector<128x8xbf16> to vector<128x8xf32>
    %13 = math.cos %12 : vector<128x8xf32>
    %14 = arith.truncf %13 : vector<128x8xf32> to vector<128x8xbf16>
    %cst_8 = arith.constant dense<0.000000e+00> : vector<128x128xf32>
    %15 = tpu.matmul %14, %0, %cst_8 {dimension_numbers = #tpu.dot_dimension_numbers<[1], [0], [0], [1], [0, 0, 1, 1], [], []>} : vector<128x8xbf16>, vector<8x128xbf16>, vector<128x128xf32> -> vector<128x128xf32>
    %16 = arith.addf %15, %3 : vector<128x128xf32>
    %c128_9 = arith.constant 128 : index
    %c0_10 = arith.constant 0 : index
    %17 = vector.load %arg4[%c128_9, %c0_10] : memref<512x128xf32, #tpu.memory_space<vmem>>, vector<128x128xf32>
    tpu.vector_store %arg4[%c128_9, %c0_10], %16 {strides = array<i32>} : memref<512x128xf32, #tpu.memory_space<vmem>>, vector<128x128xf32>,
    %c256 = arith.constant 256 : index
    %c0_11 = arith.constant 0 : index
    %18 = vector.load %arg1[%c256, %c0_11] : memref<512x8xbf16, #tpu.memory_space<vmem>>, vector<128x8xbf16>
    %19 = arith.extf %18 : vector<128x8xbf16> to vector<128x8xf32>
    %20 = math.cos %19 : vector<128x8xf32>
    %21 = arith.truncf %20 : vector<128x8xf32> to vector<128x8xbf16>
    %cst_12 = arith.constant dense<0.000000e+00> : vector<128x128xf32>
    %22 = tpu.matmul %21, %0, %cst_12 {dimension_numbers = #tpu.dot_dimension_numbers<[1], [0], [0], [1], [0, 0, 1, 1], [], []>} : vector<128x8xbf16>, vector<8x128xbf16>, vector<128x128xf32> -> vector<128x128xf32>
    %23 = arith.addf %22, %3 : vector<128x128xf32>
    %c256_13 = arith.constant 256 : index
    %c0_14 = arith.constant 0 : index
    %24 = vector.load %arg4[%c256_13, %c0_14] : memref<512x128xf32, #tpu.memory_space<vmem>>, vector<128x128xf32>
    tpu.vector_store %arg4[%c256_13, %c0_14], %23 {strides = array<i32>} : memref<512x128xf32, #tpu.memory_space<vmem>>, vector<128x128xf32>,
    %c384 = arith.constant 384 : index
    %c0_15 = arith.constant 0 : index
    %25 = vector.load %arg1[%c384, %c0_15] : memref<512x8xbf16, #tpu.memory_space<vmem>>, vector<128x8xbf16>
    %26 = arith.extf %25 : vector<128x8xbf16> to vector<128x8xf32>
    %27 = math.cos %26 : vector<128x8xf32>
    %28 = arith.truncf %27 : vector<128x8xf32> to vector<128x8xbf16>
    %cst_16 = arith.constant dense<0.000000e+00> : vector<128x128xf32>
    %29 = tpu.matmul %28, %0, %cst_16 {dimension_numbers = #tpu.dot_dimension_numbers<[1], [0], [0], [1], [0, 0, 1, 1], [], []>} : vector<128x8xbf16>, vector<8x128xbf16>, vector<128x128xf32> -> vector<128x128xf32>
    %30 = arith.addf %29, %3 : vector<128x128xf32>
    %c384_17 = arith.constant 384 : index
    %c0_18 = arith.constant 0 : index
    %31 = vector.load %arg4[%c384_17, %c0_18] : memref<512x128xf32, #tpu.memory_space<vmem>>, vector<128x128xf32>
    tpu.vector_store %arg4[%c384_17, %c0_18], %30 {strides = array<i32>} : memref<512x128xf32, #tpu.memory_space<vmem>>, vector<128x128xf32>,
    return
  }
  func.func @transform_0(%arg0: i32) -> (i32, i32) {
    %c0_i32 = arith.constant 0 : i32
    %c0_i32_0 = arith.constant 0 : i32
    %c0_i32_1 = arith.constant 0 : i32
    return %c0_i32, %c0_i32_0 : i32, i32
  }
  func.func @transform_1(%arg0: i32) -> (i32, i32) {
    %c0_i32 = arith.constant 0 : i32
    %c0_i32_0 = arith.constant 0 : i32
    %c0_i32_1 = arith.constant 0 : i32
    return %c0_i32, %c0_i32_0 : i32, i32
  }
  func.func @transform_2(%arg0: i32) -> (i32, i32) {
    %c0_i32 = arith.constant 0 : i32
    %c0_i32_0 = arith.constant 0 : i32
    %c0_i32_1 = arith.constant 0 : i32
    return %c0_i32, %c0_i32_0 : i32, i32
  }
  func.func @transform_3(%arg0: i32) -> (i32, i32) {
    %c0_i32 = arith.constant 0 : i32
    %c0_i32_0 = arith.constant 0 : i32
    %c0_i32_1 = arith.constant 0 : i32
    return %c0_i32, %c0_i32_0 : i32, i32
  }
}

</mosaic_0001>

<llo_original>
// kernel: custom-call.1
$region0: #{custom-call.1}
  %s0 = inlined_call_operand.hbm [shape: c64[2,1,32,32], index: 0, kind: input, shape index: {}]
  %s1 = inlined_call_operand.vmem [shape: f32[2,1,32,32], index: 1, kind: output, shape index: {}]
  %s2 = scalar_lea.hbm %s0, 1024
  $region1: #{custom-call.1} parent=0
    #allocation0 [shape = 's32[1]{0}', space=sflag, size = 0x4, scoped, tag = 'scoped memory for custom-call.1']
    %3 = vsyncpa [#allocation0], 0
    %s4 = sshll.u32 %s1, 4
    %s5 = int_to_ptr.vmem [resolvable:$true] %s4
    %7 = dma.hbm_to_vmem [thread:$0]  %s2, 1024, %s5, [#allocation0]
    %8 = dma.done [#allocation0], 1024
    %9 = vsyncpa [#allocation0], 1

// kernel: custom-call
$region0: #{custom-call}
  %s0 = inlined_call_operand.hbm [shape: c64[2,1,32,32], index: 0, kind: input, shape index: {}]
  %s1 = inlined_call_operand.vmem [shape: f32[2,1,32,32], index: 1, kind: output, shape index: {}]
  $region1: #{custom-call} parent=0
    #allocation0 [shape = 's32[1]{0}', space=sflag, size = 0x4, scoped, tag = 'scoped memory for custom-call']
    %2 = vsyncpa [#allocation0], 0
    %s3 = sshll.u32 %s1, 4
    %s4 = int_to_ptr.vmem [resolvable:$true] %s3
    %6 = dma.hbm_to_vmem [thread:$0]  %s0, 1024, %s4, [#allocation0]
    %7 = dma.done [#allocation0], 1024
    %8 = vsyncpa [#allocation0], 1

// kernel: fan_cos_forward.4
$region0: #{fan_cos_forward.4}
  #allocation0 [shape = 'u32[]', space=smem, size = 0x4, offset = 0x4, fixed_abs, tag = 'smem constant byte address 0x4 - core index']
  #allocation1 [shape = 'u32[144,128]{1,0:T(1,128)}', space=vmem, size = 0x12000, scoped, tag = 'internal scratch']
  #allocation2 [shape = 'f32[512,128]{1,0:T(8,128)}', space=vmem, size = 0x40000, scoped, tag = 'scratch operand']
  %s0 = inlined_call_operand.vmem [shape: bf16[512,72], index: 0, kind: input, shape index: {}]
  %s1 = inlined_call_operand.vmem [shape: bf16[72,128], index: 1, kind: input, shape index: {}]
  %s2 = inlined_call_operand.vmem [shape: f32[1,128], index: 2, kind: input, shape index: {}]
  %s3 = inlined_call_operand.vmem [shape: f32[1,128], index: 3, kind: input, shape index: {}]
  %s4 = inlined_call_operand.vmem [shape: f32[128,128], index: 4, kind: input, shape index: {}]
  %s5 = inlined_call_operand.vmem [shape: bf16[512,128], index: 5, kind: output, shape index: {}]
  %s6 = sld [smem:[#allocation0]]
  $region30: #{fan_cos_forward.4} parent=0
    _
  %s8 = ssub.s32 1, %s6
  %s9 = scalar_select 0, %s8, %s6
  // Predicated region
  $region2: #{fan_cos_forward.4} parent=0 // pred_check
    _
  $region3: #{fan_cos_forward.4} parent=0 // pred_check_branch
    %11 = sbr.rel (0) target = $region5
  $region4: #{fan_cos_forward.4} parent=0 // pred_region
    _
  $region5: #{fan_cos_forward.4} parent=0 // pred_fallthru
    _
  // Predicated region
  $region6: #{fan_cos_forward.4} parent=0 // pred_check
    _
  $region7: #{fan_cos_forward.4} parent=0 // pred_check_branch
    %13 = sbr.rel (0) target = $region9
  $region8: #{fan_cos_forward.4} parent=0 // pred_region
    _
  $region9: #{fan_cos_forward.4} parent=0 // pred_fallthru
    _
  // Predicated region
  $region10: #{fan_cos_forward.4} parent=0 // pred_check
    _
  $region11: #{fan_cos_forward.4} parent=0 // pred_check_branch
    %15 = sbr.rel (0) target = $region13
  $region12: #{fan_cos_forward.4} parent=0 // pred_region
    _
  $region13: #{fan_cos_forward.4} parent=0 // pred_fallthru
    _
  // Predicated region
  $region14: #{fan_cos_forward.4} parent=0 // pred_check
    _
  $region15: #{fan_cos_forward.4} parent=0 // pred_check_branch
    %17 = sbr.rel (0) target = $region17
  $region16: #{fan_cos_forward.4} parent=0 // pred_region
    _
  $region17: #{fan_cos_forward.4} parent=0 // pred_fallthru
    _
  // Predicated region
  $region18: #{fan_cos_forward.4} parent=0 // pred_check
    _
  $region19: #{fan_cos_forward.4} parent=0 // pred_check_branch
    %19 = sbr.rel (0) target = $region21
  $region20: #{fan_cos_forward.4} parent=0 // pred_region
    _
  $region21: #{fan_cos_forward.4} parent=0 // pred_fallthru
    _
  %v21 = vld [vmem:[%s1] sm:$0xf]
  %v22 = vld [vmem:[%s1 + $0x4] sm:$0xf]
  %v23 = vld [vmem:[%s1 + $0x8] sm:$0xf]
  %v24 = vld [vmem:[%s1 + $0xc] sm:$0xf]
  %v25 = vld [vmem:[%s1 + $0x10] sm:$0xf]
  %v26 = vld [vmem:[%s1 + $0x14] sm:$0xf]
  %v27 = vld [vmem:[%s1 + $0x18] sm:$0xf]
  %v28 = vld [vmem:[%s1 + $0x1c] sm:$0xf]
  %v29 = vld [vmem:[%s1 + $0x20] sm:$0xf]
  %v30 = vld [vmem:[%s4] sm:$0xff]
  %v31 = vld [vmem:[%s4 + $0x8] sm:$0xff]
  %v32 = vld [vmem:[%s4 + $0x10] sm:$0xff]
  %v33 = vld [vmem:[%s4 + $0x18] sm:$0xff]
  %v34 = vld [vmem:[%s4 + $0x20] sm:$0xff]
  %v35 = vld [vmem:[%s4 + $0x28] sm:$0xff]
  %v36 = vld [vmem:[%s4 + $0x30] sm:$0xff]
  %v37 = vld [vmem:[%s4 + $0x38] sm:$0xff]
  %v38 = vld [vmem:[%s4 + $0x40] sm:$0xff]
  %v39 = vld [vmem:[%s4 + $0x48] sm:$0xff]
  %v40 = vld [vmem:[%s4 + $0x50] sm:$0xff]
  %v41 = vld [vmem:[%s4 + $0x58] sm:$0xff]
  %v42 = vld [vmem:[%s4 + $0x60] sm:$0xff]
  %v43 = vld [vmem:[%s4 + $0x68] sm:$0xff]
  %v44 = vld [vmem:[%s4 + $0x70] sm:$0xff]
  %v45 = vld [vmem:[%s4 + $0x78] sm:$0xff]
  %v46 = vld [vmem:[%s0] sm:$0xf]
  %v47 = vld [vmem:[%s0 + $0x4] sm:$0xf]
  %v48 = vld [vmem:[%s0 + $0x8] sm:$0xf]
  %v49 = vld [vmem:[%s0 + $0xc] sm:$0xf]
  %v50 = vld [vmem:[%s0 + $0x10] sm:$0xf]
  %v51 = vld [vmem:[%s0 + $0x14] sm:$0xf]
  %v52 = vld [vmem:[%s0 + $0x18] sm:$0xf]
  %v53 = vld [vmem:[%s0 + $0x1c] sm:$0xf]
  %v54 = vld [vmem:[%s0 + $0x20] sm:$0xf]
  %v55 = vld [vmem:[%s0 + $0x24] sm:$0xf]
  %v56 = vld [vmem:[%s0 + $0x28] sm:$0xf]
  %v57 = vld [vmem:[%s0 + $0x2c] sm:$0xf]
  %v58 = vld [vmem:[%s0 + $0x30] sm:$0xf]
  %v59 = vld [vmem:[%s0 + $0x34] sm:$0xf]
  %v60 = vld [vmem:[%s0 + $0x38] sm:$0xf]
  %v61 = vld [vmem:[%s0 + $0x3c] sm:$0xf]
  %v78 = vunpack.c.l.b16 %v46
  %v79 = vunpack.c.l.b16 %v47
  %v80 = vunpack.c.l.b16 %v48
  %v81 = vunpack.c.l.b16 %v49
  %v82 = vunpack.c.l.b16 %v50
  %v83 = vunpack.c.l.b16 %v51
  %v84 = vunpack.c.l.b16 %v52
  %v85 = vunpack.c.l.b16 %v53
  %v86 = vunpack.c.l.b16 %v54
  %v87 = vunpack.c.l.b16 %v55
  %v88 = vunpack.c.l.b16 %v56
  %v89 = vunpack.c.l.b16 %v57
  %v90 = vunpack.c.l.b16 %v58
  %v91 = vunpack.c.l.b16 %v59
  %v92 = vunpack.c.l.b16 %v60
  %v93 = vunpack.c.l.b16 %v61
  %v94 = vpack.c.b16 %v79, %v78
  %v95 = vpack.c.b16 %v81, %v80
  %v96 = vpack.c.b16 %v83, %v82
  %v97 = vpack.c.b16 %v85, %v84
  %v98 = vpack.c.b16 %v87, %v86
  %v99 = vpack.c.b16 %v89, %v88
  %v100 = vpack.c.b16 %v91, %v90
  %v101 = vpack.c.b16 %v93, %v92
  %v111 = vunpack.c.l.b16 %v21
  %v112 = vunpack.c.l.b16 %v22
  %v113 = vunpack.c.l.b16 %v23
  %v114 = vunpack.c.l.b16 %v24
  %v115 = vunpack.c.l.b16 %v25
  %v116 = vunpack.c.l.b16 %v26
  %v117 = vunpack.c.l.b16 %v27
  %v118 = vunpack.c.l.b16 %v28
  %v119 = vunpack.c.l.b16 %v29
  %v120 = vpack.c.b16 %v112, %v111
  %v121 = vpack.c.b16 %v114, %v113
  %v122 = vpack.c.b16 %v116, %v115
  %v123 = vpack.c.b16 %v118, %v117
  %v124 = vpack.c.b16 %v119, %v119
  %vm129 = vcmask 588800
  %v131 = vsel %vm129, %v94, 0
  %v134 = vsel %vm129, %v95, 0
  %v137 = vsel %vm129, %v96, 0
  %v140 = vsel %vm129, %v97, 0
  %v143 = vsel %vm129, %v98, 0
  %v146 = vsel %vm129, %v99, 0
  %v149 = vsel %vm129, %v100, 0
  %v152 = vsel %vm129, %v101, 0
  %vm154 = vcmask 1043456
  %v156 = vsel %vm154, %v124, 0
  %158 = vmatprep.subr.bf16.mxu0 0
  %159 = vmatpush1.bf16.msra.mxu0 %v120
  %160 = vmatprep.subr.bf16.mxu0 0
  %161 = vmatpush1.bf16.msra.mxu0 %v121
  %162 = vmatprep.subr.bf16.mxu0 0
  %163 = vmatpush1.bf16.msra.mxu0 %v122
  %164 = vmatprep.subr.bf16.mxu0 0
  %165 = vmatpush1.bf16.msra.mxu0 %v123
  %166 = vmatprep.subr.bf16.mxu0 0
  %167 = vmatpush1.bf16.msra.mxu0 %v156
  %168 = vmatprep.subr.bf16.mxu0 0
  %169 = vmatpush1.bf16.msra.mxu0 0
  %170 = vmatprep.subr.bf16.mxu0 0
  %171 = vmatpush1.bf16.msra.mxu0 0
  %172 = vmatprep.subr.bf16.mxu0 0
  %173 = vmatpush1.bf16.msra.mxu0 0
  %174 = vmatprep.subr.bf16.mxu0 0
  %175 = vmatpush1.bf16.msra.mxu0 0
  %176 = vmatprep.subr.bf16.mxu0 0
  %177 = vmatpush1.bf16.msra.mxu0 0
  %178 = vmatprep.subr.bf16.mxu0 0
  %179 = vmatpush1.bf16.msra.mxu0 0
  %180 = vmatprep.subr.bf16.mxu0 0
  %181 = vmatpush1.bf16.msra.mxu0 0
  %182 = vmatprep.subr.bf16.mxu0 0
  %183 = vmatpush1.bf16.msra.mxu0 0
  %184 = vmatprep.subr.bf16.mxu0 0
  %185 = vmatpush1.bf16.msra.mxu0 0
  %186 = vmatprep.subr.bf16.mxu0 0
  %187 = vmatpush1.bf16.msra.mxu0 0
  %188 = vmatprep.subr.bf16.mxu0 0
  %189 = vmatpush1.bf16.msra.mxu0 0
  %190 = vmatprep.mubr.bf16.mxu0 0
  %191 = vmatmul.mubr.bf16.gmra.mrb[0].mxu0 %v131
  %v192 = vpop.f32.mrb[0].mxu0
  %v193 = vadd.f32 0.0, %v192
  %v194 = vpop.f32.mrb[0].mxu0
  %v195 = vpop.f32.mrb[0].mxu0
  %v196 = vadd.f32 0.0, %v195
  %v197 = vpop.f32.mrb[0].mxu0
  %198 = vmatprep.mubr.bf16.mxu0 0
  %199 = vmatmul.mubr.bf16.gmra.mrb[0].mxu0 %v134
  %v200 = vpop.f32.mrb[0].mxu0
  %v201 = vadd.f32 0.0, %v200
  %v202 = vpop.f32.mrb[0].mxu0
  %v203 = vpop.f32.mrb[0].mxu0
  %v204 = vadd.f32 0.0, %v203
  %v205 = vpop.f32.mrb[0].mxu0
  %206 = vmatprep.mubr.bf16.mxu0 0
  %207 = vmatmul.mubr.bf16.gmra.mrb[0].mxu0 %v137
  %v208 = vpop.f32.mrb[0].mxu0
  %v209 = vadd.f32 0.0, %v208
  %v210 = vpop.f32.mrb[0].mxu0
  %v211 = vpop.f32.mrb[0].mxu0
  %v212 = vadd.f32 0.0, %v211
  %v213 = vpop.f32.mrb[0].mxu0
  %214 = vmatprep.mubr.bf16.mxu0 0
  %215 = vmatmul.mubr.bf16.gmra.mrb[0].mxu0 %v140
  %v216 = vpop.f32.mrb[0].mxu0
  %v217 = vadd.f32 0.0, %v216
  %v218 = vpop.f32.mrb[0].mxu0
  %v219 = vpop.f32.mrb[0].mxu0
  %v220 = vadd.f32 0.0, %v219
  %v221 = vpop.f32.mrb[0].mxu0
  %222 = vmatprep.mubr.bf16.mxu0 0
  %223 = vmatmul.mubr.bf16.gmra.mrb[0].mxu0 %v143
  %v224 = vpop.f32.mrb[0].mxu0
  %v225 = vadd.f32 0.0, %v224
  %v226 = vpop.f32.mrb[0].mxu0
  %v227 = vpop.f32.mrb[0].mxu0
  %v228 = vadd.f32 0.0, %v227
  %v229 = vpop.f32.mrb[0].mxu0
  %230 = vmatprep.mubr.bf16.mxu0 0
  %231 = vmatmul.mubr.bf16.gmra.mrb[0].mxu0 %v146
  %v232 = vpop.f32.mrb[0].mxu0
  %v233 = vadd.f32 0.0, %v232
  %v234 = vpop.f32.mrb[0].mxu0
  %v235 = vpop.f32.mrb[0].mxu0
  %v236 = vadd.f32 0.0, %v235
  %v237 = vpop.f32.mrb[0].mxu0
  %238 = vmatprep.mubr.bf16.mxu0 0
  %239 = vmatmul.mubr.bf16.gmra.mrb[0].mxu0 %v149
  %v240 = vpop.f32.mrb[0].mxu0
  %v241 = vadd.f32 0.0, %v240
  %v242 = vpop.f32.mrb[0].mxu0
  %v243 = vpop.f32.mrb[0].mxu0
  %v244 = vadd.f32 0.0, %v243
  %v245 = vpop.f32.mrb[0].mxu0
  %246 = vmatprep.mubr.bf16.mxu0 0
  %247 = vmatmul.mubr.bf16.gmra.mrb[0].mxu0 %v152
  %v248 = vpop.f32.mrb[0].mxu0
  %v249 = vadd.f32 0.0, %v248
  %v250 = vpop.f32.mrb[0].mxu0
  %v251 = vpop.f32.mrb[0].mxu0
  %v252 = vadd.f32 0.0, %v251
  %v253 = vpop.f32.mrb[0].mxu0
  %254 = vdwg.mxu0
  %255 = vst [vmem:[#allocation2] sm:$0xff] %v193
  %256 = vst [vmem:[#allocation2 + $0x8] sm:$0xff] %v196
  %257 = vst [vmem:[#allocation2 + $0x10] sm:$0xff] %v201
  %258 = vst [vmem:[#allocation2 + $0x18] sm:$0xff] %v204
  %259 = vst [vmem:[#allocation2 + $0x20] sm:$0xff] %v209
  %260 = vst [vmem:[#allocation2 + $0x28] sm:$0xff] %v212
  %261 = vst [vmem:[#allocation2 + $0x30] sm:$0xff] %v217
  %262 = vst [vmem:[#allocation2 + $0x38] sm:$0xff] %v220
  %263 = vst [vmem:[#allocation2 + $0x40] sm:$0xff] %v225
  %264 = vst [vmem:[#allocation2 + $0x48] sm:$0xff] %v228
  %265 = vst [vmem:[#allocation2 + $0x50] sm:$0xff] %v233
  %266 = vst [vmem:[#allocation2 + $0x58] sm:$0xff] %v236
  %267 = vst [vmem:[#allocation2 + $0x60] sm:$0xff] %v241
  %268 = vst [vmem:[#allocation2 + $0x68] sm:$0xff] %v244
  %269 = vst [vmem:[#allocation2 + $0x70] sm:$0xff] %v249
  %270 = vst [vmem:[#allocation2 + $0x78] sm:$0xff] %v252
  %v271 = vadd.f32 %v193, %v196
  %v272 = vadd.f32 %v271, %v201
  %v273 = vadd.f32 %v272, %v204
  %v274 = vadd.f32 %v273, %v209
  %v275 = vadd.f32 %v274, %v212
  %v276 = vadd.f32 %v275, %v217
  %v277 = vadd.f32 %v276, %v220
  %v278 = vadd.f32 %v277, %v225
  %v279 = vadd.f32 %v278, %v228
  %v280 = vadd.f32 %v279, %v233
  %v281 = vadd.f32 %v280, %v236
  %v282 = vadd.f32 %v281, %v241
  %v283 = vadd.f32 %v282, %v244
  %v284 = vadd.f32 %v283, %v249
  %v285 = vadd.f32 %v284, %v252
  %v286 = vrot.slane %v285, 4
  %v287 = vadd.f32 %v285, %v286
  %v288 = vrot.slane %v287, 2
  %v289 = vadd.f32 %v287, %v288
  %v290 = vrot.slane %v289, 1
  %v291 = vadd.f32 %v289, %v290
  %v292 = vadd.f32 %v291, 0.0
  %v293 = vld [vmem:[%s0 + $0x40] sm:$0xf]
  %v294 = vld [vmem:[%s0 + $0x44] sm:$0xf]
  %v295 = vld [vmem:[%s0 + $0x48] sm:$0xf]
  %v296 = vld [vmem:[%s0 + $0x4c] sm:$0xf]
  %v297 = vld [vmem:[%s0 + $0x50] sm:$0xf]
  %v298 = vld [vmem:[%s0 + $0x54] sm:$0xf]
  %v299 = vld [vmem:[%s0 + $0x58] sm:$0xf]
  %v300 = vld [vmem:[%s0 + $0x5c] sm:$0xf]
  %v301 = vld [vmem:[%s0 + $0x60] sm:$0xf]
  %v302 = vld [vmem:[%s0 + $0x64] sm:$0xf]
  %v303 = vld [vmem:[%s0 + $0x68] sm:$0xf]
  %v304 = vld [vmem:[%s0 + $0x6c] sm:$0xf]
  %v305 = vld [vmem:[%s0 + $0x70] sm:$0xf]
  %v306 = vld [vmem:[%s0 + $0x74] sm:$0xf]
  %v307 = vld [vmem:[%s0 + $0x78] sm:$0xf]
  %v308 = vld [vmem:[%s0 + $0x7c] sm:$0xf]
  %v325 = vunpack.c.l.b16 %v293
  %v326 = vunpack.c.l.b16 %v294
  %v327 = vunpack.c.l.b16 %v295
  %v328 = vunpack.c.l.b16 %v296
  %v329 = vunpack.c.l.b16 %v297
  %v330 = vunpack.c.l.b16 %v298
  %v331 = vunpack.c.l.b16 %v299
  %v332 = vunpack.c.l.b16 %v300
  %v333 = vunpack.c.l.b16 %v301
  %v334 = vunpack.c.l.b16 %v302
  %v335 = vunpack.c.l.b16 %v303
  %v336 = vunpack.c.l.b16 %v304
  %v337 = vunpack.c.l.b16 %v305
  %v338 = vunpack.c.l.b16 %v306
  %v339 = vunpack.c.l.b16 %v307
  %v340 = vunpack.c.l.b16 %v308
  %v341 = vpack.c.b16 %v326, %v325
  %v342 = vpack.c.b16 %v328, %v327
  %v343 = vpack.c.b16 %v330, %v329
  %v344 = vpack.c.b16 %v332, %v331
  %v345 = vpack.c.b16 %v334, %v333
  %v346 = vpack.c.b16 %v336, %v335
  %v347 = vpack.c.b16 %v338, %v337
  %v348 = vpack.c.b16 %v340, %v339
  %v350 = vsel %vm129, %v341, 0
  %v353 = vsel %vm129, %v342, 0
  %v356 = vsel %vm129, %v343, 0
  %v359 = vsel %vm129, %v344, 0
  %v362 = vsel %vm129, %v345, 0
  %v365 = vsel %vm129, %v346, 0
  %v368 = vsel %vm129, %v347, 0
  %v371 = vsel %vm129, %v348, 0
  %373 = vmatprep.subr.bf16.mxu0 0
  %374 = vmatpush1.bf16.msra.mxu0 %v120
  %375 = vmatprep.subr.bf16.mxu0 0
  %376 = vmatpush1.bf16.msra.mxu0 %v121
  %377 = vmatprep.subr.bf16.mxu0 0
  %378 = vmatpush1.bf16.msra.mxu0 %v122
  %379 = vmatprep.subr.bf16.mxu0 0
  %380 = vmatpush1.bf16.msra.mxu0 %v123
  %381 = vmatprep.subr.bf16.mxu0 0
  %382 = vmatpush1.bf16.msra.mxu0 %v156
  %383 = vmatprep.subr.bf16.mxu0 0
  %384 = vmatpush1.bf16.msra.mxu0 0
  %385 = vmatprep.subr.bf16.mxu0 0
  %386 = vmatpush1.bf16.msra.mxu0 0
  %387 = vmatprep.subr.bf16.mxu0 0
  %388 = vmatpush1.bf16.msra.mxu0 0
  %389 = vmatprep.subr.bf16.mxu0 0
  %390 = vmatpush1.bf16.msra.mxu0 0
  %391 = vmatprep.subr.bf16.mxu0 0
  %392 = vmatpush1.bf16.msra.mxu0 0
  %393 = vmatprep.subr.bf16.mxu0 0
  %394 = vmatpush1.bf16.msra.mxu0 0
  %395 = vmatprep.subr.bf16.mxu0 0
  %396 = vmatpush1.bf16.msra.mxu0 0
  %397 = vmatprep.subr.bf16.mxu0 0
  %398 = vmatpush1.bf16.msra.mxu0 0
  %399 = vmatprep.subr.bf16.mxu0 0
  %400 = vmatpush1.bf16.msra.mxu0 0
  %401 = vmatprep.subr.bf16.mxu0 0
  %402 = vmatpush1.bf16.msra.mxu0 0
  %403 = vmatprep.subr.bf16.mxu0 0
  %404 = vmatpush1.bf16.msra.mxu0 0
  %405 = vmatprep.mubr.bf16.mxu0 0
  %406 = vmatmul.mubr.bf16.gmra.mrb[0].mxu0 %v350
  %v407 = vpop.f32.mrb[0].mxu0
  %v408 = vadd.f32 0.0, %v407
  %v409 = vpop.f32.mrb[0].mxu0
  %v410 = vpop.f32.mrb[0].mxu0
  %v411 = vadd.f32 0.0, %v410
  %v412 = vpop.f32.mrb[0].mxu0
  %413 = vmatprep.mubr.bf16.mxu0 0
  %414 = vmatmul.mubr.bf16.gmra.mrb[0].mxu0 %v353
  %v415 = vpop.f32.mrb[0].mxu0
  %v416 = vadd.f32 0.0, %v415
  %v417 = vpop.f32.mrb[0].mxu0
  %v418 = vpop.f32.mrb[0].mxu0
  %v419 = vadd.f32 0.0, %v418
  %v420 = vpop.f32.mrb[0].mxu0
  %421 = vmatprep.mubr.bf16.mxu0 0
  %422 = vmatmul.mubr.bf16.gmra.mrb[0].mxu0 %v356
  %v423 = vpop.f32.mrb[0].mxu0
  %v424 = vadd.f32 0.0, %v423
  %v425 = vpop.f32.mrb[0].mxu0
  %v426 = vpop.f32.mrb[0].mxu0
  %v427 = vadd.f32 0.0, %v426
  %v428 = vpop.f32.mrb[0].mxu0
  %429 = vmatprep.mubr.bf16.mxu0 0
  %430 = vmatmul.mubr.bf16.gmra.mrb[0].mxu0 %v359
  %v431 = vpop.f32.mrb[0].mxu0
  %v432 = vadd.f32 0.0, %v431
  %v433 = vpop.f32.mrb[0].mxu0
  %v434 = vpop.f32.mrb[0].mxu0
  %v435 = vadd.f32 0.0, %v434
  %v436 = vpop.f32.mrb[0].mxu0
  %437 = vmatprep.mubr.bf16.mxu0 0
  %438 = vmatmul.mubr.bf16.gmra.mrb[0].mxu0 %v362
  %v439 = vpop.f32.mrb[0].mxu0
  %v440 = vadd.f32 0.0, %v439
  %v441 = vpop.f32.mrb[0].mxu0
  %v442 = vpop.f32.mrb[0].mxu0
  %v443 = vadd.f32 0.0, %v442
  %v444 = vpop.f32.mrb[0].mxu0
  %445 = vmatprep.mubr.bf16.mxu0 0
  %446 = vmatmul.mubr.bf16.gmra.mrb[0].mxu0 %v365
  %v447 = vpop.f32.mrb[0].mxu0
  %v448 = vadd.f32 0.0, %v447
  %v449 = vpop.f32.mrb[0].mxu0
  %v450 = vpop.f32.mrb[0].mxu0
  %v451 = vadd.f32 0.0, %v450
  %v452 = vpop.f32.mrb[0].mxu0
  %453 = vmatprep.mubr.bf16.mxu0 0
  %454 = vmatmul.mubr.bf16.gmra.mrb[0].mxu0 %v368
  %v455 = vpop.f32.mrb[0].mxu0
  %v456 = vadd.f32 0.0, %v455
  %v457 = vpop.f32.mrb[0].mxu0
  %v458 = vpop.f32.mrb[0].mxu0
  %v459 = vadd.f32 0.0, %v458
  %v460 = vpop.f32.mrb[0].mxu0
  %461 = vmatprep.mubr.bf16.mxu0 0
  %462 = vmatmul.mubr.bf16.gmra.mrb[0].mxu0 %v371
  %v463 = vpop.f32.mrb[0].mxu0
  %v464 = vadd.f32 0.0, %v463
  %v465 = vpop.f32.mrb[0].mxu0
  %v466 = vpop.f32.mrb[0].mxu0
  %v467 = vadd.f32 0.0, %v466
  %v468 = vpop.f32.mrb[0].mxu0
  %469 = vdwg.mxu0
  %470 = vst [vmem:[#allocation2 + $0x80] sm:$0xff] %v408
  %471 = vst [vmem:[#allocation2 + $0x88] sm:$0xff] %v411
  %472 = vst [vmem:[#allocation2 + $0x90] sm:$0xff] %v416
  %473 = vst [vmem:[#allocation2 + $0x98] sm:$0xff] %v419
  %474 = vst [vmem:[#allocation2 + $0xa0] sm:$0xff] %v424
  %475 = vst [vmem:[#allocation2 + $0xa8] sm:$0xff] %v427
  %476 = vst [vmem:[#allocation2 + $0xb0] sm:$0xff] %v432
  %477 = vst [vmem:[#allocation2 + $0xb8] sm:$0xff] %v435
  %478 = vst [vmem:[#allocation2 + $0xc0] sm:$0xff] %v440
  %479 = vst [vmem:[#allocation2 + $0xc8] sm:$0xff] %v443
  %480 = vst [vmem:[#allocation2 + $0xd0] sm:$0xff] %v448
  %481 = vst [vmem:[#allocation2 + $0xd8] sm:$0xff] %v451
  %482 = vst [vmem:[#allocation2 + $0xe0] sm:$0xff] %v456
  %483 = vst [vmem:[#allocation2 + $0xe8] sm:$0xff] %v459
  %484 = vst [vmem:[#allocation2 + $0xf0] sm:$0xff] %v464
  %485 = vst [vmem:[#allocation2 + $0xf8] sm:$0xff] %v467
  %v486 = vadd.f32 %v408, %v411
  %v487 = vadd.f32 %v486, %v416
  %v488 = vadd.f32 %v487, %v419
  %v489 = vadd.f32 %v488, %v424
  %v490 = vadd.f32 %v489, %v427
  %v491 = vadd.f32 %v490, %v432
  %v492 = vadd.f32 %v491, %v435
  %v493 = vadd.f32 %v492, %v440
  %v494 = vadd.f32 %v493, %v443
  %v495 = vadd.f32 %v494, %v448
  %v496 = vadd.f32 %v495, %v451
  %v497 = vadd.f32 %v496, %v456
  %v498 = vadd.f32 %v497, %v459
  %v499 = vadd.f32 %v498, %v464
  %v500 = vadd.f32 %v499, %v467
  %v501 = vrot.slane %v500, 4
  %v502 = vadd.f32 %v500, %v501
  %v503 = vrot.slane %v502, 2
  %v504 = vadd.f32 %v502, %v503
  %v505 = vrot.slane %v504, 1
  %v506 = vadd.f32 %v504, %v505
  %v507 = vadd.f32 %v292, %v506
  %v508 = vld [vmem:[%s0 + $0x80] sm:$0xf]
  %v509 = vld [vmem:[%s0 + $0x84] sm:$0xf]
  %v510 = vld [vmem:[%s0 + $0x88] sm:$0xf]
  %v511 = vld [vmem:[%s0 + $0x8c] sm:$0xf]
  %v512 = vld [vmem:[%s0 + $0x90] sm:$0xf]
  %v513 = vld [vmem:[%s0 + $0x94] sm:$0xf]
  %v514 = vld [vmem:[%s0 + $0x98] sm:$0xf]
  %v515 = vld [vmem:[%s0 + $0x9c] sm:$0xf]
  %v516 = vld [vmem:[%s0 + $0xa0] sm:$0xf]
  %v517 = vld [vmem:[%s0 + $0xa4] sm:$0xf]
  %v518 = vld [vmem:[%s0 + $0xa8] sm:$0xf]
  %v519 = vld [vmem:[%s0 + $0xac] sm:$0xf]
  %v520 = vld [vmem:[%s0 + $0xb0] sm:$0xf]
  %v521 = vld [vmem:[%s0 + $0xb4] sm:$0xf]
  %v522 = vld [vmem:[%s0 + $0xb8] sm:$0xf]
  %v523 = vld [vmem:[%s0 + $0xbc] sm:$0xf]
  %v540 = vunpack.c.l.b16 %v508
  %v541 = vunpack.c.l.b16 %v509
  %v542 = vunpack.c.l.b16 %v510
  %v543 = vunpack.c.l.b16 %v511
  %v544 = vunpack.c.l.b16 %v512
  %v545 = vunpack.c.l.b16 %v513
  %v546 = vunpack.c.l.b16 %v514
  %v547 = vunpack.c.l.b16 %v515
  %v548 = vunpack.c.l.b16 %v516
  %v549 = vunpack.c.l.b16 %v517
  %v550 = vunpack.c.l.b16 %v518
  %v551 = vunpack.c.l.b16 %v519
  %v552 = vunpack.c.l.b16 %v520
  %v553 = vunpack.c.l.b16 %v521
  %v554 = vunpack.c.l.b16 %v522
  %v555 = vunpack.c.l.b16 %v523
  %v556 = vpack.c.b16 %v541, %v540
  %v557 = vpack.c.b16 %v543, %v542
  %v558 = vpack.c.b16 %v545, %v544
  %v559 = vpack.c.b16 %v547, %v546
  %v560 = vpack.c.b16 %v549, %v548
  %v561 = vpack.c.b16 %v551, %v550
  %v562 = vpack.c.b16 %v553, %v552
  %v563 = vpack.c.b16 %v555, %v554
  %v565 = vsel %vm129, %v556, 0
  %v568 = vsel %vm129, %v557, 0
  %v571 = vsel %vm129, %v558, 0
  %v574 = vsel %vm129, %v559, 0
  %v577 = vsel %vm129, %v560, 0
  %v580 = vsel %vm129, %v561, 0
  %v583 = vsel %vm129, %v562, 0
  %v586 = vsel %vm129, %v563, 0
  %588 = vmatprep.subr.bf16.mxu0 0
  %589 = vmatpush1.bf16.msra.mxu0 %v120
  %590 = vmatprep.subr.bf16.mxu0 0
  %591 = vmatpush1.bf16.msra.mxu0 %v121
  %592 = vmatprep.subr.bf16.mxu0 0
  %593 = vmatpush1.bf16.msra.mxu0 %v122
  %594 = vmatprep.subr.bf16.mxu0 0
  %595 = vmatpush1.bf16.msra.mxu0 %v123
  %596 = vmatprep.subr.bf16.mxu0 0
  %597 = vmatpush1.bf16.msra.mxu0 %v156
  %598 = vmatprep.subr.bf16.mxu0 0
  %599 = vmatpush1.bf16.msra.mxu0 0
  %600 = vmatprep.subr.bf16.mxu0 0
  %601 = vmatpush1.bf16.msra.mxu0 0
  %602 = vmatprep.subr.bf16.mxu0 0
  %603 = vmatpush1.bf16.msra.mxu0 0
  %604 = vmatprep.subr.bf16.mxu0 0
  %605 = vmatpush1.bf16.msra.mxu0 0
  %606 = vmatprep.subr.bf16.mxu0 0
  %607 = vmatpush1.bf16.msra.mxu0 0
  %608 = vmatprep.subr.bf16.mxu0 0
  %609 = vmatpush1.bf16.msra.mxu0 0
  %610 = vmatprep.subr.bf16.mxu0 0
  %611 = vmatpush1.bf16.msra.mxu0 0
  %612 = vmatprep.subr.bf16.mxu0 0
  %613 = vmatpush1.bf16.msra.mxu0 0
  %614 = vmatprep.subr.bf16.mxu0 0
  %615 = vmatpush1.bf16.msra.mxu0 0
  %616 = vmatprep.subr.bf16.mxu0 0
  %617 = vmatpush1.bf16.msra.mxu0 0
  %618 = vmatprep.subr.bf16.mxu0 0
  %619 = vmatpush1.bf16.msra.mxu0 0
  %620 = vmatprep.mubr.bf16.mxu0 0
  %621 = vmatmul.mubr.bf16.gmra.mrb[0].mxu0 %v565
  %v622 = vpop.f32.mrb[0].mxu0
  %v623 = vadd.f32 0.0, %v622
  %v624 = vpop.f32.mrb[0].mxu0
  %v625 = vpop.f32.mrb[0].mxu0
  %v626 = vadd.f32 0.0, %v625
  %v627 = vpop.f32.mrb[0].mxu0
  %628 = vmatprep.mubr.bf16.mxu0 0
  %629 = vmatmul.mubr.bf16.gmra.mrb[0].mxu0 %v568
  %v630 = vpop.f32.mrb[0].mxu0
  %v631 = vadd.f32 0.0, %v630
  %v632 = vpop.f32.mrb[0].mxu0
  %v633 = vpop.f32.mrb[0].mxu0
  %v634 = vadd.f32 0.0, %v633
  %v635 = vpop.f32.mrb[0].mxu0
  %636 = vmatprep.mubr.bf16.mxu0 0
  %637 = vmatmul.mubr.bf16.gmra.mrb[0].mxu0 %v571
  %v638 = vpop.f32.mrb[0].mxu0
  %v639 = vadd.f32 0.0, %v638
  %v640 = vpop.f32.mrb[0].mxu0
  %v641 = vpop.f32.mrb[0].mxu0
  %v642 = vadd.f32 0.0, %v641
  %v643 = vpop.f32.mrb[0].mxu0
  %644 = vmatprep.mubr.bf16.mxu0 0
  %645 = vmatmul.mubr.bf16.gmra.mrb[0].mxu0 %v574
  %v646 = vpop.f32.mrb[0].mxu0
  %v647 = vadd.f32 0.0, %v646
  %v648 = vpop.f32.mrb[0].mxu0
  %v649 = vpop.f32.mrb[0].mxu0
  %v650 = vadd.f32 0.0, %v649
  %v651 = vpop.f32.mrb[0].mxu0
  %652 = vmatprep.mubr.bf16.mxu0 0
  %653 = vmatmul.mubr.bf16.gmra.mrb[0].mxu0 %v577
  %v654 = vpop.f32.mrb[0].mxu0
  %v655 = vadd.f32 0.0, %v654
  %v656 = vpop.f32.mrb[0].mxu0
  %v657 = vpop.f32.mrb[0].mxu0
  %v658 = vadd.f32 0.0, %v657
  %v659 = vpop.f32.mrb[0].mxu0
  %660 = vmatprep.mubr.bf16.mxu0 0
  %661 = vmatmul.mubr.bf16.gmra.mrb[0].mxu0 %v580
  %v662 = vpop.f32.mrb[0].mxu0
  %v663 = vadd.f32 0.0, %v662
  %v664 = vpop.f32.mrb[0].mxu0
  %v665 = vpop.f32.mrb[0].mxu0
  %v666 = vadd.f32 0.0, %v665
  %v667 = vpop.f32.mrb[0].mxu0
  %668 = vmatprep.mubr.bf16.mxu0 0
  %669 = vmatmul.mubr.bf16.gmra.mrb[0].mxu0 %v583
  %v670 = vpop.f32.mrb[0].mxu0
  %v671 = vadd.f32 0.0, %v670
  %v672 = vpop.f32.mrb[0].mxu0
  %v673 = vpop.f32.mrb[0].mxu0
  %v674 = vadd.f32 0.0, %v673
  %v675 = vpop.f32.mrb[0].mxu0
  %676 = vmatprep.mubr.bf16.mxu0 0
  %677 = vmatmul.mubr.bf16.gmra.mrb[0].mxu0 %v586
  %v678 = vpop.f32.mrb[0].mxu0
  %v679 = vadd.f32 0.0, %v678
  %v680 = vpop.f32.mrb[0].mxu0
  %v681 = vpop.f32.mrb[0].mxu0
  %v682 = vadd.f32 0.0, %v681
  %v683 = vpop.f32.mrb[0].mxu0
  %684 = vdwg.mxu0
  %685 = vst [vmem:[#allocation2 + $0x100] sm:$0xff] %v623
  %686 = vst [vmem:[#allocation2 + $0x108] sm:$0xff] %v626
  %687 = vst [vmem:[#allocation2 + $0x110] sm:$0xff] %v631
  %688 = vst [vmem:[#allocation2 + $0x118] sm:$0xff] %v634
  %689 = vst [vmem:[#allocation2 + $0x120] sm:$0xff] %v639
  %690 = vst [vmem:[#allocation2 + $0x128] sm:$0xff] %v642
  %691 = vst [vmem:[#allocation2 + $0x130] sm:$0xff] %v647
  %692 = vst [vmem:[#allocation2 + $0x138] sm:$0xff] %v650
  %693 = vst [vmem:[#allocation2 + $0x140] sm:$0xff] %v655
  %694 = vst [vmem:[#allocation2 + $0x148] sm:$0xff] %v658
  %695 = vst [vmem:[#allocation2 + $0x150] sm:$0xff] %v663
  %696 = vst [vmem:[#allocation2 + $0x158] sm:$0xff] %v666
  %697 = vst [vmem:[#allocation2 + $0x160] sm:$0xff] %v671
  %698 = vst [vmem:[#allocation2 + $0x168] sm:$0xff] %v674
  %699 = vst [vmem:[#allocation2 + $0x170] sm:$0xff] %v679
  %700 = vst [vmem:[#allocation2 + $0x178] sm:$0xff] %v682
  %v701 = vadd.f32 %v623, %v626
  %v702 = vadd.f32 %v701, %v631
  %v703 = vadd.f32 %v702, %v634
  %v704 = vadd.f32 %v703, %v639
  %v705 = vadd.f32 %v704, %v642
  %v706 = vadd.f32 %v705, %v647
  %v707 = vadd.f32 %v706, %v650
  %v708 = vadd.f32 %v707, %v655
  %v709 = vadd.f32 %v708, %v658
  %v710 = vadd.f32 %v709, %v663
  %v711 = vadd.f32 %v710, %v666
  %v712 = vadd.f32 %v711, %v671
  %v713 = vadd.f32 %v712, %v674
  %v714 = vadd.f32 %v713, %v679
  %v715 = vadd.f32 %v714, %v682
  %v716 = vrot.slane %v715, 4
  %v717 = vadd.f32 %v715, %v716
  %v718 = vrot.slane %v717, 2
  %v719 = vadd.f32 %v717, %v718
  %v720 = vrot.slane %v719, 1
  %v721 = vadd.f32 %v719, %v720
  %v722 = vadd.f32 %v507, %v721
  %v723 = vld [vmem:[%s0 + $0xc0] sm:$0xf]
  %v724 = vld [vmem:[%s0 + $0xc4] sm:$0xf]
  %v725 = vld [vmem:[%s0 + $0xc8] sm:$0xf]
  %v726 = vld [vmem:[%s0 + $0xcc] sm:$0xf]
  %v727 = vld [vmem:[%s0 + $0xd0] sm:$0xf]
  %v728 = vld [vmem:[%s0 + $0xd4] sm:$0xf]
  %v729 = vld [vmem:[%s0 + $0xd8] sm:$0xf]
  %v730 = vld [vmem:[%s0 + $0xdc] sm:$0xf]
  %v731 = vld [vmem:[%s0 + $0xe0] sm:$0xf]
  %v732 = vld [vmem:[%s0 + $0xe4] sm:$0xf]
  %v733 = vld [vmem:[%s0 + $0xe8] sm:$0xf]
  %v734 = vld [vmem:[%s0 + $0xec] sm:$0xf]
  %v735 = vld [vmem:[%s0 + $0xf0] sm:$0xf]
  %v736 = vld [vmem:[%s0 + $0xf4] sm:$0xf]
  %v737 = vld [vmem:[%s0 + $0xf8] sm:$0xf]
  %v738 = vld [vmem:[%s0 + $0xfc] sm:$0xf]
  %v755 = vunpack.c.l.b16 %v723
  %v756 = vunpack.c.l.b16 %v724
  %v757 = vunpack.c.l.b16 %v725
  %v758 = vunpack.c.l.b16 %v726
  %v759 = vunpack.c.l.b16 %v727
  %v760 = vunpack.c.l.b16 %v728
  %v761 = vunpack.c.l.b16 %v729
  %v762 = vunpack.c.l.b16 %v730
  %v763 = vunpack.c.l.b16 %v731
  %v764 = vunpack.c.l.b16 %v732
  %v765 = vunpack.c.l.b16 %v733
  %v766 = vunpack.c.l.b16 %v734
  %v767 = vunpack.c.l.b16 %v735
  %v768 = vunpack.c.l.b16 %v736
  %v769 = vunpack.c.l.b16 %v737
  %v770 = vunpack.c.l.b16 %v738
  %v771 = vpack.c.b16 %v756, %v755
  %v772 = vpack.c.b16 %v758, %v757
  %v773 = vpack.c.b16 %v760, %v759
  %v774 = vpack.c.b16 %v762, %v761
  %v775 = vpack.c.b16 %v764, %v763
  %v776 = vpack.c.b16 %v766, %v765
  %v777 = vpack.c.b16 %v768, %v767
  %v778 = vpack.c.b16 %v770, %v769
  %v780 = vsel %vm129, %v771, 0
  %v783 = vsel %vm129, %v772, 0
  %v786 = vsel %vm129, %v773, 0
  %v789 = vsel %vm129, %v774, 0
  %v792 = vsel %vm129, %v775, 0
  %v795 = vsel %vm129, %v776, 0
  %v798 = vsel %vm129, %v777, 0
  %v801 = vsel %vm129, %v778, 0
  %803 = vmatprep.subr.bf16.mxu0 0
  %804 = vmatpush1.bf16.msra.mxu0 %v120
  %805 = vmatprep.subr.bf16.mxu0 0
  %806 = vmatpush1.bf16.msra.mxu0 %v121
  %807 = vmatprep.subr.bf16.mxu0 0
  %808 = vmatpush1.bf16.msra.mxu0 %v122
  %809 = vmatprep.subr.bf16.mxu0 0
  %810 = vmatpush1.bf16.msra.mxu0 %v123
  %811 = vmatprep.subr.bf16.mxu0 0
  %812 = vmatpush1.bf16.msra.mxu0 %v156
  %813 = vmatprep.subr.bf16.mxu0 0
  %814 = vmatpush1.bf16.msra.mxu0 0
  %815 = vmatprep.subr.bf16.mxu0 0
  %816 = vmatpush1.bf16.msra.mxu0 0
  %817 = vmatprep.subr.bf16.mxu0 0
  %818 = vmatpush1.bf16.msra.mxu0 0
  %819 = vmatprep.subr.bf16.mxu0 0
  %820 = vmatpush1.bf16.msra.mxu0 0
  %821 = vmatprep.subr.bf16.mxu0 0
  %822 = vmatpush1.bf16.msra.mxu0 0
  %823 = vmatprep.subr.bf16.mxu0 0
  %824 = vmatpush1.bf16.msra.mxu0 0
  %825 = vmatprep.subr.bf16.mxu0 0
  %826 = vmatpush1.bf16.msra.mxu0 0
  %827 = vmatprep.subr.bf16.mxu0 0
  %828 = vmatpush1.bf16.msra.mxu0 0
  %829 = vmatprep.subr.bf16.mxu0 0
  %830 = vmatpush1.bf16.msra.mxu0 0
  %831 = vmatprep.subr.bf16.mxu0 0
  %832 = vmatpush1.bf16.msra.mxu0 0
  %833 = vmatprep.subr.bf16.mxu0 0
  %834 = vmatpush1.bf16.msra.mxu0 0
  %835 = vmatprep.mubr.bf16.mxu0 0
  %836 = vmatmul.mubr.bf16.gmra.mrb[0].mxu0 %v780
  %v837 = vpop.f32.mrb[0].mxu0
  %v838 = vadd.f32 0.0, %v837
  %v839 = vpop.f32.mrb[0].mxu0
  %v840 = vpop.f32.mrb[0].mxu0
  %v841 = vadd.f32 0.0, %v840
  %v842 = vpop.f32.mrb[0].mxu0
  %843 = vmatprep.mubr.bf16.mxu0 0
  %844 = vmatmul.mubr.bf16.gmra.mrb[0].mxu0 %v783
  %v845 = vpop.f32.mrb[0].mxu0
  %v846 = vadd.f32 0.0, %v845
  %v847 = vpop.f32.mrb[0].mxu0
  %v848 = vpop.f32.mrb[0].mxu0
  %v849 = vadd.f32 0.0, %v848
  %v850 = vpop.f32.mrb[0].mxu0
  %851 = vmatprep.mubr.bf16.mxu0 0
  %852 = vmatmul.mubr.bf16.gmra.mrb[0].mxu0 %v786
  %v853 = vpop.f32.mrb[0].mxu0
  %v854 = vadd.f32 0.0, %v853
  %v855 = vpop.f32.mrb[0].mxu0
  %v856 = vpop.f32.mrb[0].mxu0
  %v857 = vadd.f32 0.0, %v856
  %v858 = vpop.f32.mrb[0].mxu0
  %859 = vmatprep.mubr.bf16.mxu0 0
  %860 = vmatmul.mubr.bf16.gmra.mrb[0].mxu0 %v789
  %v861 = vpop.f32.mrb[0].mxu0
  %v862 = vadd.f32 0.0, %v861
  %v863 = vpop.f32.mrb[0].mxu0
  %v864 = vpop.f32.mrb[0].mxu0
  %v865 = vadd.f32 0.0, %v864
  %v866 = vpop.f32.mrb[0].mxu0
  %867 = vmatprep.mubr.bf16.mxu0 0
  %868 = vmatmul.mubr.bf16.gmra.mrb[0].mxu0 %v792
  %v869 = vpop.f32.mrb[0].mxu0
  %v870 = vadd.f32 0.0, %v869
  %v871 = vpop.f32.mrb[0].mxu0
  %v872 = vpop.f32.mrb[0].mxu0
  %v873 = vadd.f32 0.0, %v872
  %v874 = vpop.f32.mrb[0].mxu0
  %875 = vmatprep.mubr.bf16.mxu0 0
  %876 = vmatmul.mubr.bf16.gmra.mrb[0].mxu0 %v795
  %v877 = vpop.f32.mrb[0].mxu0
  %v878 = vadd.f32 0.0, %v877
  %v879 = vpop.f32.mrb[0].mxu0
  %v880 = vpop.f32.mrb[0].mxu0
  %v881 = vadd.f32 0.0, %v880
  %v882 = vpop.f32.mrb[0].mxu0
  %883 = vmatprep.mubr.bf16.mxu0 0
  %884 = vmatmul.mubr.bf16.gmra.mrb[0].mxu0 %v798
  %v885 = vpop.f32.mrb[0].mxu0
  %v886 = vadd.f32 0.0, %v885
  %v887 = vpop.f32.mrb[0].mxu0
  %v888 = vpop.f32.mrb[0].mxu0
  %v889 = vadd.f32 0.0, %v888
  %v890 = vpop.f32.mrb[0].mxu0
  %891 = vmatprep.mubr.bf16.mxu0 0
  %892 = vmatmul.mubr.bf16.gmra.mrb[0].mxu0 %v801
  %v893 = vpop.f32.mrb[0].mxu0
  %v894 = vadd.f32 0.0, %v893
  %v895 = vpop.f32.mrb[0].mxu0
  %v896 = vpop.f32.mrb[0].mxu0
  %v897 = vadd.f32 0.0, %v896
  %v898 = vpop.f32.mrb[0].mxu0
  %899 = vdwg.mxu0
  %900 = vst [vmem:[#allocation2 + $0x180] sm:$0xff] %v838
  %901 = vst [vmem:[#allocation2 + $0x188] sm:$0xff] %v841
  %902 = vst [vmem:[#allocation2 + $0x190] sm:$0xff] %v846
  %903 = vst [vmem:[#allocation2 + $0x198] sm:$0xff] %v849
  %904 = vst [vmem:[#allocation2 + $0x1a0] sm:$0xff] %v854
  %905 = vst [vmem:[#allocation2 + $0x1a8] sm:$0xff] %v857
  %906 = vst [vmem:[#allocation2 + $0x1b0] sm:$0xff] %v862
  %907 = vst [vmem:[#allocation2 + $0x1b8] sm:$0xff] %v865
  %908 = vst [vmem:[#allocation2 + $0x1c0] sm:$0xff] %v870
  %909 = vst [vmem:[#allocation2 + $0x1c8] sm:$0xff] %v873
  %910 = vst [vmem:[#allocation2 + $0x1d0] sm:$0xff] %v878
  %911 = vst [vmem:[#allocation2 + $0x1d8] sm:$0xff] %v881
  %912 = vst [vmem:[#allocation2 + $0x1e0] sm:$0xff] %v886
  %913 = vst [vmem:[#allocation2 + $0x1e8] sm:$0xff] %v889
  %914 = vst [vmem:[#allocation2 + $0x1f0] sm:$0xff] %v894
  %915 = vst [vmem:[#allocation2 + $0x1f8] sm:$0xff] %v897
  %v916 = vadd.f32 %v838, %v841
  %v917 = vadd.f32 %v916, %v846
  %v918 = vadd.f32 %v917, %v849
  %v919 = vadd.f32 %v918, %v854
  %v920 = vadd.f32 %v919, %v857
  %v921 = vadd.f32 %v920, %v862
  %v922 = vadd.f32 %v921, %v865
  %v923 = vadd.f32 %v922, %v870
  %v924 = vadd.f32 %v923, %v873
  %v925 = vadd.f32 %v924, %v878
  %v926 = vadd.f32 %v925, %v881
  %v927 = vadd.f32 %v926, %v886
  %v928 = vadd.f32 %v927, %v889
  %v929 = vadd.f32 %v928, %v894
  %v930 = vadd.f32 %v929, %v897
  %v931 = vrot.slane %v930, 4
  %v932 = vadd.f32 %v930, %v931
  %v933 = vrot.slane %v932, 2
  %v934 = vadd.f32 %v932, %v933
  %v935 = vrot.slane %v934, 1
  %v936 = vadd.f32 %v934, %v935
  %v937 = vadd.f32 %v722, %v936
  %938 = vmatprep.subr.mxu0 0.0
  %939 = vmatpush1.msra.mxu0 %v30
  %940 = vmatprep.subr.mxu0 0.0
  %941 = vmatpush1.msra.mxu0 %v31
  %942 = vmatprep.subr.mxu0 0.0
  %943 = vmatpush1.msra.mxu0 %v32
  %944 = vmatprep.subr.mxu0 0.0
  %945 = vmatpush1.msra.mxu0 %v33
  %946 = vmatprep.subr.mxu0 0.0
  %947 = vmatpush1.msra.mxu0 %v34
  %948 = vmatprep.subr.mxu0 0.0
  %949 = vmatpush1.msra.mxu0 %v35
  %950 = vmatprep.subr.mxu0 0.0
  %951 = vmatpush1.msra.mxu0 %v36
  %952 = vmatprep.subr.mxu0 0.0
  %953 = vmatpush1.msra.mxu0 %v37
  %954 = vmatprep.subr.mxu0 0.0
  %955 = vmatpush1.msra.mxu0 %v38
  %956 = vmatprep.subr.mxu0 0.0
  %957 = vmatpush1.msra.mxu0 %v39
  %958 = vmatprep.subr.mxu0 0.0
  %959 = vmatpush1.msra.mxu0 %v40
  %960 = vmatprep.subr.mxu0 0.0
  %961 = vmatpush1.msra.mxu0 %v41
  %962 = vmatprep.subr.mxu0 0.0
  %963 = vmatpush1.msra.mxu0 %v42
  %964 = vmatprep.subr.mxu0 0.0
  %965 = vmatpush1.msra.mxu0 %v43
  %966 = vmatprep.subr.mxu0 0.0
  %967 = vmatpush1.msra.mxu0 %v44
  %968 = vmatprep.subr.mxu0 0.0
  %969 = vmatpush1.msra.mxu0 %v45
  %970 = vmatprep.subr.mxu0 0.0
  %971 = vmatpush1.msra.mxu0 0.0
  %972 = vmatprep.subr.mxu0 0.0
  %973 = vmatpush1.msra.mxu0 0.0
  %974 = vmatprep.subr.mxu0 0.0
  %975 = vmatpush1.msra.mxu0 0.0
  %976 = vmatprep.subr.mxu0 0.0
  %977 = vmatpush1.msra.mxu0 0.0
  %978 = vmatprep.subr.mxu0 0.0
  %979 = vmatpush1.msra.mxu0 0.0
  %980 = vmatprep.subr.mxu0 0.0
  %981 = vmatpush1.msra.mxu0 0.0
  %982 = vmatprep.subr.mxu0 0.0
  %983 = vmatpush1.msra.mxu0 0.0
  %984 = vmatprep.subr.mxu0 0.0
  %985 = vmatpush1.msra.mxu0 0.0
  %986 = vmatprep.subr.mxu0 0.0
  %987 = vmatpush1.msra.mxu0 0.0
  %988 = vmatprep.subr.mxu0 0.0
  %989 = vmatpush1.msra.mxu0 0.0
  %990 = vmatprep.subr.mxu0 0.0
  %991 = vmatpush1.msra.mxu0 0.0
  %992 = vmatprep.subr.mxu0 0.0
  %993 = vmatpush1.msra.mxu0 0.0
  %994 = vmatprep.subr.mxu0 0.0
  %995 = vmatpush1.msra.mxu0 0.0
  %996 = vmatprep.subr.mxu0 0.0
  %997 = vmatpush1.msra.mxu0 0.0
  %998 = vmatprep.subr.mxu0 0.0
  %999 = vmatpush1.msra.mxu0 0.0
  %1000 = vmatprep.subr.mxu0 0.0
  %1001 = vmatpush1.msra.mxu0 0.0
  %1002 = vmatprep.mubr.f32.mxu0 0.0
  %1003 = vmatmul.mubr.f32.gmra.mrb[0].mxu0 %v937
  %v1004 = vpop.f32.mrb[0].mxu0
  %v1005 = vadd.f32 0.0, %v1004
  %v1006 = vpop.f32.mrb[0].mxu0
  %1007 = vdwg.mxu0
  %v1008 = vld [vmem:[#allocation2] sm:$0xff]
  %v1009 = vld [vmem:[#allocation2 + $0x8] sm:$0xff]
  %v1010 = vld [vmem:[#allocation2 + $0x10] sm:$0xff]
  %v1011 = vld [vmem:[#allocation2 + $0x18] sm:$0xff]
  %v1012 = vld [vmem:[#allocation2 + $0x20] sm:$0xff]
  %v1013 = vld [vmem:[#allocation2 + $0x28] sm:$0xff]
  %v1014 = vld [vmem:[#allocation2 + $0x30] sm:$0xff]
  %v1015 = vld [vmem:[#allocation2 + $0x38] sm:$0xff]
  %v1016 = vld [vmem:[#allocation2 + $0x40] sm:$0xff]
  %v1017 = vld [vmem:[#allocation2 + $0x48] sm:$0xff]
  %v1018 = vld [vmem:[#allocation2 + $0x50] sm:$0xff]
  %v1019 = vld [vmem:[#allocation2 + $0x58] sm:$0xff]
  %v1020 = vld [vmem:[#allocation2 + $0x60] sm:$0xff]
  %v1021 = vld [vmem:[#allocation2 + $0x68] sm:$0xff]
  %v1022 = vld [vmem:[#allocation2 + $0x70] sm:$0xff]
  %v1023 = vld [vmem:[#allocation2 + $0x78] sm:$0xff]
  %v1024 = vlaneseq
  %v1025 = vshrl.u32 %v1024, 7
  %v1026 = vsub.s32 0, %v1025
  %v1027 = vrot.slane %v1005, %v1026
  %v1028 = vsub.f32 %v1008, %v1027
  %v1029 = vsub.f32 %v1009, %v1027
  %v1030 = vsub.f32 %v1010, %v1027
  %v1031 = vsub.f32 %v1011, %v1027
  %v1032 = vsub.f32 %v1012, %v1027
  %v1033 = vsub.f32 %v1013, %v1027
  %v1034 = vsub.f32 %v1014, %v1027
  %v1035 = vsub.f32 %v1015, %v1027
  %v1036 = vsub.f32 %v1016, %v1027
  %v1037 = vsub.f32 %v1017, %v1027
  %v1038 = vsub.f32 %v1018, %v1027
  %v1039 = vsub.f32 %v1019, %v1027
  %v1040 = vsub.f32 %v1020, %v1027
  %v1041 = vsub.f32 %v1021, %v1027
  %v1042 = vsub.f32 %v1022, %v1027
  %v1043 = vsub.f32 %v1023, %v1027
  %v1044 = vmul.f32 %v1028, %v1028
  %v1045 = vmul.f32 %v1029, %v1029
  %v1046 = vmul.f32 %v1030, %v1030
  %v1047 = vmul.f32 %v1031, %v1031
  %v1048 = vmul.f32 %v1032, %v1032
  %v1049 = vmul.f32 %v1033, %v1033
  %v1050 = vmul.f32 %v1034, %v1034
  %v1051 = vmul.f32 %v1035, %v1035
  %v1052 = vmul.f32 %v1036, %v1036
  %v1053 = vmul.f32 %v1037, %v1037
  %v1054 = vmul.f32 %v1038, %v1038
  %v1055 = vmul.f32 %v1039, %v1039
  %v1056 = vmul.f32 %v1040, %v1040
  %v1057 = vmul.f32 %v1041, %v1041
  %v1058 = vmul.f32 %v1042, %v1042
  %v1059 = vmul.f32 %v1043, %v1043
  %v1060 = vadd.f32 %v1044, %v1045
  %v1061 = vadd.f32 %v1060, %v1046
  %v1062 = vadd.f32 %v1061, %v1047
  %v1063 = vadd.f32 %v1062, %v1048
  %v1064 = vadd.f32 %v1063, %v1049
  %v1065 = vadd.f32 %v1064, %v1050
  %v1066 = vadd.f32 %v1065, %v1051
  %v1067 = vadd.f32 %v1066, %v1052
  %v1068 = vadd.f32 %v1067, %v1053
  %v1069 = vadd.f32 %v1068, %v1054
  %v1070 = vadd.f32 %v1069, %v1055
  %v1071 = vadd.f32 %v1070, %v1056
  %v1072 = vadd.f32 %v1071, %v1057
  %v1073 = vadd.f32 %v1072, %v1058
  %v1074 = vadd.f32 %v1073, %v1059
  %v1075 = vrot.slane %v1074, 4
  %v1076 = vadd.f32 %v1074, %v1075
  %v1077 = vrot.slane %v1076, 2
  %v1078 = vadd.f32 %v1076, %v1077
  %v1079 = vrot.slane %v1078, 1
  %v1080 = vadd.f32 %v1078, %v1079
  %v1081 = vadd.f32 %v1080, 0.0
  %v1082 = vld [vmem:[#allocation2 + $0x80] sm:$0xff]
  %v1083 = vld [vmem:[#allocation2 + $0x88] sm:$0xff]
  %v1084 = vld [vmem:[#allocation2 + $0x90] sm:$0xff]
  %v1085 = vld [vmem:[#allocation2 + $0x98] sm:$0xff]
  %v1086 = vld [vmem:[#allocation2 + $0xa0] sm:$0xff]
  %v1087 = vld [vmem:[#allocation2 + $0xa8] sm:$0xff]
  %v1088 = vld [vmem:[#allocation2 + $0xb0] sm:$0xff]
  %v1089 = vld [vmem:[#allocation2 + $0xb8] sm:$0xff]
  %v1090 = vld [vmem:[#allocation2 + $0xc0] sm:$0xff]
  %v1091 = vld [vmem:[#allocation2 + $0xc8] sm:$0xff]
  %v1092 = vld [vmem:[#allocation2 + $0xd0] sm:$0xff]
  %v1093 = vld [vmem:[#allocation2 + $0xd8] sm:$0xff]
  %v1094 = vld [vmem:[#allocation2 + $0xe0] sm:$0xff]
  %v1095 = vld [vmem:[#allocation2 + $0xe8] sm:$0xff]
  %v1096 = vld [vmem:[#allocation2 + $0xf0] sm:$0xff]
  %v1097 = vld [vmem:[#allocation2 + $0xf8] sm:$0xff]
  %v1098 = vsub.f32 %v1082, %v1027
  %v1099 = vsub.f32 %v1083, %v1027
  %v1100 = vsub.f32 %v1084, %v1027
  %v1101 = vsub.f32 %v1085, %v1027
  %v1102 = vsub.f32 %v1086, %v1027
  %v1103 = vsub.f32 %v1087, %v1027
  %v1104 = vsub.f32 %v1088, %v1027
  %v1105 = vsub.f32 %v1089, %v1027
  %v1106 = vsub.f32 %v1090, %v1027
  %v1107 = vsub.f32 %v1091, %v1027
  %v1108 = vsub.f32 %v1092, %v1027
  %v1109 = vsub.f32 %v1093, %v1027
  %v1110 = vsub.f32 %v1094, %v1027
  %v1111 = vsub.f32 %v1095, %v1027
  %v1112 = vsub.f32 %v1096, %v1027
  %v1113 = vsub.f32 %v1097, %v1027
  %v1114 = vmul.f32 %v1098, %v1098
  %v1115 = vmul.f32 %v1099, %v1099
  %v1116 = vmul.f32 %v1100, %v1100
  %v1117 = vmul.f32 %v1101, %v1101
  %v1118 = vmul.f32 %v1102, %v1102
  %v1119 = vmul.f32 %v1103, %v1103
  %v1120 = vmul.f32 %v1104, %v1104
  %v1121 = vmul.f32 %v1105, %v1105
  %v1122 = vmul.f32 %v1106, %v1106
  %v1123 = vmul.f32 %v1107, %v1107
  %v1124 = vmul.f32 %v1108, %v1108
  %v1125 = vmul.f32 %v1109, %v1109
  %v1126 = vmul.f32 %v1110, %v1110
  %v1127 = vmul.f32 %v1111, %v1111
  %v1128 = vmul.f32 %v1112, %v1112
  %v1129 = vmul.f32 %v1113, %v1113
  %v1130 = vadd.f32 %v1114, %v1115
  %v1131 = vadd.f32 %v1130, %v1116
  %v1132 = vadd.f32 %v1131, %v1117
  %v1133 = vadd.f32 %v1132, %v1118
  %v1134 = vadd.f32 %v1133, %v1119
  %v1135 = vadd.f32 %v1134, %v1120
  %v1136 = vadd.f32 %v1135, %v1121
  %v1137 = vadd.f32 %v1136, %v1122
  %v1138 = vadd.f32 %v1137, %v1123
  %v1139 = vadd.f32 %v1138, %v1124
  %v1140 = vadd.f32 %v1139, %v1125
  %v1141 = vadd.f32 %v1140, %v1126
  %v1142 = vadd.f32 %v1141, %v1127
  %v1143 = vadd.f32 %v1142, %v1128
  %v1144 = vadd.f32 %v1143, %v1129
  %v1145 = vrot.slane %v1144, 4
  %v1146 = vadd.f32 %v1144, %v1145
  %v1147 = vrot.slane %v1146, 2
  %v1148 = vadd.f32 %v1146, %v1147
  %v1149 = vrot.slane %v1148, 1
  %v1150 = vadd.f32 %v1148, %v1149
  %v1151 = vadd.f32 %v1081, %v1150
  %v1152 = vld [vmem:[#allocation2 + $0x100] sm:$0xff]
  %v1153 = vld [vmem:[#allocation2 + $0x108] sm:$0xff]
  %v1154 = vld [vmem:[#allocation2 + $0x110] sm:$0xff]
  %v1155 = vld [vmem:[#allocation2 + $0x118] sm:$0xff]
  %v1156 = vld [vmem:[#allocation2 + $0x120] sm:$0xff]
  %v1157 = vld [vmem:[#allocation2 + $0x128] sm:$0xff]
  %v1158 = vld [vmem:[#allocation2 + $0x130] sm:$0xff]
  %v1159 = vld [vmem:[#allocation2 + $0x138] sm:$0xff]
  %v1160 = vld [vmem:[#allocation2 + $0x140] sm:$0xff]
  %v1161 = vld [vmem:[#allocation2 + $0x148] sm:$0xff]
  %v1162 = vld [vmem:[#allocation2 + $0x150] sm:$0xff]
  %v1163 = vld [vmem:[#allocation2 + $0x158] sm:$0xff]
  %v1164 = vld [vmem:[#allocation2 + $0x160] sm:$0xff]
  %v1165 = vld [vmem:[#allocation2 + $0x168] sm:$0xff]
  %v1166 = vld [vmem:[#allocation2 + $0x170] sm:$0xff]
  %v1167 = vld [vmem:[#allocation2 + $0x178] sm:$0xff]
  %v1168 = vsub.f32 %v1152, %v1027
  %v1169 = vsub.f32 %v1153, %v1027
  %v1170 = vsub.f32 %v1154, %v1027
  %v1171 = vsub.f32 %v1155, %v1027
  %v1172 = vsub.f32 %v1156, %v1027
  %v1173 = vsub.f32 %v1157, %v1027
  %v1174 = vsub.f32 %v1158, %v1027
  %v1175 = vsub.f32 %v1159, %v1027
  %v1176 = vsub.f32 %v1160, %v1027
  %v1177 = vsub.f32 %v1161, %v1027
  %v1178 = vsub.f32 %v1162, %v1027
  %v1179 = vsub.f32 %v1163, %v1027
  %v1180 = vsub.f32 %v1164, %v1027
  %v1181 = vsub.f32 %v1165, %v1027
  %v1182 = vsub.f32 %v1166, %v1027
  %v1183 = vsub.f32 %v1167, %v1027
  %v1184 = vmul.f32 %v1168, %v1168
  %v1185 = vmul.f32 %v1169, %v1169
  %v1186 = vmul.f32 %v1170, %v1170
  %v1187 = vmul.f32 %v1171, %v1171
  %v1188 = vmul.f32 %v1172, %v1172
  %v1189 = vmul.f32 %v1173, %v1173
  %v1190 = vmul.f32 %v1174, %v1174
  %v1191 = vmul.f32 %v1175, %v1175
  %v1192 = vmul.f32 %v1176, %v1176
  %v1193 = vmul.f32 %v1177, %v1177
  %v1194 = vmul.f32 %v1178, %v1178
  %v1195 = vmul.f32 %v1179, %v1179
  %v1196 = vmul.f32 %v1180, %v1180
  %v1197 = vmul.f32 %v1181, %v1181
  %v1198 = vmul.f32 %v1182, %v1182
  %v1199 = vmul.f32 %v1183, %v1183
  %v1200 = vadd.f32 %v1184, %v1185
  %v1201 = vadd.f32 %v1200, %v1186
  %v1202 = vadd.f32 %v1201, %v1187
  %v1203 = vadd.f32 %v1202, %v1188
  %v1204 = vadd.f32 %v1203, %v1189
  %v1205 = vadd.f32 %v1204, %v1190
  %v1206 = vadd.f32 %v1205, %v1191
  %v1207 = vadd.f32 %v1206, %v1192
  %v1208 = vadd.f32 %v1207, %v1193
  %v1209 = vadd.f32 %v1208, %v1194
  %v1210 = vadd.f32 %v1209, %v1195
  %v1211 = vadd.f32 %v1210, %v1196
  %v1212 = vadd.f32 %v1211, %v1197
  %v1213 = vadd.f32 %v1212, %v1198
  %v1214 = vadd.f32 %v1213, %v1199
  %v1215 = vrot.slane %v1214, 4
  %v1216 = vadd.f32 %v1214, %v1215
  %v1217 = vrot.slane %v1216, 2
  %v1218 = vadd.f32 %v1216, %v1217
  %v1219 = vrot.slane %v1218, 1
  %v1220 = vadd.f32 %v1218, %v1219
  %v1221 = vadd.f32 %v1151, %v1220
  %v1222 = vld [vmem:[#allocation2 + $0x180] sm:$0xff]
  %v1223 = vld [vmem:[#allocation2 + $0x188] sm:$0xff]
  %v1224 = vld [vmem:[#allocation2 + $0x190] sm:$0xff]
  %v1225 = vld [vmem:[#allocation2 + $0x198] sm:$0xff]
  %v1226 = vld [vmem:[#allocation2 + $0x1a0] sm:$0xff]
  %v1227 = vld [vmem:[#allocation2 + $0x1a8] sm:$0xff]
  %v1228 = vld [vmem:[#allocation2 + $0x1b0] sm:$0xff]
  %v1229 = vld [vmem:[#allocation2 + $0x1b8] sm:$0xff]
  %v1230 = vld [vmem:[#allocation2 + $0x1c0] sm:$0xff]
  %v1231 = vld [vmem:[#allocation2 + $0x1c8] sm:$0xff]
  %v1232 = vld [vmem:[#allocation2 + $0x1d0] sm:$0xff]
  %v1233 = vld [vmem:[#allocation2 + $0x1d8] sm:$0xff]
  %v1234 = vld [vmem:[#allocation2 + $0x1e0] sm:$0xff]
  %v1235 = vld [vmem:[#allocation2 + $0x1e8] sm:$0xff]
  %v1236 = vld [vmem:[#allocation2 + $0x1f0] sm:$0xff]
  %v1237 = vld [vmem:[#allocation2 + $0x1f8] sm:$0xff]
  %v1238 = vsub.f32 %v1222, %v1027
  %v1239 = vsub.f32 %v1223, %v1027
  %v1240 = vsub.f32 %v1224, %v1027
  %v1241 = vsub.f32 %v1225, %v1027
  %v1242 = vsub.f32 %v1226, %v1027
  %v1243 = vsub.f32 %v1227, %v1027
  %v1244 = vsub.f32 %v1228, %v1027
  %v1245 = vsub.f32 %v1229, %v1027
  %v1246 = vsub.f32 %v1230, %v1027
  %v1247 = vsub.f32 %v1231, %v1027
  %v1248 = vsub.f32 %v1232, %v1027
  %v1249 = vsub.f32 %v1233, %v1027
  %v1250 = vsub.f32 %v1234, %v1027
  %v1251 = vsub.f32 %v1235, %v1027
  %v1252 = vsub.f32 %v1236, %v1027
  %v1253 = vsub.f32 %v1237, %v1027
  %v1254 = vmul.f32 %v1238, %v1238
  %v1255 = vmul.f32 %v1239, %v1239
  %v1256 = vmul.f32 %v1240, %v1240
  %v1257 = vmul.f32 %v1241, %v1241
  %v1258 = vmul.f32 %v1242, %v1242
  %v1259 = vmul.f32 %v1243, %v1243
  %v1260 = vmul.f32 %v1244, %v1244
  %v1261 = vmul.f32 %v1245, %v1245
  %v1262 = vmul.f32 %v1246, %v1246
  %v1263 = vmul.f32 %v1247, %v1247
  %v1264 = vmul.f32 %v1248, %v1248
  %v1265 = vmul.f32 %v1249, %v1249
  %v1266 = vmul.f32 %v1250, %v1250
  %v1267 = vmul.f32 %v1251, %v1251
  %v1268 = vmul.f32 %v1252, %v1252
  %v1269 = vmul.f32 %v1253, %v1253
  %v1270 = vadd.f32 %v1254, %v1255
  %v1271 = vadd.f32 %v1270, %v1256
  %v1272 = vadd.f32 %v1271, %v1257
  %v1273 = vadd.f32 %v1272, %v1258
  %v1274 = vadd.f32 %v1273, %v1259
  %v1275 = vadd.f32 %v1274, %v1260
  %v1276 = vadd.f32 %v1275, %v1261
  %v1277 = vadd.f32 %v1276, %v1262
  %v1278 = vadd.f32 %v1277, %v1263
  %v1279 = vadd.f32 %v1278, %v1264
  %v1280 = vadd.f32 %v1279, %v1265
  %v1281 = vadd.f32 %v1280, %v1266
  %v1282 = vadd.f32 %v1281, %v1267
  %v1283 = vadd.f32 %v1282, %v1268
  %v1284 = vadd.f32 %v1283, %v1269
  %v1285 = vrot.slane %v1284, 4
  %v1286 = vadd.f32 %v1284, %v1285
  %v1287 = vrot.slane %v1286, 2
  %v1288 = vadd.f32 %v1286, %v1287
  %v1289 = vrot.slane %v1288, 1
  %v1290 = vadd.f32 %v1288, %v1289
  %v1291 = vadd.f32 %v1221, %v1290
  %1292 = vmatprep.subr.mxu0 0.0
  %1293 = vmatpush1.msra.mxu0 %v30
  %1294 = vmatprep.subr.mxu0 0.0
  %1295 = vmatpush1.msra.mxu0 %v31
  %1296 = vmatprep.subr.mxu0 0.0
  %1297 = vmatpush1.msra.mxu0 %v32
  %1298 = vmatprep.subr.mxu0 0.0
  %1299 = vmatpush1.msra.mxu0 %v33
  %1300 = vmatprep.subr.mxu0 0.0
  %1301 = vmatpush1.msra.mxu0 %v34
  %1302 = vmatprep.subr.mxu0 0.0
  %1303 = vmatpush1.msra.mxu0 %v35
  %1304 = vmatprep.subr.mxu0 0.0
  %1305 = vmatpush1.msra.mxu0 %v36
  %1306 = vmatprep.subr.mxu0 0.0
  %1307 = vmatpush1.msra.mxu0 %v37
  %1308 = vmatprep.subr.mxu0 0.0
  %1309 = vmatpush1.msra.mxu0 %v38
  %1310 = vmatprep.subr.mxu0 0.0
  %1311 = vmatpush1.msra.mxu0 %v39
  %1312 = vmatprep.subr.mxu0 0.0
  %1313 = vmatpush1.msra.mxu0 %v40
  %1314 = vmatprep.subr.mxu0 0.0
  %1315 = vmatpush1.msra.mxu0 %v41
  %1316 = vmatprep.subr.mxu0 0.0
  %1317 = vmatpush1.msra.mxu0 %v42
  %1318 = vmatprep.subr.mxu0 0.0
  %1319 = vmatpush1.msra.mxu0 %v43
  %1320 = vmatprep.subr.mxu0 0.0
  %1321 = vmatpush1.msra.mxu0 %v44
  %1322 = vmatprep.subr.mxu0 0.0
  %1323 = vmatpush1.msra.mxu0 %v45
  %1324 = vmatprep.subr.mxu0 0.0
  %1325 = vmatpush1.msra.mxu0 0.0
  %1326 = vmatprep.subr.mxu0 0.0
  %1327 = vmatpush1.msra.mxu0 0.0
  %1328 = vmatprep.subr.mxu0 0.0
  %1329 = vmatpush1.msra.mxu0 0.0
  %1330 = vmatprep.subr.mxu0 0.0
  %1331 = vmatpush1.msra.mxu0 0.0
  %1332 = vmatprep.subr.mxu0 0.0
  %1333 = vmatpush1.msra.mxu0 0.0
  %1334 = vmatprep.subr.mxu0 0.0
  %1335 = vmatpush1.msra.mxu0 0.0
  %1336 = vmatprep.subr.mxu0 0.0
  %1337 = vmatpush1.msra.mxu0 0.0
  %1338 = vmatprep.subr.mxu0 0.0
  %1339 = vmatpush1.msra.mxu0 0.0
  %1340 = vmatprep.subr.mxu0 0.0
  %1341 = vmatpush1.msra.mxu0 0.0
  %1342 = vmatprep.subr.mxu0 0.0
  %1343 = vmatpush1.msra.mxu0 0.0
  %1344 = vmatprep.subr.mxu0 0.0
  %1345 = vmatpush1.msra.mxu0 0.0
  %1346 = vmatprep.subr.mxu0 0.0
  %1347 = vmatpush1.msra.mxu0 0.0
  %1348 = vmatprep.subr.mxu0 0.0
  %1349 = vmatpush1.msra.mxu0 0.0
  %1350 = vmatprep.subr.mxu0 0.0
  %1351 = vmatpush1.msra.mxu0 0.0
  %1352 = vmatprep.subr.mxu0 0.0
  %1353 = vmatpush1.msra.mxu0 0.0
  %1354 = vmatprep.subr.mxu0 0.0
  %1355 = vmatpush1.msra.mxu0 0.0
  %1356 = vmatprep.mubr.f32.mxu0 0.0
  %1357 = vmatmul.mubr.f32.gmra.mrb[0].mxu0 %v1291
  %v1358 = vpop.f32.mrb[0].mxu0
  %v1359 = vadd.f32 0.0, %v1358
  %v1360 = vpop.f32.mrb[0].mxu0
  %1361 = vdwg.mxu0
  %v1362 = vadd.f32 %v1359, 1e-05
  %v1363 = vrsqrt.pop %v1362
  %v1364 = vld [vmem:[%s2] sm:$0x1]
  %v1365 = vmul.f32 %v1364, %v1363
  %v1366 = vld [vmem:[%s3] sm:$0x1]
  %v1367 = vmul.f32 %v1005, %v1365
  %v1368 = vsub.f32 %v1366, %v1367
  %v1370 = vlaneseq
  %v1371 = vshrl.u32 %v1370, 7
  %v1372 = vsub.s32 0, %v1371
  %v1373 = vrot.slane %v1365, %v1372
  %v1376 = vlaneseq
  %v1377 = vshrl.u32 %v1376, 7
  %v1378 = vsub.s32 0, %v1377
  %v1379 = vrot.slane %v1368, %v1378
  %v1381 = vmul.f32 %v1008, %v1373
  %v1382 = vmul.f32 %v1009, %v1373
  %v1383 = vmul.f32 %v1010, %v1373
  %v1384 = vmul.f32 %v1011, %v1373
  %v1385 = vmul.f32 %v1012, %v1373
  %v1386 = vmul.f32 %v1013, %v1373
  %v1387 = vmul.f32 %v1014, %v1373
  %v1388 = vmul.f32 %v1015, %v1373
  %v1389 = vmul.f32 %v1016, %v1373
  %v1390 = vmul.f32 %v1017, %v1373
  %v1391 = vmul.f32 %v1018, %v1373
  %v1392 = vmul.f32 %v1019, %v1373
  %v1393 = vmul.f32 %v1020, %v1373
  %v1394 = vmul.f32 %v1021, %v1373
  %v1395 = vmul.f32 %v1022, %v1373
  %v1396 = vmul.f32 %v1023, %v1373
  %v1397 = vadd.f32 %v1381, %v1379
  %v1398 = vadd.f32 %v1382, %v1379
  %v1399 = vadd.f32 %v1383, %v1379
  %v1400 = vadd.f32 %v1384, %v1379
  %v1401 = vadd.f32 %v1385, %v1379
  %v1402 = vadd.f32 %v1386, %v1379
  %v1403 = vadd.f32 %v1387, %v1379
  %v1404 = vadd.f32 %v1388, %v1379
  %v1405 = vadd.f32 %v1389, %v1379
  %v1406 = vadd.f32 %v1390, %v1379
  %v1407 = vadd.f32 %v1391, %v1379
  %v1408 = vadd.f32 %v1392, %v1379
  %v1409 = vadd.f32 %v1393, %v1379
  %v1410 = vadd.f32 %v1394, %v1379
  %v1411 = vadd.f32 %v1395, %v1379
  %v1412 = vadd.f32 %v1396, %v1379
  %vm1413 = vcmp.ge.f32.partialorder %v1397, 0.0
  %vm1414 = vcmp.ge.f32.partialorder %v1398, 0.0
  %vm1415 = vcmp.ge.f32.partialorder %v1399, 0.0
  %vm1416 = vcmp.ge.f32.partialorder %v1400, 0.0
  %vm1417 = vcmp.ge.f32.partialorder %v1401, 0.0
  %vm1418 = vcmp.ge.f32.partialorder %v1402, 0.0
  %vm1419 = vcmp.ge.f32.partialorder %v1403, 0.0
  %vm1420 = vcmp.ge.f32.partialorder %v1404, 0.0
  %vm1421 = vcmp.ge.f32.partialorder %v1405, 0.0
  %vm1422 = vcmp.ge.f32.partialorder %v1406, 0.0
  %vm1423 = vcmp.ge.f32.partialorder %v1407, 0.0
  %vm1424 = vcmp.ge.f32.partialorder %v1408, 0.0
  %vm1425 = vcmp.ge.f32.partialorder %v1409, 0.0
  %vm1426 = vcmp.ge.f32.partialorder %v1410, 0.0
  %vm1427 = vcmp.ge.f32.partialorder %v1411, 0.0
  %vm1428 = vcmp.ge.f32.partialorder %v1412, 0.0
  %v1429 = vmul.f32 %v1397, 0.2
  %v1430 = vmul.f32 %v1398, 0.2
  %v1431 = vmul.f32 %v1399, 0.2
  %v1432 = vmul.f32 %v1400, 0.2
  %v1433 = vmul.f32 %v1401, 0.2
  %v1434 = vmul.f32 %v1402, 0.2
  %v1435 = vmul.f32 %v1403, 0.2
  %v1436 = vmul.f32 %v1404, 0.2
  %v1437 = vmul.f32 %v1405, 0.2
  %v1438 = vmul.f32 %v1406, 0.2
  %v1439 = vmul.f32 %v1407, 0.2
  %v1440 = vmul.f32 %v1408, 0.2
  %v1441 = vmul.f32 %v1409, 0.2
  %v1442 = vmul.f32 %v1410, 0.2
  %v1443 = vmul.f32 %v1411, 0.2
  %v1444 = vmul.f32 %v1412, 0.2
  %v1445 = vsel %vm1413, %v1397, %v1429
  %v1446 = vsel %vm1414, %v1398, %v1430
  %v1447 = vsel %vm1415, %v1399, %v1431
  %v1448 = vsel %vm1416, %v1400, %v1432
  %v1449 = vsel %vm1417, %v1401, %v1433
  %v1450 = vsel %vm1418, %v1402, %v1434
  %v1451 = vsel %vm1419, %v1403, %v1435
  %v1452 = vsel %vm1420, %v1404, %v1436
  %v1453 = vsel %vm1421, %v1405, %v1437
  %v1454 = vsel %vm1422, %v1406, %v1438
  %v1455 = vsel %vm1423, %v1407, %v1439
  %v1456 = vsel %vm1424, %v1408, %v1440
  %v1457 = vsel %vm1425, %v1409, %v1441
  %v1458 = vsel %vm1426, %v1410, %v1442
  %v1459 = vsel %vm1427, %v1411, %v1443
  %v1460 = vsel %vm1428, %v1412, %v1444
  %v1461 = vpack.c.bf16 %v1446, %v1445
  %v1462 = vpack.c.bf16 %v1448, %v1447
  %v1463 = vpack.c.bf16 %v1450, %v1449
  %v1464 = vpack.c.bf16 %v1452, %v1451
  %v1465 = vpack.c.bf16 %v1454, %v1453
  %v1466 = vpack.c.bf16 %v1456, %v1455
  %v1467 = vpack.c.bf16 %v1458, %v1457
  %v1468 = vpack.c.bf16 %v1460, %v1459
  %v1477 = vunpack.c.l.b16 %v1461
  %v1478 = vunpack.c.h.b16 %v1461
  %v1479 = vunpack.c.l.b16 %v1462
  %v1480 = vunpack.c.h.b16 %v1462
  %v1481 = vunpack.c.l.b16 %v1463
  %v1482 = vunpack.c.h.b16 %v1463
  %v1483 = vunpack.c.l.b16 %v1464
  %v1484 = vunpack.c.h.b16 %v1464
  %v1485 = vunpack.c.l.b16 %v1465
  %v1486 = vunpack.c.h.b16 %v1465
  %v1487 = vunpack.c.l.b16 %v1466
  %v1488 = vunpack.c.h.b16 %v1466
  %v1489 = vunpack.c.l.b16 %v1467
  %v1490 = vunpack.c.h.b16 %v1467
  %v1491 = vunpack.c.l.b16 %v1468
  %v1492 = vunpack.c.h.b16 %v1468
  %v1493 = vpack.c.b16 %v1477, %v1477
  %v1494 = vpack.c.b16 %v1478, %v1478
  %v1495 = vpack.c.b16 %v1479, %v1479
  %v1496 = vpack.c.b16 %v1480, %v1480
  %v1497 = vpack.c.b16 %v1481, %v1481
  %v1498 = vpack.c.b16 %v1482, %v1482
  %v1499 = vpack.c.b16 %v1483, %v1483
  %v1500 = vpack.c.b16 %v1484, %v1484
  %v1501 = vpack.c.b16 %v1485, %v1485
  %v1502 = vpack.c.b16 %v1486, %v1486
  %v1503 = vpack.c.b16 %v1487, %v1487
  %v1504 = vpack.c.b16 %v1488, %v1488
  %v1505 = vpack.c.b16 %v1489, %v1489
  %v1506 = vpack.c.b16 %v1490, %v1490
  %v1507 = vpack.c.b16 %v1491, %v1491
  %v1508 = vpack.c.b16 %v1492, %v1492
  %1525 = vst [vmem:[%s5] sm:$0xf] %v1493
  %1526 = vst [vmem:[%s5 + $0x4] sm:$0xf] %v1494
  %1527 = vst [vmem:[%s5 + $0x8] sm:$0xf] %v1495
  %1528 = vst [vmem:[%s5 + $0xc] sm:$0xf] %v1496
  %1529 = vst [vmem:[%s5 + $0x10] sm:$0xf] %v1497
  %1530 = vst [vmem:[%s5 + $0x14] sm:$0xf] %v1498
  %1531 = vst [vmem:[%s5 + $0x18] sm:$0xf] %v1499
  %1532 = vst [vmem:[%s5 + $0x1c] sm:$0xf] %v1500
  %1533 = vst [vmem:[%s5 + $0x20] sm:$0xf] %v1501
  %1534 = vst [vmem:[%s5 + $0x24] sm:$0xf] %v1502
  %1535 = vst [vmem:[%s5 + $0x28] sm:$0xf] %v1503
  %1536 = vst [vmem:[%s5 + $0x2c] sm:$0xf] %v1504
  %1537 = vst [vmem:[%s5 + $0x30] sm:$0xf] %v1505
  %1538 = vst [vmem:[%s5 + $0x34] sm:$0xf] %v1506
  %1539 = vst [vmem:[%s5 + $0x38] sm:$0xf] %v1507
  %1540 = vst [vmem:[%s5 + $0x3c] sm:$0xf] %v1508
  %v1541 = vld [vmem:[#allocation2 + $0x80] sm:$0xff]
  %v1542 = vld [vmem:[#allocation2 + $0x88] sm:$0xff]
  %v1543 = vld [vmem:[#allocation2 + $0x90] sm:$0xff]
  %v1544 = vld [vmem:[#allocation2 + $0x98] sm:$0xff]
  %v1545 = vld [vmem:[#allocation2 + $0xa0] sm:$0xff]
  %v1546 = vld [vmem:[#allocation2 + $0xa8] sm:$0xff]
  %v1547 = vld [vmem:[#allocation2 + $0xb0] sm:$0xff]
  %v1548 = vld [vmem:[#allocation2 + $0xb8] sm:$0xff]
  %v1549 = vld [vmem:[#allocation2 + $0xc0] sm:$0xff]
  %v1550 = vld [vmem:[#allocation2 + $0xc8] sm:$0xff]
  %v1551 = vld [vmem:[#allocation2 + $0xd0] sm:$0xff]
  %v1552 = vld [vmem:[#allocation2 + $0xd8] sm:$0xff]
  %v1553 = vld [vmem:[#allocation2 + $0xe0] sm:$0xff]
  %v1554 = vld [vmem:[#allocation2 + $0xe8] sm:$0xff]
  %v1555 = vld [vmem:[#allocation2 + $0xf0] sm:$0xff]
  %v1556 = vld [vmem:[#allocation2 + $0xf8] sm:$0xff]
  %v1557 = vmul.f32 %v1541, %v1373
  %v1558 = vmul.f32 %v1542, %v1373
  %v1559 = vmul.f32 %v1543, %v1373
  %v1560 = vmul.f32 %v1544, %v1373
  %v1561 = vmul.f32 %v1545, %v1373
  %v1562 = vmul.f32 %v1546, %v1373
  %v1563 = vmul.f32 %v1547, %v1373
  %v1564 = vmul.f32 %v1548, %v1373
  %v1565 = vmul.f32 %v1549, %v1373
  %v1566 = vmul.f32 %v1550, %v1373
  %v1567 = vmul.f32 %v1551, %v1373
  %v1568 = vmul.f32 %v1552, %v1373
  %v1569 = vmul.f32 %v1553, %v1373
  %v1570 = vmul.f32 %v1554, %v1373
  %v1571 = vmul.f32 %v1555, %v1373
  %v1572 = vmul.f32 %v1556, %v1373
  %v1573 = vadd.f32 %v1557, %v1379
  %v1574 = vadd.f32 %v1558, %v1379
  %v1575 = vadd.f32 %v1559, %v1379
  %v1576 = vadd.f32 %v1560, %v1379
  %v1577 = vadd.f32 %v1561, %v1379
  %v1578 = vadd.f32 %v1562, %v1379
  %v1579 = vadd.f32 %v1563, %v1379
  %v1580 = vadd.f32 %v1564, %v1379
  %v1581 = vadd.f32 %v1565, %v1379
  %v1582 = vadd.f32 %v1566, %v1379
  %v1583 = vadd.f32 %v1567, %v1379
  %v1584 = vadd.f32 %v1568, %v1379
  %v1585 = vadd.f32 %v1569, %v1379
  %v1586 = vadd.f32 %v1570, %v1379
  %v1587 = vadd.f32 %v1571, %v1379
  %v1588 = vadd.f32 %v1572, %v1379
  %vm1589 = vcmp.ge.f32.partialorder %v1573, 0.0
  %vm1590 = vcmp.ge.f32.partialorder %v1574, 0.0
  %vm1591 = vcmp.ge.f32.partialorder %v1575, 0.0
  %vm1592 = vcmp.ge.f32.partialorder %v1576, 0.0
  %vm1593 = vcmp.ge.f32.partialorder %v1577, 0.0
  %vm1594 = vcmp.ge.f32.partialorder %v1578, 0.0
  %vm1595 = vcmp.ge.f32.partialorder %v1579, 0.0
  %vm1596 = vcmp.ge.f32.partialorder %v1580, 0.0
  %vm1597 = vcmp.ge.f32.partialorder %v1581, 0.0
  %vm1598 = vcmp.ge.f32.partialorder %v1582, 0.0
  %vm1599 = vcmp.ge.f32.partialorder %v1583, 0.0
  %vm1600 = vcmp.ge.f32.partialorder %v1584, 0.0
  %vm1601 = vcmp.ge.f32.partialorder %v1585, 0.0
  %vm1602 = vcmp.ge.f32.partialorder %v1586, 0.0
  %vm1603 = vcmp.ge.f32.partialorder %v1587, 0.0
  %vm1604 = vcmp.ge.f32.partialorder %v1588, 0.0
  %v1605 = vmul.f32 %v1573, 0.2
  %v1606 = vmul.f32 %v1574, 0.2
  %v1607 = vmul.f32 %v1575, 0.2
  %v1608 = vmul.f32 %v1576, 0.2
  %v1609 = vmul.f32 %v1577, 0.2
  %v1610 = vmul.f32 %v1578, 0.2
  %v1611 = vmul.f32 %v1579, 0.2
  %v1612 = vmul.f32 %v1580, 0.2
  %v1613 = vmul.f32 %v1581, 0.2
  %v1614 = vmul.f32 %v1582, 0.2
  %v1615 = vmul.f32 %v1583, 0.2
  %v1616 = vmul.f32 %v1584, 0.2
  %v1617 = vmul.f32 %v1585, 0.2
  %v1618 = vmul.f32 %v1586, 0.2
  %v1619 = vmul.f32 %v1587, 0.2
  %v1620 = vmul.f32 %v1588, 0.2
  %v1621 = vsel %vm1589, %v1573, %v1605
  %v1622 = vsel %vm1590, %v1574, %v1606
  %v1623 = vsel %vm1591, %v1575, %v1607
  %v1624 = vsel %vm1592, %v1576, %v1608
  %v1625 = vsel %vm1593, %v1577, %v1609
  %v1626 = vsel %vm1594, %v1578, %v1610
  %v1627 = vsel %vm1595, %v1579, %v1611
  %v1628 = vsel %vm1596, %v1580, %v1612
  %v1629 = vsel %vm1597, %v1581, %v1613
  %v1630 = vsel %vm1598, %v1582, %v1614
  %v1631 = vsel %vm1599, %v1583, %v1615
  %v1632 = vsel %vm1600, %v1584, %v1616
  %v1633 = vsel %vm1601, %v1585, %v1617
  %v1634 = vsel %vm1602, %v1586, %v1618
  %v1635 = vsel %vm1603, %v1587, %v1619
  %v1636 = vsel %vm1604, %v1588, %v1620
  %v1637 = vpack.c.bf16 %v1622, %v1621
  %v1638 = vpack.c.bf16 %v1624, %v1623
  %v1639 = vpack.c.bf16 %v1626, %v1625
  %v1640 = vpack.c.bf16 %v1628, %v1627
  %v1641 = vpack.c.bf16 %v1630, %v1629
  %v1642 = vpack.c.bf16 %v1632, %v1631
  %v1643 = vpack.c.bf16 %v1634, %v1633
  %v1644 = vpack.c.bf16 %v1636, %v1635
  %v1653 = vunpack.c.l.b16 %v1637
  %v1654 = vunpack.c.h.b16 %v1637
  %v1655 = vunpack.c.l.b16 %v1638
  %v1656 = vunpack.c.h.b16 %v1638
  %v1657 = vunpack.c.l.b16 %v1639
  %v1658 = vunpack.c.h.b16 %v1639
  %v1659 = vunpack.c.l.b16 %v1640
  %v1660 = vunpack.c.h.b16 %v1640
  %v1661 = vunpack.c.l.b16 %v1641
  %v1662 = vunpack.c.h.b16 %v1641
  %v1663 = vunpack.c.l.b16 %v1642
  %v1664 = vunpack.c.h.b16 %v1642
  %v1665 = vunpack.c.l.b16 %v1643
  %v1666 = vunpack.c.h.b16 %v1643
  %v1667 = vunpack.c.l.b16 %v1644
  %v1668 = vunpack.c.h.b16 %v1644
  %v1669 = vpack.c.b16 %v1653, %v1653
  %v1670 = vpack.c.b16 %v1654, %v1654
  %v1671 = vpack.c.b16 %v1655, %v1655
  %v1672 = vpack.c.b16 %v1656, %v1656
  %v1673 = vpack.c.b16 %v1657, %v1657
  %v1674 = vpack.c.b16 %v1658, %v1658
  %v1675 = vpack.c.b16 %v1659, %v1659
  %v1676 = vpack.c.b16 %v1660, %v1660
  %v1677 = vpack.c.b16 %v1661, %v1661
  %v1678 = vpack.c.b16 %v1662, %v1662
  %v1679 = vpack.c.b16 %v1663, %v1663
  %v1680 = vpack.c.b16 %v1664, %v1664
  %v1681 = vpack.c.b16 %v1665, %v1665
  %v1682 = vpack.c.b16 %v1666, %v1666
  %v1683 = vpack.c.b16 %v1667, %v1667
  %v1684 = vpack.c.b16 %v1668, %v1668
  %1701 = vst [vmem:[%s5 + $0x40] sm:$0xf] %v1669
  %1702 = vst [vmem:[%s5 + $0x44] sm:$0xf] %v1670
  %1703 = vst [vmem:[%s5 + $0x48] sm:$0xf] %v1671
  %1704 = vst [vmem:[%s5 + $0x4c] sm:$0xf] %v1672
  %1705 = vst [vmem:[%s5 + $0x50] sm:$0xf] %v1673
  %1706 = vst [vmem:[%s5 + $0x54] sm:$0xf] %v1674
  %1707 = vst [vmem:[%s5 + $0x58] sm:$0xf] %v1675
  %1708 = vst [vmem:[%s5 + $0x5c] sm:$0xf] %v1676
  %1709 = vst [vmem:[%s5 + $0x60] sm:$0xf] %v1677
  %1710 = vst [vmem:[%s5 + $0x64] sm:$0xf] %v1678
  %1711 = vst [vmem:[%s5 + $0x68] sm:$0xf] %v1679
  %1712 = vst [vmem:[%s5 + $0x6c] sm:$0xf] %v1680
  %1713 = vst [vmem:[%s5 + $0x70] sm:$0xf] %v1681
  %1714 = vst [vmem:[%s5 + $0x74] sm:$0xf] %v1682
  %1715 = vst [vmem:[%s5 + $0x78] sm:$0xf] %v1683
  %1716 = vst [vmem:[%s5 + $0x7c] sm:$0xf] %v1684
  %v1717 = vld [vmem:[#allocation2 + $0x100] sm:$0xff]
  %v1718 = vld [vmem:[#allocation2 + $0x108] sm:$0xff]
  %v1719 = vld [vmem:[#allocation2 + $0x110] sm:$0xff]
  %v1720 = vld [vmem:[#allocation2 + $0x118] sm:$0xff]
  %v1721 = vld [vmem:[#allocation2 + $0x120] sm:$0xff]
  %v1722 = vld [vmem:[#allocation2 + $0x128] sm:$0xff]
  %v1723 = vld [vmem:[#allocation2 + $0x130] sm:$0xff]
  %v1724 = vld [vmem:[#allocation2 + $0x138] sm:$0xff]
  %v1725 = vld [vmem:[#allocation2 + $0x140] sm:$0xff]
  %v1726 = vld [vmem:[#allocation2 + $0x148] sm:$0xff]
  %v1727 = vld [vmem:[#allocation2 + $0x150] sm:$0xff]
  %v1728 = vld [vmem:[#allocation2 + $0x158] sm:$0xff]
  %v1729 = vld [vmem:[#allocation2 + $0x160] sm:$0xff]
  %v1730 = vld [vmem:[#allocation2 + $0x168] sm:$0xff]
  %v1731 = vld [vmem:[#allocation2 + $0x170] sm:$0xff]
  %v1732 = vld [vmem:[#allocation2 + $0x178] sm:$0xff]
  %v1733 = vmul.f32 %v1717, %v1373
  %v1734 = vmul.f32 %v1718, %v1373
  %v1735 = vmul.f32 %v1719, %v1373
  %v1736 = vmul.f32 %v1720, %v1373
  %v1737 = vmul.f32 %v1721, %v1373
  %v1738 = vmul.f32 %v1722, %v1373
  %v1739 = vmul.f32 %v1723, %v1373
  %v1740 = vmul.f32 %v1724, %v1373
  %v1741 = vmul.f32 %v1725, %v1373
  %v1742 = vmul.f32 %v1726, %v1373
  %v1743 = vmul.f32 %v1727, %v1373
  %v1744 = vmul.f32 %v1728, %v1373
  %v1745 = vmul.f32 %v1729, %v1373
  %v1746 = vmul.f32 %v1730, %v1373
  %v1747 = vmul.f32 %v1731, %v1373
  %v1748 = vmul.f32 %v1732, %v1373
  %v1749 = vadd.f32 %v1733, %v1379
  %v1750 = vadd.f32 %v1734, %v1379
  %v1751 = vadd.f32 %v1735, %v1379
  %v1752 = vadd.f32 %v1736, %v1379
  %v1753 = vadd.f32 %v1737, %v1379
  %v1754 = vadd.f32 %v1738, %v1379
  %v1755 = vadd.f32 %v1739, %v1379
  %v1756 = vadd.f32 %v1740, %v1379
  %v1757 = vadd.f32 %v1741, %v1379
  %v1758 = vadd.f32 %v1742, %v1379
  %v1759 = vadd.f32 %v1743, %v1379
  %v1760 = vadd.f32 %v1744, %v1379
  %v1761 = vadd.f32 %v1745, %v1379
  %v1762 = vadd.f32 %v1746, %v1379
  %v1763 = vadd.f32 %v1747, %v1379
  %v1764 = vadd.f32 %v1748, %v1379
  %vm1765 = vcmp.ge.f32.partialorder %v1749, 0.0
  %vm1766 = vcmp.ge.f32.partialorder %v1750, 0.0
  %vm1767 = vcmp.ge.f32.partialorder %v1751, 0.0
  %vm1768 = vcmp.ge.f32.partialorder %v1752, 0.0
  %vm1769 = vcmp.ge.f32.partialorder %v1753, 0.0
  %vm1770 = vcmp.ge.f32.partialorder %v1754, 0.0
  %vm1771 = vcmp.ge.f32.partialorder %v1755, 0.0
  %vm1772 = vcmp.ge.f32.partialorder %v1756, 0.0
  %vm1773 = vcmp.ge.f32.partialorder %v1757, 0.0
  %vm1774 = vcmp.ge.f32.partialorder %v1758, 0.0
  %vm1775 = vcmp.ge.f32.partialorder %v1759, 0.0
  %vm1776 = vcmp.ge.f32.partialorder %v1760, 0.0
  %vm1777 = vcmp.ge.f32.partialorder %v1761, 0.0
  %vm1778 = vcmp.ge.f32.partialorder %v1762, 0.0
  %vm1779 = vcmp.ge.f32.partialorder %v1763, 0.0
  %vm1780 = vcmp.ge.f32.partialorder %v1764, 0.0
  %v1781 = vmul.f32 %v1749, 0.2
  %v1782 = vmul.f32 %v1750, 0.2
  %v1783 = vmul.f32 %v1751, 0.2
  %v1784 = vmul.f32 %v1752, 0.2
  %v1785 = vmul.f32 %v1753, 0.2
  %v1786 = vmul.f32 %v1754, 0.2
  %v1787 = vmul.f32 %v1755, 0.2
  %v1788 = vmul.f32 %v1756, 0.2
  %v1789 = vmul.f32 %v1757, 0.2
  %v1790 = vmul.f32 %v1758, 0.2
  %v1791 = vmul.f32 %v1759, 0.2
  %v1792 = vmul.f32 %v1760, 0.2
  %v1793 = vmul.f32 %v1761, 0.2
  %v1794 = vmul.f32 %v1762, 0.2
  %v1795 = vmul.f32 %v1763, 0.2
  %v1796 = vmul.f32 %v1764, 0.2
  %v1797 = vsel %vm1765, %v1749, %v1781
  %v1798 = vsel %vm1766, %v1750, %v1782
  %v1799 = vsel %vm1767, %v1751, %v1783
  %v1800 = vsel %vm1768, %v1752, %v1784
  %v1801 = vsel %vm1769, %v1753, %v1785
  %v1802 = vsel %vm1770, %v1754, %v1786
  %v1803 = vsel %vm1771, %v1755, %v1787
  %v1804 = vsel %vm1772, %v1756, %v1788
  %v1805 = vsel %vm1773, %v1757, %v1789
  %v1806 = vsel %vm1774, %v1758, %v1790
  %v1807 = vsel %vm1775, %v1759, %v1791
  %v1808 = vsel %vm1776, %v1760, %v1792
  %v1809 = vsel %vm1777, %v1761, %v1793
  %v1810 = vsel %vm1778, %v1762, %v1794
  %v1811 = vsel %vm1779, %v1763, %v1795
  %v1812 = vsel %vm1780, %v1764, %v1796
  %v1813 = vpack.c.bf16 %v1798, %v1797
  %v1814 = vpack.c.bf16 %v1800, %v1799
  %v1815 = vpack.c.bf16 %v1802, %v1801
  %v1816 = vpack.c.bf16 %v1804, %v1803
  %v1817 = vpack.c.bf16 %v1806, %v1805
  %v1818 = vpack.c.bf16 %v1808, %v1807
  %v1819 = vpack.c.bf16 %v1810, %v1809
  %v1820 = vpack.c.bf16 %v1812, %v1811
  %v1829 = vunpack.c.l.b16 %v1813
  %v1830 = vunpack.c.h.b16 %v1813
  %v1831 = vunpack.c.l.b16 %v1814
  %v1832 = vunpack.c.h.b16 %v1814
  %v1833 = vunpack.c.l.b16 %v1815
  %v1834 = vunpack.c.h.b16 %v1815
  %v1835 = vunpack.c.l.b16 %v1816
  %v1836 = vunpack.c.h.b16 %v1816
  %v1837 = vunpack.c.l.b16 %v1817
  %v1838 = vunpack.c.h.b16 %v1817
  %v1839 = vunpack.c.l.b16 %v1818
  %v1840 = vunpack.c.h.b16 %v1818
  %v1841 = vunpack.c.l.b16 %v1819
  %v1842 = vunpack.c.h.b16 %v1819
  %v1843 = vunpack.c.l.b16 %v1820
  %v1844 = vunpack.c.h.b16 %v1820
  %v1845 = vpack.c.b16 %v1829, %v1829
  %v1846 = vpack.c.b16 %v1830, %v1830
  %v1847 = vpack.c.b16 %v1831, %v1831
  %v1848 = vpack.c.b16 %v1832, %v1832
  %v1849 = vpack.c.b16 %v1833, %v1833
  %v1850 = vpack.c.b16 %v1834, %v1834
  %v1851 = vpack.c.b16 %v1835, %v1835
  %v1852 = vpack.c.b16 %v1836, %v1836
  %v1853 = vpack.c.b16 %v1837, %v1837
  %v1854 = vpack.c.b16 %v1838, %v1838
  %v1855 = vpack.c.b16 %v1839, %v1839
  %v1856 = vpack.c.b16 %v1840, %v1840
  %v1857 = vpack.c.b16 %v1841, %v1841
  %v1858 = vpack.c.b16 %v1842, %v1842
  %v1859 = vpack.c.b16 %v1843, %v1843
  %v1860 = vpack.c.b16 %v1844, %v1844
  %1877 = vst [vmem:[%s5 + $0x80] sm:$0xf] %v1845
  %1878 = vst [vmem:[%s5 + $0x84] sm:$0xf] %v1846
  %1879 = vst [vmem:[%s5 + $0x88] sm:$0xf] %v1847
  %1880 = vst [vmem:[%s5 + $0x8c] sm:$0xf] %v1848
  %1881 = vst [vmem:[%s5 + $0x90] sm:$0xf] %v1849
  %1882 = vst [vmem:[%s5 + $0x94] sm:$0xf] %v1850
  %1883 = vst [vmem:[%s5 + $0x98] sm:$0xf] %v1851
  %1884 = vst [vmem:[%s5 + $0x9c] sm:$0xf] %v1852
  %1885 = vst [vmem:[%s5 + $0xa0] sm:$0xf] %v1853
  %1886 = vst [vmem:[%s5 + $0xa4] sm:$0xf] %v1854
  %1887 = vst [vmem:[%s5 + $0xa8] sm:$0xf] %v1855
  %1888 = vst [vmem:[%s5 + $0xac] sm:$0xf] %v1856
  %1889 = vst [vmem:[%s5 + $0xb0] sm:$0xf] %v1857
  %1890 = vst [vmem:[%s5 + $0xb4] sm:$0xf] %v1858
  %1891 = vst [vmem:[%s5 + $0xb8] sm:$0xf] %v1859
  %1892 = vst [vmem:[%s5 + $0xbc] sm:$0xf] %v1860
  %v1893 = vld [vmem:[#allocation2 + $0x180] sm:$0xff]
  %v1894 = vld [vmem:[#allocation2 + $0x188] sm:$0xff]
  %v1895 = vld [vmem:[#allocation2 + $0x190] sm:$0xff]
  %v1896 = vld [vmem:[#allocation2 + $0x198] sm:$0xff]
  %v1897 = vld [vmem:[#allocation2 + $0x1a0] sm:$0xff]
  %v1898 = vld [vmem:[#allocation2 + $0x1a8] sm:$0xff]
  %v1899 = vld [vmem:[#allocation2 + $0x1b0] sm:$0xff]
  %v1900 = vld [vmem:[#allocation2 + $0x1b8] sm:$0xff]
  %v1901 = vld [vmem:[#allocation2 + $0x1c0] sm:$0xff]
  %v1902 = vld [vmem:[#allocation2 + $0x1c8] sm:$0xff]
  %v1903 = vld [vmem:[#allocation2 + $0x1d0] sm:$0xff]
  %v1904 = vld [vmem:[#allocation2 + $0x1d8] sm:$0xff]
  %v1905 = vld [vmem:[#allocation2 + $0x1e0] sm:$0xff]
  %v1906 = vld [vmem:[#allocation2 + $0x1e8] sm:$0xff]
  %v1907 = vld [vmem:[#allocation2 + $0x1f0] sm:$0xff]
  %v1908 = vld [vmem:[#allocation2 + $0x1f8] sm:$0xff]
  %v1909 = vmul.f32 %v1893, %v1373
  %v1910 = vmul.f32 %v1894, %v1373
  %v1911 = vmul.f32 %v1895, %v1373
  %v1912 = vmul.f32 %v1896, %v1373
  %v1913 = vmul.f32 %v1897, %v1373
  %v1914 = vmul.f32 %v1898, %v1373
  %v1915 = vmul.f32 %v1899, %v1373
  %v1916 = vmul.f32 %v1900, %v1373
  %v1917 = vmul.f32 %v1901, %v1373
  %v1918 = vmul.f32 %v1902, %v1373
  %v1919 = vmul.f32 %v1903, %v1373
  %v1920 = vmul.f32 %v1904, %v1373
  %v1921 = vmul.f32 %v1905, %v1373
  %v1922 = vmul.f32 %v1906, %v1373
  %v1923 = vmul.f32 %v1907, %v1373
  %v1924 = vmul.f32 %v1908, %v1373
  %v1925 = vadd.f32 %v1909, %v1379
  %v1926 = vadd.f32 %v1910, %v1379
  %v1927 = vadd.f32 %v1911, %v1379
  %v1928 = vadd.f32 %v1912, %v1379
  %v1929 = vadd.f32 %v1913, %v1379
  %v1930 = vadd.f32 %v1914, %v1379
  %v1931 = vadd.f32 %v1915, %v1379
  %v1932 = vadd.f32 %v1916, %v1379
  %v1933 = vadd.f32 %v1917, %v1379
  %v1934 = vadd.f32 %v1918, %v1379
  %v1935 = vadd.f32 %v1919, %v1379
  %v1936 = vadd.f32 %v1920, %v1379
  %v1937 = vadd.f32 %v1921, %v1379
  %v1938 = vadd.f32 %v1922, %v1379
  %v1939 = vadd.f32 %v1923, %v1379
  %v1940 = vadd.f32 %v1924, %v1379
  %vm1941 = vcmp.ge.f32.partialorder %v1925, 0.0
  %vm1942 = vcmp.ge.f32.partialorder %v1926, 0.0
  %vm1943 = vcmp.ge.f32.partialorder %v1927, 0.0
  %vm1944 = vcmp.ge.f32.partialorder %v1928, 0.0
  %vm1945 = vcmp.ge.f32.partialorder %v1929, 0.0
  %vm1946 = vcmp.ge.f32.partialorder %v1930, 0.0
  %vm1947 = vcmp.ge.f32.partialorder %v1931, 0.0
  %vm1948 = vcmp.ge.f32.partialorder %v1932, 0.0
  %vm1949 = vcmp.ge.f32.partialorder %v1933, 0.0
  %vm1950 = vcmp.ge.f32.partialorder %v1934, 0.0
  %vm1951 = vcmp.ge.f32.partialorder %v1935, 0.0
  %vm1952 = vcmp.ge.f32.partialorder %v1936, 0.0
  %vm1953 = vcmp.ge.f32.partialorder %v1937, 0.0
  %vm1954 = vcmp.ge.f32.partialorder %v1938, 0.0
  %vm1955 = vcmp.ge.f32.partialorder %v1939, 0.0
  %vm1956 = vcmp.ge.f32.partialorder %v1940, 0.0
  %v1957 = vmul.f32 %v1925, 0.2
  %v1958 = vmul.f32 %v1926, 0.2
  %v1959 = vmul.f32 %v1927, 0.2
  %v1960 = vmul.f32 %v1928, 0.2
  %v1961 = vmul.f32 %v1929, 0.2
  %v1962 = vmul.f32 %v1930, 0.2
  %v1963 = vmul.f32 %v1931, 0.2
  %v1964 = vmul.f32 %v1932, 0.2
  %v1965 = vmul.f32 %v1933, 0.2
  %v1966 = vmul.f32 %v1934, 0.2
  %v1967 = vmul.f32 %v1935, 0.2
  %v1968 = vmul.f32 %v1936, 0.2
  %v1969 = vmul.f32 %v1937, 0.2
  %v1970 = vmul.f32 %v1938, 0.2
  %v1971 = vmul.f32 %v1939, 0.2
  %v1972 = vmul.f32 %v1940, 0.2
  %v1973 = vsel %vm1941, %v1925, %v1957
  %v1974 = vsel %vm1942, %v1926, %v1958
  %v1975 = vsel %vm1943, %v1927, %v1959
  %v1976 = vsel %vm1944, %v1928, %v1960
  %v1977 = vsel %vm1945, %v1929, %v1961
  %v1978 = vsel %vm1946, %v1930, %v1962
  %v1979 = vsel %vm1947, %v1931, %v1963
  %v1980 = vsel %vm1948, %v1932, %v1964
  %v1981 = vsel %vm1949, %v1933, %v1965
  %v1982 = vsel %vm1950, %v1934, %v1966
  %v1983 = vsel %vm1951, %v1935, %v1967
  %v1984 = vsel %vm1952, %v1936, %v1968
  %v1985 = vsel %vm1953, %v1937, %v1969
  %v1986 = vsel %vm1954, %v1938, %v1970
  %v1987 = vsel %vm1955, %v1939, %v1971
  %v1988 = vsel %vm1956, %v1940, %v1972
  %v1989 = vpack.c.bf16 %v1974, %v1973
  %v1990 = vpack.c.bf16 %v1976, %v1975
  %v1991 = vpack.c.bf16 %v1978, %v1977
  %v1992 = vpack.c.bf16 %v1980, %v1979
  %v1993 = vpack.c.bf16 %v1982, %v1981
  %v1994 = vpack.c.bf16 %v1984, %v1983
  %v1995 = vpack.c.bf16 %v1986, %v1985
  %v1996 = vpack.c.bf16 %v1988, %v1987
  %v2005 = vunpack.c.l.b16 %v1989
  %v2006 = vunpack.c.h.b16 %v1989
  %v2007 = vunpack.c.l.b16 %v1990
  %v2008 = vunpack.c.h.b16 %v1990
  %v2009 = vunpack.c.l.b16 %v1991
  %v2010 = vunpack.c.h.b16 %v1991
  %v2011 = vunpack.c.l.b16 %v1992
  %v2012 = vunpack.c.h.b16 %v1992
  %v2013 = vunpack.c.l.b16 %v1993
  %v2014 = vunpack.c.h.b16 %v1993
  %v2015 = vunpack.c.l.b16 %v1994
  %v2016 = vunpack.c.h.b16 %v1994
  %v2017 = vunpack.c.l.b16 %v1995
  %v2018 = vunpack.c.h.b16 %v1995
  %v2019 = vunpack.c.l.b16 %v1996
  %v2020 = vunpack.c.h.b16 %v1996
  %v2021 = vpack.c.b16 %v2005, %v2005
  %v2022 = vpack.c.b16 %v2006, %v2006
  %v2023 = vpack.c.b16 %v2007, %v2007
  %v2024 = vpack.c.b16 %v2008, %v2008
  %v2025 = vpack.c.b16 %v2009, %v2009
  %v2026 = vpack.c.b16 %v2010, %v2010
  %v2027 = vpack.c.b16 %v2011, %v2011
  %v2028 = vpack.c.b16 %v2012, %v2012
  %v2029 = vpack.c.b16 %v2013, %v2013
  %v2030 = vpack.c.b16 %v2014, %v2014
  %v2031 = vpack.c.b16 %v2015, %v2015
  %v2032 = vpack.c.b16 %v2016, %v2016
  %v2033 = vpack.c.b16 %v2017, %v2017
  %v2034 = vpack.c.b16 %v2018, %v2018
  %v2035 = vpack.c.b16 %v2019, %v2019
  %v2036 = vpack.c.b16 %v2020, %v2020
  %2053 = vst [vmem:[%s5 + $0xc0] sm:$0xf] %v2021
  %2054 = vst [vmem:[%s5 + $0xc4] sm:$0xf] %v2022
  %2055 = vst [vmem:[%s5 + $0xc8] sm:$0xf] %v2023
  %2056 = vst [vmem:[%s5 + $0xcc] sm:$0xf] %v2024
  %2057 = vst [vmem:[%s5 + $0xd0] sm:$0xf] %v2025
  %2058 = vst [vmem:[%s5 + $0xd4] sm:$0xf] %v2026
  %2059 = vst [vmem:[%s5 + $0xd8] sm:$0xf] %v2027
  %2060 = vst [vmem:[%s5 + $0xdc] sm:$0xf] %v2028
  %2061 = vst [vmem:[%s5 + $0xe0] sm:$0xf] %v2029
  %2062 = vst [vmem:[%s5 + $0xe4] sm:$0xf] %v2030
  %2063 = vst [vmem:[%s5 + $0xe8] sm:$0xf] %v2031
  %2064 = vst [vmem:[%s5 + $0xec] sm:$0xf] %v2032
  %2065 = vst [vmem:[%s5 + $0xf0] sm:$0xf] %v2033
  %2066 = vst [vmem:[%s5 + $0xf4] sm:$0xf] %v2034
  %2067 = vst [vmem:[%s5 + $0xf8] sm:$0xf] %v2035
  %2068 = vst [vmem:[%s5 + $0xfc] sm:$0xf] %v2036
  // Predicated region
  $region22: #{fan_cos_forward.4} parent=0 // pred_check
    _
  $region23: #{fan_cos_forward.4} parent=0 // pred_check_branch
    %2070 = sbr.rel (0) target = $region25
  $region24: #{fan_cos_forward.4} parent=0 // pred_region
    _
  $region25: #{fan_cos_forward.4} parent=0 // pred_fallthru
    _
  // Predicated region
  $region26: #{fan_cos_forward.4} parent=0 // pred_check
    _
  $region27: #{fan_cos_forward.4} parent=0 // pred_check_branch
    %2072 = sbr.rel (0) target = $region29
  $region28: #{fan_cos_forward.4} parent=0 // pred_region
    _
  $region29: #{fan_cos_forward.4} parent=0 // pred_fallthru
    _

// kernel: fan_cos_forward.5
$region0: #{fan_cos_forward.5}
  #allocation0 [shape = 'u32[]', space=smem, size = 0x4, offset = 0x4, fixed_abs, tag = 'smem constant byte address 0x4 - core index']
  #allocation1 [shape = 'u32[144,128]{1,0:T(1,128)}', space=vmem, size = 0x12000, scoped, tag = 'internal scratch']
  #allocation2 [shape = 'f32[128,128]{1,0:T(8,128)}', space=vmem, size = 0x10000, scoped, tag = 'scratch operand']
  %s0 = inlined_call_operand.vmem [shape: bf16[128,72], index: 0, kind: input, shape index: {}]
  %s1 = inlined_call_operand.vmem [shape: bf16[72,128], index: 1, kind: input, shape index: {}]
  %s2 = inlined_call_operand.vmem [shape: f32[1,128], index: 2, kind: input, shape index: {}]
  %s3 = inlined_call_operand.vmem [shape: f32[1,128], index: 3, kind: input, shape index: {}]
  %s4 = inlined_call_operand.vmem [shape: f32[128,128], index: 4, kind: input, shape index: {}]
  %s5 = inlined_call_operand.vmem [shape: bf16[128,128], index: 5, kind: output, shape index: {}]
  %s6 = sld [smem:[#allocation0]]
  $region30: #{fan_cos_forward.5} parent=0
    _
  %s8 = ssub.s32 1, %s6
  %s9 = scalar_select 0, %s8, %s6
  // Predicated region
  $region2: #{fan_cos_forward.5} parent=0 // pred_check
    _
  $region3: #{fan_cos_forward.5} parent=0 // pred_check_branch
    %11 = sbr.rel (0) target = $region5
  $region4: #{fan_cos_forward.5} parent=0 // pred_region
    _
  $region5: #{fan_cos_forward.5} parent=0 // pred_fallthru
    _
  // Predicated region
  $region6: #{fan_cos_forward.5} parent=0 // pred_check
    _
  $region7: #{fan_cos_forward.5} parent=0 // pred_check_branch
    %13 = sbr.rel (0) target = $region9
  $region8: #{fan_cos_forward.5} parent=0 // pred_region
    _
  $region9: #{fan_cos_forward.5} parent=0 // pred_fallthru
    _
  // Predicated region
  $region10: #{fan_cos_forward.5} parent=0 // pred_check
    _
  $region11: #{fan_cos_forward.5} parent=0 // pred_check_branch
    %15 = sbr.rel (0) target = $region13
  $region12: #{fan_cos_forward.5} parent=0 // pred_region
    _
  $region13: #{fan_cos_forward.5} parent=0 // pred_fallthru
    _
  // Predicated region
  $region14: #{fan_cos_forward.5} parent=0 // pred_check
    _
  $region15: #{fan_cos_forward.5} parent=0 // pred_check_branch
    %17 = sbr.rel (0) target = $region17
  $region16: #{fan_cos_forward.5} parent=0 // pred_region
    _
  $region17: #{fan_cos_forward.5} parent=0 // pred_fallthru
    _
  // Predicated region
  $region18: #{fan_cos_forward.5} parent=0 // pred_check
    _
  $region19: #{fan_cos_forward.5} parent=0 // pred_check_branch
    %19 = sbr.rel (0) target = $region21
  $region20: #{fan_cos_forward.5} parent=0 // pred_region
    _
  $region21: #{fan_cos_forward.5} parent=0 // pred_fallthru
    _
  %v21 = vld [vmem:[%s1] sm:$0xf]
  %v22 = vld [vmem:[%s1 + $0x4] sm:$0xf]
  %v23 = vld [vmem:[%s1 + $0x8] sm:$0xf]
  %v24 = vld [vmem:[%s1 + $0xc] sm:$0xf]
  %v25 = vld [vmem:[%s1 + $0x10] sm:$0xf]
  %v26 = vld [vmem:[%s1 + $0x14] sm:$0xf]
  %v27 = vld [vmem:[%s1 + $0x18] sm:$0xf]
  %v28 = vld [vmem:[%s1 + $0x1c] sm:$0xf]
  %v29 = vld [vmem:[%s1 + $0x20] sm:$0xf]
  %v30 = vld [vmem:[%s4] sm:$0xff]
  %v31 = vld [vmem:[%s4 + $0x8] sm:$0xff]
  %v32 = vld [vmem:[%s4 + $0x10] sm:$0xff]
  %v33 = vld [vmem:[%s4 + $0x18] sm:$0xff]
  %v34 = vld [vmem:[%s4 + $0x20] sm:$0xff]
  %v35 = vld [vmem:[%s4 + $0x28] sm:$0xff]
  %v36 = vld [vmem:[%s4 + $0x30] sm:$0xff]
  %v37 = vld [vmem:[%s4 + $0x38] sm:$0xff]
  %v38 = vld [vmem:[%s4 + $0x40] sm:$0xff]
  %v39 = vld [vmem:[%s4 + $0x48] sm:$0xff]
  %v40 = vld [vmem:[%s4 + $0x50] sm:$0xff]
  %v41 = vld [vmem:[%s4 + $0x58] sm:$0xff]
  %v42 = vld [vmem:[%s4 + $0x60] sm:$0xff]
  %v43 = vld [vmem:[%s4 + $0x68] sm:$0xff]
  %v44 = vld [vmem:[%s4 + $0x70] sm:$0xff]
  %v45 = vld [vmem:[%s4 + $0x78] sm:$0xff]
  %v46 = vld [vmem:[%s0] sm:$0xf]
  %v47 = vld [vmem:[%s0 + $0x4] sm:$0xf]
  %v48 = vld [vmem:[%s0 + $0x8] sm:$0xf]
  %v49 = vld [vmem:[%s0 + $0xc] sm:$0xf]
  %v50 = vld [vmem:[%s0 + $0x10] sm:$0xf]
  %v51 = vld [vmem:[%s0 + $0x14] sm:$0xf]
  %v52 = vld [vmem:[%s0 + $0x18] sm:$0xf]
  %v53 = vld [vmem:[%s0 + $0x1c] sm:$0xf]
  %v54 = vld [vmem:[%s0 + $0x20] sm:$0xf]
  %v55 = vld [vmem:[%s0 + $0x24] sm:$0xf]
  %v56 = vld [vmem:[%s0 + $0x28] sm:$0xf]
  %v57 = vld [vmem:[%s0 + $0x2c] sm:$0xf]
  %v58 = vld [vmem:[%s0 + $0x30] sm:$0xf]
  %v59 = vld [vmem:[%s0 + $0x34] sm:$0xf]
  %v60 = vld [vmem:[%s0 + $0x38] sm:$0xf]
  %v61 = vld [vmem:[%s0 + $0x3c] sm:$0xf]
  %v78 = vunpack.c.l.b16 %v46
  %v79 = vunpack.c.l.b16 %v47
  %v80 = vunpack.c.l.b16 %v48
  %v81 = vunpack.c.l.b16 %v49
  %v82 = vunpack.c.l.b16 %v50
  %v83 = vunpack.c.l.b16 %v51
  %v84 = vunpack.c.l.b16 %v52
  %v85 = vunpack.c.l.b16 %v53
  %v86 = vunpack.c.l.b16 %v54
  %v87 = vunpack.c.l.b16 %v55
  %v88 = vunpack.c.l.b16 %v56
  %v89 = vunpack.c.l.b16 %v57
  %v90 = vunpack.c.l.b16 %v58
  %v91 = vunpack.c.l.b16 %v59
  %v92 = vunpack.c.l.b16 %v60
  %v93 = vunpack.c.l.b16 %v61
  %v94 = vpack.c.b16 %v79, %v78
  %v95 = vpack.c.b16 %v81, %v80
  %v96 = vpack.c.b16 %v83, %v82
  %v97 = vpack.c.b16 %v85, %v84
  %v98 = vpack.c.b16 %v87, %v86
  %v99 = vpack.c.b16 %v89, %v88
  %v100 = vpack.c.b16 %v91, %v90
  %v101 = vpack.c.b16 %v93, %v92
  %v111 = vunpack.c.l.b16 %v21
  %v112 = vunpack.c.l.b16 %v22
  %v113 = vunpack.c.l.b16 %v23
  %v114 = vunpack.c.l.b16 %v24
  %v115 = vunpack.c.l.b16 %v25
  %v116 = vunpack.c.l.b16 %v26
  %v117 = vunpack.c.l.b16 %v27
  %v118 = vunpack.c.l.b16 %v28
  %v119 = vunpack.c.l.b16 %v29
  %v120 = vpack.c.b16 %v112, %v111
  %v121 = vpack.c.b16 %v114, %v113
  %v122 = vpack.c.b16 %v116, %v115
  %v123 = vpack.c.b16 %v118, %v117
  %v124 = vpack.c.b16 %v119, %v119
  %vm129 = vcmask 588800
  %v131 = vsel %vm129, %v94, 0
  %v134 = vsel %vm129, %v95, 0
  %v137 = vsel %vm129, %v96, 0
  %v140 = vsel %vm129, %v97, 0
  %v143 = vsel %vm129, %v98, 0
  %v146 = vsel %vm129, %v99, 0
  %v149 = vsel %vm129, %v100, 0
  %v152 = vsel %vm129, %v101, 0
  %vm154 = vcmask 1043456
  %v156 = vsel %vm154, %v124, 0
  %158 = vmatprep.subr.bf16.mxu0 0
  %159 = vmatpush1.bf16.msra.mxu0 %v120
  %160 = vmatprep.subr.bf16.mxu0 0
  %161 = vmatpush1.bf16.msra.mxu0 %v121
  %162 = vmatprep.subr.bf16.mxu0 0
  %163 = vmatpush1.bf16.msra.mxu0 %v122
  %164 = vmatprep.subr.bf16.mxu0 0
  %165 = vmatpush1.bf16.msra.mxu0 %v123
  %166 = vmatprep.subr.bf16.mxu0 0
  %167 = vmatpush1.bf16.msra.mxu0 %v156
  %168 = vmatprep.subr.bf16.mxu0 0
  %169 = vmatpush1.bf16.msra.mxu0 0
  %170 = vmatprep.subr.bf16.mxu0 0
  %171 = vmatpush1.bf16.msra.mxu0 0
  %172 = vmatprep.subr.bf16.mxu0 0
  %173 = vmatpush1.bf16.msra.mxu0 0
  %174 = vmatprep.subr.bf16.mxu0 0
  %175 = vmatpush1.bf16.msra.mxu0 0
  %176 = vmatprep.subr.bf16.mxu0 0
  %177 = vmatpush1.bf16.msra.mxu0 0
  %178 = vmatprep.subr.bf16.mxu0 0
  %179 = vmatpush1.bf16.msra.mxu0 0
  %180 = vmatprep.subr.bf16.mxu0 0
  %181 = vmatpush1.bf16.msra.mxu0 0
  %182 = vmatprep.subr.bf16.mxu0 0
  %183 = vmatpush1.bf16.msra.mxu0 0
  %184 = vmatprep.subr.bf16.mxu0 0
  %185 = vmatpush1.bf16.msra.mxu0 0
  %186 = vmatprep.subr.bf16.mxu0 0
  %187 = vmatpush1.bf16.msra.mxu0 0
  %188 = vmatprep.subr.bf16.mxu0 0
  %189 = vmatpush1.bf16.msra.mxu0 0
  %190 = vmatprep.mubr.bf16.mxu0 0
  %191 = vmatmul.mubr.bf16.gmra.mrb[0].mxu0 %v131
  %v192 = vpop.f32.mrb[0].mxu0
  %v193 = vadd.f32 0.0, %v192
  %v194 = vpop.f32.mrb[0].mxu0
  %v195 = vpop.f32.mrb[0].mxu0
  %v196 = vadd.f32 0.0, %v195
  %v197 = vpop.f32.mrb[0].mxu0
  %198 = vmatprep.mubr.bf16.mxu0 0
  %199 = vmatmul.mubr.bf16.gmra.mrb[0].mxu0 %v134
  %v200 = vpop.f32.mrb[0].mxu0
  %v201 = vadd.f32 0.0, %v200
  %v202 = vpop.f32.mrb[0].mxu0
  %v203 = vpop.f32.mrb[0].mxu0
  %v204 = vadd.f32 0.0, %v203
  %v205 = vpop.f32.mrb[0].mxu0
  %206 = vmatprep.mubr.bf16.mxu0 0
  %207 = vmatmul.mubr.bf16.gmra.mrb[0].mxu0 %v137
  %v208 = vpop.f32.mrb[0].mxu0
  %v209 = vadd.f32 0.0, %v208
  %v210 = vpop.f32.mrb[0].mxu0
  %v211 = vpop.f32.mrb[0].mxu0
  %v212 = vadd.f32 0.0, %v211
  %v213 = vpop.f32.mrb[0].mxu0
  %214 = vmatprep.mubr.bf16.mxu0 0
  %215 = vmatmul.mubr.bf16.gmra.mrb[0].mxu0 %v140
  %v216 = vpop.f32.mrb[0].mxu0
  %v217 = vadd.f32 0.0, %v216
  %v218 = vpop.f32.mrb[0].mxu0
  %v219 = vpop.f32.mrb[0].mxu0
  %v220 = vadd.f32 0.0, %v219
  %v221 = vpop.f32.mrb[0].mxu0
  %222 = vmatprep.mubr.bf16.mxu0 0
  %223 = vmatmul.mubr.bf16.gmra.mrb[0].mxu0 %v143
  %v224 = vpop.f32.mrb[0].mxu0
  %v225 = vadd.f32 0.0, %v224
  %v226 = vpop.f32.mrb[0].mxu0
  %v227 = vpop.f32.mrb[0].mxu0
  %v228 = vadd.f32 0.0, %v227
  %v229 = vpop.f32.mrb[0].mxu0
  %230 = vmatprep.mubr.bf16.mxu0 0
  %231 = vmatmul.mubr.bf16.gmra.mrb[0].mxu0 %v146
  %v232 = vpop.f32.mrb[0].mxu0
  %v233 = vadd.f32 0.0, %v232
  %v234 = vpop.f32.mrb[0].mxu0
  %v235 = vpop.f32.mrb[0].mxu0
  %v236 = vadd.f32 0.0, %v235
  %v237 = vpop.f32.mrb[0].mxu0
  %238 = vmatprep.mubr.bf16.mxu0 0
  %239 = vmatmul.mubr.bf16.gmra.mrb[0].mxu0 %v149
  %v240 = vpop.f32.mrb[0].mxu0
  %v241 = vadd.f32 0.0, %v240
  %v242 = vpop.f32.mrb[0].mxu0
  %v243 = vpop.f32.mrb[0].mxu0
  %v244 = vadd.f32 0.0, %v243
  %v245 = vpop.f32.mrb[0].mxu0
  %246 = vmatprep.mubr.bf16.mxu0 0
  %247 = vmatmul.mubr.bf16.gmra.mrb[0].mxu0 %v152
  %v248 = vpop.f32.mrb[0].mxu0
  %v249 = vadd.f32 0.0, %v248
  %v250 = vpop.f32.mrb[0].mxu0
  %v251 = vpop.f32.mrb[0].mxu0
  %v252 = vadd.f32 0.0, %v251
  %v253 = vpop.f32.mrb[0].mxu0
  %254 = vdwg.mxu0
  %255 = vst [vmem:[#allocation2] sm:$0xff] %v193
  %256 = vst [vmem:[#allocation2 + $0x8] sm:$0xff] %v196
  %257 = vst [vmem:[#allocation2 + $0x10] sm:$0xff] %v201
  %258 = vst [vmem:[#allocation2 + $0x18] sm:$0xff] %v204
  %259 = vst [vmem:[#allocation2 + $0x20] sm:$0xff] %v209
  %260 = vst [vmem:[#allocation2 + $0x28] sm:$0xff] %v212
  %261 = vst [vmem:[#allocation2 + $0x30] sm:$0xff] %v217
  %262 = vst [vmem:[#allocation2 + $0x38] sm:$0xff] %v220
  %263 = vst [vmem:[#allocation2 + $0x40] sm:$0xff] %v225
  %264 = vst [vmem:[#allocation2 + $0x48] sm:$0xff] %v228
  %265 = vst [vmem:[#allocation2 + $0x50] sm:$0xff] %v233
  %266 = vst [vmem:[#allocation2 + $0x58] sm:$0xff] %v236
  %267 = vst [vmem:[#allocation2 + $0x60] sm:$0xff] %v241
  %268 = vst [vmem:[#allocation2 + $0x68] sm:$0xff] %v244
  %269 = vst [vmem:[#allocation2 + $0x70] sm:$0xff] %v249
  %270 = vst [vmem:[#allocation2 + $0x78] sm:$0xff] %v252
  %v271 = vadd.f32 %v193, %v196
  %v272 = vadd.f32 %v271, %v201
  %v273 = vadd.f32 %v272, %v204
  %v274 = vadd.f32 %v273, %v209
  %v275 = vadd.f32 %v274, %v212
  %v276 = vadd.f32 %v275, %v217
  %v277 = vadd.f32 %v276, %v220
  %v278 = vadd.f32 %v277, %v225
  %v279 = vadd.f32 %v278, %v228
  %v280 = vadd.f32 %v279, %v233
  %v281 = vadd.f32 %v280, %v236
  %v282 = vadd.f32 %v281, %v241
  %v283 = vadd.f32 %v282, %v244
  %v284 = vadd.f32 %v283, %v249
  %v285 = vadd.f32 %v284, %v252
  %v286 = vrot.slane %v285, 4
  %v287 = vadd.f32 %v285, %v286
  %v288 = vrot.slane %v287, 2
  %v289 = vadd.f32 %v287, %v288
  %v290 = vrot.slane %v289, 1
  %v291 = vadd.f32 %v289, %v290
  %v292 = vadd.f32 %v291, 0.0
  %293 = vmatprep.subr.mxu0 0.0
  %294 = vmatpush1.msra.mxu0 %v30
  %295 = vmatprep.subr.mxu0 0.0
  %296 = vmatpush1.msra.mxu0 %v31
  %297 = vmatprep.subr.mxu0 0.0
  %298 = vmatpush1.msra.mxu0 %v32
  %299 = vmatprep.subr.mxu0 0.0
  %300 = vmatpush1.msra.mxu0 %v33
  %301 = vmatprep.subr.mxu0 0.0
  %302 = vmatpush1.msra.mxu0 %v34
  %303 = vmatprep.subr.mxu0 0.0
  %304 = vmatpush1.msra.mxu0 %v35
  %305 = vmatprep.subr.mxu0 0.0
  %306 = vmatpush1.msra.mxu0 %v36
  %307 = vmatprep.subr.mxu0 0.0
  %308 = vmatpush1.msra.mxu0 %v37
  %309 = vmatprep.subr.mxu0 0.0
  %310 = vmatpush1.msra.mxu0 %v38
  %311 = vmatprep.subr.mxu0 0.0
  %312 = vmatpush1.msra.mxu0 %v39
  %313 = vmatprep.subr.mxu0 0.0
  %314 = vmatpush1.msra.mxu0 %v40
  %315 = vmatprep.subr.mxu0 0.0
  %316 = vmatpush1.msra.mxu0 %v41
  %317 = vmatprep.subr.mxu0 0.0
  %318 = vmatpush1.msra.mxu0 %v42
  %319 = vmatprep.subr.mxu0 0.0
  %320 = vmatpush1.msra.mxu0 %v43
  %321 = vmatprep.subr.mxu0 0.0
  %322 = vmatpush1.msra.mxu0 %v44
  %323 = vmatprep.subr.mxu0 0.0
  %324 = vmatpush1.msra.mxu0 %v45
  %325 = vmatprep.subr.mxu0 0.0
  %326 = vmatpush1.msra.mxu0 0.0
  %327 = vmatprep.subr.mxu0 0.0
  %328 = vmatpush1.msra.mxu0 0.0
  %329 = vmatprep.subr.mxu0 0.0
  %330 = vmatpush1.msra.mxu0 0.0
  %331 = vmatprep.subr.mxu0 0.0
  %332 = vmatpush1.msra.mxu0 0.0
  %333 = vmatprep.subr.mxu0 0.0
  %334 = vmatpush1.msra.mxu0 0.0
  %335 = vmatprep.subr.mxu0 0.0
  %336 = vmatpush1.msra.mxu0 0.0
  %337 = vmatprep.subr.mxu0 0.0
  %338 = vmatpush1.msra.mxu0 0.0
  %339 = vmatprep.subr.mxu0 0.0
  %340 = vmatpush1.msra.mxu0 0.0
  %341 = vmatprep.subr.mxu0 0.0
  %342 = vmatpush1.msra.mxu0 0.0
  %343 = vmatprep.subr.mxu0 0.0
  %344 = vmatpush1.msra.mxu0 0.0
  %345 = vmatprep.subr.mxu0 0.0
  %346 = vmatpush1.msra.mxu0 0.0
  %347 = vmatprep.subr.mxu0 0.0
  %348 = vmatpush1.msra.mxu0 0.0
  %349 = vmatprep.subr.mxu0 0.0
  %350 = vmatpush1.msra.mxu0 0.0
  %351 = vmatprep.subr.mxu0 0.0
  %352 = vmatpush1.msra.mxu0 0.0
  %353 = vmatprep.subr.mxu0 0.0
  %354 = vmatpush1.msra.mxu0 0.0
  %355 = vmatprep.subr.mxu0 0.0
  %356 = vmatpush1.msra.mxu0 0.0
  %357 = vmatprep.mubr.f32.mxu0 0.0
  %358 = vmatmul.mubr.f32.gmra.mrb[0].mxu0 %v292
  %v359 = vpop.f32.mrb[0].mxu0
  %v360 = vadd.f32 0.0, %v359
  %v361 = vpop.f32.mrb[0].mxu0
  %362 = vdwg.mxu0
  %v363 = vld [vmem:[#allocation2] sm:$0xff]
  %v364 = vld [vmem:[#allocation2 + $0x8] sm:$0xff]
  %v365 = vld [vmem:[#allocation2 + $0x10] sm:$0xff]
  %v366 = vld [vmem:[#allocation2 + $0x18] sm:$0xff]
  %v367 = vld [vmem:[#allocation2 + $0x20] sm:$0xff]
  %v368 = vld [vmem:[#allocation2 + $0x28] sm:$0xff]
  %v369 = vld [vmem:[#allocation2 + $0x30] sm:$0xff]
  %v370 = vld [vmem:[#allocation2 + $0x38] sm:$0xff]
  %v371 = vld [vmem:[#allocation2 + $0x40] sm:$0xff]
  %v372 = vld [vmem:[#allocation2 + $0x48] sm:$0xff]
  %v373 = vld [vmem:[#allocation2 + $0x50] sm:$0xff]
  %v374 = vld [vmem:[#allocation2 + $0x58] sm:$0xff]
  %v375 = vld [vmem:[#allocation2 + $0x60] sm:$0xff]
  %v376 = vld [vmem:[#allocation2 + $0x68] sm:$0xff]
  %v377 = vld [vmem:[#allocation2 + $0x70] sm:$0xff]
  %v378 = vld [vmem:[#allocation2 + $0x78] sm:$0xff]
  %v379 = vlaneseq
  %v380 = vshrl.u32 %v379, 7
  %v381 = vsub.s32 0, %v380
  %v382 = vrot.slane %v360, %v381
  %v383 = vsub.f32 %v363, %v382
  %v384 = vsub.f32 %v364, %v382
  %v385 = vsub.f32 %v365, %v382
  %v386 = vsub.f32 %v366, %v382
  %v387 = vsub.f32 %v367, %v382
  %v388 = vsub.f32 %v368, %v382
  %v389 = vsub.f32 %v369, %v382
  %v390 = vsub.f32 %v370, %v382
  %v391 = vsub.f32 %v371, %v382
  %v392 = vsub.f32 %v372, %v382
  %v393 = vsub.f32 %v373, %v382
  %v394 = vsub.f32 %v374, %v382
  %v395 = vsub.f32 %v375, %v382
  %v396 = vsub.f32 %v376, %v382
  %v397 = vsub.f32 %v377, %v382
  %v398 = vsub.f32 %v378, %v382
  %v399 = vmul.f32 %v383, %v383
  %v400 = vmul.f32 %v384, %v384
  %v401 = vmul.f32 %v385, %v385
  %v402 = vmul.f32 %v386, %v386
  %v403 = vmul.f32 %v387, %v387
  %v404 = vmul.f32 %v388, %v388
  %v405 = vmul.f32 %v389, %v389
  %v406 = vmul.f32 %v390, %v390
  %v407 = vmul.f32 %v391, %v391
  %v408 = vmul.f32 %v392, %v392
  %v409 = vmul.f32 %v393, %v393
  %v410 = vmul.f32 %v394, %v394
  %v411 = vmul.f32 %v395, %v395
  %v412 = vmul.f32 %v396, %v396
  %v413 = vmul.f32 %v397, %v397
  %v414 = vmul.f32 %v398, %v398
  %v415 = vadd.f32 %v399, %v400
  %v416 = vadd.f32 %v415, %v401
  %v417 = vadd.f32 %v416, %v402
  %v418 = vadd.f32 %v417, %v403
  %v419 = vadd.f32 %v418, %v404
  %v420 = vadd.f32 %v419, %v405
  %v421 = vadd.f32 %v420, %v406
  %v422 = vadd.f32 %v421, %v407
  %v423 = vadd.f32 %v422, %v408
  %v424 = vadd.f32 %v423, %v409
  %v425 = vadd.f32 %v424, %v410
  %v426 = vadd.f32 %v425, %v411
  %v427 = vadd.f32 %v426, %v412
  %v428 = vadd.f32 %v427, %v413
  %v429 = vadd.f32 %v428, %v414
  %v430 = vrot.slane %v429, 4
  %v431 = vadd.f32 %v429, %v430
  %v432 = vrot.slane %v431, 2
  %v433 = vadd.f32 %v431, %v432
  %v434 = vrot.slane %v433, 1
  %v435 = vadd.f32 %v433, %v434
  %v436 = vadd.f32 %v435, 0.0
  %437 = vmatprep.subr.mxu0 0.0
  %438 = vmatpush1.msra.mxu0 %v30
  %439 = vmatprep.subr.mxu0 0.0
  %440 = vmatpush1.msra.mxu0 %v31
  %441 = vmatprep.subr.mxu0 0.0
  %442 = vmatpush1.msra.mxu0 %v32
  %443 = vmatprep.subr.mxu0 0.0
  %444 = vmatpush1.msra.mxu0 %v33
  %445 = vmatprep.subr.mxu0 0.0
  %446 = vmatpush1.msra.mxu0 %v34
  %447 = vmatprep.subr.mxu0 0.0
  %448 = vmatpush1.msra.mxu0 %v35
  %449 = vmatprep.subr.mxu0 0.0
  %450 = vmatpush1.msra.mxu0 %v36
  %451 = vmatprep.subr.mxu0 0.0
  %452 = vmatpush1.msra.mxu0 %v37
  %453 = vmatprep.subr.mxu0 0.0
  %454 = vmatpush1.msra.mxu0 %v38
  %455 = vmatprep.subr.mxu0 0.0
  %456 = vmatpush1.msra.mxu0 %v39
  %457 = vmatprep.subr.mxu0 0.0
  %458 = vmatpush1.msra.mxu0 %v40
  %459 = vmatprep.subr.mxu0 0.0
  %460 = vmatpush1.msra.mxu0 %v41
  %461 = vmatprep.subr.mxu0 0.0
  %462 = vmatpush1.msra.mxu0 %v42
  %463 = vmatprep.subr.mxu0 0.0
  %464 = vmatpush1.msra.mxu0 %v43
  %465 = vmatprep.subr.mxu0 0.0
  %466 = vmatpush1.msra.mxu0 %v44
  %467 = vmatprep.subr.mxu0 0.0
  %468 = vmatpush1.msra.mxu0 %v45
  %469 = vmatprep.subr.mxu0 0.0
  %470 = vmatpush1.msra.mxu0 0.0
  %471 = vmatprep.subr.mxu0 0.0
  %472 = vmatpush1.msra.mxu0 0.0
  %473 = vmatprep.subr.mxu0 0.0
  %474 = vmatpush1.msra.mxu0 0.0
  %475 = vmatprep.subr.mxu0 0.0
  %476 = vmatpush1.msra.mxu0 0.0
  %477 = vmatprep.subr.mxu0 0.0
  %478 = vmatpush1.msra.mxu0 0.0
  %479 = vmatprep.subr.mxu0 0.0
  %480 = vmatpush1.msra.mxu0 0.0
  %481 = vmatprep.subr.mxu0 0.0
  %482 = vmatpush1.msra.mxu0 0.0
  %483 = vmatprep.subr.mxu0 0.0
  %484 = vmatpush1.msra.mxu0 0.0
  %485 = vmatprep.subr.mxu0 0.0
  %486 = vmatpush1.msra.mxu0 0.0
  %487 = vmatprep.subr.mxu0 0.0
  %488 = vmatpush1.msra.mxu0 0.0
  %489 = vmatprep.subr.mxu0 0.0
  %490 = vmatpush1.msra.mxu0 0.0
  %491 = vmatprep.subr.mxu0 0.0
  %492 = vmatpush1.msra.mxu0 0.0
  %493 = vmatprep.subr.mxu0 0.0
  %494 = vmatpush1.msra.mxu0 0.0
  %495 = vmatprep.subr.mxu0 0.0
  %496 = vmatpush1.msra.mxu0 0.0
  %497 = vmatprep.subr.mxu0 0.0
  %498 = vmatpush1.msra.mxu0 0.0
  %499 = vmatprep.subr.mxu0 0.0
  %500 = vmatpush1.msra.mxu0 0.0
  %501 = vmatprep.mubr.f32.mxu0 0.0
  %502 = vmatmul.mubr.f32.gmra.mrb[0].mxu0 %v436
  %v503 = vpop.f32.mrb[0].mxu0
  %v504 = vadd.f32 0.0, %v503
  %v505 = vpop.f32.mrb[0].mxu0
  %506 = vdwg.mxu0
  %v507 = vadd.f32 %v504, 1e-05
  %v508 = vrsqrt.pop %v507
  %v509 = vld [vmem:[%s2] sm:$0x1]
  %v510 = vmul.f32 %v509, %v508
  %v511 = vld [vmem:[%s3] sm:$0x1]
  %v512 = vmul.f32 %v360, %v510
  %v513 = vsub.f32 %v511, %v512
  %v515 = vlaneseq
  %v516 = vshrl.u32 %v515, 7
  %v517 = vsub.s32 0, %v516
  %v518 = vrot.slane %v510, %v517
  %v521 = vlaneseq
  %v522 = vshrl.u32 %v521, 7
  %v523 = vsub.s32 0, %v522
  %v524 = vrot.slane %v513, %v523
  %v526 = vmul.f32 %v363, %v518
  %v527 = vmul.f32 %v364, %v518
  %v528 = vmul.f32 %v365, %v518
  %v529 = vmul.f32 %v366, %v518
  %v530 = vmul.f32 %v367, %v518
  %v531 = vmul.f32 %v368, %v518
  %v532 = vmul.f32 %v369, %v518
  %v533 = vmul.f32 %v370, %v518
  %v534 = vmul.f32 %v371, %v518
  %v535 = vmul.f32 %v372, %v518
  %v536 = vmul.f32 %v373, %v518
  %v537 = vmul.f32 %v374, %v518
  %v538 = vmul.f32 %v375, %v518
  %v539 = vmul.f32 %v376, %v518
  %v540 = vmul.f32 %v377, %v518
  %v541 = vmul.f32 %v378, %v518
  %v542 = vadd.f32 %v526, %v524
  %v543 = vadd.f32 %v527, %v524
  %v544 = vadd.f32 %v528, %v524
  %v545 = vadd.f32 %v529, %v524
  %v546 = vadd.f32 %v530, %v524
  %v547 = vadd.f32 %v531, %v524
  %v548 = vadd.f32 %v532, %v524
  %v549 = vadd.f32 %v533, %v524
  %v550 = vadd.f32 %v534, %v524
  %v551 = vadd.f32 %v535, %v524
  %v552 = vadd.f32 %v536, %v524
  %v553 = vadd.f32 %v537, %v524
  %v554 = vadd.f32 %v538, %v524
  %v555 = vadd.f32 %v539, %v524
  %v556 = vadd.f32 %v540, %v524
  %v557 = vadd.f32 %v541, %v524
  %vm558 = vcmp.ge.f32.partialorder %v542, 0.0
  %vm559 = vcmp.ge.f32.partialorder %v543, 0.0
  %vm560 = vcmp.ge.f32.partialorder %v544, 0.0
  %vm561 = vcmp.ge.f32.partialorder %v545, 0.0
  %vm562 = vcmp.ge.f32.partialorder %v546, 0.0
  %vm563 = vcmp.ge.f32.partialorder %v547, 0.0
  %vm564 = vcmp.ge.f32.partialorder %v548, 0.0
  %vm565 = vcmp.ge.f32.partialorder %v549, 0.0
  %vm566 = vcmp.ge.f32.partialorder %v550, 0.0
  %vm567 = vcmp.ge.f32.partialorder %v551, 0.0
  %vm568 = vcmp.ge.f32.partialorder %v552, 0.0
  %vm569 = vcmp.ge.f32.partialorder %v553, 0.0
  %vm570 = vcmp.ge.f32.partialorder %v554, 0.0
  %vm571 = vcmp.ge.f32.partialorder %v555, 0.0
  %vm572 = vcmp.ge.f32.partialorder %v556, 0.0
  %vm573 = vcmp.ge.f32.partialorder %v557, 0.0
  %v574 = vmul.f32 %v542, 0.2
  %v575 = vmul.f32 %v543, 0.2
  %v576 = vmul.f32 %v544, 0.2
  %v577 = vmul.f32 %v545, 0.2
  %v578 = vmul.f32 %v546, 0.2
  %v579 = vmul.f32 %v547, 0.2
  %v580 = vmul.f32 %v548, 0.2
  %v581 = vmul.f32 %v549, 0.2
  %v582 = vmul.f32 %v550, 0.2
  %v583 = vmul.f32 %v551, 0.2
  %v584 = vmul.f32 %v552, 0.2
  %v585 = vmul.f32 %v553, 0.2
  %v586 = vmul.f32 %v554, 0.2
  %v587 = vmul.f32 %v555, 0.2
  %v588 = vmul.f32 %v556, 0.2
  %v589 = vmul.f32 %v557, 0.2
  %v590 = vsel %vm558, %v542, %v574
  %v591 = vsel %vm559, %v543, %v575
  %v592 = vsel %vm560, %v544, %v576
  %v593 = vsel %vm561, %v545, %v577
  %v594 = vsel %vm562, %v546, %v578
  %v595 = vsel %vm563, %v547, %v579
  %v596 = vsel %vm564, %v548, %v580
  %v597 = vsel %vm565, %v549, %v581
  %v598 = vsel %vm566, %v550, %v582
  %v599 = vsel %vm567, %v551, %v583
  %v600 = vsel %vm568, %v552, %v584
  %v601 = vsel %vm569, %v553, %v585
  %v602 = vsel %vm570, %v554, %v586
  %v603 = vsel %vm571, %v555, %v587
  %v604 = vsel %vm572, %v556, %v588
  %v605 = vsel %vm573, %v557, %v589
  %v606 = vpack.c.bf16 %v591, %v590
  %v607 = vpack.c.bf16 %v593, %v592
  %v608 = vpack.c.bf16 %v595, %v594
  %v609 = vpack.c.bf16 %v597, %v596
  %v610 = vpack.c.bf16 %v599, %v598
  %v611 = vpack.c.bf16 %v601, %v600
  %v612 = vpack.c.bf16 %v603, %v602
  %v613 = vpack.c.bf16 %v605, %v604
  %v622 = vunpack.c.l.b16 %v606
  %v623 = vunpack.c.h.b16 %v606
  %v624 = vunpack.c.l.b16 %v607
  %v625 = vunpack.c.h.b16 %v607
  %v626 = vunpack.c.l.b16 %v608
  %v627 = vunpack.c.h.b16 %v608
  %v628 = vunpack.c.l.b16 %v609
  %v629 = vunpack.c.h.b16 %v609
  %v630 = vunpack.c.l.b16 %v610
  %v631 = vunpack.c.h.b16 %v610
  %v632 = vunpack.c.l.b16 %v611
  %v633 = vunpack.c.h.b16 %v611
  %v634 = vunpack.c.l.b16 %v612
  %v635 = vunpack.c.h.b16 %v612
  %v636 = vunpack.c.l.b16 %v613
  %v637 = vunpack.c.h.b16 %v613
  %v638 = vpack.c.b16 %v622, %v622
  %v639 = vpack.c.b16 %v623, %v623
  %v640 = vpack.c.b16 %v624, %v624
  %v641 = vpack.c.b16 %v625, %v625
  %v642 = vpack.c.b16 %v626, %v626
  %v643 = vpack.c.b16 %v627, %v627
  %v644 = vpack.c.b16 %v628, %v628
  %v645 = vpack.c.b16 %v629, %v629
  %v646 = vpack.c.b16 %v630, %v630
  %v647 = vpack.c.b16 %v631, %v631
  %v648 = vpack.c.b16 %v632, %v632
  %v649 = vpack.c.b16 %v633, %v633
  %v650 = vpack.c.b16 %v634, %v634
  %v651 = vpack.c.b16 %v635, %v635
  %v652 = vpack.c.b16 %v636, %v636
  %v653 = vpack.c.b16 %v637, %v637
  %670 = vst [vmem:[%s5] sm:$0xf] %v638
  %671 = vst [vmem:[%s5 + $0x4] sm:$0xf] %v639
  %672 = vst [vmem:[%s5 + $0x8] sm:$0xf] %v640
  %673 = vst [vmem:[%s5 + $0xc] sm:$0xf] %v641
  %674 = vst [vmem:[%s5 + $0x10] sm:$0xf] %v642
  %675 = vst [vmem:[%s5 + $0x14] sm:$0xf] %v643
  %676 = vst [vmem:[%s5 + $0x18] sm:$0xf] %v644
  %677 = vst [vmem:[%s5 + $0x1c] sm:$0xf] %v645
  %678 = vst [vmem:[%s5 + $0x20] sm:$0xf] %v646
  %679 = vst [vmem:[%s5 + $0x24] sm:$0xf] %v647
  %680 = vst [vmem:[%s5 + $0x28] sm:$0xf] %v648
  %681 = vst [vmem:[%s5 + $0x2c] sm:$0xf] %v649
  %682 = vst [vmem:[%s5 + $0x30] sm:$0xf] %v650
  %683 = vst [vmem:[%s5 + $0x34] sm:$0xf] %v651
  %684 = vst [vmem:[%s5 + $0x38] sm:$0xf] %v652
  %685 = vst [vmem:[%s5 + $0x3c] sm:$0xf] %v653
  // Predicated region
  $region22: #{fan_cos_forward.5} parent=0 // pred_check
    _
  $region23: #{fan_cos_forward.5} parent=0 // pred_check_branch
    %687 = sbr.rel (0) target = $region25
  $region24: #{fan_cos_forward.5} parent=0 // pred_region
    _
  $region25: #{fan_cos_forward.5} parent=0 // pred_fallthru
    _
  // Predicated region
  $region26: #{fan_cos_forward.5} parent=0 // pred_check
    _
  $region27: #{fan_cos_forward.5} parent=0 // pred_check_branch
    %689 = sbr.rel (0) target = $region29
  $region28: #{fan_cos_forward.5} parent=0 // pred_region
    _
  $region29: #{fan_cos_forward.5} parent=0 // pred_fallthru
    _

// kernel: tile.13
$region0: #{tile.13}
  #allocation0 [shape = 's32[1]{0}', space=sflag, size = 0x4, scoped, tag = 'scoped memory for tile.13']
  %s0 = inlined_call_operand.vmem [shape: f32[4], index: 0, kind: input, shape index: {}]
  %s1 = inlined_call_operand.vmem [shape: f32[4,4], index: 1, kind: output, shape index: {}]
  // Predicated region
  $region2: #{tile.13} parent=0 // pred_check
    _
  $region3: #{tile.13} parent=0 // pred_check_branch
    %3 = sbr.rel (0) target = $region5
  $region4: #{tile.13} parent=0 // pred_region
    _
  $region5: #{tile.13} parent=0 // pred_fallthru
    _
  %v4 = vld [vmem:[%s0] ss:$0 sm:$0xff]
  %5 = vst [vmem:[%s1] sm:$0xf] %v4

// kernel: tile.14
$region0: #{tile.14}
  %s0 = inlined_call_operand.vmem [shape: f32[4,4], index: 0, kind: input, shape index: {}]
  %s1 = inlined_call_operand.vmem [shape: f32[16], index: 1, kind: output, shape index: {}]
  $region1: #{tile.14} parent=0
    #allocation0 [shape = 'u8[4096]{0}', space=vmem, size = 0x1000, scoped, tag = 'scoped mem for output reshape']
    #allocation1 [shape = 'u8[4096]{0}', space=vmem, size = 0x1000, scoped, tag = 'scoped mem for input reshape']
    %s3 = sshllo.u32 0, 4
    %v4 = vld [vmem:[%s0] sm:%s3]
    %5 = vst [vmem:[#allocation1] sm:%s3] %v4
    %v6 = vld [vmem:[#allocation1] sm:$0x1]
    %vm7 = vcmask 31744
    %8 = vst.msk [vmem:[#allocation0] sm:$0x1] %vm7, %v6
    %s9 = scalar_lea.vmem [#allocation1], 3
    %v10 = vld [vmem:[%s9] sm:$0x1]
    %11 = vrot.lane.b32.xlu0 %v10, 12
    %v12 = vpop.permute.xlu0 %11
    %vm13 = vcmask 130144
    %14 = vst.msk [vmem:[#allocation0] sm:$0x1] %vm13, %v12
    %s15 = scalar_lea.vmem [#allocation1], 2
    %v16 = vld [vmem:[%s15] sm:$0x1]
    %17 = vrot.lane.b32.xlu0 %v16, 8
    %v18 = vpop.permute.xlu0 %17
    %vm19 = vcmask 97344
    %20 = vst.msk [vmem:[#allocation0] sm:$0x1] %vm19, %v18
    %s21 = scalar_lea.vmem [#allocation1], 1
    %v22 = vld [vmem:[%s21] sm:$0x1]
    %23 = vrot.lane.b32.xlu0 %v22, 4
    %v24 = vpop.permute.xlu0 %23
    %vm25 = vcmask 64544
    %26 = vst.msk [vmem:[#allocation0] sm:$0x1] %vm25, %v24
    %s28 = sshllo.u32 0, 1
    %v30 = vld [vmem:[#allocation0] sm:%s28]
    %s31 = sshllo.u32 0, 1
    %32 = vst [vmem:[%s1] sm:%s31] %v30

// kernel: fan_cos_forward.6
$region0: #{fan_cos_forward.6}
  #allocation0 [shape = 'u32[]', space=smem, size = 0x4, offset = 0x4, fixed_abs, tag = 'smem constant byte address 0x4 - core index']
  #allocation1 [shape = 'u32[144,128]{1,0:T(1,128)}', space=vmem, size = 0x12000, scoped, tag = 'internal scratch']
  #allocation2 [shape = 'f32[128,128]{1,0:T(8,128)}', space=vmem, size = 0x10000, scoped, tag = 'scratch operand']
  %s0 = inlined_call_operand.vmem [shape: bf16[128,8], index: 0, kind: input, shape index: {}]
  %s1 = inlined_call_operand.vmem [shape: bf16[8,128], index: 1, kind: input, shape index: {}]
  %s2 = inlined_call_operand.vmem [shape: f32[1,128], index: 2, kind: input, shape index: {}]
  %s3 = inlined_call_operand.vmem [shape: f32[1,128], index: 3, kind: input, shape index: {}]
  %s4 = inlined_call_operand.vmem [shape: f32[128,128], index: 4, kind: input, shape index: {}]
  %s5 = inlined_call_operand.vmem [shape: bf16[128,128], index: 5, kind: output, shape index: {}]
  %s6 = sld [smem:[#allocation0]]
  $region30: #{fan_cos_forward.6} parent=0
    _
  %s8 = ssub.s32 1, %s6
  %s9 = scalar_select 0, %s8, %s6
  // Predicated region
  $region2: #{fan_cos_forward.6} parent=0 // pred_check
    _
  $region3: #{fan_cos_forward.6} parent=0 // pred_check_branch
    %11 = sbr.rel (0) target = $region5
  $region4: #{fan_cos_forward.6} parent=0 // pred_region
    _
  $region5: #{fan_cos_forward.6} parent=0 // pred_fallthru
    _
  // Predicated region
  $region6: #{fan_cos_forward.6} parent=0 // pred_check
    _
  $region7: #{fan_cos_forward.6} parent=0 // pred_check_branch
    %13 = sbr.rel (0) target = $region9
  $region8: #{fan_cos_forward.6} parent=0 // pred_region
    _
  $region9: #{fan_cos_forward.6} parent=0 // pred_fallthru
    _
  // Predicated region
  $region10: #{fan_cos_forward.6} parent=0 // pred_check
    _
  $region11: #{fan_cos_forward.6} parent=0 // pred_check_branch
    %15 = sbr.rel (0) target = $region13
  $region12: #{fan_cos_forward.6} parent=0 // pred_region
    _
  $region13: #{fan_cos_forward.6} parent=0 // pred_fallthru
    _
  // Predicated region
  $region14: #{fan_cos_forward.6} parent=0 // pred_check
    _
  $region15: #{fan_cos_forward.6} parent=0 // pred_check_branch
    %17 = sbr.rel (0) target = $region17
  $region16: #{fan_cos_forward.6} parent=0 // pred_region
    _
  $region17: #{fan_cos_forward.6} parent=0 // pred_fallthru
    _
  // Predicated region
  $region18: #{fan_cos_forward.6} parent=0 // pred_check
    _
  $region19: #{fan_cos_forward.6} parent=0 // pred_check_branch
    %19 = sbr.rel (0) target = $region21
  $region20: #{fan_cos_forward.6} parent=0 // pred_region
    _
  $region21: #{fan_cos_forward.6} parent=0 // pred_fallthru
    _
  %v21 = vld [vmem:[%s1] sm:$0xf]
  %v22 = vld [vmem:[%s4] sm:$0xff]
  %v23 = vld [vmem:[%s4 + $0x8] sm:$0xff]
  %v24 = vld [vmem:[%s4 + $0x10] sm:$0xff]
  %v25 = vld [vmem:[%s4 + $0x18] sm:$0xff]
  %v26 = vld [vmem:[%s4 + $0x20] sm:$0xff]
  %v27 = vld [vmem:[%s4 + $0x28] sm:$0xff]
  %v28 = vld [vmem:[%s4 + $0x30] sm:$0xff]
  %v29 = vld [vmem:[%s4 + $0x38] sm:$0xff]
  %v30 = vld [vmem:[%s4 + $0x40] sm:$0xff]
  %v31 = vld [vmem:[%s4 + $0x48] sm:$0xff]
  %v32 = vld [vmem:[%s4 + $0x50] sm:$0xff]
  %v33 = vld [vmem:[%s4 + $0x58] sm:$0xff]
  %v34 = vld [vmem:[%s4 + $0x60] sm:$0xff]
  %v35 = vld [vmem:[%s4 + $0x68] sm:$0xff]
  %v36 = vld [vmem:[%s4 + $0x70] sm:$0xff]
  %v37 = vld [vmem:[%s4 + $0x78] sm:$0xff]
  %v38 = vld [vmem:[%s0] sm:$0xf]
  %v39 = vld [vmem:[%s0 + $0x4] sm:$0xf]
  %v40 = vld [vmem:[%s0 + $0x8] sm:$0xf]
  %v41 = vld [vmem:[%s0 + $0xc] sm:$0xf]
  %v42 = vld [vmem:[%s0 + $0x10] sm:$0xf]
  %v43 = vld [vmem:[%s0 + $0x14] sm:$0xf]
  %v44 = vld [vmem:[%s0 + $0x18] sm:$0xf]
  %v45 = vld [vmem:[%s0 + $0x1c] sm:$0xf]
  %v46 = vld [vmem:[%s0 + $0x20] sm:$0xf]
  %v47 = vld [vmem:[%s0 + $0x24] sm:$0xf]
  %v48 = vld [vmem:[%s0 + $0x28] sm:$0xf]
  %v49 = vld [vmem:[%s0 + $0x2c] sm:$0xf]
  %v50 = vld [vmem:[%s0 + $0x30] sm:$0xf]
  %v51 = vld [vmem:[%s0 + $0x34] sm:$0xf]
  %v52 = vld [vmem:[%s0 + $0x38] sm:$0xf]
  %v53 = vld [vmem:[%s0 + $0x3c] sm:$0xf]
  %v70 = vunpack.c.l.b16 %v38
  %v71 = vunpack.c.l.b16 %v39
  %v72 = vunpack.c.l.b16 %v40
  %v73 = vunpack.c.l.b16 %v41
  %v74 = vunpack.c.l.b16 %v42
  %v75 = vunpack.c.l.b16 %v43
  %v76 = vunpack.c.l.b16 %v44
  %v77 = vunpack.c.l.b16 %v45
  %v78 = vunpack.c.l.b16 %v46
  %v79 = vunpack.c.l.b16 %v47
  %v80 = vunpack.c.l.b16 %v48
  %v81 = vunpack.c.l.b16 %v49
  %v82 = vunpack.c.l.b16 %v50
  %v83 = vunpack.c.l.b16 %v51
  %v84 = vunpack.c.l.b16 %v52
  %v85 = vunpack.c.l.b16 %v53
  %v86 = vpack.c.b16 %v71, %v70
  %v87 = vpack.c.b16 %v73, %v72
  %v88 = vpack.c.b16 %v75, %v74
  %v89 = vpack.c.b16 %v77, %v76
  %v90 = vpack.c.b16 %v79, %v78
  %v91 = vpack.c.b16 %v81, %v80
  %v92 = vpack.c.b16 %v83, %v82
  %v93 = vpack.c.b16 %v85, %v84
  %vm94 = vcmask 64512
  %v96 = vsel %vm94, %v86, 0
  %v99 = vsel %vm94, %v87, 0
  %v102 = vsel %vm94, %v88, 0
  %v105 = vsel %vm94, %v89, 0
  %v108 = vsel %vm94, %v90, 0
  %v111 = vsel %vm94, %v91, 0
  %v114 = vsel %vm94, %v92, 0
  %v117 = vsel %vm94, %v93, 0
  %vm119 = vcmask 1043456
  %v121 = vsel %vm119, %v21, 0
  %123 = vmatprep.subr.bf16.mxu0 0
  %124 = vmatpush1.bf16.msra.mxu0 %v121
  %125 = vmatprep.subr.bf16.mxu0 0
  %126 = vmatpush1.bf16.msra.mxu0 0
  %127 = vmatprep.subr.bf16.mxu0 0
  %128 = vmatpush1.bf16.msra.mxu0 0
  %129 = vmatprep.subr.bf16.mxu0 0
  %130 = vmatpush1.bf16.msra.mxu0 0
  %131 = vmatprep.subr.bf16.mxu0 0
  %132 = vmatpush1.bf16.msra.mxu0 0
  %133 = vmatprep.subr.bf16.mxu0 0
  %134 = vmatpush1.bf16.msra.mxu0 0
  %135 = vmatprep.subr.bf16.mxu0 0
  %136 = vmatpush1.bf16.msra.mxu0 0
  %137 = vmatprep.subr.bf16.mxu0 0
  %138 = vmatpush1.bf16.msra.mxu0 0
  %139 = vmatprep.subr.bf16.mxu0 0
  %140 = vmatpush1.bf16.msra.mxu0 0
  %141 = vmatprep.subr.bf16.mxu0 0
  %142 = vmatpush1.bf16.msra.mxu0 0
  %143 = vmatprep.subr.bf16.mxu0 0
  %144 = vmatpush1.bf16.msra.mxu0 0
  %145 = vmatprep.subr.bf16.mxu0 0
  %146 = vmatpush1.bf16.msra.mxu0 0
  %147 = vmatprep.subr.bf16.mxu0 0
  %148 = vmatpush1.bf16.msra.mxu0 0
  %149 = vmatprep.subr.bf16.mxu0 0
  %150 = vmatpush1.bf16.msra.mxu0 0
  %151 = vmatprep.subr.bf16.mxu0 0
  %152 = vmatpush1.bf16.msra.mxu0 0
  %153 = vmatprep.subr.bf16.mxu0 0
  %154 = vmatpush1.bf16.msra.mxu0 0
  %155 = vmatprep.mubr.bf16.mxu0 0
  %156 = vmatmul.mubr.bf16.gmra.mrb[0].mxu0 %v96
  %v157 = vpop.f32.mrb[0].mxu0
  %v158 = vadd.f32 0.0, %v157
  %v159 = vpop.f32.mrb[0].mxu0
  %v160 = vpop.f32.mrb[0].mxu0
  %v161 = vadd.f32 0.0, %v160
  %v162 = vpop.f32.mrb[0].mxu0
  %163 = vmatprep.mubr.bf16.mxu0 0
  %164 = vmatmul.mubr.bf16.gmra.mrb[0].mxu0 %v99
  %v165 = vpop.f32.mrb[0].mxu0
  %v166 = vadd.f32 0.0, %v165
  %v167 = vpop.f32.mrb[0].mxu0
  %v168 = vpop.f32.mrb[0].mxu0
  %v169 = vadd.f32 0.0, %v168
  %v170 = vpop.f32.mrb[0].mxu0
  %171 = vmatprep.mubr.bf16.mxu0 0
  %172 = vmatmul.mubr.bf16.gmra.mrb[0].mxu0 %v102
  %v173 = vpop.f32.mrb[0].mxu0
  %v174 = vadd.f32 0.0, %v173
  %v175 = vpop.f32.mrb[0].mxu0
  %v176 = vpop.f32.mrb[0].mxu0
  %v177 = vadd.f32 0.0, %v176
  %v178 = vpop.f32.mrb[0].mxu0
  %179 = vmatprep.mubr.bf16.mxu0 0
  %180 = vmatmul.mubr.bf16.gmra.mrb[0].mxu0 %v105
  %v181 = vpop.f32.mrb[0].mxu0
  %v182 = vadd.f32 0.0, %v181
  %v183 = vpop.f32.mrb[0].mxu0
  %v184 = vpop.f32.mrb[0].mxu0
  %v185 = vadd.f32 0.0, %v184
  %v186 = vpop.f32.mrb[0].mxu0
  %187 = vmatprep.mubr.bf16.mxu0 0
  %188 = vmatmul.mubr.bf16.gmra.mrb[0].mxu0 %v108
  %v189 = vpop.f32.mrb[0].mxu0
  %v190 = vadd.f32 0.0, %v189
  %v191 = vpop.f32.mrb[0].mxu0
  %v192 = vpop.f32.mrb[0].mxu0
  %v193 = vadd.f32 0.0, %v192
  %v194 = vpop.f32.mrb[0].mxu0
  %195 = vmatprep.mubr.bf16.mxu0 0
  %196 = vmatmul.mubr.bf16.gmra.mrb[0].mxu0 %v111
  %v197 = vpop.f32.mrb[0].mxu0
  %v198 = vadd.f32 0.0, %v197
  %v199 = vpop.f32.mrb[0].mxu0
  %v200 = vpop.f32.mrb[0].mxu0
  %v201 = vadd.f32 0.0, %v200
  %v202 = vpop.f32.mrb[0].mxu0
  %203 = vmatprep.mubr.bf16.mxu0 0
  %204 = vmatmul.mubr.bf16.gmra.mrb[0].mxu0 %v114
  %v205 = vpop.f32.mrb[0].mxu0
  %v206 = vadd.f32 0.0, %v205
  %v207 = vpop.f32.mrb[0].mxu0
  %v208 = vpop.f32.mrb[0].mxu0
  %v209 = vadd.f32 0.0, %v208
  %v210 = vpop.f32.mrb[0].mxu0
  %211 = vmatprep.mubr.bf16.mxu0 0
  %212 = vmatmul.mubr.bf16.gmra.mrb[0].mxu0 %v117
  %v213 = vpop.f32.mrb[0].mxu0
  %v214 = vadd.f32 0.0, %v213
  %v215 = vpop.f32.mrb[0].mxu0
  %v216 = vpop.f32.mrb[0].mxu0
  %v217 = vadd.f32 0.0, %v216
  %v218 = vpop.f32.mrb[0].mxu0
  %219 = vdwg.mxu0
  %220 = vst [vmem:[#allocation2] sm:$0xff] %v158
  %221 = vst [vmem:[#allocation2 + $0x8] sm:$0xff] %v161
  %222 = vst [vmem:[#allocation2 + $0x10] sm:$0xff] %v166
  %223 = vst [vmem:[#allocation2 + $0x18] sm:$0xff] %v169
  %224 = vst [vmem:[#allocation2 + $0x20] sm:$0xff] %v174
  %225 = vst [vmem:[#allocation2 + $0x28] sm:$0xff] %v177
  %226 = vst [vmem:[#allocation2 + $0x30] sm:$0xff] %v182
  %227 = vst [vmem:[#allocation2 + $0x38] sm:$0xff] %v185
  %228 = vst [vmem:[#allocation2 + $0x40] sm:$0xff] %v190
  %229 = vst [vmem:[#allocation2 + $0x48] sm:$0xff] %v193
  %230 = vst [vmem:[#allocation2 + $0x50] sm:$0xff] %v198
  %231 = vst [vmem:[#allocation2 + $0x58] sm:$0xff] %v201
  %232 = vst [vmem:[#allocation2 + $0x60] sm:$0xff] %v206
  %233 = vst [vmem:[#allocation2 + $0x68] sm:$0xff] %v209
  %234 = vst [vmem:[#allocation2 + $0x70] sm:$0xff] %v214
  %235 = vst [vmem:[#allocation2 + $0x78] sm:$0xff] %v217
  %v236 = vadd.f32 %v158, %v161
  %v237 = vadd.f32 %v236, %v166
  %v238 = vadd.f32 %v237, %v169
  %v239 = vadd.f32 %v238, %v174
  %v240 = vadd.f32 %v239, %v177
  %v241 = vadd.f32 %v240, %v182
  %v242 = vadd.f32 %v241, %v185
  %v243 = vadd.f32 %v242, %v190
  %v244 = vadd.f32 %v243, %v193
  %v245 = vadd.f32 %v244, %v198
  %v246 = vadd.f32 %v245, %v201
  %v247 = vadd.f32 %v246, %v206
  %v248 = vadd.f32 %v247, %v209
  %v249 = vadd.f32 %v248, %v214
  %v250 = vadd.f32 %v249, %v217
  %v251 = vrot.slane %v250, 4
  %v252 = vadd.f32 %v250, %v251
  %v253 = vrot.slane %v252, 2
  %v254 = vadd.f32 %v252, %v253
  %v255 = vrot.slane %v254, 1
  %v256 = vadd.f32 %v254, %v255
  %v257 = vadd.f32 %v256, 0.0
  %258 = vmatprep.subr.mxu0 0.0
  %259 = vmatpush1.msra.mxu0 %v22
  %260 = vmatprep.subr.mxu0 0.0
  %261 = vmatpush1.msra.mxu0 %v23
  %262 = vmatprep.subr.mxu0 0.0
  %263 = vmatpush1.msra.mxu0 %v24
  %264 = vmatprep.subr.mxu0 0.0
  %265 = vmatpush1.msra.mxu0 %v25
  %266 = vmatprep.subr.mxu0 0.0
  %267 = vmatpush1.msra.mxu0 %v26
  %268 = vmatprep.subr.mxu0 0.0
  %269 = vmatpush1.msra.mxu0 %v27
  %270 = vmatprep.subr.mxu0 0.0
  %271 = vmatpush1.msra.mxu0 %v28
  %272 = vmatprep.subr.mxu0 0.0
  %273 = vmatpush1.msra.mxu0 %v29
  %274 = vmatprep.subr.mxu0 0.0
  %275 = vmatpush1.msra.mxu0 %v30
  %276 = vmatprep.subr.mxu0 0.0
  %277 = vmatpush1.msra.mxu0 %v31
  %278 = vmatprep.subr.mxu0 0.0
  %279 = vmatpush1.msra.mxu0 %v32
  %280 = vmatprep.subr.mxu0 0.0
  %281 = vmatpush1.msra.mxu0 %v33
  %282 = vmatprep.subr.mxu0 0.0
  %283 = vmatpush1.msra.mxu0 %v34
  %284 = vmatprep.subr.mxu0 0.0
  %285 = vmatpush1.msra.mxu0 %v35
  %286 = vmatprep.subr.mxu0 0.0
  %287 = vmatpush1.msra.mxu0 %v36
  %288 = vmatprep.subr.mxu0 0.0
  %289 = vmatpush1.msra.mxu0 %v37
  %290 = vmatprep.subr.mxu0 0.0
  %291 = vmatpush1.msra.mxu0 0.0
  %292 = vmatprep.subr.mxu0 0.0
  %293 = vmatpush1.msra.mxu0 0.0
  %294 = vmatprep.subr.mxu0 0.0
  %295 = vmatpush1.msra.mxu0 0.0
  %296 = vmatprep.subr.mxu0 0.0
  %297 = vmatpush1.msra.mxu0 0.0
  %298 = vmatprep.subr.mxu0 0.0
  %299 = vmatpush1.msra.mxu0 0.0
  %300 = vmatprep.subr.mxu0 0.0
  %301 = vmatpush1.msra.mxu0 0.0
  %302 = vmatprep.subr.mxu0 0.0
  %303 = vmatpush1.msra.mxu0 0.0
  %304 = vmatprep.subr.mxu0 0.0
  %305 = vmatpush1.msra.mxu0 0.0
  %306 = vmatprep.subr.mxu0 0.0
  %307 = vmatpush1.msra.mxu0 0.0
  %308 = vmatprep.subr.mxu0 0.0
  %309 = vmatpush1.msra.mxu0 0.0
  %310 = vmatprep.subr.mxu0 0.0
  %311 = vmatpush1.msra.mxu0 0.0
  %312 = vmatprep.subr.mxu0 0.0
  %313 = vmatpush1.msra.mxu0 0.0
  %314 = vmatprep.subr.mxu0 0.0
  %315 = vmatpush1.msra.mxu0 0.0
  %316 = vmatprep.subr.mxu0 0.0
  %317 = vmatpush1.msra.mxu0 0.0
  %318 = vmatprep.subr.mxu0 0.0
  %319 = vmatpush1.msra.mxu0 0.0
  %320 = vmatprep.subr.mxu0 0.0
  %321 = vmatpush1.msra.mxu0 0.0
  %322 = vmatprep.mubr.f32.mxu0 0.0
  %323 = vmatmul.mubr.f32.gmra.mrb[0].mxu0 %v257
  %v324 = vpop.f32.mrb[0].mxu0
  %v325 = vadd.f32 0.0, %v324
  %v326 = vpop.f32.mrb[0].mxu0
  %327 = vdwg.mxu0
  %v328 = vld [vmem:[#allocation2] sm:$0xff]
  %v329 = vld [vmem:[#allocation2 + $0x8] sm:$0xff]
  %v330 = vld [vmem:[#allocation2 + $0x10] sm:$0xff]
  %v331 = vld [vmem:[#allocation2 + $0x18] sm:$0xff]
  %v332 = vld [vmem:[#allocation2 + $0x20] sm:$0xff]
  %v333 = vld [vmem:[#allocation2 + $0x28] sm:$0xff]
  %v334 = vld [vmem:[#allocation2 + $0x30] sm:$0xff]
  %v335 = vld [vmem:[#allocation2 + $0x38] sm:$0xff]
  %v336 = vld [vmem:[#allocation2 + $0x40] sm:$0xff]
  %v337 = vld [vmem:[#allocation2 + $0x48] sm:$0xff]
  %v338 = vld [vmem:[#allocation2 + $0x50] sm:$0xff]
  %v339 = vld [vmem:[#allocation2 + $0x58] sm:$0xff]
  %v340 = vld [vmem:[#allocation2 + $0x60] sm:$0xff]
  %v341 = vld [vmem:[#allocation2 + $0x68] sm:$0xff]
  %v342 = vld [vmem:[#allocation2 + $0x70] sm:$0xff]
  %v343 = vld [vmem:[#allocation2 + $0x78] sm:$0xff]
  %v344 = vlaneseq
  %v345 = vshrl.u32 %v344, 7
  %v346 = vsub.s32 0, %v345
  %v347 = vrot.slane %v325, %v346
  %v348 = vsub.f32 %v328, %v347
  %v349 = vsub.f32 %v329, %v347
  %v350 = vsub.f32 %v330, %v347
  %v351 = vsub.f32 %v331, %v347
  %v352 = vsub.f32 %v332, %v347
  %v353 = vsub.f32 %v333, %v347
  %v354 = vsub.f32 %v334, %v347
  %v355 = vsub.f32 %v335, %v347
  %v356 = vsub.f32 %v336, %v347
  %v357 = vsub.f32 %v337, %v347
  %v358 = vsub.f32 %v338, %v347
  %v359 = vsub.f32 %v339, %v347
  %v360 = vsub.f32 %v340, %v347
  %v361 = vsub.f32 %v341, %v347
  %v362 = vsub.f32 %v342, %v347
  %v363 = vsub.f32 %v343, %v347
  %v364 = vmul.f32 %v348, %v348
  %v365 = vmul.f32 %v349, %v349
  %v366 = vmul.f32 %v350, %v350
  %v367 = vmul.f32 %v351, %v351
  %v368 = vmul.f32 %v352, %v352
  %v369 = vmul.f32 %v353, %v353
  %v370 = vmul.f32 %v354, %v354
  %v371 = vmul.f32 %v355, %v355
  %v372 = vmul.f32 %v356, %v356
  %v373 = vmul.f32 %v357, %v357
  %v374 = vmul.f32 %v358, %v358
  %v375 = vmul.f32 %v359, %v359
  %v376 = vmul.f32 %v360, %v360
  %v377 = vmul.f32 %v361, %v361
  %v378 = vmul.f32 %v362, %v362
  %v379 = vmul.f32 %v363, %v363
  %v380 = vadd.f32 %v364, %v365
  %v381 = vadd.f32 %v380, %v366
  %v382 = vadd.f32 %v381, %v367
  %v383 = vadd.f32 %v382, %v368
  %v384 = vadd.f32 %v383, %v369
  %v385 = vadd.f32 %v384, %v370
  %v386 = vadd.f32 %v385, %v371
  %v387 = vadd.f32 %v386, %v372
  %v388 = vadd.f32 %v387, %v373
  %v389 = vadd.f32 %v388, %v374
  %v390 = vadd.f32 %v389, %v375
  %v391 = vadd.f32 %v390, %v376
  %v392 = vadd.f32 %v391, %v377
  %v393 = vadd.f32 %v392, %v378
  %v394 = vadd.f32 %v393, %v379
  %v395 = vrot.slane %v394, 4
  %v396 = vadd.f32 %v394, %v395
  %v397 = vrot.slane %v396, 2
  %v398 = vadd.f32 %v396, %v397
  %v399 = vrot.slane %v398, 1
  %v400 = vadd.f32 %v398, %v399
  %v401 = vadd.f32 %v400, 0.0
  %402 = vmatprep.subr.mxu0 0.0
  %403 = vmatpush1.msra.mxu0 %v22
  %404 = vmatprep.subr.mxu0 0.0
  %405 = vmatpush1.msra.mxu0 %v23
  %406 = vmatprep.subr.mxu0 0.0
  %407 = vmatpush1.msra.mxu0 %v24
  %408 = vmatprep.subr.mxu0 0.0
  %409 = vmatpush1.msra.mxu0 %v25
  %410 = vmatprep.subr.mxu0 0.0
  %411 = vmatpush1.msra.mxu0 %v26
  %412 = vmatprep.subr.mxu0 0.0
  %413 = vmatpush1.msra.mxu0 %v27
  %414 = vmatprep.subr.mxu0 0.0
  %415 = vmatpush1.msra.mxu0 %v28
  %416 = vmatprep.subr.mxu0 0.0
  %417 = vmatpush1.msra.mxu0 %v29
  %418 = vmatprep.subr.mxu0 0.0
  %419 = vmatpush1.msra.mxu0 %v30
  %420 = vmatprep.subr.mxu0 0.0
  %421 = vmatpush1.msra.mxu0 %v31
  %422 = vmatprep.subr.mxu0 0.0
  %423 = vmatpush1.msra.mxu0 %v32
  %424 = vmatprep.subr.mxu0 0.0
  %425 = vmatpush1.msra.mxu0 %v33
  %426 = vmatprep.subr.mxu0 0.0
  %427 = vmatpush1.msra.mxu0 %v34
  %428 = vmatprep.subr.mxu0 0.0
  %429 = vmatpush1.msra.mxu0 %v35
  %430 = vmatprep.subr.mxu0 0.0
  %431 = vmatpush1.msra.mxu0 %v36
  %432 = vmatprep.subr.mxu0 0.0
  %433 = vmatpush1.msra.mxu0 %v37
  %434 = vmatprep.subr.mxu0 0.0
  %435 = vmatpush1.msra.mxu0 0.0
  %436 = vmatprep.subr.mxu0 0.0
  %437 = vmatpush1.msra.mxu0 0.0
  %438 = vmatprep.subr.mxu0 0.0
  %439 = vmatpush1.msra.mxu0 0.0
  %440 = vmatprep.subr.mxu0 0.0
  %441 = vmatpush1.msra.mxu0 0.0
  %442 = vmatprep.subr.mxu0 0.0
  %443 = vmatpush1.msra.mxu0 0.0
  %444 = vmatprep.subr.mxu0 0.0
  %445 = vmatpush1.msra.mxu0 0.0
  %446 = vmatprep.subr.mxu0 0.0
  %447 = vmatpush1.msra.mxu0 0.0
  %448 = vmatprep.subr.mxu0 0.0
  %449 = vmatpush1.msra.mxu0 0.0
  %450 = vmatprep.subr.mxu0 0.0
  %451 = vmatpush1.msra.mxu0 0.0
  %452 = vmatprep.subr.mxu0 0.0
  %453 = vmatpush1.msra.mxu0 0.0
  %454 = vmatprep.subr.mxu0 0.0
  %455 = vmatpush1.msra.mxu0 0.0
  %456 = vmatprep.subr.mxu0 0.0
  %457 = vmatpush1.msra.mxu0 0.0
  %458 = vmatprep.subr.mxu0 0.0
  %459 = vmatpush1.msra.mxu0 0.0
  %460 = vmatprep.subr.mxu0 0.0
  %461 = vmatpush1.msra.mxu0 0.0
  %462 = vmatprep.subr.mxu0 0.0
  %463 = vmatpush1.msra.mxu0 0.0
  %464 = vmatprep.subr.mxu0 0.0
  %465 = vmatpush1.msra.mxu0 0.0
  %466 = vmatprep.mubr.f32.mxu0 0.0
  %467 = vmatmul.mubr.f32.gmra.mrb[0].mxu0 %v401
  %v468 = vpop.f32.mrb[0].mxu0
  %v469 = vadd.f32 0.0, %v468
  %v470 = vpop.f32.mrb[0].mxu0
  %471 = vdwg.mxu0
  %v472 = vadd.f32 %v469, 1e-05
  %v473 = vrsqrt.pop %v472
  %v474 = vld [vmem:[%s2] sm:$0x1]
  %v475 = vmul.f32 %v474, %v473
  %v476 = vld [vmem:[%s3] sm:$0x1]
  %v477 = vmul.f32 %v325, %v475
  %v478 = vsub.f32 %v476, %v477
  %v480 = vlaneseq
  %v481 = vshrl.u32 %v480, 7
  %v482 = vsub.s32 0, %v481
  %v483 = vrot.slane %v475, %v482
  %v486 = vlaneseq
  %v487 = vshrl.u32 %v486, 7
  %v488 = vsub.s32 0, %v487
  %v489 = vrot.slane %v478, %v488
  %v491 = vmul.f32 %v328, %v483
  %v492 = vmul.f32 %v329, %v483
  %v493 = vmul.f32 %v330, %v483
  %v494 = vmul.f32 %v331, %v483
  %v495 = vmul.f32 %v332, %v483
  %v496 = vmul.f32 %v333, %v483
  %v497 = vmul.f32 %v334, %v483
  %v498 = vmul.f32 %v335, %v483
  %v499 = vmul.f32 %v336, %v483
  %v500 = vmul.f32 %v337, %v483
  %v501 = vmul.f32 %v338, %v483
  %v502 = vmul.f32 %v339, %v483
  %v503 = vmul.f32 %v340, %v483
  %v504 = vmul.f32 %v341, %v483
  %v505 = vmul.f32 %v342, %v483
  %v506 = vmul.f32 %v343, %v483
  %v507 = vadd.f32 %v491, %v489
  %v508 = vadd.f32 %v492, %v489
  %v509 = vadd.f32 %v493, %v489
  %v510 = vadd.f32 %v494, %v489
  %v511 = vadd.f32 %v495, %v489
  %v512 = vadd.f32 %v496, %v489
  %v513 = vadd.f32 %v497, %v489
  %v514 = vadd.f32 %v498, %v489
  %v515 = vadd.f32 %v499, %v489
  %v516 = vadd.f32 %v500, %v489
  %v517 = vadd.f32 %v501, %v489
  %v518 = vadd.f32 %v502, %v489
  %v519 = vadd.f32 %v503, %v489
  %v520 = vadd.f32 %v504, %v489
  %v521 = vadd.f32 %v505, %v489
  %v522 = vadd.f32 %v506, %v489
  %vm523 = vcmp.ge.f32.partialorder %v507, 0.0
  %vm524 = vcmp.ge.f32.partialorder %v508, 0.0
  %vm525 = vcmp.ge.f32.partialorder %v509, 0.0
  %vm526 = vcmp.ge.f32.partialorder %v510, 0.0
  %vm527 = vcmp.ge.f32.partialorder %v511, 0.0
  %vm528 = vcmp.ge.f32.partialorder %v512, 0.0
  %vm529 = vcmp.ge.f32.partialorder %v513, 0.0
  %vm530 = vcmp.ge.f32.partialorder %v514, 0.0
  %vm531 = vcmp.ge.f32.partialorder %v515, 0.0
  %vm532 = vcmp.ge.f32.partialorder %v516, 0.0
  %vm533 = vcmp.ge.f32.partialorder %v517, 0.0
  %vm534 = vcmp.ge.f32.partialorder %v518, 0.0
  %vm535 = vcmp.ge.f32.partialorder %v519, 0.0
  %vm536 = vcmp.ge.f32.partialorder %v520, 0.0
  %vm537 = vcmp.ge.f32.partialorder %v521, 0.0
  %vm538 = vcmp.ge.f32.partialorder %v522, 0.0
  %v539 = vmul.f32 %v507, 0.2
  %v540 = vmul.f32 %v508, 0.2
  %v541 = vmul.f32 %v509, 0.2
  %v542 = vmul.f32 %v510, 0.2
  %v543 = vmul.f32 %v511, 0.2
  %v544 = vmul.f32 %v512, 0.2
  %v545 = vmul.f32 %v513, 0.2
  %v546 = vmul.f32 %v514, 0.2
  %v547 = vmul.f32 %v515, 0.2
  %v548 = vmul.f32 %v516, 0.2
  %v549 = vmul.f32 %v517, 0.2
  %v550 = vmul.f32 %v518, 0.2
  %v551 = vmul.f32 %v519, 0.2
  %v552 = vmul.f32 %v520, 0.2
  %v553 = vmul.f32 %v521, 0.2
  %v554 = vmul.f32 %v522, 0.2
  %v555 = vsel %vm523, %v507, %v539
  %v556 = vsel %vm524, %v508, %v540
  %v557 = vsel %vm525, %v509, %v541
  %v558 = vsel %vm526, %v510, %v542
  %v559 = vsel %vm527, %v511, %v543
  %v560 = vsel %vm528, %v512, %v544
  %v561 = vsel %vm529, %v513, %v545
  %v562 = vsel %vm530, %v514, %v546
  %v563 = vsel %vm531, %v515, %v547
  %v564 = vsel %vm532, %v516, %v548
  %v565 = vsel %vm533, %v517, %v549
  %v566 = vsel %vm534, %v518, %v550
  %v567 = vsel %vm535, %v519, %v551
  %v568 = vsel %vm536, %v520, %v552
  %v569 = vsel %vm537, %v521, %v553
  %v570 = vsel %vm538, %v522, %v554
  %v571 = vpack.c.bf16 %v556, %v555
  %v572 = vpack.c.bf16 %v558, %v557
  %v573 = vpack.c.bf16 %v560, %v559
  %v574 = vpack.c.bf16 %v562, %v561
  %v575 = vpack.c.bf16 %v564, %v563
  %v576 = vpack.c.bf16 %v566, %v565
  %v577 = vpack.c.bf16 %v568, %v567
  %v578 = vpack.c.bf16 %v570, %v569
  %v587 = vunpack.c.l.b16 %v571
  %v588 = vunpack.c.h.b16 %v571
  %v589 = vunpack.c.l.b16 %v572
  %v590 = vunpack.c.h.b16 %v572
  %v591 = vunpack.c.l.b16 %v573
  %v592 = vunpack.c.h.b16 %v573
  %v593 = vunpack.c.l.b16 %v574
  %v594 = vunpack.c.h.b16 %v574
  %v595 = vunpack.c.l.b16 %v575
  %v596 = vunpack.c.h.b16 %v575
  %v597 = vunpack.c.l.b16 %v576
  %v598 = vunpack.c.h.b16 %v576
  %v599 = vunpack.c.l.b16 %v577
  %v600 = vunpack.c.h.b16 %v577
  %v601 = vunpack.c.l.b16 %v578
  %v602 = vunpack.c.h.b16 %v578
  %v603 = vpack.c.b16 %v587, %v587
  %v604 = vpack.c.b16 %v588, %v588
  %v605 = vpack.c.b16 %v589, %v589
  %v606 = vpack.c.b16 %v590, %v590
  %v607 = vpack.c.b16 %v591, %v591
  %v608 = vpack.c.b16 %v592, %v592
  %v609 = vpack.c.b16 %v593, %v593
  %v610 = vpack.c.b16 %v594, %v594
  %v611 = vpack.c.b16 %v595, %v595
  %v612 = vpack.c.b16 %v596, %v596
  %v613 = vpack.c.b16 %v597, %v597
  %v614 = vpack.c.b16 %v598, %v598
  %v615 = vpack.c.b16 %v599, %v599
  %v616 = vpack.c.b16 %v600, %v600
  %v617 = vpack.c.b16 %v601, %v601
  %v618 = vpack.c.b16 %v602, %v602
  %635 = vst [vmem:[%s5] sm:$0xf] %v603
  %636 = vst [vmem:[%s5 + $0x4] sm:$0xf] %v604
  %637 = vst [vmem:[%s5 + $0x8] sm:$0xf] %v605
  %638 = vst [vmem:[%s5 + $0xc] sm:$0xf] %v606
  %639 = vst [vmem:[%s5 + $0x10] sm:$0xf] %v607
  %640 = vst [vmem:[%s5 + $0x14] sm:$0xf] %v608
  %641 = vst [vmem:[%s5 + $0x18] sm:$0xf] %v609
  %642 = vst [vmem:[%s5 + $0x1c] sm:$0xf] %v610
  %643 = vst [vmem:[%s5 + $0x20] sm:$0xf] %v611
  %644 = vst [vmem:[%s5 + $0x24] sm:$0xf] %v612
  %645 = vst [vmem:[%s5 + $0x28] sm:$0xf] %v613
  %646 = vst [vmem:[%s5 + $0x2c] sm:$0xf] %v614
  %647 = vst [vmem:[%s5 + $0x30] sm:$0xf] %v615
  %648 = vst [vmem:[%s5 + $0x34] sm:$0xf] %v616
  %649 = vst [vmem:[%s5 + $0x38] sm:$0xf] %v617
  %650 = vst [vmem:[%s5 + $0x3c] sm:$0xf] %v618
  // Predicated region
  $region22: #{fan_cos_forward.6} parent=0 // pred_check
    _
  $region23: #{fan_cos_forward.6} parent=0 // pred_check_branch
    %652 = sbr.rel (0) target = $region25
  $region24: #{fan_cos_forward.6} parent=0 // pred_region
    _
  $region25: #{fan_cos_forward.6} parent=0 // pred_fallthru
    _
  // Predicated region
  $region26: #{fan_cos_forward.6} parent=0 // pred_check
    _
  $region27: #{fan_cos_forward.6} parent=0 // pred_check_branch
    %654 = sbr.rel (0) target = $region29
  $region28: #{fan_cos_forward.6} parent=0 // pred_region
    _
  $region29: #{fan_cos_forward.6} parent=0 // pred_fallthru
    _

// kernel: fan_cos_forward.7
$region0: #{fan_cos_forward.7}
  #allocation0 [shape = 'u32[]', space=smem, size = 0x4, offset = 0x4, fixed_abs, tag = 'smem constant byte address 0x4 - core index']
  #allocation1 [shape = 'u32[144,128]{1,0:T(1,128)}', space=vmem, size = 0x12000, scoped, tag = 'internal scratch']
  %s0 = inlined_call_operand.vmem [shape: bf16[512,8], index: 0, kind: input, shape index: {}]
  %s1 = inlined_call_operand.vmem [shape: bf16[8,128], index: 1, kind: input, shape index: {}]
  %s2 = inlined_call_operand.vmem [shape: f32[1,128], index: 2, kind: input, shape index: {}]
  %s3 = inlined_call_operand.vmem [shape: f32[512,128], index: 3, kind: output, shape index: {}]
  %s4 = sld [smem:[#allocation0]]
  $region22: #{fan_cos_forward.7} parent=0
    _
  %s6 = ssub.s32 1, %s4
  %s7 = scalar_select 0, %s6, %s4
  // Predicated region
  $region2: #{fan_cos_forward.7} parent=0 // pred_check
    _
  $region3: #{fan_cos_forward.7} parent=0 // pred_check_branch
    %9 = sbr.rel (0) target = $region5
  $region4: #{fan_cos_forward.7} parent=0 // pred_region
    _
  $region5: #{fan_cos_forward.7} parent=0 // pred_fallthru
    _
  // Predicated region
  $region6: #{fan_cos_forward.7} parent=0 // pred_check
    _
  $region7: #{fan_cos_forward.7} parent=0 // pred_check_branch
    %11 = sbr.rel (0) target = $region9
  $region8: #{fan_cos_forward.7} parent=0 // pred_region
    _
  $region9: #{fan_cos_forward.7} parent=0 // pred_fallthru
    _
  // Predicated region
  $region10: #{fan_cos_forward.7} parent=0 // pred_check
    _
  $region11: #{fan_cos_forward.7} parent=0 // pred_check_branch
    %13 = sbr.rel (0) target = $region13
  $region12: #{fan_cos_forward.7} parent=0 // pred_region
    _
  $region13: #{fan_cos_forward.7} parent=0 // pred_fallthru
    _
  %v15 = vld [vmem:[%s1] sm:$0xf]
  %v16 = vld [vmem:[%s2] sm:$0x1]
  %v18 = vlaneseq
  %v19 = vshrl.u32 %v18, 7
  %v20 = vsub.s32 0, %v19
  %v21 = vrot.slane %v16, %v20
  %v23 = vld [vmem:[%s0] sm:$0xf]
  %v24 = vld [vmem:[%s0 + $0x4] sm:$0xf]
  %v25 = vld [vmem:[%s0 + $0x8] sm:$0xf]
  %v26 = vld [vmem:[%s0 + $0xc] sm:$0xf]
  %v27 = vld [vmem:[%s0 + $0x10] sm:$0xf]
  %v28 = vld [vmem:[%s0 + $0x14] sm:$0xf]
  %v29 = vld [vmem:[%s0 + $0x18] sm:$0xf]
  %v30 = vld [vmem:[%s0 + $0x1c] sm:$0xf]
  %v31 = vld [vmem:[%s0 + $0x20] sm:$0xf]
  %v32 = vld [vmem:[%s0 + $0x24] sm:$0xf]
  %v33 = vld [vmem:[%s0 + $0x28] sm:$0xf]
  %v34 = vld [vmem:[%s0 + $0x2c] sm:$0xf]
  %v35 = vld [vmem:[%s0 + $0x30] sm:$0xf]
  %v36 = vld [vmem:[%s0 + $0x34] sm:$0xf]
  %v37 = vld [vmem:[%s0 + $0x38] sm:$0xf]
  %v38 = vld [vmem:[%s0 + $0x3c] sm:$0xf]
  %v39 = vunpack.c.l.bf16 %v23
  %v40 = vunpack.c.l.bf16 %v24
  %v41 = vunpack.c.l.bf16 %v25
  %v42 = vunpack.c.l.bf16 %v26
  %v43 = vunpack.c.l.bf16 %v27
  %v44 = vunpack.c.l.bf16 %v28
  %v45 = vunpack.c.l.bf16 %v29
  %v46 = vunpack.c.l.bf16 %v30
  %v47 = vunpack.c.l.bf16 %v31
  %v48 = vunpack.c.l.bf16 %v32
  %v49 = vunpack.c.l.bf16 %v33
  %v50 = vunpack.c.l.bf16 %v34
  %v51 = vunpack.c.l.bf16 %v35
  %v52 = vunpack.c.l.bf16 %v36
  %v53 = vunpack.c.l.bf16 %v37
  %v54 = vunpack.c.l.bf16 %v38
  %v55 = vand.u32 2147483647, %v39
  %vm56 = vcmp.le.f32.partialorder %v55, 0.7853982
  %vm57 = vcmp.lt.s32.totalorder %v39, 0
  %v58 = vand.u32 %v39, 2139095040
  %v59 = vshrl.u32 %v58, 23
  %v60 = vsub.s32 %v59, 127
  %v61 = vand.u32 2147483647, %v39
  %v62 = vand.u32 %v61, 8388607
  %v63 = vor.u32 %v62, 8388608
  %v64 = vsub.s32 0, %v63
  %v65 = vadd.s32 %v60, 1
  %vm66 = vcmp.gt.s32.totalorder %v65, 0
  %v67 = vsel %vm66, %v65, 0
  %v68 = vshrl.u32 %v67, 5
  %v69 = vand.u32 %v67, 31
  %v70 = vsub.s32 32, %v69
  %v71 = vshrl.u32 683565275, %v70
  %v72 = vshll.u32 683565275, %v69
  %v73 = vshrl.u32 2475754826, %v70
  %v74 = vor.u32 %v72, %v73
  %v75 = vshll.u32 2475754826, %v69
  %v76 = vshrl.u32 2131351028, %v70
  %v77 = vor.u32 %v75, %v76
  %v78 = vshll.u32 2131351028, %v69
  %v79 = vshrl.u32 2102212464, %v70
  %v80 = vor.u32 %v78, %v79
  %v81 = vshll.u32 2102212464, %v69
  %v82 = vshrl.u32 920167782, %v70
  %v83 = vor.u32 %v81, %v82
  %v84 = vshll.u32 920167782, %v69
  %v85 = vshrl.u32 1326507024, %v70
  %v86 = vor.u32 %v84, %v85
  %vm87 = vcmp.lt.s32.totalorder %v68, 1
  %vm88 = vcmp.lt.s32.totalorder %v68, 2
  %vm89 = vcmp.lt.s32.totalorder %v68, 3
  %vm90 = vcmp.lt.s32.totalorder %v68, 4
  %v91 = vsel %vm87, %v71, %v74
  %v92 = vsel %vm90, %v80, 2102212464
  %v93 = vsel %vm89, %v77, %v92
  %v94 = vsel %vm88, %v91, %v93
  %v95 = vsel %vm87, %v74, %v77
  %v96 = vsel %vm90, %v83, 920167782
  %v97 = vsel %vm89, %v80, %v96
  %v98 = vsel %vm88, %v95, %v97
  %v99 = vsel %vm87, %v77, %v80
  %v100 = vsel %vm90, %v86, 1326507024
  %v101 = vsel %vm89, %v83, %v100
  %v102 = vsel %vm88, %v99, %v101
  %v103 = vshll.u32 %v63, 8
  %v104 = vmul.u32.u64.compose %v103, %v102
  %v105 = vextract.low.u32 %v104
  %v106 = vextract.high.u32 %v104
  %v107 = vmul.u32.u64.compose %v103, %v98
  %v108 = vextract.low.u32 %v107
  %v109 = vextract.high.u32 %v107
  %v110 = vmul.u32 %v103, %v94
  %v111 = vadd.s32 %v106, %v108
  %vm112 = vc.u32 %v106, %v108
  %v113 = vadd.s32 %v109, 1
  %v114 = vsel %vm112, %v113, %v109
  %v115 = vadd.s32 %v110, %v114
  %v116 = vadd.s32 %v115, 536870912
  %v117 = vshrl.u32 %v116, 30
  %v118 = vshll.u32 %v117, 30
  %v119 = vsub.s32 %v115, %v118
  %vm120 = vcmp.lt.s32.totalorder %v119, 0
  %v121 = vsub.s32 0, %v119
  %v122 = vsel %vm120, %v121, %v119
  %v123 = vclz %v122
  %v124 = vsub.s32 %v123, 2
  %vm125 = vcmp.gt.s32.totalorder 0, %v124
  %v126 = vsel %vm125, 0, %v124
  %v127 = vsub.s32 32, %v126
  %v128 = vshll.u32 %v119, %v126
  %v129 = vshrl.u32 %v111, %v127
  %v130 = vor.u32 %v128, %v129
  %v131 = vsub.s32 4294967266, %v126
  %v132 = vadd.s32 %v131, 127
  %v133 = vshll.u32 %v132, 23
  %v134 = vor.u32 4788187, %v133
  %v135 = vand.u32 2147483647, %v134
  %v137 = vcvt.s32.f32 %v130
  %v138 = vmul.f32 %v137, %v135
  %v139 = vxor.u32 %v138, 2147483648
  %v140 = vsel %vm57, %v139, %v138
  %v141 = vsub.s32 4, %v117
  %v142 = vsel %vm57, %v141, %v117
  %v143 = vsel %vm56, %v39, %v140
  %v144 = vsel %vm56, 0, %v142
  %v145 = vcosq.f32.pop %v143
  %v146 = vsinq.f32.pop %v143
  %vm147 = vweird.f32 %v39
  %v148 = vand.u32 %v144, 3
  %vm149 = vcmp.lt.s32.totalorder %v148, 2
  %vm150 = vcmp.eq.s32.totalorder %v148, 0
  %v151 = vxor.u32 %v146, 2147483648
  %v152 = vsel %vm150, %v145, %v151
  %vm153 = vcmp.eq.s32.totalorder %v148, 2
  %v154 = vxor.u32 %v145, 2147483648
  %v155 = vsel %vm153, %v154, %v146
  %v156 = vsel %vm149, %v152, %v155
  %v157 = vsel %vm147, nan, %v156
  %v158 = vand.u32 2147483647, %v40
  %vm159 = vcmp.le.f32.partialorder %v158, 0.7853982
  %vm160 = vcmp.lt.s32.totalorder %v40, 0
  %v161 = vand.u32 %v40, 2139095040
  %v162 = vshrl.u32 %v161, 23
  %v163 = vsub.s32 %v162, 127
  %v164 = vand.u32 2147483647, %v40
  %v165 = vand.u32 %v164, 8388607
  %v166 = vor.u32 %v165, 8388608
  %v167 = vsub.s32 0, %v166
  %v168 = vadd.s32 %v163, 1
  %vm169 = vcmp.gt.s32.totalorder %v168, 0
  %v170 = vsel %vm169, %v168, 0
  %v171 = vshrl.u32 %v170, 5
  %v172 = vand.u32 %v170, 31
  %v173 = vsub.s32 32, %v172
  %v174 = vshrl.u32 683565275, %v173
  %v175 = vshll.u32 683565275, %v172
  %v176 = vshrl.u32 2475754826, %v173
  %v177 = vor.u32 %v175, %v176
  %v178 = vshll.u32 2475754826, %v172
  %v179 = vshrl.u32 2131351028, %v173
  %v180 = vor.u32 %v178, %v179
  %v181 = vshll.u32 2131351028, %v172
  %v182 = vshrl.u32 2102212464, %v173
  %v183 = vor.u32 %v181, %v182
  %v184 = vshll.u32 2102212464, %v172
  %v185 = vshrl.u32 920167782, %v173
  %v186 = vor.u32 %v184, %v185
  %v187 = vshll.u32 920167782, %v172
  %v188 = vshrl.u32 1326507024, %v173
  %v189 = vor.u32 %v187, %v188
  %vm190 = vcmp.lt.s32.totalorder %v171, 1
  %vm191 = vcmp.lt.s32.totalorder %v171, 2
  %vm192 = vcmp.lt.s32.totalorder %v171, 3
  %vm193 = vcmp.lt.s32.totalorder %v171, 4
  %v194 = vsel %vm190, %v174, %v177
  %v195 = vsel %vm193, %v183, 2102212464
  %v196 = vsel %vm192, %v180, %v195
  %v197 = vsel %vm191, %v194, %v196
  %v198 = vsel %vm190, %v177, %v180
  %v199 = vsel %vm193, %v186, 920167782
  %v200 = vsel %vm192, %v183, %v199
  %v201 = vsel %vm191, %v198, %v200
  %v202 = vsel %vm190, %v180, %v183
  %v203 = vsel %vm193, %v189, 1326507024
  %v204 = vsel %vm192, %v186, %v203
  %v205 = vsel %vm191, %v202, %v204
  %v206 = vshll.u32 %v166, 8
  %v207 = vmul.u32.u64.compose %v206, %v205
  %v208 = vextract.low.u32 %v207
  %v209 = vextract.high.u32 %v207
  %v210 = vmul.u32.u64.compose %v206, %v201
  %v211 = vextract.low.u32 %v210
  %v212 = vextract.high.u32 %v210
  %v213 = vmul.u32 %v206, %v197
  %v214 = vadd.s32 %v209, %v211
  %vm215 = vc.u32 %v209, %v211
  %v216 = vadd.s32 %v212, 1
  %v217 = vsel %vm215, %v216, %v212
  %v218 = vadd.s32 %v213, %v217
  %v219 = vadd.s32 %v218, 536870912
  %v220 = vshrl.u32 %v219, 30
  %v221 = vshll.u32 %v220, 30
  %v222 = vsub.s32 %v218, %v221
  %vm223 = vcmp.lt.s32.totalorder %v222, 0
  %v224 = vsub.s32 0, %v222
  %v225 = vsel %vm223, %v224, %v222
  %v226 = vclz %v225
  %v227 = vsub.s32 %v226, 2
  %vm228 = vcmp.gt.s32.totalorder 0, %v227
  %v229 = vsel %vm228, 0, %v227
  %v230 = vsub.s32 32, %v229
  %v231 = vshll.u32 %v222, %v229
  %v232 = vshrl.u32 %v214, %v230
  %v233 = vor.u32 %v231, %v232
  %v234 = vsub.s32 4294967266, %v229
  %v235 = vadd.s32 %v234, 127
  %v236 = vshll.u32 %v235, 23
  %v237 = vor.u32 4788187, %v236
  %v238 = vand.u32 2147483647, %v237
  %v240 = vcvt.s32.f32 %v233
  %v241 = vmul.f32 %v240, %v238
  %v242 = vxor.u32 %v241, 2147483648
  %v243 = vsel %vm160, %v242, %v241
  %v244 = vsub.s32 4, %v220
  %v245 = vsel %vm160, %v244, %v220
  %v246 = vsel %vm159, %v40, %v243
  %v247 = vsel %vm159, 0, %v245
  %v248 = vcosq.f32.pop %v246
  %v249 = vsinq.f32.pop %v246
  %vm250 = vweird.f32 %v40
  %v251 = vand.u32 %v247, 3
  %vm252 = vcmp.lt.s32.totalorder %v251, 2
  %vm253 = vcmp.eq.s32.totalorder %v251, 0
  %v254 = vxor.u32 %v249, 2147483648
  %v255 = vsel %vm253, %v248, %v254
  %vm256 = vcmp.eq.s32.totalorder %v251, 2
  %v257 = vxor.u32 %v248, 2147483648
  %v258 = vsel %vm256, %v257, %v249
  %v259 = vsel %vm252, %v255, %v258
  %v260 = vsel %vm250, nan, %v259
  %v261 = vand.u32 2147483647, %v41
  %vm262 = vcmp.le.f32.partialorder %v261, 0.7853982
  %vm263 = vcmp.lt.s32.totalorder %v41, 0
  %v264 = vand.u32 %v41, 2139095040
  %v265 = vshrl.u32 %v264, 23
  %v266 = vsub.s32 %v265, 127
  %v267 = vand.u32 2147483647, %v41
  %v268 = vand.u32 %v267, 8388607
  %v269 = vor.u32 %v268, 8388608
  %v270 = vsub.s32 0, %v269
  %v271 = vadd.s32 %v266, 1
  %vm272 = vcmp.gt.s32.totalorder %v271, 0
  %v273 = vsel %vm272, %v271, 0
  %v274 = vshrl.u32 %v273, 5
  %v275 = vand.u32 %v273, 31
  %v276 = vsub.s32 32, %v275
  %v277 = vshrl.u32 683565275, %v276
  %v278 = vshll.u32 683565275, %v275
  %v279 = vshrl.u32 2475754826, %v276
  %v280 = vor.u32 %v278, %v279
  %v281 = vshll.u32 2475754826, %v275
  %v282 = vshrl.u32 2131351028, %v276
  %v283 = vor.u32 %v281, %v282
  %v284 = vshll.u32 2131351028, %v275
  %v285 = vshrl.u32 2102212464, %v276
  %v286 = vor.u32 %v284, %v285
  %v287 = vshll.u32 2102212464, %v275
  %v288 = vshrl.u32 920167782, %v276
  %v289 = vor.u32 %v287, %v288
  %v290 = vshll.u32 920167782, %v275
  %v291 = vshrl.u32 1326507024, %v276
  %v292 = vor.u32 %v290, %v291
  %vm293 = vcmp.lt.s32.totalorder %v274, 1
  %vm294 = vcmp.lt.s32.totalorder %v274, 2
  %vm295 = vcmp.lt.s32.totalorder %v274, 3
  %vm296 = vcmp.lt.s32.totalorder %v274, 4
  %v297 = vsel %vm293, %v277, %v280
  %v298 = vsel %vm296, %v286, 2102212464
  %v299 = vsel %vm295, %v283, %v298
  %v300 = vsel %vm294, %v297, %v299
  %v301 = vsel %vm293, %v280, %v283
  %v302 = vsel %vm296, %v289, 920167782
  %v303 = vsel %vm295, %v286, %v302
  %v304 = vsel %vm294, %v301, %v303
  %v305 = vsel %vm293, %v283, %v286
  %v306 = vsel %vm296, %v292, 1326507024
  %v307 = vsel %vm295, %v289, %v306
  %v308 = vsel %vm294, %v305, %v307
  %v309 = vshll.u32 %v269, 8
  %v310 = vmul.u32.u64.compose %v309, %v308
  %v311 = vextract.low.u32 %v310
  %v312 = vextract.high.u32 %v310
  %v313 = vmul.u32.u64.compose %v309, %v304
  %v314 = vextract.low.u32 %v313
  %v315 = vextract.high.u32 %v313
  %v316 = vmul.u32 %v309, %v300
  %v317 = vadd.s32 %v312, %v314
  %vm318 = vc.u32 %v312, %v314
  %v319 = vadd.s32 %v315, 1
  %v320 = vsel %vm318, %v319, %v315
  %v321 = vadd.s32 %v316, %v320
  %v322 = vadd.s32 %v321, 536870912
  %v323 = vshrl.u32 %v322, 30
  %v324 = vshll.u32 %v323, 30
  %v325 = vsub.s32 %v321, %v324
  %vm326 = vcmp.lt.s32.totalorder %v325, 0
  %v327 = vsub.s32 0, %v325
  %v328 = vsel %vm326, %v327, %v325
  %v329 = vclz %v328
  %v330 = vsub.s32 %v329, 2
  %vm331 = vcmp.gt.s32.totalorder 0, %v330
  %v332 = vsel %vm331, 0, %v330
  %v333 = vsub.s32 32, %v332
  %v334 = vshll.u32 %v325, %v332
  %v335 = vshrl.u32 %v317, %v333
  %v336 = vor.u32 %v334, %v335
  %v337 = vsub.s32 4294967266, %v332
  %v338 = vadd.s32 %v337, 127
  %v339 = vshll.u32 %v338, 23
  %v340 = vor.u32 4788187, %v339
  %v341 = vand.u32 2147483647, %v340
  %v343 = vcvt.s32.f32 %v336
  %v344 = vmul.f32 %v343, %v341
  %v345 = vxor.u32 %v344, 2147483648
  %v346 = vsel %vm263, %v345, %v344
  %v347 = vsub.s32 4, %v323
  %v348 = vsel %vm263, %v347, %v323
  %v349 = vsel %vm262, %v41, %v346
  %v350 = vsel %vm262, 0, %v348
  %v351 = vcosq.f32.pop %v349
  %v352 = vsinq.f32.pop %v349
  %vm353 = vweird.f32 %v41
  %v354 = vand.u32 %v350, 3
  %vm355 = vcmp.lt.s32.totalorder %v354, 2
  %vm356 = vcmp.eq.s32.totalorder %v354, 0
  %v357 = vxor.u32 %v352, 2147483648
  %v358 = vsel %vm356, %v351, %v357
  %vm359 = vcmp.eq.s32.totalorder %v354, 2
  %v360 = vxor.u32 %v351, 2147483648
  %v361 = vsel %vm359, %v360, %v352
  %v362 = vsel %vm355, %v358, %v361
  %v363 = vsel %vm353, nan, %v362
  %v364 = vand.u32 2147483647, %v42
  %vm365 = vcmp.le.f32.partialorder %v364, 0.7853982
  %vm366 = vcmp.lt.s32.totalorder %v42, 0
  %v367 = vand.u32 %v42, 2139095040
  %v368 = vshrl.u32 %v367, 23
  %v369 = vsub.s32 %v368, 127
  %v370 = vand.u32 2147483647, %v42
  %v371 = vand.u32 %v370, 8388607
  %v372 = vor.u32 %v371, 8388608
  %v373 = vsub.s32 0, %v372
  %v374 = vadd.s32 %v369, 1
  %vm375 = vcmp.gt.s32.totalorder %v374, 0
  %v376 = vsel %vm375, %v374, 0
  %v377 = vshrl.u32 %v376, 5
  %v378 = vand.u32 %v376, 31
  %v379 = vsub.s32 32, %v378
  %v380 = vshrl.u32 683565275, %v379
  %v381 = vshll.u32 683565275, %v378
  %v382 = vshrl.u32 2475754826, %v379
  %v383 = vor.u32 %v381, %v382
  %v384 = vshll.u32 2475754826, %v378
  %v385 = vshrl.u32 2131351028, %v379
  %v386 = vor.u32 %v384, %v385
  %v387 = vshll.u32 2131351028, %v378
  %v388 = vshrl.u32 2102212464, %v379
  %v389 = vor.u32 %v387, %v388
  %v390 = vshll.u32 2102212464, %v378
  %v391 = vshrl.u32 920167782, %v379
  %v392 = vor.u32 %v390, %v391
  %v393 = vshll.u32 920167782, %v378
  %v394 = vshrl.u32 1326507024, %v379
  %v395 = vor.u32 %v393, %v394
  %vm396 = vcmp.lt.s32.totalorder %v377, 1
  %vm397 = vcmp.lt.s32.totalorder %v377, 2
  %vm398 = vcmp.lt.s32.totalorder %v377, 3
  %vm399 = vcmp.lt.s32.totalorder %v377, 4
  %v400 = vsel %vm396, %v380, %v383
  %v401 = vsel %vm399, %v389, 2102212464
  %v402 = vsel %vm398, %v386, %v401
  %v403 = vsel %vm397, %v400, %v402
  %v404 = vsel %vm396, %v383, %v386
  %v405 = vsel %vm399, %v392, 920167782
  %v406 = vsel %vm398, %v389, %v405
  %v407 = vsel %vm397, %v404, %v406
  %v408 = vsel %vm396, %v386, %v389
  %v409 = vsel %vm399, %v395, 1326507024
  %v410 = vsel %vm398, %v392, %v409
  %v411 = vsel %vm397, %v408, %v410
  %v412 = vshll.u32 %v372, 8
  %v413 = vmul.u32.u64.compose %v412, %v411
  %v414 = vextract.low.u32 %v413
  %v415 = vextract.high.u32 %v413
  %v416 = vmul.u32.u64.compose %v412, %v407
  %v417 = vextract.low.u32 %v416
  %v418 = vextract.high.u32 %v416
  %v419 = vmul.u32 %v412, %v403
  %v420 = vadd.s32 %v415, %v417
  %vm421 = vc.u32 %v415, %v417
  %v422 = vadd.s32 %v418, 1
  %v423 = vsel %vm421, %v422, %v418
  %v424 = vadd.s32 %v419, %v423
  %v425 = vadd.s32 %v424, 536870912
  %v426 = vshrl.u32 %v425, 30
  %v427 = vshll.u32 %v426, 30
  %v428 = vsub.s32 %v424, %v427
  %vm429 = vcmp.lt.s32.totalorder %v428, 0
  %v430 = vsub.s32 0, %v428
  %v431 = vsel %vm429, %v430, %v428
  %v432 = vclz %v431
  %v433 = vsub.s32 %v432, 2
  %vm434 = vcmp.gt.s32.totalorder 0, %v433
  %v435 = vsel %vm434, 0, %v433
  %v436 = vsub.s32 32, %v435
  %v437 = vshll.u32 %v428, %v435
  %v438 = vshrl.u32 %v420, %v436
  %v439 = vor.u32 %v437, %v438
  %v440 = vsub.s32 4294967266, %v435
  %v441 = vadd.s32 %v440, 127
  %v442 = vshll.u32 %v441, 23
  %v443 = vor.u32 4788187, %v442
  %v444 = vand.u32 2147483647, %v443
  %v446 = vcvt.s32.f32 %v439
  %v447 = vmul.f32 %v446, %v444
  %v448 = vxor.u32 %v447, 2147483648
  %v449 = vsel %vm366, %v448, %v447
  %v450 = vsub.s32 4, %v426
  %v451 = vsel %vm366, %v450, %v426
  %v452 = vsel %vm365, %v42, %v449
  %v453 = vsel %vm365, 0, %v451
  %v454 = vcosq.f32.pop %v452
  %v455 = vsinq.f32.pop %v452
  %vm456 = vweird.f32 %v42
  %v457 = vand.u32 %v453, 3
  %vm458 = vcmp.lt.s32.totalorder %v457, 2
  %vm459 = vcmp.eq.s32.totalorder %v457, 0
  %v460 = vxor.u32 %v455, 2147483648
  %v461 = vsel %vm459, %v454, %v460
  %vm462 = vcmp.eq.s32.totalorder %v457, 2
  %v463 = vxor.u32 %v454, 2147483648
  %v464 = vsel %vm462, %v463, %v455
  %v465 = vsel %vm458, %v461, %v464
  %v466 = vsel %vm456, nan, %v465
  %v467 = vand.u32 2147483647, %v43
  %vm468 = vcmp.le.f32.partialorder %v467, 0.7853982
  %vm469 = vcmp.lt.s32.totalorder %v43, 0
  %v470 = vand.u32 %v43, 2139095040
  %v471 = vshrl.u32 %v470, 23
  %v472 = vsub.s32 %v471, 127
  %v473 = vand.u32 2147483647, %v43
  %v474 = vand.u32 %v473, 8388607
  %v475 = vor.u32 %v474, 8388608
  %v476 = vsub.s32 0, %v475
  %v477 = vadd.s32 %v472, 1
  %vm478 = vcmp.gt.s32.totalorder %v477, 0
  %v479 = vsel %vm478, %v477, 0
  %v480 = vshrl.u32 %v479, 5
  %v481 = vand.u32 %v479, 31
  %v482 = vsub.s32 32, %v481
  %v483 = vshrl.u32 683565275, %v482
  %v484 = vshll.u32 683565275, %v481
  %v485 = vshrl.u32 2475754826, %v482
  %v486 = vor.u32 %v484, %v485
  %v487 = vshll.u32 2475754826, %v481
  %v488 = vshrl.u32 2131351028, %v482
  %v489 = vor.u32 %v487, %v488
  %v490 = vshll.u32 2131351028, %v481
  %v491 = vshrl.u32 2102212464, %v482
  %v492 = vor.u32 %v490, %v491
  %v493 = vshll.u32 2102212464, %v481
  %v494 = vshrl.u32 920167782, %v482
  %v495 = vor.u32 %v493, %v494
  %v496 = vshll.u32 920167782, %v481
  %v497 = vshrl.u32 1326507024, %v482
  %v498 = vor.u32 %v496, %v497
  %vm499 = vcmp.lt.s32.totalorder %v480, 1
  %vm500 = vcmp.lt.s32.totalorder %v480, 2
  %vm501 = vcmp.lt.s32.totalorder %v480, 3
  %vm502 = vcmp.lt.s32.totalorder %v480, 4
  %v503 = vsel %vm499, %v483, %v486
  %v504 = vsel %vm502, %v492, 2102212464
  %v505 = vsel %vm501, %v489, %v504
  %v506 = vsel %vm500, %v503, %v505
  %v507 = vsel %vm499, %v486, %v489
  %v508 = vsel %vm502, %v495, 920167782
  %v509 = vsel %vm501, %v492, %v508
  %v510 = vsel %vm500, %v507, %v509
  %v511 = vsel %vm499, %v489, %v492
  %v512 = vsel %vm502, %v498, 1326507024
  %v513 = vsel %vm501, %v495, %v512
  %v514 = vsel %vm500, %v511, %v513
  %v515 = vshll.u32 %v475, 8
  %v516 = vmul.u32.u64.compose %v515, %v514
  %v517 = vextract.low.u32 %v516
  %v518 = vextract.high.u32 %v516
  %v519 = vmul.u32.u64.compose %v515, %v510
  %v520 = vextract.low.u32 %v519
  %v521 = vextract.high.u32 %v519
  %v522 = vmul.u32 %v515, %v506
  %v523 = vadd.s32 %v518, %v520
  %vm524 = vc.u32 %v518, %v520
  %v525 = vadd.s32 %v521, 1
  %v526 = vsel %vm524, %v525, %v521
  %v527 = vadd.s32 %v522, %v526
  %v528 = vadd.s32 %v527, 536870912
  %v529 = vshrl.u32 %v528, 30
  %v530 = vshll.u32 %v529, 30
  %v531 = vsub.s32 %v527, %v530
  %vm532 = vcmp.lt.s32.totalorder %v531, 0
  %v533 = vsub.s32 0, %v531
  %v534 = vsel %vm532, %v533, %v531
  %v535 = vclz %v534
  %v536 = vsub.s32 %v535, 2
  %vm537 = vcmp.gt.s32.totalorder 0, %v536
  %v538 = vsel %vm537, 0, %v536
  %v539 = vsub.s32 32, %v538
  %v540 = vshll.u32 %v531, %v538
  %v541 = vshrl.u32 %v523, %v539
  %v542 = vor.u32 %v540, %v541
  %v543 = vsub.s32 4294967266, %v538
  %v544 = vadd.s32 %v543, 127
  %v545 = vshll.u32 %v544, 23
  %v546 = vor.u32 4788187, %v545
  %v547 = vand.u32 2147483647, %v546
  %v549 = vcvt.s32.f32 %v542
  %v550 = vmul.f32 %v549, %v547
  %v551 = vxor.u32 %v550, 2147483648
  %v552 = vsel %vm469, %v551, %v550
  %v553 = vsub.s32 4, %v529
  %v554 = vsel %vm469, %v553, %v529
  %v555 = vsel %vm468, %v43, %v552
  %v556 = vsel %vm468, 0, %v554
  %v557 = vcosq.f32.pop %v555
  %v558 = vsinq.f32.pop %v555
  %vm559 = vweird.f32 %v43
  %v560 = vand.u32 %v556, 3
  %vm561 = vcmp.lt.s32.totalorder %v560, 2
  %vm562 = vcmp.eq.s32.totalorder %v560, 0
  %v563 = vxor.u32 %v558, 2147483648
  %v564 = vsel %vm562, %v557, %v563
  %vm565 = vcmp.eq.s32.totalorder %v560, 2
  %v566 = vxor.u32 %v557, 2147483648
  %v567 = vsel %vm565, %v566, %v558
  %v568 = vsel %vm561, %v564, %v567
  %v569 = vsel %vm559, nan, %v568
  %v570 = vand.u32 2147483647, %v44
  %vm571 = vcmp.le.f32.partialorder %v570, 0.7853982
  %vm572 = vcmp.lt.s32.totalorder %v44, 0
  %v573 = vand.u32 %v44, 2139095040
  %v574 = vshrl.u32 %v573, 23
  %v575 = vsub.s32 %v574, 127
  %v576 = vand.u32 2147483647, %v44
  %v577 = vand.u32 %v576, 8388607
  %v578 = vor.u32 %v577, 8388608
  %v579 = vsub.s32 0, %v578
  %v580 = vadd.s32 %v575, 1
  %vm581 = vcmp.gt.s32.totalorder %v580, 0
  %v582 = vsel %vm581, %v580, 0
  %v583 = vshrl.u32 %v582, 5
  %v584 = vand.u32 %v582, 31
  %v585 = vsub.s32 32, %v584
  %v586 = vshrl.u32 683565275, %v585
  %v587 = vshll.u32 683565275, %v584
  %v588 = vshrl.u32 2475754826, %v585
  %v589 = vor.u32 %v587, %v588
  %v590 = vshll.u32 2475754826, %v584
  %v591 = vshrl.u32 2131351028, %v585
  %v592 = vor.u32 %v590, %v591
  %v593 = vshll.u32 2131351028, %v584
  %v594 = vshrl.u32 2102212464, %v585
  %v595 = vor.u32 %v593, %v594
  %v596 = vshll.u32 2102212464, %v584
  %v597 = vshrl.u32 920167782, %v585
  %v598 = vor.u32 %v596, %v597
  %v599 = vshll.u32 920167782, %v584
  %v600 = vshrl.u32 1326507024, %v585
  %v601 = vor.u32 %v599, %v600
  %vm602 = vcmp.lt.s32.totalorder %v583, 1
  %vm603 = vcmp.lt.s32.totalorder %v583, 2
  %vm604 = vcmp.lt.s32.totalorder %v583, 3
  %vm605 = vcmp.lt.s32.totalorder %v583, 4
  %v606 = vsel %vm602, %v586, %v589
  %v607 = vsel %vm605, %v595, 2102212464
  %v608 = vsel %vm604, %v592, %v607
  %v609 = vsel %vm603, %v606, %v608
  %v610 = vsel %vm602, %v589, %v592
  %v611 = vsel %vm605, %v598, 920167782
  %v612 = vsel %vm604, %v595, %v611
  %v613 = vsel %vm603, %v610, %v612
  %v614 = vsel %vm602, %v592, %v595
  %v615 = vsel %vm605, %v601, 1326507024
  %v616 = vsel %vm604, %v598, %v615
  %v617 = vsel %vm603, %v614, %v616
  %v618 = vshll.u32 %v578, 8
  %v619 = vmul.u32.u64.compose %v618, %v617
  %v620 = vextract.low.u32 %v619
  %v621 = vextract.high.u32 %v619
  %v622 = vmul.u32.u64.compose %v618, %v613
  %v623 = vextract.low.u32 %v622
  %v624 = vextract.high.u32 %v622
  %v625 = vmul.u32 %v618, %v609
  %v626 = vadd.s32 %v621, %v623
  %vm627 = vc.u32 %v621, %v623
  %v628 = vadd.s32 %v624, 1
  %v629 = vsel %vm627, %v628, %v624
  %v630 = vadd.s32 %v625, %v629
  %v631 = vadd.s32 %v630, 536870912
  %v632 = vshrl.u32 %v631, 30
  %v633 = vshll.u32 %v632, 30
  %v634 = vsub.s32 %v630, %v633
  %vm635 = vcmp.lt.s32.totalorder %v634, 0
  %v636 = vsub.s32 0, %v634
  %v637 = vsel %vm635, %v636, %v634
  %v638 = vclz %v637
  %v639 = vsub.s32 %v638, 2
  %vm640 = vcmp.gt.s32.totalorder 0, %v639
  %v641 = vsel %vm640, 0, %v639
  %v642 = vsub.s32 32, %v641
  %v643 = vshll.u32 %v634, %v641
  %v644 = vshrl.u32 %v626, %v642
  %v645 = vor.u32 %v643, %v644
  %v646 = vsub.s32 4294967266, %v641
  %v647 = vadd.s32 %v646, 127
  %v648 = vshll.u32 %v647, 23
  %v649 = vor.u32 4788187, %v648
  %v650 = vand.u32 2147483647, %v649
  %v652 = vcvt.s32.f32 %v645
  %v653 = vmul.f32 %v652, %v650
  %v654 = vxor.u32 %v653, 2147483648
  %v655 = vsel %vm572, %v654, %v653
  %v656 = vsub.s32 4, %v632
  %v657 = vsel %vm572, %v656, %v632
  %v658 = vsel %vm571, %v44, %v655
  %v659 = vsel %vm571, 0, %v657
  %v660 = vcosq.f32.pop %v658
  %v661 = vsinq.f32.pop %v658
  %vm662 = vweird.f32 %v44
  %v663 = vand.u32 %v659, 3
  %vm664 = vcmp.lt.s32.totalorder %v663, 2
  %vm665 = vcmp.eq.s32.totalorder %v663, 0
  %v666 = vxor.u32 %v661, 2147483648
  %v667 = vsel %vm665, %v660, %v666
  %vm668 = vcmp.eq.s32.totalorder %v663, 2
  %v669 = vxor.u32 %v660, 2147483648
  %v670 = vsel %vm668, %v669, %v661
  %v671 = vsel %vm664, %v667, %v670
  %v672 = vsel %vm662, nan, %v671
  %v673 = vand.u32 2147483647, %v45
  %vm674 = vcmp.le.f32.partialorder %v673, 0.7853982
  %vm675 = vcmp.lt.s32.totalorder %v45, 0
  %v676 = vand.u32 %v45, 2139095040
  %v677 = vshrl.u32 %v676, 23
  %v678 = vsub.s32 %v677, 127
  %v679 = vand.u32 2147483647, %v45
  %v680 = vand.u32 %v679, 8388607
  %v681 = vor.u32 %v680, 8388608
  %v682 = vsub.s32 0, %v681
  %v683 = vadd.s32 %v678, 1
  %vm684 = vcmp.gt.s32.totalorder %v683, 0
  %v685 = vsel %vm684, %v683, 0
  %v686 = vshrl.u32 %v685, 5
  %v687 = vand.u32 %v685, 31
  %v688 = vsub.s32 32, %v687
  %v689 = vshrl.u32 683565275, %v688
  %v690 = vshll.u32 683565275, %v687
  %v691 = vshrl.u32 2475754826, %v688
  %v692 = vor.u32 %v690, %v691
  %v693 = vshll.u32 2475754826, %v687
  %v694 = vshrl.u32 2131351028, %v688
  %v695 = vor.u32 %v693, %v694
  %v696 = vshll.u32 2131351028, %v687
  %v697 = vshrl.u32 2102212464, %v688
  %v698 = vor.u32 %v696, %v697
  %v699 = vshll.u32 2102212464, %v687
  %v700 = vshrl.u32 920167782, %v688
  %v701 = vor.u32 %v699, %v700
  %v702 = vshll.u32 920167782, %v687
  %v703 = vshrl.u32 1326507024, %v688
  %v704 = vor.u32 %v702, %v703
  %vm705 = vcmp.lt.s32.totalorder %v686, 1
  %vm706 = vcmp.lt.s32.totalorder %v686, 2
  %vm707 = vcmp.lt.s32.totalorder %v686, 3
  %vm708 = vcmp.lt.s32.totalorder %v686, 4
  %v709 = vsel %vm705, %v689, %v692
  %v710 = vsel %vm708, %v698, 2102212464
  %v711 = vsel %vm707, %v695, %v710
  %v712 = vsel %vm706, %v709, %v711
  %v713 = vsel %vm705, %v692, %v695
  %v714 = vsel %vm708, %v701, 920167782
  %v715 = vsel %vm707, %v698, %v714
  %v716 = vsel %vm706, %v713, %v715
  %v717 = vsel %vm705, %v695, %v698
  %v718 = vsel %vm708, %v704, 1326507024
  %v719 = vsel %vm707, %v701, %v718
  %v720 = vsel %vm706, %v717, %v719
  %v721 = vshll.u32 %v681, 8
  %v722 = vmul.u32.u64.compose %v721, %v720
  %v723 = vextract.low.u32 %v722
  %v724 = vextract.high.u32 %v722
  %v725 = vmul.u32.u64.compose %v721, %v716
  %v726 = vextract.low.u32 %v725
  %v727 = vextract.high.u32 %v725
  %v728 = vmul.u32 %v721, %v712
  %v729 = vadd.s32 %v724, %v726
  %vm730 = vc.u32 %v724, %v726
  %v731 = vadd.s32 %v727, 1
  %v732 = vsel %vm730, %v731, %v727
  %v733 = vadd.s32 %v728, %v732
  %v734 = vadd.s32 %v733, 536870912
  %v735 = vshrl.u32 %v734, 30
  %v736 = vshll.u32 %v735, 30
  %v737 = vsub.s32 %v733, %v736
  %vm738 = vcmp.lt.s32.totalorder %v737, 0
  %v739 = vsub.s32 0, %v737
  %v740 = vsel %vm738, %v739, %v737
  %v741 = vclz %v740
  %v742 = vsub.s32 %v741, 2
  %vm743 = vcmp.gt.s32.totalorder 0, %v742
  %v744 = vsel %vm743, 0, %v742
  %v745 = vsub.s32 32, %v744
  %v746 = vshll.u32 %v737, %v744
  %v747 = vshrl.u32 %v729, %v745
  %v748 = vor.u32 %v746, %v747
  %v749 = vsub.s32 4294967266, %v744
  %v750 = vadd.s32 %v749, 127
  %v751 = vshll.u32 %v750, 23
  %v752 = vor.u32 4788187, %v751
  %v753 = vand.u32 2147483647, %v752
  %v755 = vcvt.s32.f32 %v748
  %v756 = vmul.f32 %v755, %v753
  %v757 = vxor.u32 %v756, 2147483648
  %v758 = vsel %vm675, %v757, %v756
  %v759 = vsub.s32 4, %v735
  %v760 = vsel %vm675, %v759, %v735
  %v761 = vsel %vm674, %v45, %v758
  %v762 = vsel %vm674, 0, %v760
  %v763 = vcosq.f32.pop %v761
  %v764 = vsinq.f32.pop %v761
  %vm765 = vweird.f32 %v45
  %v766 = vand.u32 %v762, 3
  %vm767 = vcmp.lt.s32.totalorder %v766, 2
  %vm768 = vcmp.eq.s32.totalorder %v766, 0
  %v769 = vxor.u32 %v764, 2147483648
  %v770 = vsel %vm768, %v763, %v769
  %vm771 = vcmp.eq.s32.totalorder %v766, 2
  %v772 = vxor.u32 %v763, 2147483648
  %v773 = vsel %vm771, %v772, %v764
  %v774 = vsel %vm767, %v770, %v773
  %v775 = vsel %vm765, nan, %v774
  %v776 = vand.u32 2147483647, %v46
  %vm777 = vcmp.le.f32.partialorder %v776, 0.7853982
  %vm778 = vcmp.lt.s32.totalorder %v46, 0
  %v779 = vand.u32 %v46, 2139095040
  %v780 = vshrl.u32 %v779, 23
  %v781 = vsub.s32 %v780, 127
  %v782 = vand.u32 2147483647, %v46
  %v783 = vand.u32 %v782, 8388607
  %v784 = vor.u32 %v783, 8388608
  %v785 = vsub.s32 0, %v784
  %v786 = vadd.s32 %v781, 1
  %vm787 = vcmp.gt.s32.totalorder %v786, 0
  %v788 = vsel %vm787, %v786, 0
  %v789 = vshrl.u32 %v788, 5
  %v790 = vand.u32 %v788, 31
  %v791 = vsub.s32 32, %v790
  %v792 = vshrl.u32 683565275, %v791
  %v793 = vshll.u32 683565275, %v790
  %v794 = vshrl.u32 2475754826, %v791
  %v795 = vor.u32 %v793, %v794
  %v796 = vshll.u32 2475754826, %v790
  %v797 = vshrl.u32 2131351028, %v791
  %v798 = vor.u32 %v796, %v797
  %v799 = vshll.u32 2131351028, %v790
  %v800 = vshrl.u32 2102212464, %v791
  %v801 = vor.u32 %v799, %v800
  %v802 = vshll.u32 2102212464, %v790
  %v803 = vshrl.u32 920167782, %v791
  %v804 = vor.u32 %v802, %v803
  %v805 = vshll.u32 920167782, %v790
  %v806 = vshrl.u32 1326507024, %v791
  %v807 = vor.u32 %v805, %v806
  %vm808 = vcmp.lt.s32.totalorder %v789, 1
  %vm809 = vcmp.lt.s32.totalorder %v789, 2
  %vm810 = vcmp.lt.s32.totalorder %v789, 3
  %vm811 = vcmp.lt.s32.totalorder %v789, 4
  %v812 = vsel %vm808, %v792, %v795
  %v813 = vsel %vm811, %v801, 2102212464
  %v814 = vsel %vm810, %v798, %v813
  %v815 = vsel %vm809, %v812, %v814
  %v816 = vsel %vm808, %v795, %v798
  %v817 = vsel %vm811, %v804, 920167782
  %v818 = vsel %vm810, %v801, %v817
  %v819 = vsel %vm809, %v816, %v818
  %v820 = vsel %vm808, %v798, %v801
  %v821 = vsel %vm811, %v807, 1326507024
  %v822 = vsel %vm810, %v804, %v821
  %v823 = vsel %vm809, %v820, %v822
  %v824 = vshll.u32 %v784, 8
  %v825 = vmul.u32.u64.compose %v824, %v823
  %v826 = vextract.low.u32 %v825
  %v827 = vextract.high.u32 %v825
  %v828 = vmul.u32.u64.compose %v824, %v819
  %v829 = vextract.low.u32 %v828
  %v830 = vextract.high.u32 %v828
  %v831 = vmul.u32 %v824, %v815
  %v832 = vadd.s32 %v827, %v829
  %vm833 = vc.u32 %v827, %v829
  %v834 = vadd.s32 %v830, 1
  %v835 = vsel %vm833, %v834, %v830
  %v836 = vadd.s32 %v831, %v835
  %v837 = vadd.s32 %v836, 536870912
  %v838 = vshrl.u32 %v837, 30
  %v839 = vshll.u32 %v838, 30
  %v840 = vsub.s32 %v836, %v839
  %vm841 = vcmp.lt.s32.totalorder %v840, 0
  %v842 = vsub.s32 0, %v840
  %v843 = vsel %vm841, %v842, %v840
  %v844 = vclz %v843
  %v845 = vsub.s32 %v844, 2
  %vm846 = vcmp.gt.s32.totalorder 0, %v845
  %v847 = vsel %vm846, 0, %v845
  %v848 = vsub.s32 32, %v847
  %v849 = vshll.u32 %v840, %v847
  %v850 = vshrl.u32 %v832, %v848
  %v851 = vor.u32 %v849, %v850
  %v852 = vsub.s32 4294967266, %v847
  %v853 = vadd.s32 %v852, 127
  %v854 = vshll.u32 %v853, 23
  %v855 = vor.u32 4788187, %v854
  %v856 = vand.u32 2147483647, %v855
  %v858 = vcvt.s32.f32 %v851
  %v859 = vmul.f32 %v858, %v856
  %v860 = vxor.u32 %v859, 2147483648
  %v861 = vsel %vm778, %v860, %v859
  %v862 = vsub.s32 4, %v838
  %v863 = vsel %vm778, %v862, %v838
  %v864 = vsel %vm777, %v46, %v861
  %v865 = vsel %vm777, 0, %v863
  %v866 = vcosq.f32.pop %v864
  %v867 = vsinq.f32.pop %v864
  %vm868 = vweird.f32 %v46
  %v869 = vand.u32 %v865, 3
  %vm870 = vcmp.lt.s32.totalorder %v869, 2
  %vm871 = vcmp.eq.s32.totalorder %v869, 0
  %v872 = vxor.u32 %v867, 2147483648
  %v873 = vsel %vm871, %v866, %v872
  %vm874 = vcmp.eq.s32.totalorder %v869, 2
  %v875 = vxor.u32 %v866, 2147483648
  %v876 = vsel %vm874, %v875, %v867
  %v877 = vsel %vm870, %v873, %v876
  %v878 = vsel %vm868, nan, %v877
  %v879 = vand.u32 2147483647, %v47
  %vm880 = vcmp.le.f32.partialorder %v879, 0.7853982
  %vm881 = vcmp.lt.s32.totalorder %v47, 0
  %v882 = vand.u32 %v47, 2139095040
  %v883 = vshrl.u32 %v882, 23
  %v884 = vsub.s32 %v883, 127
  %v885 = vand.u32 2147483647, %v47
  %v886 = vand.u32 %v885, 8388607
  %v887 = vor.u32 %v886, 8388608
  %v888 = vsub.s32 0, %v887
  %v889 = vadd.s32 %v884, 1
  %vm890 = vcmp.gt.s32.totalorder %v889, 0
  %v891 = vsel %vm890, %v889, 0
  %v892 = vshrl.u32 %v891, 5
  %v893 = vand.u32 %v891, 31
  %v894 = vsub.s32 32, %v893
  %v895 = vshrl.u32 683565275, %v894
  %v896 = vshll.u32 683565275, %v893
  %v897 = vshrl.u32 2475754826, %v894
  %v898 = vor.u32 %v896, %v897
  %v899 = vshll.u32 2475754826, %v893
  %v900 = vshrl.u32 2131351028, %v894
  %v901 = vor.u32 %v899, %v900
  %v902 = vshll.u32 2131351028, %v893
  %v903 = vshrl.u32 2102212464, %v894
  %v904 = vor.u32 %v902, %v903
  %v905 = vshll.u32 2102212464, %v893
  %v906 = vshrl.u32 920167782, %v894
  %v907 = vor.u32 %v905, %v906
  %v908 = vshll.u32 920167782, %v893
  %v909 = vshrl.u32 1326507024, %v894
  %v910 = vor.u32 %v908, %v909
  %vm911 = vcmp.lt.s32.totalorder %v892, 1
  %vm912 = vcmp.lt.s32.totalorder %v892, 2
  %vm913 = vcmp.lt.s32.totalorder %v892, 3
  %vm914 = vcmp.lt.s32.totalorder %v892, 4
  %v915 = vsel %vm911, %v895, %v898
  %v916 = vsel %vm914, %v904, 2102212464
  %v917 = vsel %vm913, %v901, %v916
  %v918 = vsel %vm912, %v915, %v917
  %v919 = vsel %vm911, %v898, %v901
  %v920 = vsel %vm914, %v907, 920167782
  %v921 = vsel %vm913, %v904, %v920
  %v922 = vsel %vm912, %v919, %v921
  %v923 = vsel %vm911, %v901, %v904
  %v924 = vsel %vm914, %v910, 1326507024
  %v925 = vsel %vm913, %v907, %v924
  %v926 = vsel %vm912, %v923, %v925
  %v927 = vshll.u32 %v887, 8
  %v928 = vmul.u32.u64.compose %v927, %v926
  %v929 = vextract.low.u32 %v928
  %v930 = vextract.high.u32 %v928
  %v931 = vmul.u32.u64.compose %v927, %v922
  %v932 = vextract.low.u32 %v931
  %v933 = vextract.high.u32 %v931
  %v934 = vmul.u32 %v927, %v918
  %v935 = vadd.s32 %v930, %v932
  %vm936 = vc.u32 %v930, %v932
  %v937 = vadd.s32 %v933, 1
  %v938 = vsel %vm936, %v937, %v933
  %v939 = vadd.s32 %v934, %v938
  %v940 = vadd.s32 %v939, 536870912
  %v941 = vshrl.u32 %v940, 30
  %v942 = vshll.u32 %v941, 30
  %v943 = vsub.s32 %v939, %v942
  %vm944 = vcmp.lt.s32.totalorder %v943, 0
  %v945 = vsub.s32 0, %v943
  %v946 = vsel %vm944, %v945, %v943
  %v947 = vclz %v946
  %v948 = vsub.s32 %v947, 2
  %vm949 = vcmp.gt.s32.totalorder 0, %v948
  %v950 = vsel %vm949, 0, %v948
  %v951 = vsub.s32 32, %v950
  %v952 = vshll.u32 %v943, %v950
  %v953 = vshrl.u32 %v935, %v951
  %v954 = vor.u32 %v952, %v953
  %v955 = vsub.s32 4294967266, %v950
  %v956 = vadd.s32 %v955, 127
  %v957 = vshll.u32 %v956, 23
  %v958 = vor.u32 4788187, %v957
  %v959 = vand.u32 2147483647, %v958
  %v961 = vcvt.s32.f32 %v954
  %v962 = vmul.f32 %v961, %v959
  %v963 = vxor.u32 %v962, 2147483648
  %v964 = vsel %vm881, %v963, %v962
  %v965 = vsub.s32 4, %v941
  %v966 = vsel %vm881, %v965, %v941
  %v967 = vsel %vm880, %v47, %v964
  %v968 = vsel %vm880, 0, %v966
  %v969 = vcosq.f32.pop %v967
  %v970 = vsinq.f32.pop %v967
  %vm971 = vweird.f32 %v47
  %v972 = vand.u32 %v968, 3
  %vm973 = vcmp.lt.s32.totalorder %v972, 2
  %vm974 = vcmp.eq.s32.totalorder %v972, 0
  %v975 = vxor.u32 %v970, 2147483648
  %v976 = vsel %vm974, %v969, %v975
  %vm977 = vcmp.eq.s32.totalorder %v972, 2
  %v978 = vxor.u32 %v969, 2147483648
  %v979 = vsel %vm977, %v978, %v970
  %v980 = vsel %vm973, %v976, %v979
  %v981 = vsel %vm971, nan, %v980
  %v982 = vand.u32 2147483647, %v48
  %vm983 = vcmp.le.f32.partialorder %v982, 0.7853982
  %vm984 = vcmp.lt.s32.totalorder %v48, 0
  %v985 = vand.u32 %v48, 2139095040
  %v986 = vshrl.u32 %v985, 23
  %v987 = vsub.s32 %v986, 127
  %v988 = vand.u32 2147483647, %v48
  %v989 = vand.u32 %v988, 8388607
  %v990 = vor.u32 %v989, 8388608
  %v991 = vsub.s32 0, %v990
  %v992 = vadd.s32 %v987, 1
  %vm993 = vcmp.gt.s32.totalorder %v992, 0
  %v994 = vsel %vm993, %v992, 0
  %v995 = vshrl.u32 %v994, 5
  %v996 = vand.u32 %v994, 31
  %v997 = vsub.s32 32, %v996
  %v998 = vshrl.u32 683565275, %v997
  %v999 = vshll.u32 683565275, %v996
  %v1000 = vshrl.u32 2475754826, %v997
  %v1001 = vor.u32 %v999, %v1000
  %v1002 = vshll.u32 2475754826, %v996
  %v1003 = vshrl.u32 2131351028, %v997
  %v1004 = vor.u32 %v1002, %v1003
  %v1005 = vshll.u32 2131351028, %v996
  %v1006 = vshrl.u32 2102212464, %v997
  %v1007 = vor.u32 %v1005, %v1006
  %v1008 = vshll.u32 2102212464, %v996
  %v1009 = vshrl.u32 920167782, %v997
  %v1010 = vor.u32 %v1008, %v1009
  %v1011 = vshll.u32 920167782, %v996
  %v1012 = vshrl.u32 1326507024, %v997
  %v1013 = vor.u32 %v1011, %v1012
  %vm1014 = vcmp.lt.s32.totalorder %v995, 1
  %vm1015 = vcmp.lt.s32.totalorder %v995, 2
  %vm1016 = vcmp.lt.s32.totalorder %v995, 3
  %vm1017 = vcmp.lt.s32.totalorder %v995, 4
  %v1018 = vsel %vm1014, %v998, %v1001
  %v1019 = vsel %vm1017, %v1007, 2102212464
  %v1020 = vsel %vm1016, %v1004, %v1019
  %v1021 = vsel %vm1015, %v1018, %v1020
  %v1022 = vsel %vm1014, %v1001, %v1004
  %v1023 = vsel %vm1017, %v1010, 920167782
  %v1024 = vsel %vm1016, %v1007, %v1023
  %v1025 = vsel %vm1015, %v1022, %v1024
  %v1026 = vsel %vm1014, %v1004, %v1007
  %v1027 = vsel %vm1017, %v1013, 1326507024
  %v1028 = vsel %vm1016, %v1010, %v1027
  %v1029 = vsel %vm1015, %v1026, %v1028
  %v1030 = vshll.u32 %v990, 8
  %v1031 = vmul.u32.u64.compose %v1030, %v1029
  %v1032 = vextract.low.u32 %v1031
  %v1033 = vextract.high.u32 %v1031
  %v1034 = vmul.u32.u64.compose %v1030, %v1025
  %v1035 = vextract.low.u32 %v1034
  %v1036 = vextract.high.u32 %v1034
  %v1037 = vmul.u32 %v1030, %v1021
  %v1038 = vadd.s32 %v1033, %v1035
  %vm1039 = vc.u32 %v1033, %v1035
  %v1040 = vadd.s32 %v1036, 1
  %v1041 = vsel %vm1039, %v1040, %v1036
  %v1042 = vadd.s32 %v1037, %v1041
  %v1043 = vadd.s32 %v1042, 536870912
  %v1044 = vshrl.u32 %v1043, 30
  %v1045 = vshll.u32 %v1044, 30
  %v1046 = vsub.s32 %v1042, %v1045
  %vm1047 = vcmp.lt.s32.totalorder %v1046, 0
  %v1048 = vsub.s32 0, %v1046
  %v1049 = vsel %vm1047, %v1048, %v1046
  %v1050 = vclz %v1049
  %v1051 = vsub.s32 %v1050, 2
  %vm1052 = vcmp.gt.s32.totalorder 0, %v1051
  %v1053 = vsel %vm1052, 0, %v1051
  %v1054 = vsub.s32 32, %v1053
  %v1055 = vshll.u32 %v1046, %v1053
  %v1056 = vshrl.u32 %v1038, %v1054
  %v1057 = vor.u32 %v1055, %v1056
  %v1058 = vsub.s32 4294967266, %v1053
  %v1059 = vadd.s32 %v1058, 127
  %v1060 = vshll.u32 %v1059, 23
  %v1061 = vor.u32 4788187, %v1060
  %v1062 = vand.u32 2147483647, %v1061
  %v1064 = vcvt.s32.f32 %v1057
  %v1065 = vmul.f32 %v1064, %v1062
  %v1066 = vxor.u32 %v1065, 2147483648
  %v1067 = vsel %vm984, %v1066, %v1065
  %v1068 = vsub.s32 4, %v1044
  %v1069 = vsel %vm984, %v1068, %v1044
  %v1070 = vsel %vm983, %v48, %v1067
  %v1071 = vsel %vm983, 0, %v1069
  %v1072 = vcosq.f32.pop %v1070
  %v1073 = vsinq.f32.pop %v1070
  %vm1074 = vweird.f32 %v48
  %v1075 = vand.u32 %v1071, 3
  %vm1076 = vcmp.lt.s32.totalorder %v1075, 2
  %vm1077 = vcmp.eq.s32.totalorder %v1075, 0
  %v1078 = vxor.u32 %v1073, 2147483648
  %v1079 = vsel %vm1077, %v1072, %v1078
  %vm1080 = vcmp.eq.s32.totalorder %v1075, 2
  %v1081 = vxor.u32 %v1072, 2147483648
  %v1082 = vsel %vm1080, %v1081, %v1073
  %v1083 = vsel %vm1076, %v1079, %v1082
  %v1084 = vsel %vm1074, nan, %v1083
  %v1085 = vand.u32 2147483647, %v49
  %vm1086 = vcmp.le.f32.partialorder %v1085, 0.7853982
  %vm1087 = vcmp.lt.s32.totalorder %v49, 0
  %v1088 = vand.u32 %v49, 2139095040
  %v1089 = vshrl.u32 %v1088, 23
  %v1090 = vsub.s32 %v1089, 127
  %v1091 = vand.u32 2147483647, %v49
  %v1092 = vand.u32 %v1091, 8388607
  %v1093 = vor.u32 %v1092, 8388608
  %v1094 = vsub.s32 0, %v1093
  %v1095 = vadd.s32 %v1090, 1
  %vm1096 = vcmp.gt.s32.totalorder %v1095, 0
  %v1097 = vsel %vm1096, %v1095, 0
  %v1098 = vshrl.u32 %v1097, 5
  %v1099 = vand.u32 %v1097, 31
  %v1100 = vsub.s32 32, %v1099
  %v1101 = vshrl.u32 683565275, %v1100
  %v1102 = vshll.u32 683565275, %v1099
  %v1103 = vshrl.u32 2475754826, %v1100
  %v1104 = vor.u32 %v1102, %v1103
  %v1105 = vshll.u32 2475754826, %v1099
  %v1106 = vshrl.u32 2131351028, %v1100
  %v1107 = vor.u32 %v1105, %v1106
  %v1108 = vshll.u32 2131351028, %v1099
  %v1109 = vshrl.u32 2102212464, %v1100
  %v1110 = vor.u32 %v1108, %v1109
  %v1111 = vshll.u32 2102212464, %v1099
  %v1112 = vshrl.u32 920167782, %v1100
  %v1113 = vor.u32 %v1111, %v1112
  %v1114 = vshll.u32 920167782, %v1099
  %v1115 = vshrl.u32 1326507024, %v1100
  %v1116 = vor.u32 %v1114, %v1115
  %vm1117 = vcmp.lt.s32.totalorder %v1098, 1
  %vm1118 = vcmp.lt.s32.totalorder %v1098, 2
  %vm1119 = vcmp.lt.s32.totalorder %v1098, 3
  %vm1120 = vcmp.lt.s32.totalorder %v1098, 4
  %v1121 = vsel %vm1117, %v1101, %v1104
  %v1122 = vsel %vm1120, %v1110, 2102212464
  %v1123 = vsel %vm1119, %v1107, %v1122
  %v1124 = vsel %vm1118, %v1121, %v1123
  %v1125 = vsel %vm1117, %v1104, %v1107
  %v1126 = vsel %vm1120, %v1113, 920167782
  %v1127 = vsel %vm1119, %v1110, %v1126
  %v1128 = vsel %vm1118, %v1125, %v1127
  %v1129 = vsel %vm1117, %v1107, %v1110
  %v1130 = vsel %vm1120, %v1116, 1326507024
  %v1131 = vsel %vm1119, %v1113, %v1130
  %v1132 = vsel %vm1118, %v1129, %v1131
  %v1133 = vshll.u32 %v1093, 8
  %v1134 = vmul.u32.u64.compose %v1133, %v1132
  %v1135 = vextract.low.u32 %v1134
  %v1136 = vextract.high.u32 %v1134
  %v1137 = vmul.u32.u64.compose %v1133, %v1128
  %v1138 = vextract.low.u32 %v1137
  %v1139 = vextract.high.u32 %v1137
  %v1140 = vmul.u32 %v1133, %v1124
  %v1141 = vadd.s32 %v1136, %v1138
  %vm1142 = vc.u32 %v1136, %v1138
  %v1143 = vadd.s32 %v1139, 1
  %v1144 = vsel %vm1142, %v1143, %v1139
  %v1145 = vadd.s32 %v1140, %v1144
  %v1146 = vadd.s32 %v1145, 536870912
  %v1147 = vshrl.u32 %v1146, 30
  %v1148 = vshll.u32 %v1147, 30
  %v1149 = vsub.s32 %v1145, %v1148
  %vm1150 = vcmp.lt.s32.totalorder %v1149, 0
  %v1151 = vsub.s32 0, %v1149
  %v1152 = vsel %vm1150, %v1151, %v1149
  %v1153 = vclz %v1152
  %v1154 = vsub.s32 %v1153, 2
  %vm1155 = vcmp.gt.s32.totalorder 0, %v1154
  %v1156 = vsel %vm1155, 0, %v1154
  %v1157 = vsub.s32 32, %v1156
  %v1158 = vshll.u32 %v1149, %v1156
  %v1159 = vshrl.u32 %v1141, %v1157
  %v1160 = vor.u32 %v1158, %v1159
  %v1161 = vsub.s32 4294967266, %v1156
  %v1162 = vadd.s32 %v1161, 127
  %v1163 = vshll.u32 %v1162, 23
  %v1164 = vor.u32 4788187, %v1163
  %v1165 = vand.u32 2147483647, %v1164
  %v1167 = vcvt.s32.f32 %v1160
  %v1168 = vmul.f32 %v1167, %v1165
  %v1169 = vxor.u32 %v1168, 2147483648
  %v1170 = vsel %vm1087, %v1169, %v1168
  %v1171 = vsub.s32 4, %v1147
  %v1172 = vsel %vm1087, %v1171, %v1147
  %v1173 = vsel %vm1086, %v49, %v1170
  %v1174 = vsel %vm1086, 0, %v1172
  %v1175 = vcosq.f32.pop %v1173
  %v1176 = vsinq.f32.pop %v1173
  %vm1177 = vweird.f32 %v49
  %v1178 = vand.u32 %v1174, 3
  %vm1179 = vcmp.lt.s32.totalorder %v1178, 2
  %vm1180 = vcmp.eq.s32.totalorder %v1178, 0
  %v1181 = vxor.u32 %v1176, 2147483648
  %v1182 = vsel %vm1180, %v1175, %v1181
  %vm1183 = vcmp.eq.s32.totalorder %v1178, 2
  %v1184 = vxor.u32 %v1175, 2147483648
  %v1185 = vsel %vm1183, %v1184, %v1176
  %v1186 = vsel %vm1179, %v1182, %v1185
  %v1187 = vsel %vm1177, nan, %v1186
  %v1188 = vand.u32 2147483647, %v50
  %vm1189 = vcmp.le.f32.partialorder %v1188, 0.7853982
  %vm1190 = vcmp.lt.s32.totalorder %v50, 0
  %v1191 = vand.u32 %v50, 2139095040
  %v1192 = vshrl.u32 %v1191, 23
  %v1193 = vsub.s32 %v1192, 127
  %v1194 = vand.u32 2147483647, %v50
  %v1195 = vand.u32 %v1194, 8388607
  %v1196 = vor.u32 %v1195, 8388608
  %v1197 = vsub.s32 0, %v1196
  %v1198 = vadd.s32 %v1193, 1
  %vm1199 = vcmp.gt.s32.totalorder %v1198, 0
  %v1200 = vsel %vm1199, %v1198, 0
  %v1201 = vshrl.u32 %v1200, 5
  %v1202 = vand.u32 %v1200, 31
  %v1203 = vsub.s32 32, %v1202
  %v1204 = vshrl.u32 683565275, %v1203
  %v1205 = vshll.u32 683565275, %v1202
  %v1206 = vshrl.u32 2475754826, %v1203
  %v1207 = vor.u32 %v1205, %v1206
  %v1208 = vshll.u32 2475754826, %v1202
  %v1209 = vshrl.u32 2131351028, %v1203
  %v1210 = vor.u32 %v1208, %v1209
  %v1211 = vshll.u32 2131351028, %v1202
  %v1212 = vshrl.u32 2102212464, %v1203
  %v1213 = vor.u32 %v1211, %v1212
  %v1214 = vshll.u32 2102212464, %v1202
  %v1215 = vshrl.u32 920167782, %v1203
  %v1216 = vor.u32 %v1214, %v1215
  %v1217 = vshll.u32 920167782, %v1202
  %v1218 = vshrl.u32 1326507024, %v1203
  %v1219 = vor.u32 %v1217, %v1218
  %vm1220 = vcmp.lt.s32.totalorder %v1201, 1
  %vm1221 = vcmp.lt.s32.totalorder %v1201, 2
  %vm1222 = vcmp.lt.s32.totalorder %v1201, 3
  %vm1223 = vcmp.lt.s32.totalorder %v1201, 4
  %v1224 = vsel %vm1220, %v1204, %v1207
  %v1225 = vsel %vm1223, %v1213, 2102212464
  %v1226 = vsel %vm1222, %v1210, %v1225
  %v1227 = vsel %vm1221, %v1224, %v1226
  %v1228 = vsel %vm1220, %v1207, %v1210
  %v1229 = vsel %vm1223, %v1216, 920167782
  %v1230 = vsel %vm1222, %v1213, %v1229
  %v1231 = vsel %vm1221, %v1228, %v1230
  %v1232 = vsel %vm1220, %v1210, %v1213
  %v1233 = vsel %vm1223, %v1219, 1326507024
  %v1234 = vsel %vm1222, %v1216, %v1233
  %v1235 = vsel %vm1221, %v1232, %v1234
  %v1236 = vshll.u32 %v1196, 8
  %v1237 = vmul.u32.u64.compose %v1236, %v1235
  %v1238 = vextract.low.u32 %v1237
  %v1239 = vextract.high.u32 %v1237
  %v1240 = vmul.u32.u64.compose %v1236, %v1231
  %v1241 = vextract.low.u32 %v1240
  %v1242 = vextract.high.u32 %v1240
  %v1243 = vmul.u32 %v1236, %v1227
  %v1244 = vadd.s32 %v1239, %v1241
  %vm1245 = vc.u32 %v1239, %v1241
  %v1246 = vadd.s32 %v1242, 1
  %v1247 = vsel %vm1245, %v1246, %v1242
  %v1248 = vadd.s32 %v1243, %v1247
  %v1249 = vadd.s32 %v1248, 536870912
  %v1250 = vshrl.u32 %v1249, 30
  %v1251 = vshll.u32 %v1250, 30
  %v1252 = vsub.s32 %v1248, %v1251
  %vm1253 = vcmp.lt.s32.totalorder %v1252, 0
  %v1254 = vsub.s32 0, %v1252
  %v1255 = vsel %vm1253, %v1254, %v1252
  %v1256 = vclz %v1255
  %v1257 = vsub.s32 %v1256, 2
  %vm1258 = vcmp.gt.s32.totalorder 0, %v1257
  %v1259 = vsel %vm1258, 0, %v1257
  %v1260 = vsub.s32 32, %v1259
  %v1261 = vshll.u32 %v1252, %v1259
  %v1262 = vshrl.u32 %v1244, %v1260
  %v1263 = vor.u32 %v1261, %v1262
  %v1264 = vsub.s32 4294967266, %v1259
  %v1265 = vadd.s32 %v1264, 127
  %v1266 = vshll.u32 %v1265, 23
  %v1267 = vor.u32 4788187, %v1266
  %v1268 = vand.u32 2147483647, %v1267
  %v1270 = vcvt.s32.f32 %v1263
  %v1271 = vmul.f32 %v1270, %v1268
  %v1272 = vxor.u32 %v1271, 2147483648
  %v1273 = vsel %vm1190, %v1272, %v1271
  %v1274 = vsub.s32 4, %v1250
  %v1275 = vsel %vm1190, %v1274, %v1250
  %v1276 = vsel %vm1189, %v50, %v1273
  %v1277 = vsel %vm1189, 0, %v1275
  %v1278 = vcosq.f32.pop %v1276
  %v1279 = vsinq.f32.pop %v1276
  %vm1280 = vweird.f32 %v50
  %v1281 = vand.u32 %v1277, 3
  %vm1282 = vcmp.lt.s32.totalorder %v1281, 2
  %vm1283 = vcmp.eq.s32.totalorder %v1281, 0
  %v1284 = vxor.u32 %v1279, 2147483648
  %v1285 = vsel %vm1283, %v1278, %v1284
  %vm1286 = vcmp.eq.s32.totalorder %v1281, 2
  %v1287 = vxor.u32 %v1278, 2147483648
  %v1288 = vsel %vm1286, %v1287, %v1279
  %v1289 = vsel %vm1282, %v1285, %v1288
  %v1290 = vsel %vm1280, nan, %v1289
  %v1291 = vand.u32 2147483647, %v51
  %vm1292 = vcmp.le.f32.partialorder %v1291, 0.7853982
  %vm1293 = vcmp.lt.s32.totalorder %v51, 0
  %v1294 = vand.u32 %v51, 2139095040
  %v1295 = vshrl.u32 %v1294, 23
  %v1296 = vsub.s32 %v1295, 127
  %v1297 = vand.u32 2147483647, %v51
  %v1298 = vand.u32 %v1297, 8388607
  %v1299 = vor.u32 %v1298, 8388608
  %v1300 = vsub.s32 0, %v1299
  %v1301 = vadd.s32 %v1296, 1
  %vm1302 = vcmp.gt.s32.totalorder %v1301, 0
  %v1303 = vsel %vm1302, %v1301, 0
  %v1304 = vshrl.u32 %v1303, 5
  %v1305 = vand.u32 %v1303, 31
  %v1306 = vsub.s32 32, %v1305
  %v1307 = vshrl.u32 683565275, %v1306
  %v1308 = vshll.u32 683565275, %v1305
  %v1309 = vshrl.u32 2475754826, %v1306
  %v1310 = vor.u32 %v1308, %v1309
  %v1311 = vshll.u32 2475754826, %v1305
  %v1312 = vshrl.u32 2131351028, %v1306
  %v1313 = vor.u32 %v1311, %v1312
  %v1314 = vshll.u32 2131351028, %v1305
  %v1315 = vshrl.u32 2102212464, %v1306
  %v1316 = vor.u32 %v1314, %v1315
  %v1317 = vshll.u32 2102212464, %v1305
  %v1318 = vshrl.u32 920167782, %v1306
  %v1319 = vor.u32 %v1317, %v1318
  %v1320 = vshll.u32 920167782, %v1305
  %v1321 = vshrl.u32 1326507024, %v1306
  %v1322 = vor.u32 %v1320, %v1321
  %vm1323 = vcmp.lt.s32.totalorder %v1304, 1
  %vm1324 = vcmp.lt.s32.totalorder %v1304, 2
  %vm1325 = vcmp.lt.s32.totalorder %v1304, 3
  %vm1326 = vcmp.lt.s32.totalorder %v1304, 4
  %v1327 = vsel %vm1323, %v1307, %v1310
  %v1328 = vsel %vm1326, %v1316, 2102212464
  %v1329 = vsel %vm1325, %v1313, %v1328
  %v1330 = vsel %vm1324, %v1327, %v1329
  %v1331 = vsel %vm1323, %v1310, %v1313
  %v1332 = vsel %vm1326, %v1319, 920167782
  %v1333 = vsel %vm1325, %v1316, %v1332
  %v1334 = vsel %vm1324, %v1331, %v1333
  %v1335 = vsel %vm1323, %v1313, %v1316
  %v1336 = vsel %vm1326, %v1322, 1326507024
  %v1337 = vsel %vm1325, %v1319, %v1336
  %v1338 = vsel %vm1324, %v1335, %v1337
  %v1339 = vshll.u32 %v1299, 8
  %v1340 = vmul.u32.u64.compose %v1339, %v1338
  %v1341 = vextract.low.u32 %v1340
  %v1342 = vextract.high.u32 %v1340
  %v1343 = vmul.u32.u64.compose %v1339, %v1334
  %v1344 = vextract.low.u32 %v1343
  %v1345 = vextract.high.u32 %v1343
  %v1346 = vmul.u32 %v1339, %v1330
  %v1347 = vadd.s32 %v1342, %v1344
  %vm1348 = vc.u32 %v1342, %v1344
  %v1349 = vadd.s32 %v1345, 1
  %v1350 = vsel %vm1348, %v1349, %v1345
  %v1351 = vadd.s32 %v1346, %v1350
  %v1352 = vadd.s32 %v1351, 536870912
  %v1353 = vshrl.u32 %v1352, 30
  %v1354 = vshll.u32 %v1353, 30
  %v1355 = vsub.s32 %v1351, %v1354
  %vm1356 = vcmp.lt.s32.totalorder %v1355, 0
  %v1357 = vsub.s32 0, %v1355
  %v1358 = vsel %vm1356, %v1357, %v1355
  %v1359 = vclz %v1358
  %v1360 = vsub.s32 %v1359, 2
  %vm1361 = vcmp.gt.s32.totalorder 0, %v1360
  %v1362 = vsel %vm1361, 0, %v1360
  %v1363 = vsub.s32 32, %v1362
  %v1364 = vshll.u32 %v1355, %v1362
  %v1365 = vshrl.u32 %v1347, %v1363
  %v1366 = vor.u32 %v1364, %v1365
  %v1367 = vsub.s32 4294967266, %v1362
  %v1368 = vadd.s32 %v1367, 127
  %v1369 = vshll.u32 %v1368, 23
  %v1370 = vor.u32 4788187, %v1369
  %v1371 = vand.u32 2147483647, %v1370
  %v1373 = vcvt.s32.f32 %v1366
  %v1374 = vmul.f32 %v1373, %v1371
  %v1375 = vxor.u32 %v1374, 2147483648
  %v1376 = vsel %vm1293, %v1375, %v1374
  %v1377 = vsub.s32 4, %v1353
  %v1378 = vsel %vm1293, %v1377, %v1353
  %v1379 = vsel %vm1292, %v51, %v1376
  %v1380 = vsel %vm1292, 0, %v1378
  %v1381 = vcosq.f32.pop %v1379
  %v1382 = vsinq.f32.pop %v1379
  %vm1383 = vweird.f32 %v51
  %v1384 = vand.u32 %v1380, 3
  %vm1385 = vcmp.lt.s32.totalorder %v1384, 2
  %vm1386 = vcmp.eq.s32.totalorder %v1384, 0
  %v1387 = vxor.u32 %v1382, 2147483648
  %v1388 = vsel %vm1386, %v1381, %v1387
  %vm1389 = vcmp.eq.s32.totalorder %v1384, 2
  %v1390 = vxor.u32 %v1381, 2147483648
  %v1391 = vsel %vm1389, %v1390, %v1382
  %v1392 = vsel %vm1385, %v1388, %v1391
  %v1393 = vsel %vm1383, nan, %v1392
  %v1394 = vand.u32 2147483647, %v52
  %vm1395 = vcmp.le.f32.partialorder %v1394, 0.7853982
  %vm1396 = vcmp.lt.s32.totalorder %v52, 0
  %v1397 = vand.u32 %v52, 2139095040
  %v1398 = vshrl.u32 %v1397, 23
  %v1399 = vsub.s32 %v1398, 127
  %v1400 = vand.u32 2147483647, %v52
  %v1401 = vand.u32 %v1400, 8388607
  %v1402 = vor.u32 %v1401, 8388608
  %v1403 = vsub.s32 0, %v1402
  %v1404 = vadd.s32 %v1399, 1
  %vm1405 = vcmp.gt.s32.totalorder %v1404, 0
  %v1406 = vsel %vm1405, %v1404, 0
  %v1407 = vshrl.u32 %v1406, 5
  %v1408 = vand.u32 %v1406, 31
  %v1409 = vsub.s32 32, %v1408
  %v1410 = vshrl.u32 683565275, %v1409
  %v1411 = vshll.u32 683565275, %v1408
  %v1412 = vshrl.u32 2475754826, %v1409
  %v1413 = vor.u32 %v1411, %v1412
  %v1414 = vshll.u32 2475754826, %v1408
  %v1415 = vshrl.u32 2131351028, %v1409
  %v1416 = vor.u32 %v1414, %v1415
  %v1417 = vshll.u32 2131351028, %v1408
  %v1418 = vshrl.u32 2102212464, %v1409
  %v1419 = vor.u32 %v1417, %v1418
  %v1420 = vshll.u32 2102212464, %v1408
  %v1421 = vshrl.u32 920167782, %v1409
  %v1422 = vor.u32 %v1420, %v1421
  %v1423 = vshll.u32 920167782, %v1408
  %v1424 = vshrl.u32 1326507024, %v1409
  %v1425 = vor.u32 %v1423, %v1424
  %vm1426 = vcmp.lt.s32.totalorder %v1407, 1
  %vm1427 = vcmp.lt.s32.totalorder %v1407, 2
  %vm1428 = vcmp.lt.s32.totalorder %v1407, 3
  %vm1429 = vcmp.lt.s32.totalorder %v1407, 4
  %v1430 = vsel %vm1426, %v1410, %v1413
  %v1431 = vsel %vm1429, %v1419, 2102212464
  %v1432 = vsel %vm1428, %v1416, %v1431
  %v1433 = vsel %vm1427, %v1430, %v1432
  %v1434 = vsel %vm1426, %v1413, %v1416
  %v1435 = vsel %vm1429, %v1422, 920167782
  %v1436 = vsel %vm1428, %v1419, %v1435
  %v1437 = vsel %vm1427, %v1434, %v1436
  %v1438 = vsel %vm1426, %v1416, %v1419
  %v1439 = vsel %vm1429, %v1425, 1326507024
  %v1440 = vsel %vm1428, %v1422, %v1439
  %v1441 = vsel %vm1427, %v1438, %v1440
  %v1442 = vshll.u32 %v1402, 8
  %v1443 = vmul.u32.u64.compose %v1442, %v1441
  %v1444 = vextract.low.u32 %v1443
  %v1445 = vextract.high.u32 %v1443
  %v1446 = vmul.u32.u64.compose %v1442, %v1437
  %v1447 = vextract.low.u32 %v1446
  %v1448 = vextract.high.u32 %v1446
  %v1449 = vmul.u32 %v1442, %v1433
  %v1450 = vadd.s32 %v1445, %v1447
  %vm1451 = vc.u32 %v1445, %v1447
  %v1452 = vadd.s32 %v1448, 1
  %v1453 = vsel %vm1451, %v1452, %v1448
  %v1454 = vadd.s32 %v1449, %v1453
  %v1455 = vadd.s32 %v1454, 536870912
  %v1456 = vshrl.u32 %v1455, 30
  %v1457 = vshll.u32 %v1456, 30
  %v1458 = vsub.s32 %v1454, %v1457
  %vm1459 = vcmp.lt.s32.totalorder %v1458, 0
  %v1460 = vsub.s32 0, %v1458
  %v1461 = vsel %vm1459, %v1460, %v1458
  %v1462 = vclz %v1461
  %v1463 = vsub.s32 %v1462, 2
  %vm1464 = vcmp.gt.s32.totalorder 0, %v1463
  %v1465 = vsel %vm1464, 0, %v1463
  %v1466 = vsub.s32 32, %v1465
  %v1467 = vshll.u32 %v1458, %v1465
  %v1468 = vshrl.u32 %v1450, %v1466
  %v1469 = vor.u32 %v1467, %v1468
  %v1470 = vsub.s32 4294967266, %v1465
  %v1471 = vadd.s32 %v1470, 127
  %v1472 = vshll.u32 %v1471, 23
  %v1473 = vor.u32 4788187, %v1472
  %v1474 = vand.u32 2147483647, %v1473
  %v1476 = vcvt.s32.f32 %v1469
  %v1477 = vmul.f32 %v1476, %v1474
  %v1478 = vxor.u32 %v1477, 2147483648
  %v1479 = vsel %vm1396, %v1478, %v1477
  %v1480 = vsub.s32 4, %v1456
  %v1481 = vsel %vm1396, %v1480, %v1456
  %v1482 = vsel %vm1395, %v52, %v1479
  %v1483 = vsel %vm1395, 0, %v1481
  %v1484 = vcosq.f32.pop %v1482
  %v1485 = vsinq.f32.pop %v1482
  %vm1486 = vweird.f32 %v52
  %v1487 = vand.u32 %v1483, 3
  %vm1488 = vcmp.lt.s32.totalorder %v1487, 2
  %vm1489 = vcmp.eq.s32.totalorder %v1487, 0
  %v1490 = vxor.u32 %v1485, 2147483648
  %v1491 = vsel %vm1489, %v1484, %v1490
  %vm1492 = vcmp.eq.s32.totalorder %v1487, 2
  %v1493 = vxor.u32 %v1484, 2147483648
  %v1494 = vsel %vm1492, %v1493, %v1485
  %v1495 = vsel %vm1488, %v1491, %v1494
  %v1496 = vsel %vm1486, nan, %v1495
  %v1497 = vand.u32 2147483647, %v53
  %vm1498 = vcmp.le.f32.partialorder %v1497, 0.7853982
  %vm1499 = vcmp.lt.s32.totalorder %v53, 0
  %v1500 = vand.u32 %v53, 2139095040
  %v1501 = vshrl.u32 %v1500, 23
  %v1502 = vsub.s32 %v1501, 127
  %v1503 = vand.u32 2147483647, %v53
  %v1504 = vand.u32 %v1503, 8388607
  %v1505 = vor.u32 %v1504, 8388608
  %v1506 = vsub.s32 0, %v1505
  %v1507 = vadd.s32 %v1502, 1
  %vm1508 = vcmp.gt.s32.totalorder %v1507, 0
  %v1509 = vsel %vm1508, %v1507, 0
  %v1510 = vshrl.u32 %v1509, 5
  %v1511 = vand.u32 %v1509, 31
  %v1512 = vsub.s32 32, %v1511
  %v1513 = vshrl.u32 683565275, %v1512
  %v1514 = vshll.u32 683565275, %v1511
  %v1515 = vshrl.u32 2475754826, %v1512
  %v1516 = vor.u32 %v1514, %v1515
  %v1517 = vshll.u32 2475754826, %v1511
  %v1518 = vshrl.u32 2131351028, %v1512
  %v1519 = vor.u32 %v1517, %v1518
  %v1520 = vshll.u32 2131351028, %v1511
  %v1521 = vshrl.u32 2102212464, %v1512
  %v1522 = vor.u32 %v1520, %v1521
  %v1523 = vshll.u32 2102212464, %v1511
  %v1524 = vshrl.u32 920167782, %v1512
  %v1525 = vor.u32 %v1523, %v1524
  %v1526 = vshll.u32 920167782, %v1511
  %v1527 = vshrl.u32 1326507024, %v1512
  %v1528 = vor.u32 %v1526, %v1527
  %vm1529 = vcmp.lt.s32.totalorder %v1510, 1
  %vm1530 = vcmp.lt.s32.totalorder %v1510, 2
  %vm1531 = vcmp.lt.s32.totalorder %v1510, 3
  %vm1532 = vcmp.lt.s32.totalorder %v1510, 4
  %v1533 = vsel %vm1529, %v1513, %v1516
  %v1534 = vsel %vm1532, %v1522, 2102212464
  %v1535 = vsel %vm1531, %v1519, %v1534
  %v1536 = vsel %vm1530, %v1533, %v1535
  %v1537 = vsel %vm1529, %v1516, %v1519
  %v1538 = vsel %vm1532, %v1525, 920167782
  %v1539 = vsel %vm1531, %v1522, %v1538
  %v1540 = vsel %vm1530, %v1537, %v1539
  %v1541 = vsel %vm1529, %v1519, %v1522
  %v1542 = vsel %vm1532, %v1528, 1326507024
  %v1543 = vsel %vm1531, %v1525, %v1542
  %v1544 = vsel %vm1530, %v1541, %v1543
  %v1545 = vshll.u32 %v1505, 8
  %v1546 = vmul.u32.u64.compose %v1545, %v1544
  %v1547 = vextract.low.u32 %v1546
  %v1548 = vextract.high.u32 %v1546
  %v1549 = vmul.u32.u64.compose %v1545, %v1540
  %v1550 = vextract.low.u32 %v1549
  %v1551 = vextract.high.u32 %v1549
  %v1552 = vmul.u32 %v1545, %v1536
  %v1553 = vadd.s32 %v1548, %v1550
  %vm1554 = vc.u32 %v1548, %v1550
  %v1555 = vadd.s32 %v1551, 1
  %v1556 = vsel %vm1554, %v1555, %v1551
  %v1557 = vadd.s32 %v1552, %v1556
  %v1558 = vadd.s32 %v1557, 536870912
  %v1559 = vshrl.u32 %v1558, 30
  %v1560 = vshll.u32 %v1559, 30
  %v1561 = vsub.s32 %v1557, %v1560
  %vm1562 = vcmp.lt.s32.totalorder %v1561, 0
  %v1563 = vsub.s32 0, %v1561
  %v1564 = vsel %vm1562, %v1563, %v1561
  %v1565 = vclz %v1564
  %v1566 = vsub.s32 %v1565, 2
  %vm1567 = vcmp.gt.s32.totalorder 0, %v1566
  %v1568 = vsel %vm1567, 0, %v1566
  %v1569 = vsub.s32 32, %v1568
  %v1570 = vshll.u32 %v1561, %v1568
  %v1571 = vshrl.u32 %v1553, %v1569
  %v1572 = vor.u32 %v1570, %v1571
  %v1573 = vsub.s32 4294967266, %v1568
  %v1574 = vadd.s32 %v1573, 127
  %v1575 = vshll.u32 %v1574, 23
  %v1576 = vor.u32 4788187, %v1575
  %v1577 = vand.u32 2147483647, %v1576
  %v1579 = vcvt.s32.f32 %v1572
  %v1580 = vmul.f32 %v1579, %v1577
  %v1581 = vxor.u32 %v1580, 2147483648
  %v1582 = vsel %vm1499, %v1581, %v1580
  %v1583 = vsub.s32 4, %v1559
  %v1584 = vsel %vm1499, %v1583, %v1559
  %v1585 = vsel %vm1498, %v53, %v1582
  %v1586 = vsel %vm1498, 0, %v1584
  %v1587 = vcosq.f32.pop %v1585
  %v1588 = vsinq.f32.pop %v1585
  %vm1589 = vweird.f32 %v53
  %v1590 = vand.u32 %v1586, 3
  %vm1591 = vcmp.lt.s32.totalorder %v1590, 2
  %vm1592 = vcmp.eq.s32.totalorder %v1590, 0
  %v1593 = vxor.u32 %v1588, 2147483648
  %v1594 = vsel %vm1592, %v1587, %v1593
  %vm1595 = vcmp.eq.s32.totalorder %v1590, 2
  %v1596 = vxor.u32 %v1587, 2147483648
  %v1597 = vsel %vm1595, %v1596, %v1588
  %v1598 = vsel %vm1591, %v1594, %v1597
  %v1599 = vsel %vm1589, nan, %v1598
  %v1600 = vand.u32 2147483647, %v54
  %vm1601 = vcmp.le.f32.partialorder %v1600, 0.7853982
  %vm1602 = vcmp.lt.s32.totalorder %v54, 0
  %v1603 = vand.u32 %v54, 2139095040
  %v1604 = vshrl.u32 %v1603, 23
  %v1605 = vsub.s32 %v1604, 127
  %v1606 = vand.u32 2147483647, %v54
  %v1607 = vand.u32 %v1606, 8388607
  %v1608 = vor.u32 %v1607, 8388608
  %v1609 = vsub.s32 0, %v1608
  %v1610 = vadd.s32 %v1605, 1
  %vm1611 = vcmp.gt.s32.totalorder %v1610, 0
  %v1612 = vsel %vm1611, %v1610, 0
  %v1613 = vshrl.u32 %v1612, 5
  %v1614 = vand.u32 %v1612, 31
  %v1615 = vsub.s32 32, %v1614
  %v1616 = vshrl.u32 683565275, %v1615
  %v1617 = vshll.u32 683565275, %v1614
  %v1618 = vshrl.u32 2475754826, %v1615
  %v1619 = vor.u32 %v1617, %v1618
  %v1620 = vshll.u32 2475754826, %v1614
  %v1621 = vshrl.u32 2131351028, %v1615
  %v1622 = vor.u32 %v1620, %v1621
  %v1623 = vshll.u32 2131351028, %v1614
  %v1624 = vshrl.u32 2102212464, %v1615
  %v1625 = vor.u32 %v1623, %v1624
  %v1626 = vshll.u32 2102212464, %v1614
  %v1627 = vshrl.u32 920167782, %v1615
  %v1628 = vor.u32 %v1626, %v1627
  %v1629 = vshll.u32 920167782, %v1614
  %v1630 = vshrl.u32 1326507024, %v1615
  %v1631 = vor.u32 %v1629, %v1630
  %vm1632 = vcmp.lt.s32.totalorder %v1613, 1
  %vm1633 = vcmp.lt.s32.totalorder %v1613, 2
  %vm1634 = vcmp.lt.s32.totalorder %v1613, 3
  %vm1635 = vcmp.lt.s32.totalorder %v1613, 4
  %v1636 = vsel %vm1632, %v1616, %v1619
  %v1637 = vsel %vm1635, %v1625, 2102212464
  %v1638 = vsel %vm1634, %v1622, %v1637
  %v1639 = vsel %vm1633, %v1636, %v1638
  %v1640 = vsel %vm1632, %v1619, %v1622
  %v1641 = vsel %vm1635, %v1628, 920167782
  %v1642 = vsel %vm1634, %v1625, %v1641
  %v1643 = vsel %vm1633, %v1640, %v1642
  %v1644 = vsel %vm1632, %v1622, %v1625
  %v1645 = vsel %vm1635, %v1631, 1326507024
  %v1646 = vsel %vm1634, %v1628, %v1645
  %v1647 = vsel %vm1633, %v1644, %v1646
  %v1648 = vshll.u32 %v1608, 8
  %v1649 = vmul.u32.u64.compose %v1648, %v1647
  %v1650 = vextract.low.u32 %v1649
  %v1651 = vextract.high.u32 %v1649
  %v1652 = vmul.u32.u64.compose %v1648, %v1643
  %v1653 = vextract.low.u32 %v1652
  %v1654 = vextract.high.u32 %v1652
  %v1655 = vmul.u32 %v1648, %v1639
  %v1656 = vadd.s32 %v1651, %v1653
  %vm1657 = vc.u32 %v1651, %v1653
  %v1658 = vadd.s32 %v1654, 1
  %v1659 = vsel %vm1657, %v1658, %v1654
  %v1660 = vadd.s32 %v1655, %v1659
  %v1661 = vadd.s32 %v1660, 536870912
  %v1662 = vshrl.u32 %v1661, 30
  %v1663 = vshll.u32 %v1662, 30
  %v1664 = vsub.s32 %v1660, %v1663
  %vm1665 = vcmp.lt.s32.totalorder %v1664, 0
  %v1666 = vsub.s32 0, %v1664
  %v1667 = vsel %vm1665, %v1666, %v1664
  %v1668 = vclz %v1667
  %v1669 = vsub.s32 %v1668, 2
  %vm1670 = vcmp.gt.s32.totalorder 0, %v1669
  %v1671 = vsel %vm1670, 0, %v1669
  %v1672 = vsub.s32 32, %v1671
  %v1673 = vshll.u32 %v1664, %v1671
  %v1674 = vshrl.u32 %v1656, %v1672
  %v1675 = vor.u32 %v1673, %v1674
  %v1676 = vsub.s32 4294967266, %v1671
  %v1677 = vadd.s32 %v1676, 127
  %v1678 = vshll.u32 %v1677, 23
  %v1679 = vor.u32 4788187, %v1678
  %v1680 = vand.u32 2147483647, %v1679
  %v1682 = vcvt.s32.f32 %v1675
  %v1683 = vmul.f32 %v1682, %v1680
  %v1684 = vxor.u32 %v1683, 2147483648
  %v1685 = vsel %vm1602, %v1684, %v1683
  %v1686 = vsub.s32 4, %v1662
  %v1687 = vsel %vm1602, %v1686, %v1662
  %v1688 = vsel %vm1601, %v54, %v1685
  %v1689 = vsel %vm1601, 0, %v1687
  %v1690 = vcosq.f32.pop %v1688
  %v1691 = vsinq.f32.pop %v1688
  %vm1692 = vweird.f32 %v54
  %v1693 = vand.u32 %v1689, 3
  %vm1694 = vcmp.lt.s32.totalorder %v1693, 2
  %vm1695 = vcmp.eq.s32.totalorder %v1693, 0
  %v1696 = vxor.u32 %v1691, 2147483648
  %v1697 = vsel %vm1695, %v1690, %v1696
  %vm1698 = vcmp.eq.s32.totalorder %v1693, 2
  %v1699 = vxor.u32 %v1690, 2147483648
  %v1700 = vsel %vm1698, %v1699, %v1691
  %v1701 = vsel %vm1694, %v1697, %v1700
  %v1702 = vsel %vm1692, nan, %v1701
  %v1703 = vpack.c.bf16 %v260, %v157
  %v1704 = vpack.c.bf16 %v466, %v363
  %v1705 = vpack.c.bf16 %v672, %v569
  %v1706 = vpack.c.bf16 %v878, %v775
  %v1707 = vpack.c.bf16 %v1084, %v981
  %v1708 = vpack.c.bf16 %v1290, %v1187
  %v1709 = vpack.c.bf16 %v1496, %v1393
  %v1710 = vpack.c.bf16 %v1702, %v1599
  %vm1711 = vcmask 64512
  %v1713 = vsel %vm1711, %v1703, 0
  %v1716 = vsel %vm1711, %v1704, 0
  %v1719 = vsel %vm1711, %v1705, 0
  %v1722 = vsel %vm1711, %v1706, 0
  %v1725 = vsel %vm1711, %v1707, 0
  %v1728 = vsel %vm1711, %v1708, 0
  %v1731 = vsel %vm1711, %v1709, 0
  %v1734 = vsel %vm1711, %v1710, 0
  %vm1736 = vcmask 1043456
  %v1738 = vsel %vm1736, %v15, 0
  %1740 = vmatprep.subr.bf16.mxu0 0
  %1741 = vmatpush1.bf16.msra.mxu0 %v1738
  %1742 = vmatprep.subr.bf16.mxu0 0
  %1743 = vmatpush1.bf16.msra.mxu0 0
  %1744 = vmatprep.subr.bf16.mxu0 0
  %1745 = vmatpush1.bf16.msra.mxu0 0
  %1746 = vmatprep.subr.bf16.mxu0 0
  %1747 = vmatpush1.bf16.msra.mxu0 0
  %1748 = vmatprep.subr.bf16.mxu0 0
  %1749 = vmatpush1.bf16.msra.mxu0 0
  %1750 = vmatprep.subr.bf16.mxu0 0
  %1751 = vmatpush1.bf16.msra.mxu0 0
  %1752 = vmatprep.subr.bf16.mxu0 0
  %1753 = vmatpush1.bf16.msra.mxu0 0
  %1754 = vmatprep.subr.bf16.mxu0 0
  %1755 = vmatpush1.bf16.msra.mxu0 0
  %1756 = vmatprep.subr.bf16.mxu0 0
  %1757 = vmatpush1.bf16.msra.mxu0 0
  %1758 = vmatprep.subr.bf16.mxu0 0
  %1759 = vmatpush1.bf16.msra.mxu0 0
  %1760 = vmatprep.subr.bf16.mxu0 0
  %1761 = vmatpush1.bf16.msra.mxu0 0
  %1762 = vmatprep.subr.bf16.mxu0 0
  %1763 = vmatpush1.bf16.msra.mxu0 0
  %1764 = vmatprep.subr.bf16.mxu0 0
  %1765 = vmatpush1.bf16.msra.mxu0 0
  %1766 = vmatprep.subr.bf16.mxu0 0
  %1767 = vmatpush1.bf16.msra.mxu0 0
  %1768 = vmatprep.subr.bf16.mxu0 0
  %1769 = vmatpush1.bf16.msra.mxu0 0
  %1770 = vmatprep.subr.bf16.mxu0 0
  %1771 = vmatpush1.bf16.msra.mxu0 0
  %1772 = vmatprep.mubr.bf16.mxu0 0
  %1773 = vmatmul.mubr.bf16.gmra.mrb[0].mxu0 %v1713
  %v1774 = vpop.f32.mrb[0].mxu0
  %v1775 = vadd.f32 %v21, %v1774
  %v1776 = vpop.f32.mrb[0].mxu0
  %v1777 = vpop.f32.mrb[0].mxu0
  %v1778 = vadd.f32 %v21, %v1777
  %v1779 = vpop.f32.mrb[0].mxu0
  %1780 = vmatprep.mubr.bf16.mxu0 0
  %1781 = vmatmul.mubr.bf16.gmra.mrb[0].mxu0 %v1716
  %v1782 = vpop.f32.mrb[0].mxu0
  %v1783 = vadd.f32 %v21, %v1782
  %v1784 = vpop.f32.mrb[0].mxu0
  %v1785 = vpop.f32.mrb[0].mxu0
  %v1786 = vadd.f32 %v21, %v1785
  %v1787 = vpop.f32.mrb[0].mxu0
  %1788 = vmatprep.mubr.bf16.mxu0 0
  %1789 = vmatmul.mubr.bf16.gmra.mrb[0].mxu0 %v1719
  %v1790 = vpop.f32.mrb[0].mxu0
  %v1791 = vadd.f32 %v21, %v1790
  %v1792 = vpop.f32.mrb[0].mxu0
  %v1793 = vpop.f32.mrb[0].mxu0
  %v1794 = vadd.f32 %v21, %v1793
  %v1795 = vpop.f32.mrb[0].mxu0
  %1796 = vmatprep.mubr.bf16.mxu0 0
  %1797 = vmatmul.mubr.bf16.gmra.mrb[0].mxu0 %v1722
  %v1798 = vpop.f32.mrb[0].mxu0
  %v1799 = vadd.f32 %v21, %v1798
  %v1800 = vpop.f32.mrb[0].mxu0
  %v1801 = vpop.f32.mrb[0].mxu0
  %v1802 = vadd.f32 %v21, %v1801
  %v1803 = vpop.f32.mrb[0].mxu0
  %1804 = vmatprep.mubr.bf16.mxu0 0
  %1805 = vmatmul.mubr.bf16.gmra.mrb[0].mxu0 %v1725
  %v1806 = vpop.f32.mrb[0].mxu0
  %v1807 = vadd.f32 %v21, %v1806
  %v1808 = vpop.f32.mrb[0].mxu0
  %v1809 = vpop.f32.mrb[0].mxu0
  %v1810 = vadd.f32 %v21, %v1809
  %v1811 = vpop.f32.mrb[0].mxu0
  %1812 = vmatprep.mubr.bf16.mxu0 0
  %1813 = vmatmul.mubr.bf16.gmra.mrb[0].mxu0 %v1728
  %v1814 = vpop.f32.mrb[0].mxu0
  %v1815 = vadd.f32 %v21, %v1814
  %v1816 = vpop.f32.mrb[0].mxu0
  %v1817 = vpop.f32.mrb[0].mxu0
  %v1818 = vadd.f32 %v21, %v1817
  %v1819 = vpop.f32.mrb[0].mxu0
  %1820 = vmatprep.mubr.bf16.mxu0 0
  %1821 = vmatmul.mubr.bf16.gmra.mrb[0].mxu0 %v1731
  %v1822 = vpop.f32.mrb[0].mxu0
  %v1823 = vadd.f32 %v21, %v1822
  %v1824 = vpop.f32.mrb[0].mxu0
  %v1825 = vpop.f32.mrb[0].mxu0
  %v1826 = vadd.f32 %v21, %v1825
  %v1827 = vpop.f32.mrb[0].mxu0
  %1828 = vmatprep.mubr.bf16.mxu0 0
  %1829 = vmatmul.mubr.bf16.gmra.mrb[0].mxu0 %v1734
  %v1830 = vpop.f32.mrb[0].mxu0
  %v1831 = vadd.f32 %v21, %v1830
  %v1832 = vpop.f32.mrb[0].mxu0
  %v1833 = vpop.f32.mrb[0].mxu0
  %v1834 = vadd.f32 %v21, %v1833
  %v1835 = vpop.f32.mrb[0].mxu0
  %1836 = vdwg.mxu0
  %1837 = vst [vmem:[%s3] sm:$0xff] %v1775
  %1838 = vst [vmem:[%s3 + $0x8] sm:$0xff] %v1778
  %1839 = vst [vmem:[%s3 + $0x10] sm:$0xff] %v1783
  %1840 = vst [vmem:[%s3 + $0x18] sm:$0xff] %v1786
  %1841 = vst [vmem:[%s3 + $0x20] sm:$0xff] %v1791
  %1842 = vst [vmem:[%s3 + $0x28] sm:$0xff] %v1794
  %1843 = vst [vmem:[%s3 + $0x30] sm:$0xff] %v1799
  %1844 = vst [vmem:[%s3 + $0x38] sm:$0xff] %v1802
  %1845 = vst [vmem:[%s3 + $0x40] sm:$0xff] %v1807
  %1846 = vst [vmem:[%s3 + $0x48] sm:$0xff] %v1810
  %1847 = vst [vmem:[%s3 + $0x50] sm:$0xff] %v1815
  %1848 = vst [vmem:[%s3 + $0x58] sm:$0xff] %v1818
  %1849 = vst [vmem:[%s3 + $0x60] sm:$0xff] %v1823
  %1850 = vst [vmem:[%s3 + $0x68] sm:$0xff] %v1826
  %1851 = vst [vmem:[%s3 + $0x70] sm:$0xff] %v1831
  %1852 = vst [vmem:[%s3 + $0x78] sm:$0xff] %v1834
  %v1853 = vld [vmem:[%s0 + $0x40] sm:$0xf]
  %v1854 = vld [vmem:[%s0 + $0x44] sm:$0xf]
  %v1855 = vld [vmem:[%s0 + $0x48] sm:$0xf]
  %v1856 = vld [vmem:[%s0 + $0x4c] sm:$0xf]
  %v1857 = vld [vmem:[%s0 + $0x50] sm:$0xf]
  %v1858 = vld [vmem:[%s0 + $0x54] sm:$0xf]
  %v1859 = vld [vmem:[%s0 + $0x58] sm:$0xf]
  %v1860 = vld [vmem:[%s0 + $0x5c] sm:$0xf]
  %v1861 = vld [vmem:[%s0 + $0x60] sm:$0xf]
  %v1862 = vld [vmem:[%s0 + $0x64] sm:$0xf]
  %v1863 = vld [vmem:[%s0 + $0x68] sm:$0xf]
  %v1864 = vld [vmem:[%s0 + $0x6c] sm:$0xf]
  %v1865 = vld [vmem:[%s0 + $0x70] sm:$0xf]
  %v1866 = vld [vmem:[%s0 + $0x74] sm:$0xf]
  %v1867 = vld [vmem:[%s0 + $0x78] sm:$0xf]
  %v1868 = vld [vmem:[%s0 + $0x7c] sm:$0xf]
  %v1869 = vunpack.c.l.bf16 %v1853
  %v1870 = vunpack.c.l.bf16 %v1854
  %v1871 = vunpack.c.l.bf16 %v1855
  %v1872 = vunpack.c.l.bf16 %v1856
  %v1873 = vunpack.c.l.bf16 %v1857
  %v1874 = vunpack.c.l.bf16 %v1858
  %v1875 = vunpack.c.l.bf16 %v1859
  %v1876 = vunpack.c.l.bf16 %v1860
  %v1877 = vunpack.c.l.bf16 %v1861
  %v1878 = vunpack.c.l.bf16 %v1862
  %v1879 = vunpack.c.l.bf16 %v1863
  %v1880 = vunpack.c.l.bf16 %v1864
  %v1881 = vunpack.c.l.bf16 %v1865
  %v1882 = vunpack.c.l.bf16 %v1866
  %v1883 = vunpack.c.l.bf16 %v1867
  %v1884 = vunpack.c.l.bf16 %v1868
  %v1885 = vand.u32 2147483647, %v1869
  %vm1886 = vcmp.le.f32.partialorder %v1885, 0.7853982
  %vm1887 = vcmp.lt.s32.totalorder %v1869, 0
  %v1888 = vand.u32 %v1869, 2139095040
  %v1889 = vshrl.u32 %v1888, 23
  %v1890 = vsub.s32 %v1889, 127
  %v1891 = vand.u32 2147483647, %v1869
  %v1892 = vand.u32 %v1891, 8388607
  %v1893 = vor.u32 %v1892, 8388608
  %v1894 = vsub.s32 0, %v1893
  %v1895 = vadd.s32 %v1890, 1
  %vm1896 = vcmp.gt.s32.totalorder %v1895, 0
  %v1897 = vsel %vm1896, %v1895, 0
  %v1898 = vshrl.u32 %v1897, 5
  %v1899 = vand.u32 %v1897, 31
  %v1900 = vsub.s32 32, %v1899
  %v1901 = vshrl.u32 683565275, %v1900
  %v1902 = vshll.u32 683565275, %v1899
  %v1903 = vshrl.u32 2475754826, %v1900
  %v1904 = vor.u32 %v1902, %v1903
  %v1905 = vshll.u32 2475754826, %v1899
  %v1906 = vshrl.u32 2131351028, %v1900
  %v1907 = vor.u32 %v1905, %v1906
  %v1908 = vshll.u32 2131351028, %v1899
  %v1909 = vshrl.u32 2102212464, %v1900
  %v1910 = vor.u32 %v1908, %v1909
  %v1911 = vshll.u32 2102212464, %v1899
  %v1912 = vshrl.u32 920167782, %v1900
  %v1913 = vor.u32 %v1911, %v1912
  %v1914 = vshll.u32 920167782, %v1899
  %v1915 = vshrl.u32 1326507024, %v1900
  %v1916 = vor.u32 %v1914, %v1915
  %vm1917 = vcmp.lt.s32.totalorder %v1898, 1
  %vm1918 = vcmp.lt.s32.totalorder %v1898, 2
  %vm1919 = vcmp.lt.s32.totalorder %v1898, 3
  %vm1920 = vcmp.lt.s32.totalorder %v1898, 4
  %v1921 = vsel %vm1917, %v1901, %v1904
  %v1922 = vsel %vm1920, %v1910, 2102212464
  %v1923 = vsel %vm1919, %v1907, %v1922
  %v1924 = vsel %vm1918, %v1921, %v1923
  %v1925 = vsel %vm1917, %v1904, %v1907
  %v1926 = vsel %vm1920, %v1913, 920167782
  %v1927 = vsel %vm1919, %v1910, %v1926
  %v1928 = vsel %vm1918, %v1925, %v1927
  %v1929 = vsel %vm1917, %v1907, %v1910
  %v1930 = vsel %vm1920, %v1916, 1326507024
  %v1931 = vsel %vm1919, %v1913, %v1930
  %v1932 = vsel %vm1918, %v1929, %v1931
  %v1933 = vshll.u32 %v1893, 8
  %v1934 = vmul.u32.u64.compose %v1933, %v1932
  %v1935 = vextract.low.u32 %v1934
  %v1936 = vextract.high.u32 %v1934
  %v1937 = vmul.u32.u64.compose %v1933, %v1928
  %v1938 = vextract.low.u32 %v1937
  %v1939 = vextract.high.u32 %v1937
  %v1940 = vmul.u32 %v1933, %v1924
  %v1941 = vadd.s32 %v1936, %v1938
  %vm1942 = vc.u32 %v1936, %v1938
  %v1943 = vadd.s32 %v1939, 1
  %v1944 = vsel %vm1942, %v1943, %v1939
  %v1945 = vadd.s32 %v1940, %v1944
  %v1946 = vadd.s32 %v1945, 536870912
  %v1947 = vshrl.u32 %v1946, 30
  %v1948 = vshll.u32 %v1947, 30
  %v1949 = vsub.s32 %v1945, %v1948
  %vm1950 = vcmp.lt.s32.totalorder %v1949, 0
  %v1951 = vsub.s32 0, %v1949
  %v1952 = vsel %vm1950, %v1951, %v1949
  %v1953 = vclz %v1952
  %v1954 = vsub.s32 %v1953, 2
  %vm1955 = vcmp.gt.s32.totalorder 0, %v1954
  %v1956 = vsel %vm1955, 0, %v1954
  %v1957 = vsub.s32 32, %v1956
  %v1958 = vshll.u32 %v1949, %v1956
  %v1959 = vshrl.u32 %v1941, %v1957
  %v1960 = vor.u32 %v1958, %v1959
  %v1961 = vsub.s32 4294967266, %v1956
  %v1962 = vadd.s32 %v1961, 127
  %v1963 = vshll.u32 %v1962, 23
  %v1964 = vor.u32 4788187, %v1963
  %v1965 = vand.u32 2147483647, %v1964
  %v1967 = vcvt.s32.f32 %v1960
  %v1968 = vmul.f32 %v1967, %v1965
  %v1969 = vxor.u32 %v1968, 2147483648
  %v1970 = vsel %vm1887, %v1969, %v1968
  %v1971 = vsub.s32 4, %v1947
  %v1972 = vsel %vm1887, %v1971, %v1947
  %v1973 = vsel %vm1886, %v1869, %v1970
  %v1974 = vsel %vm1886, 0, %v1972
  %v1975 = vcosq.f32.pop %v1973
  %v1976 = vsinq.f32.pop %v1973
  %vm1977 = vweird.f32 %v1869
  %v1978 = vand.u32 %v1974, 3
  %vm1979 = vcmp.lt.s32.totalorder %v1978, 2
  %vm1980 = vcmp.eq.s32.totalorder %v1978, 0
  %v1981 = vxor.u32 %v1976, 2147483648
  %v1982 = vsel %vm1980, %v1975, %v1981
  %vm1983 = vcmp.eq.s32.totalorder %v1978, 2
  %v1984 = vxor.u32 %v1975, 2147483648
  %v1985 = vsel %vm1983, %v1984, %v1976
  %v1986 = vsel %vm1979, %v1982, %v1985
  %v1987 = vsel %vm1977, nan, %v1986
  %v1988 = vand.u32 2147483647, %v1870
  %vm1989 = vcmp.le.f32.partialorder %v1988, 0.7853982
  %vm1990 = vcmp.lt.s32.totalorder %v1870, 0
  %v1991 = vand.u32 %v1870, 2139095040
  %v1992 = vshrl.u32 %v1991, 23
  %v1993 = vsub.s32 %v1992, 127
  %v1994 = vand.u32 2147483647, %v1870
  %v1995 = vand.u32 %v1994, 8388607
  %v1996 = vor.u32 %v1995, 8388608
  %v1997 = vsub.s32 0, %v1996
  %v1998 = vadd.s32 %v1993, 1
  %vm1999 = vcmp.gt.s32.totalorder %v1998, 0
  %v2000 = vsel %vm1999, %v1998, 0
  %v2001 = vshrl.u32 %v2000, 5
  %v2002 = vand.u32 %v2000, 31
  %v2003 = vsub.s32 32, %v2002
  %v2004 = vshrl.u32 683565275, %v2003
  %v2005 = vshll.u32 683565275, %v2002
  %v2006 = vshrl.u32 2475754826, %v2003
  %v2007 = vor.u32 %v2005, %v2006
  %v2008 = vshll.u32 2475754826, %v2002
  %v2009 = vshrl.u32 2131351028, %v2003
  %v2010 = vor.u32 %v2008, %v2009
  %v2011 = vshll.u32 2131351028, %v2002
  %v2012 = vshrl.u32 2102212464, %v2003
  %v2013 = vor.u32 %v2011, %v2012
  %v2014 = vshll.u32 2102212464, %v2002
  %v2015 = vshrl.u32 920167782, %v2003
  %v2016 = vor.u32 %v2014, %v2015
  %v2017 = vshll.u32 920167782, %v2002
  %v2018 = vshrl.u32 1326507024, %v2003
  %v2019 = vor.u32 %v2017, %v2018
  %vm2020 = vcmp.lt.s32.totalorder %v2001, 1
  %vm2021 = vcmp.lt.s32.totalorder %v2001, 2
  %vm2022 = vcmp.lt.s32.totalorder %v2001, 3
  %vm2023 = vcmp.lt.s32.totalorder %v2001, 4
  %v2024 = vsel %vm2020, %v2004, %v2007
  %v2025 = vsel %vm2023, %v2013, 2102212464
  %v2026 = vsel %vm2022, %v2010, %v2025
  %v2027 = vsel %vm2021, %v2024, %v2026
  %v2028 = vsel %vm2020, %v2007, %v2010
  %v2029 = vsel %vm2023, %v2016, 920167782
  %v2030 = vsel %vm2022, %v2013, %v2029
  %v2031 = vsel %vm2021, %v2028, %v2030
  %v2032 = vsel %vm2020, %v2010, %v2013
  %v2033 = vsel %vm2023, %v2019, 1326507024
  %v2034 = vsel %vm2022, %v2016, %v2033
  %v2035 = vsel %vm2021, %v2032, %v2034
  %v2036 = vshll.u32 %v1996, 8
  %v2037 = vmul.u32.u64.compose %v2036, %v2035
  %v2038 = vextract.low.u32 %v2037
  %v2039 = vextract.high.u32 %v2037
  %v2040 = vmul.u32.u64.compose %v2036, %v2031
  %v2041 = vextract.low.u32 %v2040
  %v2042 = vextract.high.u32 %v2040
  %v2043 = vmul.u32 %v2036, %v2027
  %v2044 = vadd.s32 %v2039, %v2041
  %vm2045 = vc.u32 %v2039, %v2041
  %v2046 = vadd.s32 %v2042, 1
  %v2047 = vsel %vm2045, %v2046, %v2042
  %v2048 = vadd.s32 %v2043, %v2047
  %v2049 = vadd.s32 %v2048, 536870912
  %v2050 = vshrl.u32 %v2049, 30
  %v2051 = vshll.u32 %v2050, 30
  %v2052 = vsub.s32 %v2048, %v2051
  %vm2053 = vcmp.lt.s32.totalorder %v2052, 0
  %v2054 = vsub.s32 0, %v2052
  %v2055 = vsel %vm2053, %v2054, %v2052
  %v2056 = vclz %v2055
  %v2057 = vsub.s32 %v2056, 2
  %vm2058 = vcmp.gt.s32.totalorder 0, %v2057
  %v2059 = vsel %vm2058, 0, %v2057
  %v2060 = vsub.s32 32, %v2059
  %v2061 = vshll.u32 %v2052, %v2059
  %v2062 = vshrl.u32 %v2044, %v2060
  %v2063 = vor.u32 %v2061, %v2062
  %v2064 = vsub.s32 4294967266, %v2059
  %v2065 = vadd.s32 %v2064, 127
  %v2066 = vshll.u32 %v2065, 23
  %v2067 = vor.u32 4788187, %v2066
  %v2068 = vand.u32 2147483647, %v2067
  %v2070 = vcvt.s32.f32 %v2063
  %v2071 = vmul.f32 %v2070, %v2068
  %v2072 = vxor.u32 %v2071, 2147483648
  %v2073 = vsel %vm1990, %v2072, %v2071
  %v2074 = vsub.s32 4, %v2050
  %v2075 = vsel %vm1990, %v2074, %v2050
  %v2076 = vsel %vm1989, %v1870, %v2073
  %v2077 = vsel %vm1989, 0, %v2075
  %v2078 = vcosq.f32.pop %v2076
  %v2079 = vsinq.f32.pop %v2076
  %vm2080 = vweird.f32 %v1870
  %v2081 = vand.u32 %v2077, 3
  %vm2082 = vcmp.lt.s32.totalorder %v2081, 2
  %vm2083 = vcmp.eq.s32.totalorder %v2081, 0
  %v2084 = vxor.u32 %v2079, 2147483648
  %v2085 = vsel %vm2083, %v2078, %v2084
  %vm2086 = vcmp.eq.s32.totalorder %v2081, 2
  %v2087 = vxor.u32 %v2078, 2147483648
  %v2088 = vsel %vm2086, %v2087, %v2079
  %v2089 = vsel %vm2082, %v2085, %v2088
  %v2090 = vsel %vm2080, nan, %v2089
  %v2091 = vand.u32 2147483647, %v1871
  %vm2092 = vcmp.le.f32.partialorder %v2091, 0.7853982
  %vm2093 = vcmp.lt.s32.totalorder %v1871, 0
  %v2094 = vand.u32 %v1871, 2139095040
  %v2095 = vshrl.u32 %v2094, 23
  %v2096 = vsub.s32 %v2095, 127
  %v2097 = vand.u32 2147483647, %v1871
  %v2098 = vand.u32 %v2097, 8388607
  %v2099 = vor.u32 %v2098, 8388608
  %v2100 = vsub.s32 0, %v2099
  %v2101 = vadd.s32 %v2096, 1
  %vm2102 = vcmp.gt.s32.totalorder %v2101, 0
  %v2103 = vsel %vm2102, %v2101, 0
  %v2104 = vshrl.u32 %v2103, 5
  %v2105 = vand.u32 %v2103, 31
  %v2106 = vsub.s32 32, %v2105
  %v2107 = vshrl.u32 683565275, %v2106
  %v2108 = vshll.u32 683565275, %v2105
  %v2109 = vshrl.u32 2475754826, %v2106
  %v2110 = vor.u32 %v2108, %v2109
  %v2111 = vshll.u32 2475754826, %v2105
  %v2112 = vshrl.u32 2131351028, %v2106
  %v2113 = vor.u32 %v2111, %v2112
  %v2114 = vshll.u32 2131351028, %v2105
  %v2115 = vshrl.u32 2102212464, %v2106
  %v2116 = vor.u32 %v2114, %v2115
  %v2117 = vshll.u32 2102212464, %v2105
  %v2118 = vshrl.u32 920167782, %v2106
  %v2119 = vor.u32 %v2117, %v2118
  %v2120 = vshll.u32 920167782, %v2105
  %v2121 = vshrl.u32 1326507024, %v2106
  %v2122 = vor.u32 %v2120, %v2121
  %vm2123 = vcmp.lt.s32.totalorder %v2104, 1
  %vm2124 = vcmp.lt.s32.totalorder %v2104, 2
  %vm2125 = vcmp.lt.s32.totalorder %v2104, 3
  %vm2126 = vcmp.lt.s32.totalorder %v2104, 4
  %v2127 = vsel %vm2123, %v2107, %v2110
  %v2128 = vsel %vm2126, %v2116, 2102212464
  %v2129 = vsel %vm2125, %v2113, %v2128
  %v2130 = vsel %vm2124, %v2127, %v2129
  %v2131 = vsel %vm2123, %v2110, %v2113
  %v2132 = vsel %vm2126, %v2119, 920167782
  %v2133 = vsel %vm2125, %v2116, %v2132
  %v2134 = vsel %vm2124, %v2131, %v2133
  %v2135 = vsel %vm2123, %v2113, %v2116
  %v2136 = vsel %vm2126, %v2122, 1326507024
  %v2137 = vsel %vm2125, %v2119, %v2136
  %v2138 = vsel %vm2124, %v2135, %v2137
  %v2139 = vshll.u32 %v2099, 8
  %v2140 = vmul.u32.u64.compose %v2139, %v2138
  %v2141 = vextract.low.u32 %v2140
  %v2142 = vextract.high.u32 %v2140
  %v2143 = vmul.u32.u64.compose %v2139, %v2134
  %v2144 = vextract.low.u32 %v2143
  %v2145 = vextract.high.u32 %v2143
  %v2146 = vmul.u32 %v2139, %v2130
  %v2147 = vadd.s32 %v2142, %v2144
  %vm2148 = vc.u32 %v2142, %v2144
  %v2149 = vadd.s32 %v2145, 1
  %v2150 = vsel %vm2148, %v2149, %v2145
  %v2151 = vadd.s32 %v2146, %v2150
  %v2152 = vadd.s32 %v2151, 536870912
  %v2153 = vshrl.u32 %v2152, 30
  %v2154 = vshll.u32 %v2153, 30
  %v2155 = vsub.s32 %v2151, %v2154
  %vm2156 = vcmp.lt.s32.totalorder %v2155, 0
  %v2157 = vsub.s32 0, %v2155
  %v2158 = vsel %vm2156, %v2157, %v2155
  %v2159 = vclz %v2158
  %v2160 = vsub.s32 %v2159, 2
  %vm2161 = vcmp.gt.s32.totalorder 0, %v2160
  %v2162 = vsel %vm2161, 0, %v2160
  %v2163 = vsub.s32 32, %v2162
  %v2164 = vshll.u32 %v2155, %v2162
  %v2165 = vshrl.u32 %v2147, %v2163
  %v2166 = vor.u32 %v2164, %v2165
  %v2167 = vsub.s32 4294967266, %v2162
  %v2168 = vadd.s32 %v2167, 127
  %v2169 = vshll.u32 %v2168, 23
  %v2170 = vor.u32 4788187, %v2169
  %v2171 = vand.u32 2147483647, %v2170
  %v2173 = vcvt.s32.f32 %v2166
  %v2174 = vmul.f32 %v2173, %v2171
  %v2175 = vxor.u32 %v2174, 2147483648
  %v2176 = vsel %vm2093, %v2175, %v2174
  %v2177 = vsub.s32 4, %v2153
  %v2178 = vsel %vm2093, %v2177, %v2153
  %v2179 = vsel %vm2092, %v1871, %v2176
  %v2180 = vsel %vm2092, 0, %v2178
  %v2181 = vcosq.f32.pop %v2179
  %v2182 = vsinq.f32.pop %v2179
  %vm2183 = vweird.f32 %v1871
  %v2184 = vand.u32 %v2180, 3
  %vm2185 = vcmp.lt.s32.totalorder %v2184, 2
  %vm2186 = vcmp.eq.s32.totalorder %v2184, 0
  %v2187 = vxor.u32 %v2182, 2147483648
  %v2188 = vsel %vm2186, %v2181, %v2187
  %vm2189 = vcmp.eq.s32.totalorder %v2184, 2
  %v2190 = vxor.u32 %v2181, 2147483648
  %v2191 = vsel %vm2189, %v2190, %v2182
  %v2192 = vsel %vm2185, %v2188, %v2191
  %v2193 = vsel %vm2183, nan, %v2192
  %v2194 = vand.u32 2147483647, %v1872
  %vm2195 = vcmp.le.f32.partialorder %v2194, 0.7853982
  %vm2196 = vcmp.lt.s32.totalorder %v1872, 0
  %v2197 = vand.u32 %v1872, 2139095040
  %v2198 = vshrl.u32 %v2197, 23
  %v2199 = vsub.s32 %v2198, 127
  %v2200 = vand.u32 2147483647, %v1872
  %v2201 = vand.u32 %v2200, 8388607
  %v2202 = vor.u32 %v2201, 8388608
  %v2203 = vsub.s32 0, %v2202
  %v2204 = vadd.s32 %v2199, 1
  %vm2205 = vcmp.gt.s32.totalorder %v2204, 0
  %v2206 = vsel %vm2205, %v2204, 0
  %v2207 = vshrl.u32 %v2206, 5
  %v2208 = vand.u32 %v2206, 31
  %v2209 = vsub.s32 32, %v2208
  %v2210 = vshrl.u32 683565275, %v2209
  %v2211 = vshll.u32 683565275, %v2208
  %v2212 = vshrl.u32 2475754826, %v2209
  %v2213 = vor.u32 %v2211, %v2212
  %v2214 = vshll.u32 2475754826, %v2208
  %v2215 = vshrl.u32 2131351028, %v2209
  %v2216 = vor.u32 %v2214, %v2215
  %v2217 = vshll.u32 2131351028, %v2208
  %v2218 = vshrl.u32 2102212464, %v2209
  %v2219 = vor.u32 %v2217, %v2218
  %v2220 = vshll.u32 2102212464, %v2208
  %v2221 = vshrl.u32 920167782, %v2209
  %v2222 = vor.u32 %v2220, %v2221
  %v2223 = vshll.u32 920167782, %v2208
  %v2224 = vshrl.u32 1326507024, %v2209
  %v2225 = vor.u32 %v2223, %v2224
  %vm2226 = vcmp.lt.s32.totalorder %v2207, 1
  %vm2227 = vcmp.lt.s32.totalorder %v2207, 2
  %vm2228 = vcmp.lt.s32.totalorder %v2207, 3
  %vm2229 = vcmp.lt.s32.totalorder %v2207, 4
  %v2230 = vsel %vm2226, %v2210, %v2213
  %v2231 = vsel %vm2229, %v2219, 2102212464
  %v2232 = vsel %vm2228, %v2216, %v2231
  %v2233 = vsel %vm2227, %v2230, %v2232
  %v2234 = vsel %vm2226, %v2213, %v2216
  %v2235 = vsel %vm2229, %v2222, 920167782
  %v2236 = vsel %vm2228, %v2219, %v2235
  %v2237 = vsel %vm2227, %v2234, %v2236
  %v2238 = vsel %vm2226, %v2216, %v2219
  %v2239 = vsel %vm2229, %v2225, 1326507024
  %v2240 = vsel %vm2228, %v2222, %v2239
  %v2241 = vsel %vm2227, %v2238, %v2240
  %v2242 = vshll.u32 %v2202, 8
  %v2243 = vmul.u32.u64.compose %v2242, %v2241
  %v2244 = vextract.low.u32 %v2243
  %v2245 = vextract.high.u32 %v2243
  %v2246 = vmul.u32.u64.compose %v2242, %v2237
  %v2247 = vextract.low.u32 %v2246
  %v2248 = vextract.high.u32 %v2246
  %v2249 = vmul.u32 %v2242, %v2233
  %v2250 = vadd.s32 %v2245, %v2247
  %vm2251 = vc.u32 %v2245, %v2247
  %v2252 = vadd.s32 %v2248, 1
  %v2253 = vsel %vm2251, %v2252, %v2248
  %v2254 = vadd.s32 %v2249, %v2253
  %v2255 = vadd.s32 %v2254, 536870912
  %v2256 = vshrl.u32 %v2255, 30
  %v2257 = vshll.u32 %v2256, 30
  %v2258 = vsub.s32 %v2254, %v2257
  %vm2259 = vcmp.lt.s32.totalorder %v2258, 0
  %v2260 = vsub.s32 0, %v2258
  %v2261 = vsel %vm2259, %v2260, %v2258
  %v2262 = vclz %v2261
  %v2263 = vsub.s32 %v2262, 2
  %vm2264 = vcmp.gt.s32.totalorder 0, %v2263
  %v2265 = vsel %vm2264, 0, %v2263
  %v2266 = vsub.s32 32, %v2265
  %v2267 = vshll.u32 %v2258, %v2265
  %v2268 = vshrl.u32 %v2250, %v2266
  %v2269 = vor.u32 %v2267, %v2268
  %v2270 = vsub.s32 4294967266, %v2265
  %v2271 = vadd.s32 %v2270, 127
  %v2272 = vshll.u32 %v2271, 23
  %v2273 = vor.u32 4788187, %v2272
  %v2274 = vand.u32 2147483647, %v2273
  %v2276 = vcvt.s32.f32 %v2269
  %v2277 = vmul.f32 %v2276, %v2274
  %v2278 = vxor.u32 %v2277, 2147483648
  %v2279 = vsel %vm2196, %v2278, %v2277
  %v2280 = vsub.s32 4, %v2256
  %v2281 = vsel %vm2196, %v2280, %v2256
  %v2282 = vsel %vm2195, %v1872, %v2279
  %v2283 = vsel %vm2195, 0, %v2281
  %v2284 = vcosq.f32.pop %v2282
  %v2285 = vsinq.f32.pop %v2282
  %vm2286 = vweird.f32 %v1872
  %v2287 = vand.u32 %v2283, 3
  %vm2288 = vcmp.lt.s32.totalorder %v2287, 2
  %vm2289 = vcmp.eq.s32.totalorder %v2287, 0
  %v2290 = vxor.u32 %v2285, 2147483648
  %v2291 = vsel %vm2289, %v2284, %v2290
  %vm2292 = vcmp.eq.s32.totalorder %v2287, 2
  %v2293 = vxor.u32 %v2284, 2147483648
  %v2294 = vsel %vm2292, %v2293, %v2285
  %v2295 = vsel %vm2288, %v2291, %v2294
  %v2296 = vsel %vm2286, nan, %v2295
  %v2297 = vand.u32 2147483647, %v1873
  %vm2298 = vcmp.le.f32.partialorder %v2297, 0.7853982
  %vm2299 = vcmp.lt.s32.totalorder %v1873, 0
  %v2300 = vand.u32 %v1873, 2139095040
  %v2301 = vshrl.u32 %v2300, 23
  %v2302 = vsub.s32 %v2301, 127
  %v2303 = vand.u32 2147483647, %v1873
  %v2304 = vand.u32 %v2303, 8388607
  %v2305 = vor.u32 %v2304, 8388608
  %v2306 = vsub.s32 0, %v2305
  %v2307 = vadd.s32 %v2302, 1
  %vm2308 = vcmp.gt.s32.totalorder %v2307, 0
  %v2309 = vsel %vm2308, %v2307, 0
  %v2310 = vshrl.u32 %v2309, 5
  %v2311 = vand.u32 %v2309, 31
  %v2312 = vsub.s32 32, %v2311
  %v2313 = vshrl.u32 683565275, %v2312
  %v2314 = vshll.u32 683565275, %v2311
  %v2315 = vshrl.u32 2475754826, %v2312
  %v2316 = vor.u32 %v2314, %v2315
  %v2317 = vshll.u32 2475754826, %v2311
  %v2318 = vshrl.u32 2131351028, %v2312
  %v2319 = vor.u32 %v2317, %v2318
  %v2320 = vshll.u32 2131351028, %v2311
  %v2321 = vshrl.u32 2102212464, %v2312
  %v2322 = vor.u32 %v2320, %v2321
  %v2323 = vshll.u32 2102212464, %v2311
  %v2324 = vshrl.u32 920167782, %v2312
  %v2325 = vor.u32 %v2323, %v2324
  %v2326 = vshll.u32 920167782, %v2311
  %v2327 = vshrl.u32 1326507024, %v2312
  %v2328 = vor.u32 %v2326, %v2327
  %vm2329 = vcmp.lt.s32.totalorder %v2310, 1
  %vm2330 = vcmp.lt.s32.totalorder %v2310, 2
  %vm2331 = vcmp.lt.s32.totalorder %v2310, 3
  %vm2332 = vcmp.lt.s32.totalorder %v2310, 4
  %v2333 = vsel %vm2329, %v2313, %v2316
  %v2334 = vsel %vm2332, %v2322, 2102212464
  %v2335 = vsel %vm2331, %v2319, %v2334
  %v2336 = vsel %vm2330, %v2333, %v2335
  %v2337 = vsel %vm2329, %v2316, %v2319
  %v2338 = vsel %vm2332, %v2325, 920167782
  %v2339 = vsel %vm2331, %v2322, %v2338
  %v2340 = vsel %vm2330, %v2337, %v2339
  %v2341 = vsel %vm2329, %v2319, %v2322
  %v2342 = vsel %vm2332, %v2328, 1326507024
  %v2343 = vsel %vm2331, %v2325, %v2342
  %v2344 = vsel %vm2330, %v2341, %v2343
  %v2345 = vshll.u32 %v2305, 8
  %v2346 = vmul.u32.u64.compose %v2345, %v2344
  %v2347 = vextract.low.u32 %v2346
  %v2348 = vextract.high.u32 %v2346
  %v2349 = vmul.u32.u64.compose %v2345, %v2340
  %v2350 = vextract.low.u32 %v2349
  %v2351 = vextract.high.u32 %v2349
  %v2352 = vmul.u32 %v2345, %v2336
  %v2353 = vadd.s32 %v2348, %v2350
  %vm2354 = vc.u32 %v2348, %v2350
  %v2355 = vadd.s32 %v2351, 1
  %v2356 = vsel %vm2354, %v2355, %v2351
  %v2357 = vadd.s32 %v2352, %v2356
  %v2358 = vadd.s32 %v2357, 536870912
  %v2359 = vshrl.u32 %v2358, 30
  %v2360 = vshll.u32 %v2359, 30
  %v2361 = vsub.s32 %v2357, %v2360
  %vm2362 = vcmp.lt.s32.totalorder %v2361, 0
  %v2363 = vsub.s32 0, %v2361
  %v2364 = vsel %vm2362, %v2363, %v2361
  %v2365 = vclz %v2364
  %v2366 = vsub.s32 %v2365, 2
  %vm2367 = vcmp.gt.s32.totalorder 0, %v2366
  %v2368 = vsel %vm2367, 0, %v2366
  %v2369 = vsub.s32 32, %v2368
  %v2370 = vshll.u32 %v2361, %v2368
  %v2371 = vshrl.u32 %v2353, %v2369
  %v2372 = vor.u32 %v2370, %v2371
  %v2373 = vsub.s32 4294967266, %v2368
  %v2374 = vadd.s32 %v2373, 127
  %v2375 = vshll.u32 %v2374, 23
  %v2376 = vor.u32 4788187, %v2375
  %v2377 = vand.u32 2147483647, %v2376
  %v2379 = vcvt.s32.f32 %v2372
  %v2380 = vmul.f32 %v2379, %v2377
  %v2381 = vxor.u32 %v2380, 2147483648
  %v2382 = vsel %vm2299, %v2381, %v2380
  %v2383 = vsub.s32 4, %v2359
  %v2384 = vsel %vm2299, %v2383, %v2359
  %v2385 = vsel %vm2298, %v1873, %v2382
  %v2386 = vsel %vm2298, 0, %v2384
  %v2387 = vcosq.f32.pop %v2385
  %v2388 = vsinq.f32.pop %v2385
  %vm2389 = vweird.f32 %v1873
  %v2390 = vand.u32 %v2386, 3
  %vm2391 = vcmp.lt.s32.totalorder %v2390, 2
  %vm2392 = vcmp.eq.s32.totalorder %v2390, 0
  %v2393 = vxor.u32 %v2388, 2147483648
  %v2394 = vsel %vm2392, %v2387, %v2393
  %vm2395 = vcmp.eq.s32.totalorder %v2390, 2
  %v2396 = vxor.u32 %v2387, 2147483648
  %v2397 = vsel %vm2395, %v2396, %v2388
  %v2398 = vsel %vm2391, %v2394, %v2397
  %v2399 = vsel %vm2389, nan, %v2398
  %v2400 = vand.u32 2147483647, %v1874
  %vm2401 = vcmp.le.f32.partialorder %v2400, 0.7853982
  %vm2402 = vcmp.lt.s32.totalorder %v1874, 0
  %v2403 = vand.u32 %v1874, 2139095040
  %v2404 = vshrl.u32 %v2403, 23
  %v2405 = vsub.s32 %v2404, 127
  %v2406 = vand.u32 2147483647, %v1874
  %v2407 = vand.u32 %v2406, 8388607
  %v2408 = vor.u32 %v2407, 8388608
  %v2409 = vsub.s32 0, %v2408
  %v2410 = vadd.s32 %v2405, 1
  %vm2411 = vcmp.gt.s32.totalorder %v2410, 0
  %v2412 = vsel %vm2411, %v2410, 0
  %v2413 = vshrl.u32 %v2412, 5
  %v2414 = vand.u32 %v2412, 31
  %v2415 = vsub.s32 32, %v2414
  %v2416 = vshrl.u32 683565275, %v2415
  %v2417 = vshll.u32 683565275, %v2414
  %v2418 = vshrl.u32 2475754826, %v2415
  %v2419 = vor.u32 %v2417, %v2418
  %v2420 = vshll.u32 2475754826, %v2414
  %v2421 = vshrl.u32 2131351028, %v2415
  %v2422 = vor.u32 %v2420, %v2421
  %v2423 = vshll.u32 2131351028, %v2414
  %v2424 = vshrl.u32 2102212464, %v2415
  %v2425 = vor.u32 %v2423, %v2424
  %v2426 = vshll.u32 2102212464, %v2414
  %v2427 = vshrl.u32 920167782, %v2415
  %v2428 = vor.u32 %v2426, %v2427
  %v2429 = vshll.u32 920167782, %v2414
  %v2430 = vshrl.u32 1326507024, %v2415
  %v2431 = vor.u32 %v2429, %v2430
  %vm2432 = vcmp.lt.s32.totalorder %v2413, 1
  %vm2433 = vcmp.lt.s32.totalorder %v2413, 2
  %vm2434 = vcmp.lt.s32.totalorder %v2413, 3
  %vm2435 = vcmp.lt.s32.totalorder %v2413, 4
  %v2436 = vsel %vm2432, %v2416, %v2419
  %v2437 = vsel %vm2435, %v2425, 2102212464
  %v2438 = vsel %vm2434, %v2422, %v2437
  %v2439 = vsel %vm2433, %v2436, %v2438
  %v2440 = vsel %vm2432, %v2419, %v2422
  %v2441 = vsel %vm2435, %v2428, 920167782
  %v2442 = vsel %vm2434, %v2425, %v2441
  %v2443 = vsel %vm2433, %v2440, %v2442
  %v2444 = vsel %vm2432, %v2422, %v2425
  %v2445 = vsel %vm2435, %v2431, 1326507024
  %v2446 = vsel %vm2434, %v2428, %v2445
  %v2447 = vsel %vm2433, %v2444, %v2446
  %v2448 = vshll.u32 %v2408, 8
  %v2449 = vmul.u32.u64.compose %v2448, %v2447
  %v2450 = vextract.low.u32 %v2449
  %v2451 = vextract.high.u32 %v2449
  %v2452 = vmul.u32.u64.compose %v2448, %v2443
  %v2453 = vextract.low.u32 %v2452
  %v2454 = vextract.high.u32 %v2452
  %v2455 = vmul.u32 %v2448, %v2439
  %v2456 = vadd.s32 %v2451, %v2453
  %vm2457 = vc.u32 %v2451, %v2453
  %v2458 = vadd.s32 %v2454, 1
  %v2459 = vsel %vm2457, %v2458, %v2454
  %v2460 = vadd.s32 %v2455, %v2459
  %v2461 = vadd.s32 %v2460, 536870912
  %v2462 = vshrl.u32 %v2461, 30
  %v2463 = vshll.u32 %v2462, 30
  %v2464 = vsub.s32 %v2460, %v2463
  %vm2465 = vcmp.lt.s32.totalorder %v2464, 0
  %v2466 = vsub.s32 0, %v2464
  %v2467 = vsel %vm2465, %v2466, %v2464
  %v2468 = vclz %v2467
  %v2469 = vsub.s32 %v2468, 2
  %vm2470 = vcmp.gt.s32.totalorder 0, %v2469
  %v2471 = vsel %vm2470, 0, %v2469
  %v2472 = vsub.s32 32, %v2471
  %v2473 = vshll.u32 %v2464, %v2471
  %v2474 = vshrl.u32 %v2456, %v2472
  %v2475 = vor.u32 %v2473, %v2474
  %v2476 = vsub.s32 4294967266, %v2471
  %v2477 = vadd.s32 %v2476, 127
  %v2478 = vshll.u32 %v2477, 23
  %v2479 = vor.u32 4788187, %v2478
  %v2480 = vand.u32 2147483647, %v2479
  %v2482 = vcvt.s32.f32 %v2475
  %v2483 = vmul.f32 %v2482, %v2480
  %v2484 = vxor.u32 %v2483, 2147483648
  %v2485 = vsel %vm2402, %v2484, %v2483
  %v2486 = vsub.s32 4, %v2462
  %v2487 = vsel %vm2402, %v2486, %v2462
  %v2488 = vsel %vm2401, %v1874, %v2485
  %v2489 = vsel %vm2401, 0, %v2487
  %v2490 = vcosq.f32.pop %v2488
  %v2491 = vsinq.f32.pop %v2488
  %vm2492 = vweird.f32 %v1874
  %v2493 = vand.u32 %v2489, 3
  %vm2494 = vcmp.lt.s32.totalorder %v2493, 2
  %vm2495 = vcmp.eq.s32.totalorder %v2493, 0
  %v2496 = vxor.u32 %v2491, 2147483648
  %v2497 = vsel %vm2495, %v2490, %v2496
  %vm2498 = vcmp.eq.s32.totalorder %v2493, 2
  %v2499 = vxor.u32 %v2490, 2147483648
  %v2500 = vsel %vm2498, %v2499, %v2491
  %v2501 = vsel %vm2494, %v2497, %v2500
  %v2502 = vsel %vm2492, nan, %v2501
  %v2503 = vand.u32 2147483647, %v1875
  %vm2504 = vcmp.le.f32.partialorder %v2503, 0.7853982
  %vm2505 = vcmp.lt.s32.totalorder %v1875, 0
  %v2506 = vand.u32 %v1875, 2139095040
  %v2507 = vshrl.u32 %v2506, 23
  %v2508 = vsub.s32 %v2507, 127
  %v2509 = vand.u32 2147483647, %v1875
  %v2510 = vand.u32 %v2509, 8388607
  %v2511 = vor.u32 %v2510, 8388608
  %v2512 = vsub.s32 0, %v2511
  %v2513 = vadd.s32 %v2508, 1
  %vm2514 = vcmp.gt.s32.totalorder %v2513, 0
  %v2515 = vsel %vm2514, %v2513, 0
  %v2516 = vshrl.u32 %v2515, 5
  %v2517 = vand.u32 %v2515, 31
  %v2518 = vsub.s32 32, %v2517
  %v2519 = vshrl.u32 683565275, %v2518
  %v2520 = vshll.u32 683565275, %v2517
  %v2521 = vshrl.u32 2475754826, %v2518
  %v2522 = vor.u32 %v2520, %v2521
  %v2523 = vshll.u32 2475754826, %v2517
  %v2524 = vshrl.u32 2131351028, %v2518
  %v2525 = vor.u32 %v2523, %v2524
  %v2526 = vshll.u32 2131351028, %v2517
  %v2527 = vshrl.u32 2102212464, %v2518
  %v2528 = vor.u32 %v2526, %v2527
  %v2529 = vshll.u32 2102212464, %v2517
  %v2530 = vshrl.u32 920167782, %v2518
  %v2531 = vor.u32 %v2529, %v2530
  %v2532 = vshll.u32 920167782, %v2517
  %v2533 = vshrl.u32 1326507024, %v2518
  %v2534 = vor.u32 %v2532, %v2533
  %vm2535 = vcmp.lt.s32.totalorder %v2516, 1
  %vm2536 = vcmp.lt.s32.totalorder %v2516, 2
  %vm2537 = vcmp.lt.s32.totalorder %v2516, 3
  %vm2538 = vcmp.lt.s32.totalorder %v2516, 4
  %v2539 = vsel %vm2535, %v2519, %v2522
  %v2540 = vsel %vm2538, %v2528, 2102212464
  %v2541 = vsel %vm2537, %v2525, %v2540
  %v2542 = vsel %vm2536, %v2539, %v2541
  %v2543 = vsel %vm2535, %v2522, %v2525
  %v2544 = vsel %vm2538, %v2531, 920167782
  %v2545 = vsel %vm2537, %v2528, %v2544
  %v2546 = vsel %vm2536, %v2543, %v2545
  %v2547 = vsel %vm2535, %v2525, %v2528
  %v2548 = vsel %vm2538, %v2534, 1326507024
  %v2549 = vsel %vm2537, %v2531, %v2548
  %v2550 = vsel %vm2536, %v2547, %v2549
  %v2551 = vshll.u32 %v2511, 8
  %v2552 = vmul.u32.u64.compose %v2551, %v2550
  %v2553 = vextract.low.u32 %v2552
  %v2554 = vextract.high.u32 %v2552
  %v2555 = vmul.u32.u64.compose %v2551, %v2546
  %v2556 = vextract.low.u32 %v2555
  %v2557 = vextract.high.u32 %v2555
  %v2558 = vmul.u32 %v2551, %v2542
  %v2559 = vadd.s32 %v2554, %v2556
  %vm2560 = vc.u32 %v2554, %v2556
  %v2561 = vadd.s32 %v2557, 1
  %v2562 = vsel %vm2560, %v2561, %v2557
  %v2563 = vadd.s32 %v2558, %v2562
  %v2564 = vadd.s32 %v2563, 536870912
  %v2565 = vshrl.u32 %v2564, 30
  %v2566 = vshll.u32 %v2565, 30
  %v2567 = vsub.s32 %v2563, %v2566
  %vm2568 = vcmp.lt.s32.totalorder %v2567, 0
  %v2569 = vsub.s32 0, %v2567
  %v2570 = vsel %vm2568, %v2569, %v2567
  %v2571 = vclz %v2570
  %v2572 = vsub.s32 %v2571, 2
  %vm2573 = vcmp.gt.s32.totalorder 0, %v2572
  %v2574 = vsel %vm2573, 0, %v2572
  %v2575 = vsub.s32 32, %v2574
  %v2576 = vshll.u32 %v2567, %v2574
  %v2577 = vshrl.u32 %v2559, %v2575
  %v2578 = vor.u32 %v2576, %v2577
  %v2579 = vsub.s32 4294967266, %v2574
  %v2580 = vadd.s32 %v2579, 127
  %v2581 = vshll.u32 %v2580, 23
  %v2582 = vor.u32 4788187, %v2581
  %v2583 = vand.u32 2147483647, %v2582
  %v2585 = vcvt.s32.f32 %v2578
  %v2586 = vmul.f32 %v2585, %v2583
  %v2587 = vxor.u32 %v2586, 2147483648
  %v2588 = vsel %vm2505, %v2587, %v2586
  %v2589 = vsub.s32 4, %v2565
  %v2590 = vsel %vm2505, %v2589, %v2565
  %v2591 = vsel %vm2504, %v1875, %v2588
  %v2592 = vsel %vm2504, 0, %v2590
  %v2593 = vcosq.f32.pop %v2591
  %v2594 = vsinq.f32.pop %v2591
  %vm2595 = vweird.f32 %v1875
  %v2596 = vand.u32 %v2592, 3
  %vm2597 = vcmp.lt.s32.totalorder %v2596, 2
  %vm2598 = vcmp.eq.s32.totalorder %v2596, 0
  %v2599 = vxor.u32 %v2594, 2147483648
  %v2600 = vsel %vm2598, %v2593, %v2599
  %vm2601 = vcmp.eq.s32.totalorder %v2596, 2
  %v2602 = vxor.u32 %v2593, 2147483648
  %v2603 = vsel %vm2601, %v2602, %v2594
  %v2604 = vsel %vm2597, %v2600, %v2603
  %v2605 = vsel %vm2595, nan, %v2604
  %v2606 = vand.u32 2147483647, %v1876
  %vm2607 = vcmp.le.f32.partialorder %v2606, 0.7853982
  %vm2608 = vcmp.lt.s32.totalorder %v1876, 0
  %v2609 = vand.u32 %v1876, 2139095040
  %v2610 = vshrl.u32 %v2609, 23
  %v2611 = vsub.s32 %v2610, 127
  %v2612 = vand.u32 2147483647, %v1876
  %v2613 = vand.u32 %v2612, 8388607
  %v2614 = vor.u32 %v2613, 8388608
  %v2615 = vsub.s32 0, %v2614
  %v2616 = vadd.s32 %v2611, 1
  %vm2617 = vcmp.gt.s32.totalorder %v2616, 0
  %v2618 = vsel %vm2617, %v2616, 0
  %v2619 = vshrl.u32 %v2618, 5
  %v2620 = vand.u32 %v2618, 31
  %v2621 = vsub.s32 32, %v2620
  %v2622 = vshrl.u32 683565275, %v2621
  %v2623 = vshll.u32 683565275, %v2620
  %v2624 = vshrl.u32 2475754826, %v2621
  %v2625 = vor.u32 %v2623, %v2624
  %v2626 = vshll.u32 2475754826, %v2620
  %v2627 = vshrl.u32 2131351028, %v2621
  %v2628 = vor.u32 %v2626, %v2627
  %v2629 = vshll.u32 2131351028, %v2620
  %v2630 = vshrl.u32 2102212464, %v2621
  %v2631 = vor.u32 %v2629, %v2630
  %v2632 = vshll.u32 2102212464, %v2620
  %v2633 = vshrl.u32 920167782, %v2621
  %v2634 = vor.u32 %v2632, %v2633
  %v2635 = vshll.u32 920167782, %v2620
  %v2636 = vshrl.u32 1326507024, %v2621
  %v2637 = vor.u32 %v2635, %v2636
  %vm2638 = vcmp.lt.s32.totalorder %v2619, 1
  %vm2639 = vcmp.lt.s32.totalorder %v2619, 2
  %vm2640 = vcmp.lt.s32.totalorder %v2619, 3
  %vm2641 = vcmp.lt.s32.totalorder %v2619, 4
  %v2642 = vsel %vm2638, %v2622, %v2625
  %v2643 = vsel %vm2641, %v2631, 2102212464
  %v2644 = vsel %vm2640, %v2628, %v2643
  %v2645 = vsel %vm2639, %v2642, %v2644
  %v2646 = vsel %vm2638, %v2625, %v2628
  %v2647 = vsel %vm2641, %v2634, 920167782
  %v2648 = vsel %vm2640, %v2631, %v2647
  %v2649 = vsel %vm2639, %v2646, %v2648
  %v2650 = vsel %vm2638, %v2628, %v2631
  %v2651 = vsel %vm2641, %v2637, 1326507024
  %v2652 = vsel %vm2640, %v2634, %v2651
  %v2653 = vsel %vm2639, %v2650, %v2652
  %v2654 = vshll.u32 %v2614, 8
  %v2655 = vmul.u32.u64.compose %v2654, %v2653
  %v2656 = vextract.low.u32 %v2655
  %v2657 = vextract.high.u32 %v2655
  %v2658 = vmul.u32.u64.compose %v2654, %v2649
  %v2659 = vextract.low.u32 %v2658
  %v2660 = vextract.high.u32 %v2658
  %v2661 = vmul.u32 %v2654, %v2645
  %v2662 = vadd.s32 %v2657, %v2659
  %vm2663 = vc.u32 %v2657, %v2659
  %v2664 = vadd.s32 %v2660, 1
  %v2665 = vsel %vm2663, %v2664, %v2660
  %v2666 = vadd.s32 %v2661, %v2665
  %v2667 = vadd.s32 %v2666, 536870912
  %v2668 = vshrl.u32 %v2667, 30
  %v2669 = vshll.u32 %v2668, 30
  %v2670 = vsub.s32 %v2666, %v2669
  %vm2671 = vcmp.lt.s32.totalorder %v2670, 0
  %v2672 = vsub.s32 0, %v2670
  %v2673 = vsel %vm2671, %v2672, %v2670
  %v2674 = vclz %v2673
  %v2675 = vsub.s32 %v2674, 2
  %vm2676 = vcmp.gt.s32.totalorder 0, %v2675
  %v2677 = vsel %vm2676, 0, %v2675
  %v2678 = vsub.s32 32, %v2677
  %v2679 = vshll.u32 %v2670, %v2677
  %v2680 = vshrl.u32 %v2662, %v2678
  %v2681 = vor.u32 %v2679, %v2680
  %v2682 = vsub.s32 4294967266, %v2677
  %v2683 = vadd.s32 %v2682, 127
  %v2684 = vshll.u32 %v2683, 23
  %v2685 = vor.u32 4788187, %v2684
  %v2686 = vand.u32 2147483647, %v2685
  %v2688 = vcvt.s32.f32 %v2681
  %v2689 = vmul.f32 %v2688, %v2686
  %v2690 = vxor.u32 %v2689, 2147483648
  %v2691 = vsel %vm2608, %v2690, %v2689
  %v2692 = vsub.s32 4, %v2668
  %v2693 = vsel %vm2608, %v2692, %v2668
  %v2694 = vsel %vm2607, %v1876, %v2691
  %v2695 = vsel %vm2607, 0, %v2693
  %v2696 = vcosq.f32.pop %v2694
  %v2697 = vsinq.f32.pop %v2694
  %vm2698 = vweird.f32 %v1876
  %v2699 = vand.u32 %v2695, 3
  %vm2700 = vcmp.lt.s32.totalorder %v2699, 2
  %vm2701 = vcmp.eq.s32.totalorder %v2699, 0
  %v2702 = vxor.u32 %v2697, 2147483648
  %v2703 = vsel %vm2701, %v2696, %v2702
  %vm2704 = vcmp.eq.s32.totalorder %v2699, 2
  %v2705 = vxor.u32 %v2696, 2147483648
  %v2706 = vsel %vm2704, %v2705, %v2697
  %v2707 = vsel %vm2700, %v2703, %v2706
  %v2708 = vsel %vm2698, nan, %v2707
  %v2709 = vand.u32 2147483647, %v1877
  %vm2710 = vcmp.le.f32.partialorder %v2709, 0.7853982
  %vm2711 = vcmp.lt.s32.totalorder %v1877, 0
  %v2712 = vand.u32 %v1877, 2139095040
  %v2713 = vshrl.u32 %v2712, 23
  %v2714 = vsub.s32 %v2713, 127
  %v2715 = vand.u32 2147483647, %v1877
  %v2716 = vand.u32 %v2715, 8388607
  %v2717 = vor.u32 %v2716, 8388608
  %v2718 = vsub.s32 0, %v2717
  %v2719 = vadd.s32 %v2714, 1
  %vm2720 = vcmp.gt.s32.totalorder %v2719, 0
  %v2721 = vsel %vm2720, %v2719, 0
  %v2722 = vshrl.u32 %v2721, 5
  %v2723 = vand.u32 %v2721, 31
  %v2724 = vsub.s32 32, %v2723
  %v2725 = vshrl.u32 683565275, %v2724
  %v2726 = vshll.u32 683565275, %v2723
  %v2727 = vshrl.u32 2475754826, %v2724
  %v2728 = vor.u32 %v2726, %v2727
  %v2729 = vshll.u32 2475754826, %v2723
  %v2730 = vshrl.u32 2131351028, %v2724
  %v2731 = vor.u32 %v2729, %v2730
  %v2732 = vshll.u32 2131351028, %v2723
  %v2733 = vshrl.u32 2102212464, %v2724
  %v2734 = vor.u32 %v2732, %v2733
  %v2735 = vshll.u32 2102212464, %v2723
  %v2736 = vshrl.u32 920167782, %v2724
  %v2737 = vor.u32 %v2735, %v2736
  %v2738 = vshll.u32 920167782, %v2723
  %v2739 = vshrl.u32 1326507024, %v2724
  %v2740 = vor.u32 %v2738, %v2739
  %vm2741 = vcmp.lt.s32.totalorder %v2722, 1
  %vm2742 = vcmp.lt.s32.totalorder %v2722, 2
  %vm2743 = vcmp.lt.s32.totalorder %v2722, 3
  %vm2744 = vcmp.lt.s32.totalorder %v2722, 4
  %v2745 = vsel %vm2741, %v2725, %v2728
  %v2746 = vsel %vm2744, %v2734, 2102212464
  %v2747 = vsel %vm2743, %v2731, %v2746
  %v2748 = vsel %vm2742, %v2745, %v2747
  %v2749 = vsel %vm2741, %v2728, %v2731
  %v2750 = vsel %vm2744, %v2737, 920167782
  %v2751 = vsel %vm2743, %v2734, %v2750
  %v2752 = vsel %vm2742, %v2749, %v2751
  %v2753 = vsel %vm2741, %v2731, %v2734
  %v2754 = vsel %vm2744, %v2740, 1326507024
  %v2755 = vsel %vm2743, %v2737, %v2754
  %v2756 = vsel %vm2742, %v2753, %v2755
  %v2757 = vshll.u32 %v2717, 8
  %v2758 = vmul.u32.u64.compose %v2757, %v2756
  %v2759 = vextract.low.u32 %v2758
  %v2760 = vextract.high.u32 %v2758
  %v2761 = vmul.u32.u64.compose %v2757, %v2752
  %v2762 = vextract.low.u32 %v2761
  %v2763 = vextract.high.u32 %v2761
  %v2764 = vmul.u32 %v2757, %v2748
  %v2765 = vadd.s32 %v2760, %v2762
  %vm2766 = vc.u32 %v2760, %v2762
  %v2767 = vadd.s32 %v2763, 1
  %v2768 = vsel %vm2766, %v2767, %v2763
  %v2769 = vadd.s32 %v2764, %v2768
  %v2770 = vadd.s32 %v2769, 536870912
  %v2771 = vshrl.u32 %v2770, 30
  %v2772 = vshll.u32 %v2771, 30
  %v2773 = vsub.s32 %v2769, %v2772
  %vm2774 = vcmp.lt.s32.totalorder %v2773, 0
  %v2775 = vsub.s32 0, %v2773
  %v2776 = vsel %vm2774, %v2775, %v2773
  %v2777 = vclz %v2776
  %v2778 = vsub.s32 %v2777, 2
  %vm2779 = vcmp.gt.s32.totalorder 0, %v2778
  %v2780 = vsel %vm2779, 0, %v2778
  %v2781 = vsub.s32 32, %v2780
  %v2782 = vshll.u32 %v2773, %v2780
  %v2783 = vshrl.u32 %v2765, %v2781
  %v2784 = vor.u32 %v2782, %v2783
  %v2785 = vsub.s32 4294967266, %v2780
  %v2786 = vadd.s32 %v2785, 127
  %v2787 = vshll.u32 %v2786, 23
  %v2788 = vor.u32 4788187, %v2787
  %v2789 = vand.u32 2147483647, %v2788
  %v2791 = vcvt.s32.f32 %v2784
  %v2792 = vmul.f32 %v2791, %v2789
  %v2793 = vxor.u32 %v2792, 2147483648
  %v2794 = vsel %vm2711, %v2793, %v2792
  %v2795 = vsub.s32 4, %v2771
  %v2796 = vsel %vm2711, %v2795, %v2771
  %v2797 = vsel %vm2710, %v1877, %v2794
  %v2798 = vsel %vm2710, 0, %v2796
  %v2799 = vcosq.f32.pop %v2797
  %v2800 = vsinq.f32.pop %v2797
  %vm2801 = vweird.f32 %v1877
  %v2802 = vand.u32 %v2798, 3
  %vm2803 = vcmp.lt.s32.totalorder %v2802, 2
  %vm2804 = vcmp.eq.s32.totalorder %v2802, 0
  %v2805 = vxor.u32 %v2800, 2147483648
  %v2806 = vsel %vm2804, %v2799, %v2805
  %vm2807 = vcmp.eq.s32.totalorder %v2802, 2
  %v2808 = vxor.u32 %v2799, 2147483648
  %v2809 = vsel %vm2807, %v2808, %v2800
  %v2810 = vsel %vm2803, %v2806, %v2809
  %v2811 = vsel %vm2801, nan, %v2810
  %v2812 = vand.u32 2147483647, %v1878
  %vm2813 = vcmp.le.f32.partialorder %v2812, 0.7853982
  %vm2814 = vcmp.lt.s32.totalorder %v1878, 0
  %v2815 = vand.u32 %v1878, 2139095040
  %v2816 = vshrl.u32 %v2815, 23
  %v2817 = vsub.s32 %v2816, 127
  %v2818 = vand.u32 2147483647, %v1878
  %v2819 = vand.u32 %v2818, 8388607
  %v2820 = vor.u32 %v2819, 8388608
  %v2821 = vsub.s32 0, %v2820
  %v2822 = vadd.s32 %v2817, 1
  %vm2823 = vcmp.gt.s32.totalorder %v2822, 0
  %v2824 = vsel %vm2823, %v2822, 0
  %v2825 = vshrl.u32 %v2824, 5
  %v2826 = vand.u32 %v2824, 31
  %v2827 = vsub.s32 32, %v2826
  %v2828 = vshrl.u32 683565275, %v2827
  %v2829 = vshll.u32 683565275, %v2826
  %v2830 = vshrl.u32 2475754826, %v2827
  %v2831 = vor.u32 %v2829, %v2830
  %v2832 = vshll.u32 2475754826, %v2826
  %v2833 = vshrl.u32 2131351028, %v2827
  %v2834 = vor.u32 %v2832, %v2833
  %v2835 = vshll.u32 2131351028, %v2826
  %v2836 = vshrl.u32 2102212464, %v2827
  %v2837 = vor.u32 %v2835, %v2836
  %v2838 = vshll.u32 2102212464, %v2826
  %v2839 = vshrl.u32 920167782, %v2827
  %v2840 = vor.u32 %v2838, %v2839
  %v2841 = vshll.u32 920167782, %v2826
  %v2842 = vshrl.u32 1326507024, %v2827
  %v2843 = vor.u32 %v2841, %v2842
  %vm2844 = vcmp.lt.s32.totalorder %v2825, 1
  %vm2845 = vcmp.lt.s32.totalorder %v2825, 2
  %vm2846 = vcmp.lt.s32.totalorder %v2825, 3
  %vm2847 = vcmp.lt.s32.totalorder %v2825, 4
  %v2848 = vsel %vm2844, %v2828, %v2831
  %v2849 = vsel %vm2847, %v2837, 2102212464
  %v2850 = vsel %vm2846, %v2834, %v2849
  %v2851 = vsel %vm2845, %v2848, %v2850
  %v2852 = vsel %vm2844, %v2831, %v2834
  %v2853 = vsel %vm2847, %v2840, 920167782
  %v2854 = vsel %vm2846, %v2837, %v2853
  %v2855 = vsel %vm2845, %v2852, %v2854
  %v2856 = vsel %vm2844, %v2834, %v2837
  %v2857 = vsel %vm2847, %v2843, 1326507024
  %v2858 = vsel %vm2846, %v2840, %v2857
  %v2859 = vsel %vm2845, %v2856, %v2858
  %v2860 = vshll.u32 %v2820, 8
  %v2861 = vmul.u32.u64.compose %v2860, %v2859
  %v2862 = vextract.low.u32 %v2861
  %v2863 = vextract.high.u32 %v2861
  %v2864 = vmul.u32.u64.compose %v2860, %v2855
  %v2865 = vextract.low.u32 %v2864
  %v2866 = vextract.high.u32 %v2864
  %v2867 = vmul.u32 %v2860, %v2851
  %v2868 = vadd.s32 %v2863, %v2865
  %vm2869 = vc.u32 %v2863, %v2865
  %v2870 = vadd.s32 %v2866, 1
  %v2871 = vsel %vm2869, %v2870, %v2866
  %v2872 = vadd.s32 %v2867, %v2871
  %v2873 = vadd.s32 %v2872, 536870912
  %v2874 = vshrl.u32 %v2873, 30
  %v2875 = vshll.u32 %v2874, 30
  %v2876 = vsub.s32 %v2872, %v2875
  %vm2877 = vcmp.lt.s32.totalorder %v2876, 0
  %v2878 = vsub.s32 0, %v2876
  %v2879 = vsel %vm2877, %v2878, %v2876
  %v2880 = vclz %v2879
  %v2881 = vsub.s32 %v2880, 2
  %vm2882 = vcmp.gt.s32.totalorder 0, %v2881
  %v2883 = vsel %vm2882, 0, %v2881
  %v2884 = vsub.s32 32, %v2883
  %v2885 = vshll.u32 %v2876, %v2883
  %v2886 = vshrl.u32 %v2868, %v2884
  %v2887 = vor.u32 %v2885, %v2886
  %v2888 = vsub.s32 4294967266, %v2883
  %v2889 = vadd.s32 %v2888, 127
  %v2890 = vshll.u32 %v2889, 23
  %v2891 = vor.u32 4788187, %v2890
  %v2892 = vand.u32 2147483647, %v2891
  %v2894 = vcvt.s32.f32 %v2887
  %v2895 = vmul.f32 %v2894, %v2892
  %v2896 = vxor.u32 %v2895, 2147483648
  %v2897 = vsel %vm2814, %v2896, %v2895
  %v2898 = vsub.s32 4, %v2874
  %v2899 = vsel %vm2814, %v2898, %v2874
  %v2900 = vsel %vm2813, %v1878, %v2897
  %v2901 = vsel %vm2813, 0, %v2899
  %v2902 = vcosq.f32.pop %v2900
  %v2903 = vsinq.f32.pop %v2900
  %vm2904 = vweird.f32 %v1878
  %v2905 = vand.u32 %v2901, 3
  %vm2906 = vcmp.lt.s32.totalorder %v2905, 2
  %vm2907 = vcmp.eq.s32.totalorder %v2905, 0
  %v2908 = vxor.u32 %v2903, 2147483648
  %v2909 = vsel %vm2907, %v2902, %v2908
  %vm2910 = vcmp.eq.s32.totalorder %v2905, 2
  %v2911 = vxor.u32 %v2902, 2147483648
  %v2912 = vsel %vm2910, %v2911, %v2903
  %v2913 = vsel %vm2906, %v2909, %v2912
  %v2914 = vsel %vm2904, nan, %v2913
  %v2915 = vand.u32 2147483647, %v1879
  %vm2916 = vcmp.le.f32.partialorder %v2915, 0.7853982
  %vm2917 = vcmp.lt.s32.totalorder %v1879, 0
  %v2918 = vand.u32 %v1879, 2139095040
  %v2919 = vshrl.u32 %v2918, 23
  %v2920 = vsub.s32 %v2919, 127
  %v2921 = vand.u32 2147483647, %v1879
  %v2922 = vand.u32 %v2921, 8388607
  %v2923 = vor.u32 %v2922, 8388608
  %v2924 = vsub.s32 0, %v2923
  %v2925 = vadd.s32 %v2920, 1
  %vm2926 = vcmp.gt.s32.totalorder %v2925, 0
  %v2927 = vsel %vm2926, %v2925, 0
  %v2928 = vshrl.u32 %v2927, 5
  %v2929 = vand.u32 %v2927, 31
  %v2930 = vsub.s32 32, %v2929
  %v2931 = vshrl.u32 683565275, %v2930
  %v2932 = vshll.u32 683565275, %v2929
  %v2933 = vshrl.u32 2475754826, %v2930
  %v2934 = vor.u32 %v2932, %v2933
  %v2935 = vshll.u32 2475754826, %v2929
  %v2936 = vshrl.u32 2131351028, %v2930
  %v2937 = vor.u32 %v2935, %v2936
  %v2938 = vshll.u32 2131351028, %v2929
  %v2939 = vshrl.u32 2102212464, %v2930
  %v2940 = vor.u32 %v2938, %v2939
  %v2941 = vshll.u32 2102212464, %v2929
  %v2942 = vshrl.u32 920167782, %v2930
  %v2943 = vor.u32 %v2941, %v2942
  %v2944 = vshll.u32 920167782, %v2929
  %v2945 = vshrl.u32 1326507024, %v2930
  %v2946 = vor.u32 %v2944, %v2945
  %vm2947 = vcmp.lt.s32.totalorder %v2928, 1
  %vm2948 = vcmp.lt.s32.totalorder %v2928, 2
  %vm2949 = vcmp.lt.s32.totalorder %v2928, 3
  %vm2950 = vcmp.lt.s32.totalorder %v2928, 4
  %v2951 = vsel %vm2947, %v2931, %v2934
  %v2952 = vsel %vm2950, %v2940, 2102212464
  %v2953 = vsel %vm2949, %v2937, %v2952
  %v2954 = vsel %vm2948, %v2951, %v2953
  %v2955 = vsel %vm2947, %v2934, %v2937
  %v2956 = vsel %vm2950, %v2943, 920167782
  %v2957 = vsel %vm2949, %v2940, %v2956
  %v2958 = vsel %vm2948, %v2955, %v2957
  %v2959 = vsel %vm2947, %v2937, %v2940
  %v2960 = vsel %vm2950, %v2946, 1326507024
  %v2961 = vsel %vm2949, %v2943, %v2960
  %v2962 = vsel %vm2948, %v2959, %v2961
  %v2963 = vshll.u32 %v2923, 8
  %v2964 = vmul.u32.u64.compose %v2963, %v2962
  %v2965 = vextract.low.u32 %v2964
  %v2966 = vextract.high.u32 %v2964
  %v2967 = vmul.u32.u64.compose %v2963, %v2958
  %v2968 = vextract.low.u32 %v2967
  %v2969 = vextract.high.u32 %v2967
  %v2970 = vmul.u32 %v2963, %v2954
  %v2971 = vadd.s32 %v2966, %v2968
  %vm2972 = vc.u32 %v2966, %v2968
  %v2973 = vadd.s32 %v2969, 1
  %v2974 = vsel %vm2972, %v2973, %v2969
  %v2975 = vadd.s32 %v2970, %v2974
  %v2976 = vadd.s32 %v2975, 536870912
  %v2977 = vshrl.u32 %v2976, 30
  %v2978 = vshll.u32 %v2977, 30
  %v2979 = vsub.s32 %v2975, %v2978
  %vm2980 = vcmp.lt.s32.totalorder %v2979, 0
  %v2981 = vsub.s32 0, %v2979
  %v2982 = vsel %vm2980, %v2981, %v2979
  %v2983 = vclz %v2982
  %v2984 = vsub.s32 %v2983, 2
  %vm2985 = vcmp.gt.s32.totalorder 0, %v2984
  %v2986 = vsel %vm2985, 0, %v2984
  %v2987 = vsub.s32 32, %v2986
  %v2988 = vshll.u32 %v2979, %v2986
  %v2989 = vshrl.u32 %v2971, %v2987
  %v2990 = vor.u32 %v2988, %v2989
  %v2991 = vsub.s32 4294967266, %v2986
  %v2992 = vadd.s32 %v2991, 127
  %v2993 = vshll.u32 %v2992, 23
  %v2994 = vor.u32 4788187, %v2993
  %v2995 = vand.u32 2147483647, %v2994
  %v2997 = vcvt.s32.f32 %v2990
  %v2998 = vmul.f32 %v2997, %v2995
  %v2999 = vxor.u32 %v2998, 2147483648
  %v3000 = vsel %vm2917, %v2999, %v2998
  %v3001 = vsub.s32 4, %v2977
  %v3002 = vsel %vm2917, %v3001, %v2977
  %v3003 = vsel %vm2916, %v1879, %v3000
  %v3004 = vsel %vm2916, 0, %v3002
  %v3005 = vcosq.f32.pop %v3003
  %v3006 = vsinq.f32.pop %v3003
  %vm3007 = vweird.f32 %v1879
  %v3008 = vand.u32 %v3004, 3
  %vm3009 = vcmp.lt.s32.totalorder %v3008, 2
  %vm3010 = vcmp.eq.s32.totalorder %v3008, 0
  %v3011 = vxor.u32 %v3006, 2147483648
  %v3012 = vsel %vm3010, %v3005, %v3011
  %vm3013 = vcmp.eq.s32.totalorder %v3008, 2
  %v3014 = vxor.u32 %v3005, 2147483648
  %v3015 = vsel %vm3013, %v3014, %v3006
  %v3016 = vsel %vm3009, %v3012, %v3015
  %v3017 = vsel %vm3007, nan, %v3016
  %v3018 = vand.u32 2147483647, %v1880
  %vm3019 = vcmp.le.f32.partialorder %v3018, 0.7853982
  %vm3020 = vcmp.lt.s32.totalorder %v1880, 0
  %v3021 = vand.u32 %v1880, 2139095040
  %v3022 = vshrl.u32 %v3021, 23
  %v3023 = vsub.s32 %v3022, 127
  %v3024 = vand.u32 2147483647, %v1880
  %v3025 = vand.u32 %v3024, 8388607
  %v3026 = vor.u32 %v3025, 8388608
  %v3027 = vsub.s32 0, %v3026
  %v3028 = vadd.s32 %v3023, 1
  %vm3029 = vcmp.gt.s32.totalorder %v3028, 0
  %v3030 = vsel %vm3029, %v3028, 0
  %v3031 = vshrl.u32 %v3030, 5
  %v3032 = vand.u32 %v3030, 31
  %v3033 = vsub.s32 32, %v3032
  %v3034 = vshrl.u32 683565275, %v3033
  %v3035 = vshll.u32 683565275, %v3032
  %v3036 = vshrl.u32 2475754826, %v3033
  %v3037 = vor.u32 %v3035, %v3036
  %v3038 = vshll.u32 2475754826, %v3032
  %v3039 = vshrl.u32 2131351028, %v3033
  %v3040 = vor.u32 %v3038, %v3039
  %v3041 = vshll.u32 2131351028, %v3032
  %v3042 = vshrl.u32 2102212464, %v3033
  %v3043 = vor.u32 %v3041, %v3042
  %v3044 = vshll.u32 2102212464, %v3032
  %v3045 = vshrl.u32 920167782, %v3033
  %v3046 = vor.u32 %v3044, %v3045
  %v3047 = vshll.u32 920167782, %v3032
  %v3048 = vshrl.u32 1326507024, %v3033
  %v3049 = vor.u32 %v3047, %v3048
  %vm3050 = vcmp.lt.s32.totalorder %v3031, 1
  %vm3051 = vcmp.lt.s32.totalorder %v3031, 2
  %vm3052 = vcmp.lt.s32.totalorder %v3031, 3
  %vm3053 = vcmp.lt.s32.totalorder %v3031, 4
  %v3054 = vsel %vm3050, %v3034, %v3037
  %v3055 = vsel %vm3053, %v3043, 2102212464
  %v3056 = vsel %vm3052, %v3040, %v3055
  %v3057 = vsel %vm3051, %v3054, %v3056
  %v3058 = vsel %vm3050, %v3037, %v3040
  %v3059 = vsel %vm3053, %v3046, 920167782
  %v3060 = vsel %vm3052, %v3043, %v3059
  %v3061 = vsel %vm3051, %v3058, %v3060
  %v3062 = vsel %vm3050, %v3040, %v3043
  %v3063 = vsel %vm3053, %v3049, 1326507024
  %v3064 = vsel %vm3052, %v3046, %v3063
  %v3065 = vsel %vm3051, %v3062, %v3064
  %v3066 = vshll.u32 %v3026, 8
  %v3067 = vmul.u32.u64.compose %v3066, %v3065
  %v3068 = vextract.low.u32 %v3067
  %v3069 = vextract.high.u32 %v3067
  %v3070 = vmul.u32.u64.compose %v3066, %v3061
  %v3071 = vextract.low.u32 %v3070
  %v3072 = vextract.high.u32 %v3070
  %v3073 = vmul.u32 %v3066, %v3057
  %v3074 = vadd.s32 %v3069, %v3071
  %vm3075 = vc.u32 %v3069, %v3071
  %v3076 = vadd.s32 %v3072, 1
  %v3077 = vsel %vm3075, %v3076, %v3072
  %v3078 = vadd.s32 %v3073, %v3077
  %v3079 = vadd.s32 %v3078, 536870912
  %v3080 = vshrl.u32 %v3079, 30
  %v3081 = vshll.u32 %v3080, 30
  %v3082 = vsub.s32 %v3078, %v3081
  %vm3083 = vcmp.lt.s32.totalorder %v3082, 0
  %v3084 = vsub.s32 0, %v3082
  %v3085 = vsel %vm3083, %v3084, %v3082
  %v3086 = vclz %v3085
  %v3087 = vsub.s32 %v3086, 2
  %vm3088 = vcmp.gt.s32.totalorder 0, %v3087
  %v3089 = vsel %vm3088, 0, %v3087
  %v3090 = vsub.s32 32, %v3089
  %v3091 = vshll.u32 %v3082, %v3089
  %v3092 = vshrl.u32 %v3074, %v3090
  %v3093 = vor.u32 %v3091, %v3092
  %v3094 = vsub.s32 4294967266, %v3089
  %v3095 = vadd.s32 %v3094, 127
  %v3096 = vshll.u32 %v3095, 23
  %v3097 = vor.u32 4788187, %v3096
  %v3098 = vand.u32 2147483647, %v3097
  %v3100 = vcvt.s32.f32 %v3093
  %v3101 = vmul.f32 %v3100, %v3098
  %v3102 = vxor.u32 %v3101, 2147483648
  %v3103 = vsel %vm3020, %v3102, %v3101
  %v3104 = vsub.s32 4, %v3080
  %v3105 = vsel %vm3020, %v3104, %v3080
  %v3106 = vsel %vm3019, %v1880, %v3103
  %v3107 = vsel %vm3019, 0, %v3105
  %v3108 = vcosq.f32.pop %v3106
  %v3109 = vsinq.f32.pop %v3106
  %vm3110 = vweird.f32 %v1880
  %v3111 = vand.u32 %v3107, 3
  %vm3112 = vcmp.lt.s32.totalorder %v3111, 2
  %vm3113 = vcmp.eq.s32.totalorder %v3111, 0
  %v3114 = vxor.u32 %v3109, 2147483648
  %v3115 = vsel %vm3113, %v3108, %v3114
  %vm3116 = vcmp.eq.s32.totalorder %v3111, 2
  %v3117 = vxor.u32 %v3108, 2147483648
  %v3118 = vsel %vm3116, %v3117, %v3109
  %v3119 = vsel %vm3112, %v3115, %v3118
  %v3120 = vsel %vm3110, nan, %v3119
  %v3121 = vand.u32 2147483647, %v1881
  %vm3122 = vcmp.le.f32.partialorder %v3121, 0.7853982
  %vm3123 = vcmp.lt.s32.totalorder %v1881, 0
  %v3124 = vand.u32 %v1881, 2139095040
  %v3125 = vshrl.u32 %v3124, 23
  %v3126 = vsub.s32 %v3125, 127
  %v3127 = vand.u32 2147483647, %v1881
  %v3128 = vand.u32 %v3127, 8388607
  %v3129 = vor.u32 %v3128, 8388608
  %v3130 = vsub.s32 0, %v3129
  %v3131 = vadd.s32 %v3126, 1
  %vm3132 = vcmp.gt.s32.totalorder %v3131, 0
  %v3133 = vsel %vm3132, %v3131, 0
  %v3134 = vshrl.u32 %v3133, 5
  %v3135 = vand.u32 %v3133, 31
  %v3136 = vsub.s32 32, %v3135
  %v3137 = vshrl.u32 683565275, %v3136
  %v3138 = vshll.u32 683565275, %v3135
  %v3139 = vshrl.u32 2475754826, %v3136
  %v3140 = vor.u32 %v3138, %v3139
  %v3141 = vshll.u32 2475754826, %v3135
  %v3142 = vshrl.u32 2131351028, %v3136
  %v3143 = vor.u32 %v3141, %v3142
  %v3144 = vshll.u32 2131351028, %v3135
  %v3145 = vshrl.u32 2102212464, %v3136
  %v3146 = vor.u32 %v3144, %v3145
  %v3147 = vshll.u32 2102212464, %v3135
  %v3148 = vshrl.u32 920167782, %v3136
  %v3149 = vor.u32 %v3147, %v3148
  %v3150 = vshll.u32 920167782, %v3135
  %v3151 = vshrl.u32 1326507024, %v3136
  %v3152 = vor.u32 %v3150, %v3151
  %vm3153 = vcmp.lt.s32.totalorder %v3134, 1
  %vm3154 = vcmp.lt.s32.totalorder %v3134, 2
  %vm3155 = vcmp.lt.s32.totalorder %v3134, 3
  %vm3156 = vcmp.lt.s32.totalorder %v3134, 4
  %v3157 = vsel %vm3153, %v3137, %v3140
  %v3158 = vsel %vm3156, %v3146, 2102212464
  %v3159 = vsel %vm3155, %v3143, %v3158
  %v3160 = vsel %vm3154, %v3157, %v3159
  %v3161 = vsel %vm3153, %v3140, %v3143
  %v3162 = vsel %vm3156, %v3149, 920167782
  %v3163 = vsel %vm3155, %v3146, %v3162
  %v3164 = vsel %vm3154, %v3161, %v3163
  %v3165 = vsel %vm3153, %v3143, %v3146
  %v3166 = vsel %vm3156, %v3152, 1326507024
  %v3167 = vsel %vm3155, %v3149, %v3166
  %v3168 = vsel %vm3154, %v3165, %v3167
  %v3169 = vshll.u32 %v3129, 8
  %v3170 = vmul.u32.u64.compose %v3169, %v3168
  %v3171 = vextract.low.u32 %v3170
  %v3172 = vextract.high.u32 %v3170
  %v3173 = vmul.u32.u64.compose %v3169, %v3164
  %v3174 = vextract.low.u32 %v3173
  %v3175 = vextract.high.u32 %v3173
  %v3176 = vmul.u32 %v3169, %v3160
  %v3177 = vadd.s32 %v3172, %v3174
  %vm3178 = vc.u32 %v3172, %v3174
  %v3179 = vadd.s32 %v3175, 1
  %v3180 = vsel %vm3178, %v3179, %v3175
  %v3181 = vadd.s32 %v3176, %v3180
  %v3182 = vadd.s32 %v3181, 536870912
  %v3183 = vshrl.u32 %v3182, 30
  %v3184 = vshll.u32 %v3183, 30
  %v3185 = vsub.s32 %v3181, %v3184
  %vm3186 = vcmp.lt.s32.totalorder %v3185, 0
  %v3187 = vsub.s32 0, %v3185
  %v3188 = vsel %vm3186, %v3187, %v3185
  %v3189 = vclz %v3188
  %v3190 = vsub.s32 %v3189, 2
  %vm3191 = vcmp.gt.s32.totalorder 0, %v3190
  %v3192 = vsel %vm3191, 0, %v3190
  %v3193 = vsub.s32 32, %v3192
  %v3194 = vshll.u32 %v3185, %v3192
  %v3195 = vshrl.u32 %v3177, %v3193
  %v3196 = vor.u32 %v3194, %v3195
  %v3197 = vsub.s32 4294967266, %v3192
  %v3198 = vadd.s32 %v3197, 127
  %v3199 = vshll.u32 %v3198, 23
  %v3200 = vor.u32 4788187, %v3199
  %v3201 = vand.u32 2147483647, %v3200
  %v3203 = vcvt.s32.f32 %v3196
  %v3204 = vmul.f32 %v3203, %v3201
  %v3205 = vxor.u32 %v3204, 2147483648
  %v3206 = vsel %vm3123, %v3205, %v3204
  %v3207 = vsub.s32 4, %v3183
  %v3208 = vsel %vm3123, %v3207, %v3183
  %v3209 = vsel %vm3122, %v1881, %v3206
  %v3210 = vsel %vm3122, 0, %v3208
  %v3211 = vcosq.f32.pop %v3209
  %v3212 = vsinq.f32.pop %v3209
  %vm3213 = vweird.f32 %v1881
  %v3214 = vand.u32 %v3210, 3
  %vm3215 = vcmp.lt.s32.totalorder %v3214, 2
  %vm3216 = vcmp.eq.s32.totalorder %v3214, 0
  %v3217 = vxor.u32 %v3212, 2147483648
  %v3218 = vsel %vm3216, %v3211, %v3217
  %vm3219 = vcmp.eq.s32.totalorder %v3214, 2
  %v3220 = vxor.u32 %v3211, 2147483648
  %v3221 = vsel %vm3219, %v3220, %v3212
  %v3222 = vsel %vm3215, %v3218, %v3221
  %v3223 = vsel %vm3213, nan, %v3222
  %v3224 = vand.u32 2147483647, %v1882
  %vm3225 = vcmp.le.f32.partialorder %v3224, 0.7853982
  %vm3226 = vcmp.lt.s32.totalorder %v1882, 0
  %v3227 = vand.u32 %v1882, 2139095040
  %v3228 = vshrl.u32 %v3227, 23
  %v3229 = vsub.s32 %v3228, 127
  %v3230 = vand.u32 2147483647, %v1882
  %v3231 = vand.u32 %v3230, 8388607
  %v3232 = vor.u32 %v3231, 8388608
  %v3233 = vsub.s32 0, %v3232
  %v3234 = vadd.s32 %v3229, 1
  %vm3235 = vcmp.gt.s32.totalorder %v3234, 0
  %v3236 = vsel %vm3235, %v3234, 0
  %v3237 = vshrl.u32 %v3236, 5
  %v3238 = vand.u32 %v3236, 31
  %v3239 = vsub.s32 32, %v3238
  %v3240 = vshrl.u32 683565275, %v3239
  %v3241 = vshll.u32 683565275, %v3238
  %v3242 = vshrl.u32 2475754826, %v3239
  %v3243 = vor.u32 %v3241, %v3242
  %v3244 = vshll.u32 2475754826, %v3238
  %v3245 = vshrl.u32 2131351028, %v3239
  %v3246 = vor.u32 %v3244, %v3245
  %v3247 = vshll.u32 2131351028, %v3238
  %v3248 = vshrl.u32 2102212464, %v3239
  %v3249 = vor.u32 %v3247, %v3248
  %v3250 = vshll.u32 2102212464, %v3238
  %v3251 = vshrl.u32 920167782, %v3239
  %v3252 = vor.u32 %v3250, %v3251
  %v3253 = vshll.u32 920167782, %v3238
  %v3254 = vshrl.u32 1326507024, %v3239
  %v3255 = vor.u32 %v3253, %v3254
  %vm3256 = vcmp.lt.s32.totalorder %v3237, 1
  %vm3257 = vcmp.lt.s32.totalorder %v3237, 2
  %vm3258 = vcmp.lt.s32.totalorder %v3237, 3
  %vm3259 = vcmp.lt.s32.totalorder %v3237, 4
  %v3260 = vsel %vm3256, %v3240, %v3243
  %v3261 = vsel %vm3259, %v3249, 2102212464
  %v3262 = vsel %vm3258, %v3246, %v3261
  %v3263 = vsel %vm3257, %v3260, %v3262
  %v3264 = vsel %vm3256, %v3243, %v3246
  %v3265 = vsel %vm3259, %v3252, 920167782
  %v3266 = vsel %vm3258, %v3249, %v3265
  %v3267 = vsel %vm3257, %v3264, %v3266
  %v3268 = vsel %vm3256, %v3246, %v3249
  %v3269 = vsel %vm3259, %v3255, 1326507024
  %v3270 = vsel %vm3258, %v3252, %v3269
  %v3271 = vsel %vm3257, %v3268, %v3270
  %v3272 = vshll.u32 %v3232, 8
  %v3273 = vmul.u32.u64.compose %v3272, %v3271
  %v3274 = vextract.low.u32 %v3273
  %v3275 = vextract.high.u32 %v3273
  %v3276 = vmul.u32.u64.compose %v3272, %v3267
  %v3277 = vextract.low.u32 %v3276
  %v3278 = vextract.high.u32 %v3276
  %v3279 = vmul.u32 %v3272, %v3263
  %v3280 = vadd.s32 %v3275, %v3277
  %vm3281 = vc.u32 %v3275, %v3277
  %v3282 = vadd.s32 %v3278, 1
  %v3283 = vsel %vm3281, %v3282, %v3278
  %v3284 = vadd.s32 %v3279, %v3283
  %v3285 = vadd.s32 %v3284, 536870912
  %v3286 = vshrl.u32 %v3285, 30
  %v3287 = vshll.u32 %v3286, 30
  %v3288 = vsub.s32 %v3284, %v3287
  %vm3289 = vcmp.lt.s32.totalorder %v3288, 0
  %v3290 = vsub.s32 0, %v3288
  %v3291 = vsel %vm3289, %v3290, %v3288
  %v3292 = vclz %v3291
  %v3293 = vsub.s32 %v3292, 2
  %vm3294 = vcmp.gt.s32.totalorder 0, %v3293
  %v3295 = vsel %vm3294, 0, %v3293
  %v3296 = vsub.s32 32, %v3295
  %v3297 = vshll.u32 %v3288, %v3295
  %v3298 = vshrl.u32 %v3280, %v3296
  %v3299 = vor.u32 %v3297, %v3298
  %v3300 = vsub.s32 4294967266, %v3295
  %v3301 = vadd.s32 %v3300, 127
  %v3302 = vshll.u32 %v3301, 23
  %v3303 = vor.u32 4788187, %v3302
  %v3304 = vand.u32 2147483647, %v3303
  %v3306 = vcvt.s32.f32 %v3299
  %v3307 = vmul.f32 %v3306, %v3304
  %v3308 = vxor.u32 %v3307, 2147483648
  %v3309 = vsel %vm3226, %v3308, %v3307
  %v3310 = vsub.s32 4, %v3286
  %v3311 = vsel %vm3226, %v3310, %v3286
  %v3312 = vsel %vm3225, %v1882, %v3309
  %v3313 = vsel %vm3225, 0, %v3311
  %v3314 = vcosq.f32.pop %v3312
  %v3315 = vsinq.f32.pop %v3312
  %vm3316 = vweird.f32 %v1882
  %v3317 = vand.u32 %v3313, 3
  %vm3318 = vcmp.lt.s32.totalorder %v3317, 2
  %vm3319 = vcmp.eq.s32.totalorder %v3317, 0
  %v3320 = vxor.u32 %v3315, 2147483648
  %v3321 = vsel %vm3319, %v3314, %v3320
  %vm3322 = vcmp.eq.s32.totalorder %v3317, 2
  %v3323 = vxor.u32 %v3314, 2147483648
  %v3324 = vsel %vm3322, %v3323, %v3315
  %v3325 = vsel %vm3318, %v3321, %v3324
  %v3326 = vsel %vm3316, nan, %v3325
  %v3327 = vand.u32 2147483647, %v1883
  %vm3328 = vcmp.le.f32.partialorder %v3327, 0.7853982
  %vm3329 = vcmp.lt.s32.totalorder %v1883, 0
  %v3330 = vand.u32 %v1883, 2139095040
  %v3331 = vshrl.u32 %v3330, 23
  %v3332 = vsub.s32 %v3331, 127
  %v3333 = vand.u32 2147483647, %v1883
  %v3334 = vand.u32 %v3333, 8388607
  %v3335 = vor.u32 %v3334, 8388608
  %v3336 = vsub.s32 0, %v3335
  %v3337 = vadd.s32 %v3332, 1
  %vm3338 = vcmp.gt.s32.totalorder %v3337, 0
  %v3339 = vsel %vm3338, %v3337, 0
  %v3340 = vshrl.u32 %v3339, 5
  %v3341 = vand.u32 %v3339, 31
  %v3342 = vsub.s32 32, %v3341
  %v3343 = vshrl.u32 683565275, %v3342
  %v3344 = vshll.u32 683565275, %v3341
  %v3345 = vshrl.u32 2475754826, %v3342
  %v3346 = vor.u32 %v3344, %v3345
  %v3347 = vshll.u32 2475754826, %v3341
  %v3348 = vshrl.u32 2131351028, %v3342
  %v3349 = vor.u32 %v3347, %v3348
  %v3350 = vshll.u32 2131351028, %v3341
  %v3351 = vshrl.u32 2102212464, %v3342
  %v3352 = vor.u32 %v3350, %v3351
  %v3353 = vshll.u32 2102212464, %v3341
  %v3354 = vshrl.u32 920167782, %v3342
  %v3355 = vor.u32 %v3353, %v3354
  %v3356 = vshll.u32 920167782, %v3341
  %v3357 = vshrl.u32 1326507024, %v3342
  %v3358 = vor.u32 %v3356, %v3357
  %vm3359 = vcmp.lt.s32.totalorder %v3340, 1
  %vm3360 = vcmp.lt.s32.totalorder %v3340, 2
  %vm3361 = vcmp.lt.s32.totalorder %v3340, 3
  %vm3362 = vcmp.lt.s32.totalorder %v3340, 4
  %v3363 = vsel %vm3359, %v3343, %v3346
  %v3364 = vsel %vm3362, %v3352, 2102212464
  %v3365 = vsel %vm3361, %v3349, %v3364
  %v3366 = vsel %vm3360, %v3363, %v3365
  %v3367 = vsel %vm3359, %v3346, %v3349
  %v3368 = vsel %vm3362, %v3355, 920167782
  %v3369 = vsel %vm3361, %v3352, %v3368
  %v3370 = vsel %vm3360, %v3367, %v3369
  %v3371 = vsel %vm3359, %v3349, %v3352
  %v3372 = vsel %vm3362, %v3358, 1326507024
  %v3373 = vsel %vm3361, %v3355, %v3372
  %v3374 = vsel %vm3360, %v3371, %v3373
  %v3375 = vshll.u32 %v3335, 8
  %v3376 = vmul.u32.u64.compose %v3375, %v3374
  %v3377 = vextract.low.u32 %v3376
  %v3378 = vextract.high.u32 %v3376
  %v3379 = vmul.u32.u64.compose %v3375, %v3370
  %v3380 = vextract.low.u32 %v3379
  %v3381 = vextract.high.u32 %v3379
  %v3382 = vmul.u32 %v3375, %v3366
  %v3383 = vadd.s32 %v3378, %v3380
  %vm3384 = vc.u32 %v3378, %v3380
  %v3385 = vadd.s32 %v3381, 1
  %v3386 = vsel %vm3384, %v3385, %v3381
  %v3387 = vadd.s32 %v3382, %v3386
  %v3388 = vadd.s32 %v3387, 536870912
  %v3389 = vshrl.u32 %v3388, 30
  %v3390 = vshll.u32 %v3389, 30
  %v3391 = vsub.s32 %v3387, %v3390
  %vm3392 = vcmp.lt.s32.totalorder %v3391, 0
  %v3393 = vsub.s32 0, %v3391
  %v3394 = vsel %vm3392, %v3393, %v3391
  %v3395 = vclz %v3394
  %v3396 = vsub.s32 %v3395, 2
  %vm3397 = vcmp.gt.s32.totalorder 0, %v3396
  %v3398 = vsel %vm3397, 0, %v3396
  %v3399 = vsub.s32 32, %v3398
  %v3400 = vshll.u32 %v3391, %v3398
  %v3401 = vshrl.u32 %v3383, %v3399
  %v3402 = vor.u32 %v3400, %v3401
  %v3403 = vsub.s32 4294967266, %v3398
  %v3404 = vadd.s32 %v3403, 127
  %v3405 = vshll.u32 %v3404, 23
  %v3406 = vor.u32 4788187, %v3405
  %v3407 = vand.u32 2147483647, %v3406
  %v3409 = vcvt.s32.f32 %v3402
  %v3410 = vmul.f32 %v3409, %v3407
  %v3411 = vxor.u32 %v3410, 2147483648
  %v3412 = vsel %vm3329, %v3411, %v3410
  %v3413 = vsub.s32 4, %v3389
  %v3414 = vsel %vm3329, %v3413, %v3389
  %v3415 = vsel %vm3328, %v1883, %v3412
  %v3416 = vsel %vm3328, 0, %v3414
  %v3417 = vcosq.f32.pop %v3415
  %v3418 = vsinq.f32.pop %v3415
  %vm3419 = vweird.f32 %v1883
  %v3420 = vand.u32 %v3416, 3
  %vm3421 = vcmp.lt.s32.totalorder %v3420, 2
  %vm3422 = vcmp.eq.s32.totalorder %v3420, 0
  %v3423 = vxor.u32 %v3418, 2147483648
  %v3424 = vsel %vm3422, %v3417, %v3423
  %vm3425 = vcmp.eq.s32.totalorder %v3420, 2
  %v3426 = vxor.u32 %v3417, 2147483648
  %v3427 = vsel %vm3425, %v3426, %v3418
  %v3428 = vsel %vm3421, %v3424, %v3427
  %v3429 = vsel %vm3419, nan, %v3428
  %v3430 = vand.u32 2147483647, %v1884
  %vm3431 = vcmp.le.f32.partialorder %v3430, 0.7853982
  %vm3432 = vcmp.lt.s32.totalorder %v1884, 0
  %v3433 = vand.u32 %v1884, 2139095040
  %v3434 = vshrl.u32 %v3433, 23
  %v3435 = vsub.s32 %v3434, 127
  %v3436 = vand.u32 2147483647, %v1884
  %v3437 = vand.u32 %v3436, 8388607
  %v3438 = vor.u32 %v3437, 8388608
  %v3439 = vsub.s32 0, %v3438
  %v3440 = vadd.s32 %v3435, 1
  %vm3441 = vcmp.gt.s32.totalorder %v3440, 0
  %v3442 = vsel %vm3441, %v3440, 0
  %v3443 = vshrl.u32 %v3442, 5
  %v3444 = vand.u32 %v3442, 31
  %v3445 = vsub.s32 32, %v3444
  %v3446 = vshrl.u32 683565275, %v3445
  %v3447 = vshll.u32 683565275, %v3444
  %v3448 = vshrl.u32 2475754826, %v3445
  %v3449 = vor.u32 %v3447, %v3448
  %v3450 = vshll.u32 2475754826, %v3444
  %v3451 = vshrl.u32 2131351028, %v3445
  %v3452 = vor.u32 %v3450, %v3451
  %v3453 = vshll.u32 2131351028, %v3444
  %v3454 = vshrl.u32 2102212464, %v3445
  %v3455 = vor.u32 %v3453, %v3454
  %v3456 = vshll.u32 2102212464, %v3444
  %v3457 = vshrl.u32 920167782, %v3445
  %v3458 = vor.u32 %v3456, %v3457
  %v3459 = vshll.u32 920167782, %v3444
  %v3460 = vshrl.u32 1326507024, %v3445
  %v3461 = vor.u32 %v3459, %v3460
  %vm3462 = vcmp.lt.s32.totalorder %v3443, 1
  %vm3463 = vcmp.lt.s32.totalorder %v3443, 2
  %vm3464 = vcmp.lt.s32.totalorder %v3443, 3
  %vm3465 = vcmp.lt.s32.totalorder %v3443, 4
  %v3466 = vsel %vm3462, %v3446, %v3449
  %v3467 = vsel %vm3465, %v3455, 2102212464
  %v3468 = vsel %vm3464, %v3452, %v3467
  %v3469 = vsel %vm3463, %v3466, %v3468
  %v3470 = vsel %vm3462, %v3449, %v3452
  %v3471 = vsel %vm3465, %v3458, 920167782
  %v3472 = vsel %vm3464, %v3455, %v3471
  %v3473 = vsel %vm3463, %v3470, %v3472
  %v3474 = vsel %vm3462, %v3452, %v3455
  %v3475 = vsel %vm3465, %v3461, 1326507024
  %v3476 = vsel %vm3464, %v3458, %v3475
  %v3477 = vsel %vm3463, %v3474, %v3476
  %v3478 = vshll.u32 %v3438, 8
  %v3479 = vmul.u32.u64.compose %v3478, %v3477
  %v3480 = vextract.low.u32 %v3479
  %v3481 = vextract.high.u32 %v3479
  %v3482 = vmul.u32.u64.compose %v3478, %v3473
  %v3483 = vextract.low.u32 %v3482
  %v3484 = vextract.high.u32 %v3482
  %v3485 = vmul.u32 %v3478, %v3469
  %v3486 = vadd.s32 %v3481, %v3483
  %vm3487 = vc.u32 %v3481, %v3483
  %v3488 = vadd.s32 %v3484, 1
  %v3489 = vsel %vm3487, %v3488, %v3484
  %v3490 = vadd.s32 %v3485, %v3489
  %v3491 = vadd.s32 %v3490, 536870912
  %v3492 = vshrl.u32 %v3491, 30
  %v3493 = vshll.u32 %v3492, 30
  %v3494 = vsub.s32 %v3490, %v3493
  %vm3495 = vcmp.lt.s32.totalorder %v3494, 0
  %v3496 = vsub.s32 0, %v3494
  %v3497 = vsel %vm3495, %v3496, %v3494
  %v3498 = vclz %v3497
  %v3499 = vsub.s32 %v3498, 2
  %vm3500 = vcmp.gt.s32.totalorder 0, %v3499
  %v3501 = vsel %vm3500, 0, %v3499
  %v3502 = vsub.s32 32, %v3501
  %v3503 = vshll.u32 %v3494, %v3501
  %v3504 = vshrl.u32 %v3486, %v3502
  %v3505 = vor.u32 %v3503, %v3504
  %v3506 = vsub.s32 4294967266, %v3501
  %v3507 = vadd.s32 %v3506, 127
  %v3508 = vshll.u32 %v3507, 23
  %v3509 = vor.u32 4788187, %v3508
  %v3510 = vand.u32 2147483647, %v3509
  %v3512 = vcvt.s32.f32 %v3505
  %v3513 = vmul.f32 %v3512, %v3510
  %v3514 = vxor.u32 %v3513, 2147483648
  %v3515 = vsel %vm3432, %v3514, %v3513
  %v3516 = vsub.s32 4, %v3492
  %v3517 = vsel %vm3432, %v3516, %v3492
  %v3518 = vsel %vm3431, %v1884, %v3515
  %v3519 = vsel %vm3431, 0, %v3517
  %v3520 = vcosq.f32.pop %v3518
  %v3521 = vsinq.f32.pop %v3518
  %vm3522 = vweird.f32 %v1884
  %v3523 = vand.u32 %v3519, 3
  %vm3524 = vcmp.lt.s32.totalorder %v3523, 2
  %vm3525 = vcmp.eq.s32.totalorder %v3523, 0
  %v3526 = vxor.u32 %v3521, 2147483648
  %v3527 = vsel %vm3525, %v3520, %v3526
  %vm3528 = vcmp.eq.s32.totalorder %v3523, 2
  %v3529 = vxor.u32 %v3520, 2147483648
  %v3530 = vsel %vm3528, %v3529, %v3521
  %v3531 = vsel %vm3524, %v3527, %v3530
  %v3532 = vsel %vm3522, nan, %v3531
  %v3533 = vpack.c.bf16 %v2090, %v1987
  %v3534 = vpack.c.bf16 %v2296, %v2193
  %v3535 = vpack.c.bf16 %v2502, %v2399
  %v3536 = vpack.c.bf16 %v2708, %v2605
  %v3537 = vpack.c.bf16 %v2914, %v2811
  %v3538 = vpack.c.bf16 %v3120, %v3017
  %v3539 = vpack.c.bf16 %v3326, %v3223
  %v3540 = vpack.c.bf16 %v3532, %v3429
  %v3542 = vsel %vm1711, %v3533, 0
  %v3545 = vsel %vm1711, %v3534, 0
  %v3548 = vsel %vm1711, %v3535, 0
  %v3551 = vsel %vm1711, %v3536, 0
  %v3554 = vsel %vm1711, %v3537, 0
  %v3557 = vsel %vm1711, %v3538, 0
  %v3560 = vsel %vm1711, %v3539, 0
  %v3563 = vsel %vm1711, %v3540, 0
  %3565 = vmatprep.subr.bf16.mxu0 0
  %3566 = vmatpush1.bf16.msra.mxu0 %v1738
  %3567 = vmatprep.subr.bf16.mxu0 0
  %3568 = vmatpush1.bf16.msra.mxu0 0
  %3569 = vmatprep.subr.bf16.mxu0 0
  %3570 = vmatpush1.bf16.msra.mxu0 0
  %3571 = vmatprep.subr.bf16.mxu0 0
  %3572 = vmatpush1.bf16.msra.mxu0 0
  %3573 = vmatprep.subr.bf16.mxu0 0
  %3574 = vmatpush1.bf16.msra.mxu0 0
  %3575 = vmatprep.subr.bf16.mxu0 0
  %3576 = vmatpush1.bf16.msra.mxu0 0
  %3577 = vmatprep.subr.bf16.mxu0 0
  %3578 = vmatpush1.bf16.msra.mxu0 0
  %3579 = vmatprep.subr.bf16.mxu0 0
  %3580 = vmatpush1.bf16.msra.mxu0 0
  %3581 = vmatprep.subr.bf16.mxu0 0
  %3582 = vmatpush1.bf16.msra.mxu0 0
  %3583 = vmatprep.subr.bf16.mxu0 0
  %3584 = vmatpush1.bf16.msra.mxu0 0
  %3585 = vmatprep.subr.bf16.mxu0 0
  %3586 = vmatpush1.bf16.msra.mxu0 0
  %3587 = vmatprep.subr.bf16.mxu0 0
  %3588 = vmatpush1.bf16.msra.mxu0 0
  %3589 = vmatprep.subr.bf16.mxu0 0
  %3590 = vmatpush1.bf16.msra.mxu0 0
  %3591 = vmatprep.subr.bf16.mxu0 0
  %3592 = vmatpush1.bf16.msra.mxu0 0
  %3593 = vmatprep.subr.bf16.mxu0 0
  %3594 = vmatpush1.bf16.msra.mxu0 0
  %3595 = vmatprep.subr.bf16.mxu0 0
  %3596 = vmatpush1.bf16.msra.mxu0 0
  %3597 = vmatprep.mubr.bf16.mxu0 0
  %3598 = vmatmul.mubr.bf16.gmra.mrb[0].mxu0 %v3542
  %v3599 = vpop.f32.mrb[0].mxu0
  %v3600 = vadd.f32 %v21, %v3599
  %v3601 = vpop.f32.mrb[0].mxu0
  %v3602 = vpop.f32.mrb[0].mxu0
  %v3603 = vadd.f32 %v21, %v3602
  %v3604 = vpop.f32.mrb[0].mxu0
  %3605 = vmatprep.mubr.bf16.mxu0 0
  %3606 = vmatmul.mubr.bf16.gmra.mrb[0].mxu0 %v3545
  %v3607 = vpop.f32.mrb[0].mxu0
  %v3608 = vadd.f32 %v21, %v3607
  %v3609 = vpop.f32.mrb[0].mxu0
  %v3610 = vpop.f32.mrb[0].mxu0
  %v3611 = vadd.f32 %v21, %v3610
  %v3612 = vpop.f32.mrb[0].mxu0
  %3613 = vmatprep.mubr.bf16.mxu0 0
  %3614 = vmatmul.mubr.bf16.gmra.mrb[0].mxu0 %v3548
  %v3615 = vpop.f32.mrb[0].mxu0
  %v3616 = vadd.f32 %v21, %v3615
  %v3617 = vpop.f32.mrb[0].mxu0
  %v3618 = vpop.f32.mrb[0].mxu0
  %v3619 = vadd.f32 %v21, %v3618
  %v3620 = vpop.f32.mrb[0].mxu0
  %3621 = vmatprep.mubr.bf16.mxu0 0
  %3622 = vmatmul.mubr.bf16.gmra.mrb[0].mxu0 %v3551
  %v3623 = vpop.f32.mrb[0].mxu0
  %v3624 = vadd.f32 %v21, %v3623
  %v3625 = vpop.f32.mrb[0].mxu0
  %v3626 = vpop.f32.mrb[0].mxu0
  %v3627 = vadd.f32 %v21, %v3626
  %v3628 = vpop.f32.mrb[0].mxu0
  %3629 = vmatprep.mubr.bf16.mxu0 0
  %3630 = vmatmul.mubr.bf16.gmra.mrb[0].mxu0 %v3554
  %v3631 = vpop.f32.mrb[0].mxu0
  %v3632 = vadd.f32 %v21, %v3631
  %v3633 = vpop.f32.mrb[0].mxu0
  %v3634 = vpop.f32.mrb[0].mxu0
  %v3635 = vadd.f32 %v21, %v3634
  %v3636 = vpop.f32.mrb[0].mxu0
  %3637 = vmatprep.mubr.bf16.mxu0 0
  %3638 = vmatmul.mubr.bf16.gmra.mrb[0].mxu0 %v3557
  %v3639 = vpop.f32.mrb[0].mxu0
  %v3640 = vadd.f32 %v21, %v3639
  %v3641 = vpop.f32.mrb[0].mxu0
  %v3642 = vpop.f32.mrb[0].mxu0
  %v3643 = vadd.f32 %v21, %v3642
  %v3644 = vpop.f32.mrb[0].mxu0
  %3645 = vmatprep.mubr.bf16.mxu0 0
  %3646 = vmatmul.mubr.bf16.gmra.mrb[0].mxu0 %v3560
  %v3647 = vpop.f32.mrb[0].mxu0
  %v3648 = vadd.f32 %v21, %v3647
  %v3649 = vpop.f32.mrb[0].mxu0
  %v3650 = vpop.f32.mrb[0].mxu0
  %v3651 = vadd.f32 %v21, %v3650
  %v3652 = vpop.f32.mrb[0].mxu0
  %3653 = vmatprep.mubr.bf16.mxu0 0
  %3654 = vmatmul.mubr.bf16.gmra.mrb[0].mxu0 %v3563
  %v3655 = vpop.f32.mrb[0].mxu0
  %v3656 = vadd.f32 %v21, %v3655
  %v3657 = vpop.f32.mrb[0].mxu0
  %v3658 = vpop.f32.mrb[0].mxu0
  %v3659 = vadd.f32 %v21, %v3658
  %v3660 = vpop.f32.mrb[0].mxu0
  %3661 = vdwg.mxu0
  %3662 = vst [vmem:[%s3 + $0x80] sm:$0xff] %v3600
  %3663 = vst [vmem:[%s3 + $0x88] sm:$0xff] %v3603
  %3664 = vst [vmem:[%s3 + $0x90] sm:$0xff] %v3608
  %3665 = vst [vmem:[%s3 + $0x98] sm:$0xff] %v3611
  %3666 = vst [vmem:[%s3 + $0xa0] sm:$0xff] %v3616
  %3667 = vst [vmem:[%s3 + $0xa8] sm:$0xff] %v3619
  %3668 = vst [vmem:[%s3 + $0xb0] sm:$0xff] %v3624
  %3669 = vst [vmem:[%s3 + $0xb8] sm:$0xff] %v3627
  %3670 = vst [vmem:[%s3 + $0xc0] sm:$0xff] %v3632
  %3671 = vst [vmem:[%s3 + $0xc8] sm:$0xff] %v3635
  %3672 = vst [vmem:[%s3 + $0xd0] sm:$0xff] %v3640
  %3673 = vst [vmem:[%s3 + $0xd8] sm:$0xff] %v3643
  %3674 = vst [vmem:[%s3 + $0xe0] sm:$0xff] %v3648
  %3675 = vst [vmem:[%s3 + $0xe8] sm:$0xff] %v3651
  %3676 = vst [vmem:[%s3 + $0xf0] sm:$0xff] %v3656
  %3677 = vst [vmem:[%s3 + $0xf8] sm:$0xff] %v3659
  %v3678 = vld [vmem:[%s0 + $0x80] sm:$0xf]
  %v3679 = vld [vmem:[%s0 + $0x84] sm:$0xf]
  %v3680 = vld [vmem:[%s0 + $0x88] sm:$0xf]
  %v3681 = vld [vmem:[%s0 + $0x8c] sm:$0xf]
  %v3682 = vld [vmem:[%s0 + $0x90] sm:$0xf]
  %v3683 = vld [vmem:[%s0 + $0x94] sm:$0xf]
  %v3684 = vld [vmem:[%s0 + $0x98] sm:$0xf]
  %v3685 = vld [vmem:[%s0 + $0x9c] sm:$0xf]
  %v3686 = vld [vmem:[%s0 + $0xa0] sm:$0xf]
  %v3687 = vld [vmem:[%s0 + $0xa4] sm:$0xf]
  %v3688 = vld [vmem:[%s0 + $0xa8] sm:$0xf]
  %v3689 = vld [vmem:[%s0 + $0xac] sm:$0xf]
  %v3690 = vld [vmem:[%s0 + $0xb0] sm:$0xf]
  %v3691 = vld [vmem:[%s0 + $0xb4] sm:$0xf]
  %v3692 = vld [vmem:[%s0 + $0xb8] sm:$0xf]
  %v3693 = vld [vmem:[%s0 + $0xbc] sm:$0xf]
  %v3694 = vunpack.c.l.bf16 %v3678
  %v3695 = vunpack.c.l.bf16 %v3679
  %v3696 = vunpack.c.l.bf16 %v3680
  %v3697 = vunpack.c.l.bf16 %v3681
  %v3698 = vunpack.c.l.bf16 %v3682
  %v3699 = vunpack.c.l.bf16 %v3683
  %v3700 = vunpack.c.l.bf16 %v3684
  %v3701 = vunpack.c.l.bf16 %v3685
  %v3702 = vunpack.c.l.bf16 %v3686
  %v3703 = vunpack.c.l.bf16 %v3687
  %v3704 = vunpack.c.l.bf16 %v3688
  %v3705 = vunpack.c.l.bf16 %v3689
  %v3706 = vunpack.c.l.bf16 %v3690
  %v3707 = vunpack.c.l.bf16 %v3691
  %v3708 = vunpack.c.l.bf16 %v3692
  %v3709 = vunpack.c.l.bf16 %v3693
  %v3710 = vand.u32 2147483647, %v3694
  %vm3711 = vcmp.le.f32.partialorder %v3710, 0.7853982
  %vm3712 = vcmp.lt.s32.totalorder %v3694, 0
  %v3713 = vand.u32 %v3694, 2139095040
  %v3714 = vshrl.u32 %v3713, 23
  %v3715 = vsub.s32 %v3714, 127
  %v3716 = vand.u32 2147483647, %v3694
  %v3717 = vand.u32 %v3716, 8388607
  %v3718 = vor.u32 %v3717, 8388608
  %v3719 = vsub.s32 0, %v3718
  %v3720 = vadd.s32 %v3715, 1
  %vm3721 = vcmp.gt.s32.totalorder %v3720, 0
  %v3722 = vsel %vm3721, %v3720, 0
  %v3723 = vshrl.u32 %v3722, 5
  %v3724 = vand.u32 %v3722, 31
  %v3725 = vsub.s32 32, %v3724
  %v3726 = vshrl.u32 683565275, %v3725
  %v3727 = vshll.u32 683565275, %v3724
  %v3728 = vshrl.u32 2475754826, %v3725
  %v3729 = vor.u32 %v3727, %v3728
  %v3730 = vshll.u32 2475754826, %v3724
  %v3731 = vshrl.u32 2131351028, %v3725
  %v3732 = vor.u32 %v3730, %v3731
  %v3733 = vshll.u32 2131351028, %v3724
  %v3734 = vshrl.u32 2102212464, %v3725
  %v3735 = vor.u32 %v3733, %v3734
  %v3736 = vshll.u32 2102212464, %v3724
  %v3737 = vshrl.u32 920167782, %v3725
  %v3738 = vor.u32 %v3736, %v3737
  %v3739 = vshll.u32 920167782, %v3724
  %v3740 = vshrl.u32 1326507024, %v3725
  %v3741 = vor.u32 %v3739, %v3740
  %vm3742 = vcmp.lt.s32.totalorder %v3723, 1
  %vm3743 = vcmp.lt.s32.totalorder %v3723, 2
  %vm3744 = vcmp.lt.s32.totalorder %v3723, 3
  %vm3745 = vcmp.lt.s32.totalorder %v3723, 4
  %v3746 = vsel %vm3742, %v3726, %v3729
  %v3747 = vsel %vm3745, %v3735, 2102212464
  %v3748 = vsel %vm3744, %v3732, %v3747
  %v3749 = vsel %vm3743, %v3746, %v3748
  %v3750 = vsel %vm3742, %v3729, %v3732
  %v3751 = vsel %vm3745, %v3738, 920167782
  %v3752 = vsel %vm3744, %v3735, %v3751
  %v3753 = vsel %vm3743, %v3750, %v3752
  %v3754 = vsel %vm3742, %v3732, %v3735
  %v3755 = vsel %vm3745, %v3741, 1326507024
  %v3756 = vsel %vm3744, %v3738, %v3755
  %v3757 = vsel %vm3743, %v3754, %v3756
  %v3758 = vshll.u32 %v3718, 8
  %v3759 = vmul.u32.u64.compose %v3758, %v3757
  %v3760 = vextract.low.u32 %v3759
  %v3761 = vextract.high.u32 %v3759
  %v3762 = vmul.u32.u64.compose %v3758, %v3753
  %v3763 = vextract.low.u32 %v3762
  %v3764 = vextract.high.u32 %v3762
  %v3765 = vmul.u32 %v3758, %v3749
  %v3766 = vadd.s32 %v3761, %v3763
  %vm3767 = vc.u32 %v3761, %v3763
  %v3768 = vadd.s32 %v3764, 1
  %v3769 = vsel %vm3767, %v3768, %v3764
  %v3770 = vadd.s32 %v3765, %v3769
  %v3771 = vadd.s32 %v3770, 536870912
  %v3772 = vshrl.u32 %v3771, 30
  %v3773 = vshll.u32 %v3772, 30
  %v3774 = vsub.s32 %v3770, %v3773
  %vm3775 = vcmp.lt.s32.totalorder %v3774, 0
  %v3776 = vsub.s32 0, %v3774
  %v3777 = vsel %vm3775, %v3776, %v3774
  %v3778 = vclz %v3777
  %v3779 = vsub.s32 %v3778, 2
  %vm3780 = vcmp.gt.s32.totalorder 0, %v3779
  %v3781 = vsel %vm3780, 0, %v3779
  %v3782 = vsub.s32 32, %v3781
  %v3783 = vshll.u32 %v3774, %v3781
  %v3784 = vshrl.u32 %v3766, %v3782
  %v3785 = vor.u32 %v3783, %v3784
  %v3786 = vsub.s32 4294967266, %v3781
  %v3787 = vadd.s32 %v3786, 127
  %v3788 = vshll.u32 %v3787, 23
  %v3789 = vor.u32 4788187, %v3788
  %v3790 = vand.u32 2147483647, %v3789
  %v3792 = vcvt.s32.f32 %v3785
  %v3793 = vmul.f32 %v3792, %v3790
  %v3794 = vxor.u32 %v3793, 2147483648
  %v3795 = vsel %vm3712, %v3794, %v3793
  %v3796 = vsub.s32 4, %v3772
  %v3797 = vsel %vm3712, %v3796, %v3772
  %v3798 = vsel %vm3711, %v3694, %v3795
  %v3799 = vsel %vm3711, 0, %v3797
  %v3800 = vcosq.f32.pop %v3798
  %v3801 = vsinq.f32.pop %v3798
  %vm3802 = vweird.f32 %v3694
  %v3803 = vand.u32 %v3799, 3
  %vm3804 = vcmp.lt.s32.totalorder %v3803, 2
  %vm3805 = vcmp.eq.s32.totalorder %v3803, 0
  %v3806 = vxor.u32 %v3801, 2147483648
  %v3807 = vsel %vm3805, %v3800, %v3806
  %vm3808 = vcmp.eq.s32.totalorder %v3803, 2
  %v3809 = vxor.u32 %v3800, 2147483648
  %v3810 = vsel %vm3808, %v3809, %v3801
  %v3811 = vsel %vm3804, %v3807, %v3810
  %v3812 = vsel %vm3802, nan, %v3811
  %v3813 = vand.u32 2147483647, %v3695
  %vm3814 = vcmp.le.f32.partialorder %v3813, 0.7853982
  %vm3815 = vcmp.lt.s32.totalorder %v3695, 0
  %v3816 = vand.u32 %v3695, 2139095040
  %v3817 = vshrl.u32 %v3816, 23
  %v3818 = vsub.s32 %v3817, 127
  %v3819 = vand.u32 2147483647, %v3695
  %v3820 = vand.u32 %v3819, 8388607
  %v3821 = vor.u32 %v3820, 8388608
  %v3822 = vsub.s32 0, %v3821
  %v3823 = vadd.s32 %v3818, 1
  %vm3824 = vcmp.gt.s32.totalorder %v3823, 0
  %v3825 = vsel %vm3824, %v3823, 0
  %v3826 = vshrl.u32 %v3825, 5
  %v3827 = vand.u32 %v3825, 31
  %v3828 = vsub.s32 32, %v3827
  %v3829 = vshrl.u32 683565275, %v3828
  %v3830 = vshll.u32 683565275, %v3827
  %v3831 = vshrl.u32 2475754826, %v3828
  %v3832 = vor.u32 %v3830, %v3831
  %v3833 = vshll.u32 2475754826, %v3827
  %v3834 = vshrl.u32 2131351028, %v3828
  %v3835 = vor.u32 %v3833, %v3834
  %v3836 = vshll.u32 2131351028, %v3827
  %v3837 = vshrl.u32 2102212464, %v3828
  %v3838 = vor.u32 %v3836, %v3837
  %v3839 = vshll.u32 2102212464, %v3827
  %v3840 = vshrl.u32 920167782, %v3828
  %v3841 = vor.u32 %v3839, %v3840
  %v3842 = vshll.u32 920167782, %v3827
  %v3843 = vshrl.u32 1326507024, %v3828
  %v3844 = vor.u32 %v3842, %v3843
  %vm3845 = vcmp.lt.s32.totalorder %v3826, 1
  %vm3846 = vcmp.lt.s32.totalorder %v3826, 2
  %vm3847 = vcmp.lt.s32.totalorder %v3826, 3
  %vm3848 = vcmp.lt.s32.totalorder %v3826, 4
  %v3849 = vsel %vm3845, %v3829, %v3832
  %v3850 = vsel %vm3848, %v3838, 2102212464
  %v3851 = vsel %vm3847, %v3835, %v3850
  %v3852 = vsel %vm3846, %v3849, %v3851
  %v3853 = vsel %vm3845, %v3832, %v3835
  %v3854 = vsel %vm3848, %v3841, 920167782
  %v3855 = vsel %vm3847, %v3838, %v3854
  %v3856 = vsel %vm3846, %v3853, %v3855
  %v3857 = vsel %vm3845, %v3835, %v3838
  %v3858 = vsel %vm3848, %v3844, 1326507024
  %v3859 = vsel %vm3847, %v3841, %v3858
  %v3860 = vsel %vm3846, %v3857, %v3859
  %v3861 = vshll.u32 %v3821, 8
  %v3862 = vmul.u32.u64.compose %v3861, %v3860
  %v3863 = vextract.low.u32 %v3862
  %v3864 = vextract.high.u32 %v3862
  %v3865 = vmul.u32.u64.compose %v3861, %v3856
  %v3866 = vextract.low.u32 %v3865
  %v3867 = vextract.high.u32 %v3865
  %v3868 = vmul.u32 %v3861, %v3852
  %v3869 = vadd.s32 %v3864, %v3866
  %vm3870 = vc.u32 %v3864, %v3866
  %v3871 = vadd.s32 %v3867, 1
  %v3872 = vsel %vm3870, %v3871, %v3867
  %v3873 = vadd.s32 %v3868, %v3872
  %v3874 = vadd.s32 %v3873, 536870912
  %v3875 = vshrl.u32 %v3874, 30
  %v3876 = vshll.u32 %v3875, 30
  %v3877 = vsub.s32 %v3873, %v3876
  %vm3878 = vcmp.lt.s32.totalorder %v3877, 0
  %v3879 = vsub.s32 0, %v3877
  %v3880 = vsel %vm3878, %v3879, %v3877
  %v3881 = vclz %v3880
  %v3882 = vsub.s32 %v3881, 2
  %vm3883 = vcmp.gt.s32.totalorder 0, %v3882
  %v3884 = vsel %vm3883, 0, %v3882
  %v3885 = vsub.s32 32, %v3884
  %v3886 = vshll.u32 %v3877, %v3884
  %v3887 = vshrl.u32 %v3869, %v3885
  %v3888 = vor.u32 %v3886, %v3887
  %v3889 = vsub.s32 4294967266, %v3884
  %v3890 = vadd.s32 %v3889, 127
  %v3891 = vshll.u32 %v3890, 23
  %v3892 = vor.u32 4788187, %v3891
  %v3893 = vand.u32 2147483647, %v3892
  %v3895 = vcvt.s32.f32 %v3888
  %v3896 = vmul.f32 %v3895, %v3893
  %v3897 = vxor.u32 %v3896, 2147483648
  %v3898 = vsel %vm3815, %v3897, %v3896
  %v3899 = vsub.s32 4, %v3875
  %v3900 = vsel %vm3815, %v3899, %v3875
  %v3901 = vsel %vm3814, %v3695, %v3898
  %v3902 = vsel %vm3814, 0, %v3900
  %v3903 = vcosq.f32.pop %v3901
  %v3904 = vsinq.f32.pop %v3901
  %vm3905 = vweird.f32 %v3695
  %v3906 = vand.u32 %v3902, 3
  %vm3907 = vcmp.lt.s32.totalorder %v3906, 2
  %vm3908 = vcmp.eq.s32.totalorder %v3906, 0
  %v3909 = vxor.u32 %v3904, 2147483648
  %v3910 = vsel %vm3908, %v3903, %v3909
  %vm3911 = vcmp.eq.s32.totalorder %v3906, 2
  %v3912 = vxor.u32 %v3903, 2147483648
  %v3913 = vsel %vm3911, %v3912, %v3904
  %v3914 = vsel %vm3907, %v3910, %v3913
  %v3915 = vsel %vm3905, nan, %v3914
  %v3916 = vand.u32 2147483647, %v3696
  %vm3917 = vcmp.le.f32.partialorder %v3916, 0.7853982
  %vm3918 = vcmp.lt.s32.totalorder %v3696, 0
  %v3919 = vand.u32 %v3696, 2139095040
  %v3920 = vshrl.u32 %v3919, 23
  %v3921 = vsub.s32 %v3920, 127
  %v3922 = vand.u32 2147483647, %v3696
  %v3923 = vand.u32 %v3922, 8388607
  %v3924 = vor.u32 %v3923, 8388608
  %v3925 = vsub.s32 0, %v3924
  %v3926 = vadd.s32 %v3921, 1
  %vm3927 = vcmp.gt.s32.totalorder %v3926, 0
  %v3928 = vsel %vm3927, %v3926, 0
  %v3929 = vshrl.u32 %v3928, 5
  %v3930 = vand.u32 %v3928, 31
  %v3931 = vsub.s32 32, %v3930
  %v3932 = vshrl.u32 683565275, %v3931
  %v3933 = vshll.u32 683565275, %v3930
  %v3934 = vshrl.u32 2475754826, %v3931
  %v3935 = vor.u32 %v3933, %v3934
  %v3936 = vshll.u32 2475754826, %v3930
  %v3937 = vshrl.u32 2131351028, %v3931
  %v3938 = vor.u32 %v3936, %v3937
  %v3939 = vshll.u32 2131351028, %v3930
  %v3940 = vshrl.u32 2102212464, %v3931
  %v3941 = vor.u32 %v3939, %v3940
  %v3942 = vshll.u32 2102212464, %v3930
  %v3943 = vshrl.u32 920167782, %v3931
  %v3944 = vor.u32 %v3942, %v3943
  %v3945 = vshll.u32 920167782, %v3930
  %v3946 = vshrl.u32 1326507024, %v3931
  %v3947 = vor.u32 %v3945, %v3946
  %vm3948 = vcmp.lt.s32.totalorder %v3929, 1
  %vm3949 = vcmp.lt.s32.totalorder %v3929, 2
  %vm3950 = vcmp.lt.s32.totalorder %v3929, 3
  %vm3951 = vcmp.lt.s32.totalorder %v3929, 4
  %v3952 = vsel %vm3948, %v3932, %v3935
  %v3953 = vsel %vm3951, %v3941, 2102212464
  %v3954 = vsel %vm3950, %v3938, %v3953
  %v3955 = vsel %vm3949, %v3952, %v3954
  %v3956 = vsel %vm3948, %v3935, %v3938
  %v3957 = vsel %vm3951, %v3944, 920167782
  %v3958 = vsel %vm3950, %v3941, %v3957
  %v3959 = vsel %vm3949, %v3956, %v3958
  %v3960 = vsel %vm3948, %v3938, %v3941
  %v3961 = vsel %vm3951, %v3947, 1326507024
  %v3962 = vsel %vm3950, %v3944, %v3961
  %v3963 = vsel %vm3949, %v3960, %v3962
  %v3964 = vshll.u32 %v3924, 8
  %v3965 = vmul.u32.u64.compose %v3964, %v3963
  %v3966 = vextract.low.u32 %v3965
  %v3967 = vextract.high.u32 %v3965
  %v3968 = vmul.u32.u64.compose %v3964, %v3959
  %v3969 = vextract.low.u32 %v3968
  %v3970 = vextract.high.u32 %v3968
  %v3971 = vmul.u32 %v3964, %v3955
  %v3972 = vadd.s32 %v3967, %v3969
  %vm3973 = vc.u32 %v3967, %v3969
  %v3974 = vadd.s32 %v3970, 1
  %v3975 = vsel %vm3973, %v3974, %v3970
  %v3976 = vadd.s32 %v3971, %v3975
  %v3977 = vadd.s32 %v3976, 536870912
  %v3978 = vshrl.u32 %v3977, 30
  %v3979 = vshll.u32 %v3978, 30
  %v3980 = vsub.s32 %v3976, %v3979
  %vm3981 = vcmp.lt.s32.totalorder %v3980, 0
  %v3982 = vsub.s32 0, %v3980
  %v3983 = vsel %vm3981, %v3982, %v3980
  %v3984 = vclz %v3983
  %v3985 = vsub.s32 %v3984, 2
  %vm3986 = vcmp.gt.s32.totalorder 0, %v3985
  %v3987 = vsel %vm3986, 0, %v3985
  %v3988 = vsub.s32 32, %v3987
  %v3989 = vshll.u32 %v3980, %v3987
  %v3990 = vshrl.u32 %v3972, %v3988
  %v3991 = vor.u32 %v3989, %v3990
  %v3992 = vsub.s32 4294967266, %v3987
  %v3993 = vadd.s32 %v3992, 127
  %v3994 = vshll.u32 %v3993, 23
  %v3995 = vor.u32 4788187, %v3994
  %v3996 = vand.u32 2147483647, %v3995
  %v3998 = vcvt.s32.f32 %v3991
  %v3999 = vmul.f32 %v3998, %v3996
  %v4000 = vxor.u32 %v3999, 2147483648
  %v4001 = vsel %vm3918, %v4000, %v3999
  %v4002 = vsub.s32 4, %v3978
  %v4003 = vsel %vm3918, %v4002, %v3978
  %v4004 = vsel %vm3917, %v3696, %v4001
  %v4005 = vsel %vm3917, 0, %v4003
  %v4006 = vcosq.f32.pop %v4004
  %v4007 = vsinq.f32.pop %v4004
  %vm4008 = vweird.f32 %v3696
  %v4009 = vand.u32 %v4005, 3
  %vm4010 = vcmp.lt.s32.totalorder %v4009, 2
  %vm4011 = vcmp.eq.s32.totalorder %v4009, 0
  %v4012 = vxor.u32 %v4007, 2147483648
  %v4013 = vsel %vm4011, %v4006, %v4012
  %vm4014 = vcmp.eq.s32.totalorder %v4009, 2
  %v4015 = vxor.u32 %v4006, 2147483648
  %v4016 = vsel %vm4014, %v4015, %v4007
  %v4017 = vsel %vm4010, %v4013, %v4016
  %v4018 = vsel %vm4008, nan, %v4017
  %v4019 = vand.u32 2147483647, %v3697
  %vm4020 = vcmp.le.f32.partialorder %v4019, 0.7853982
  %vm4021 = vcmp.lt.s32.totalorder %v3697, 0
  %v4022 = vand.u32 %v3697, 2139095040
  %v4023 = vshrl.u32 %v4022, 23
  %v4024 = vsub.s32 %v4023, 127
  %v4025 = vand.u32 2147483647, %v3697
  %v4026 = vand.u32 %v4025, 8388607
  %v4027 = vor.u32 %v4026, 8388608
  %v4028 = vsub.s32 0, %v4027
  %v4029 = vadd.s32 %v4024, 1
  %vm4030 = vcmp.gt.s32.totalorder %v4029, 0
  %v4031 = vsel %vm4030, %v4029, 0
  %v4032 = vshrl.u32 %v4031, 5
  %v4033 = vand.u32 %v4031, 31
  %v4034 = vsub.s32 32, %v4033
  %v4035 = vshrl.u32 683565275, %v4034
  %v4036 = vshll.u32 683565275, %v4033
  %v4037 = vshrl.u32 2475754826, %v4034
  %v4038 = vor.u32 %v4036, %v4037
  %v4039 = vshll.u32 2475754826, %v4033
  %v4040 = vshrl.u32 2131351028, %v4034
  %v4041 = vor.u32 %v4039, %v4040
  %v4042 = vshll.u32 2131351028, %v4033
  %v4043 = vshrl.u32 2102212464, %v4034
  %v4044 = vor.u32 %v4042, %v4043
  %v4045 = vshll.u32 2102212464, %v4033
  %v4046 = vshrl.u32 920167782, %v4034
  %v4047 = vor.u32 %v4045, %v4046
  %v4048 = vshll.u32 920167782, %v4033
  %v4049 = vshrl.u32 1326507024, %v4034
  %v4050 = vor.u32 %v4048, %v4049
  %vm4051 = vcmp.lt.s32.totalorder %v4032, 1
  %vm4052 = vcmp.lt.s32.totalorder %v4032, 2
  %vm4053 = vcmp.lt.s32.totalorder %v4032, 3
  %vm4054 = vcmp.lt.s32.totalorder %v4032, 4
  %v4055 = vsel %vm4051, %v4035, %v4038
  %v4056 = vsel %vm4054, %v4044, 2102212464
  %v4057 = vsel %vm4053, %v4041, %v4056
  %v4058 = vsel %vm4052, %v4055, %v4057
  %v4059 = vsel %vm4051, %v4038, %v4041
  %v4060 = vsel %vm4054, %v4047, 920167782
  %v4061 = vsel %vm4053, %v4044, %v4060
  %v4062 = vsel %vm4052, %v4059, %v4061
  %v4063 = vsel %vm4051, %v4041, %v4044
  %v4064 = vsel %vm4054, %v4050, 1326507024
  %v4065 = vsel %vm4053, %v4047, %v4064
  %v4066 = vsel %vm4052, %v4063, %v4065
  %v4067 = vshll.u32 %v4027, 8
  %v4068 = vmul.u32.u64.compose %v4067, %v4066
  %v4069 = vextract.low.u32 %v4068
  %v4070 = vextract.high.u32 %v4068
  %v4071 = vmul.u32.u64.compose %v4067, %v4062
  %v4072 = vextract.low.u32 %v4071
  %v4073 = vextract.high.u32 %v4071
  %v4074 = vmul.u32 %v4067, %v4058
  %v4075 = vadd.s32 %v4070, %v4072
  %vm4076 = vc.u32 %v4070, %v4072
  %v4077 = vadd.s32 %v4073, 1
  %v4078 = vsel %vm4076, %v4077, %v4073
  %v4079 = vadd.s32 %v4074, %v4078
  %v4080 = vadd.s32 %v4079, 536870912
  %v4081 = vshrl.u32 %v4080, 30
  %v4082 = vshll.u32 %v4081, 30
  %v4083 = vsub.s32 %v4079, %v4082
  %vm4084 = vcmp.lt.s32.totalorder %v4083, 0
  %v4085 = vsub.s32 0, %v4083
  %v4086 = vsel %vm4084, %v4085, %v4083
  %v4087 = vclz %v4086
  %v4088 = vsub.s32 %v4087, 2
  %vm4089 = vcmp.gt.s32.totalorder 0, %v4088
  %v4090 = vsel %vm4089, 0, %v4088
  %v4091 = vsub.s32 32, %v4090
  %v4092 = vshll.u32 %v4083, %v4090
  %v4093 = vshrl.u32 %v4075, %v4091
  %v4094 = vor.u32 %v4092, %v4093
  %v4095 = vsub.s32 4294967266, %v4090
  %v4096 = vadd.s32 %v4095, 127
  %v4097 = vshll.u32 %v4096, 23
  %v4098 = vor.u32 4788187, %v4097
  %v4099 = vand.u32 2147483647, %v4098
  %v4101 = vcvt.s32.f32 %v4094
  %v4102 = vmul.f32 %v4101, %v4099
  %v4103 = vxor.u32 %v4102, 2147483648
  %v4104 = vsel %vm4021, %v4103, %v4102
  %v4105 = vsub.s32 4, %v4081
  %v4106 = vsel %vm4021, %v4105, %v4081
  %v4107 = vsel %vm4020, %v3697, %v4104
  %v4108 = vsel %vm4020, 0, %v4106
  %v4109 = vcosq.f32.pop %v4107
  %v4110 = vsinq.f32.pop %v4107
  %vm4111 = vweird.f32 %v3697
  %v4112 = vand.u32 %v4108, 3
  %vm4113 = vcmp.lt.s32.totalorder %v4112, 2
  %vm4114 = vcmp.eq.s32.totalorder %v4112, 0
  %v4115 = vxor.u32 %v4110, 2147483648
  %v4116 = vsel %vm4114, %v4109, %v4115
  %vm4117 = vcmp.eq.s32.totalorder %v4112, 2
  %v4118 = vxor.u32 %v4109, 2147483648
  %v4119 = vsel %vm4117, %v4118, %v4110
  %v4120 = vsel %vm4113, %v4116, %v4119
  %v4121 = vsel %vm4111, nan, %v4120
  %v4122 = vand.u32 2147483647, %v3698
  %vm4123 = vcmp.le.f32.partialorder %v4122, 0.7853982
  %vm4124 = vcmp.lt.s32.totalorder %v3698, 0
  %v4125 = vand.u32 %v3698, 2139095040
  %v4126 = vshrl.u32 %v4125, 23
  %v4127 = vsub.s32 %v4126, 127
  %v4128 = vand.u32 2147483647, %v3698
  %v4129 = vand.u32 %v4128, 8388607
  %v4130 = vor.u32 %v4129, 8388608
  %v4131 = vsub.s32 0, %v4130
  %v4132 = vadd.s32 %v4127, 1
  %vm4133 = vcmp.gt.s32.totalorder %v4132, 0
  %v4134 = vsel %vm4133, %v4132, 0
  %v4135 = vshrl.u32 %v4134, 5
  %v4136 = vand.u32 %v4134, 31
  %v4137 = vsub.s32 32, %v4136
  %v4138 = vshrl.u32 683565275, %v4137
  %v4139 = vshll.u32 683565275, %v4136
  %v4140 = vshrl.u32 2475754826, %v4137
  %v4141 = vor.u32 %v4139, %v4140
  %v4142 = vshll.u32 2475754826, %v4136
  %v4143 = vshrl.u32 2131351028, %v4137
  %v4144 = vor.u32 %v4142, %v4143
  %v4145 = vshll.u32 2131351028, %v4136
  %v4146 = vshrl.u32 2102212464, %v4137
  %v4147 = vor.u32 %v4145, %v4146
  %v4148 = vshll.u32 2102212464, %v4136
  %v4149 = vshrl.u32 920167782, %v4137
  %v4150 = vor.u32 %v4148, %v4149
  %v4151 = vshll.u32 920167782, %v4136
  %v4152 = vshrl.u32 1326507024, %v4137
  %v4153 = vor.u32 %v4151, %v4152
  %vm4154 = vcmp.lt.s32.totalorder %v4135, 1
  %vm4155 = vcmp.lt.s32.totalorder %v4135, 2
  %vm4156 = vcmp.lt.s32.totalorder %v4135, 3
  %vm4157 = vcmp.lt.s32.totalorder %v4135, 4
  %v4158 = vsel %vm4154, %v4138, %v4141
  %v4159 = vsel %vm4157, %v4147, 2102212464
  %v4160 = vsel %vm4156, %v4144, %v4159
  %v4161 = vsel %vm4155, %v4158, %v4160
  %v4162 = vsel %vm4154, %v4141, %v4144
  %v4163 = vsel %vm4157, %v4150, 920167782
  %v4164 = vsel %vm4156, %v4147, %v4163
  %v4165 = vsel %vm4155, %v4162, %v4164
  %v4166 = vsel %vm4154, %v4144, %v4147
  %v4167 = vsel %vm4157, %v4153, 1326507024
  %v4168 = vsel %vm4156, %v4150, %v4167
  %v4169 = vsel %vm4155, %v4166, %v4168
  %v4170 = vshll.u32 %v4130, 8
  %v4171 = vmul.u32.u64.compose %v4170, %v4169
  %v4172 = vextract.low.u32 %v4171
  %v4173 = vextract.high.u32 %v4171
  %v4174 = vmul.u32.u64.compose %v4170, %v4165
  %v4175 = vextract.low.u32 %v4174
  %v4176 = vextract.high.u32 %v4174
  %v4177 = vmul.u32 %v4170, %v4161
  %v4178 = vadd.s32 %v4173, %v4175
  %vm4179 = vc.u32 %v4173, %v4175
  %v4180 = vadd.s32 %v4176, 1
  %v4181 = vsel %vm4179, %v4180, %v4176
  %v4182 = vadd.s32 %v4177, %v4181
  %v4183 = vadd.s32 %v4182, 536870912
  %v4184 = vshrl.u32 %v4183, 30
  %v4185 = vshll.u32 %v4184, 30
  %v4186 = vsub.s32 %v4182, %v4185
  %vm4187 = vcmp.lt.s32.totalorder %v4186, 0
  %v4188 = vsub.s32 0, %v4186
  %v4189 = vsel %vm4187, %v4188, %v4186
  %v4190 = vclz %v4189
  %v4191 = vsub.s32 %v4190, 2
  %vm4192 = vcmp.gt.s32.totalorder 0, %v4191
  %v4193 = vsel %vm4192, 0, %v4191
  %v4194 = vsub.s32 32, %v4193
  %v4195 = vshll.u32 %v4186, %v4193
  %v4196 = vshrl.u32 %v4178, %v4194
  %v4197 = vor.u32 %v4195, %v4196
  %v4198 = vsub.s32 4294967266, %v4193
  %v4199 = vadd.s32 %v4198, 127
  %v4200 = vshll.u32 %v4199, 23
  %v4201 = vor.u32 4788187, %v4200
  %v4202 = vand.u32 2147483647, %v4201
  %v4204 = vcvt.s32.f32 %v4197
  %v4205 = vmul.f32 %v4204, %v4202
  %v4206 = vxor.u32 %v4205, 2147483648
  %v4207 = vsel %vm4124, %v4206, %v4205
  %v4208 = vsub.s32 4, %v4184
  %v4209 = vsel %vm4124, %v4208, %v4184
  %v4210 = vsel %vm4123, %v3698, %v4207
  %v4211 = vsel %vm4123, 0, %v4209
  %v4212 = vcosq.f32.pop %v4210
  %v4213 = vsinq.f32.pop %v4210
  %vm4214 = vweird.f32 %v3698
  %v4215 = vand.u32 %v4211, 3
  %vm4216 = vcmp.lt.s32.totalorder %v4215, 2
  %vm4217 = vcmp.eq.s32.totalorder %v4215, 0
  %v4218 = vxor.u32 %v4213, 2147483648
  %v4219 = vsel %vm4217, %v4212, %v4218
  %vm4220 = vcmp.eq.s32.totalorder %v4215, 2
  %v4221 = vxor.u32 %v4212, 2147483648
  %v4222 = vsel %vm4220, %v4221, %v4213
  %v4223 = vsel %vm4216, %v4219, %v4222
  %v4224 = vsel %vm4214, nan, %v4223
  %v4225 = vand.u32 2147483647, %v3699
  %vm4226 = vcmp.le.f32.partialorder %v4225, 0.7853982
  %vm4227 = vcmp.lt.s32.totalorder %v3699, 0
  %v4228 = vand.u32 %v3699, 2139095040
  %v4229 = vshrl.u32 %v4228, 23
  %v4230 = vsub.s32 %v4229, 127
  %v4231 = vand.u32 2147483647, %v3699
  %v4232 = vand.u32 %v4231, 8388607
  %v4233 = vor.u32 %v4232, 8388608
  %v4234 = vsub.s32 0, %v4233
  %v4235 = vadd.s32 %v4230, 1
  %vm4236 = vcmp.gt.s32.totalorder %v4235, 0
  %v4237 = vsel %vm4236, %v4235, 0
  %v4238 = vshrl.u32 %v4237, 5
  %v4239 = vand.u32 %v4237, 31
  %v4240 = vsub.s32 32, %v4239
  %v4241 = vshrl.u32 683565275, %v4240
  %v4242 = vshll.u32 683565275, %v4239
  %v4243 = vshrl.u32 2475754826, %v4240
  %v4244 = vor.u32 %v4242, %v4243
  %v4245 = vshll.u32 2475754826, %v4239
  %v4246 = vshrl.u32 2131351028, %v4240
  %v4247 = vor.u32 %v4245, %v4246
  %v4248 = vshll.u32 2131351028, %v4239
  %v4249 = vshrl.u32 2102212464, %v4240
  %v4250 = vor.u32 %v4248, %v4249
  %v4251 = vshll.u32 2102212464, %v4239
  %v4252 = vshrl.u32 920167782, %v4240
  %v4253 = vor.u32 %v4251, %v4252
  %v4254 = vshll.u32 920167782, %v4239
  %v4255 = vshrl.u32 1326507024, %v4240
  %v4256 = vor.u32 %v4254, %v4255
  %vm4257 = vcmp.lt.s32.totalorder %v4238, 1
  %vm4258 = vcmp.lt.s32.totalorder %v4238, 2
  %vm4259 = vcmp.lt.s32.totalorder %v4238, 3
  %vm4260 = vcmp.lt.s32.totalorder %v4238, 4
  %v4261 = vsel %vm4257, %v4241, %v4244
  %v4262 = vsel %vm4260, %v4250, 2102212464
  %v4263 = vsel %vm4259, %v4247, %v4262
  %v4264 = vsel %vm4258, %v4261, %v4263
  %v4265 = vsel %vm4257, %v4244, %v4247
  %v4266 = vsel %vm4260, %v4253, 920167782
  %v4267 = vsel %vm4259, %v4250, %v4266
  %v4268 = vsel %vm4258, %v4265, %v4267
  %v4269 = vsel %vm4257, %v4247, %v4250
  %v4270 = vsel %vm4260, %v4256, 1326507024
  %v4271 = vsel %vm4259, %v4253, %v4270
  %v4272 = vsel %vm4258, %v4269, %v4271
  %v4273 = vshll.u32 %v4233, 8
  %v4274 = vmul.u32.u64.compose %v4273, %v4272
  %v4275 = vextract.low.u32 %v4274
  %v4276 = vextract.high.u32 %v4274
  %v4277 = vmul.u32.u64.compose %v4273, %v4268
  %v4278 = vextract.low.u32 %v4277
  %v4279 = vextract.high.u32 %v4277
  %v4280 = vmul.u32 %v4273, %v4264
  %v4281 = vadd.s32 %v4276, %v4278
  %vm4282 = vc.u32 %v4276, %v4278
  %v4283 = vadd.s32 %v4279, 1
  %v4284 = vsel %vm4282, %v4283, %v4279
  %v4285 = vadd.s32 %v4280, %v4284
  %v4286 = vadd.s32 %v4285, 536870912
  %v4287 = vshrl.u32 %v4286, 30
  %v4288 = vshll.u32 %v4287, 30
  %v4289 = vsub.s32 %v4285, %v4288
  %vm4290 = vcmp.lt.s32.totalorder %v4289, 0
  %v4291 = vsub.s32 0, %v4289
  %v4292 = vsel %vm4290, %v4291, %v4289
  %v4293 = vclz %v4292
  %v4294 = vsub.s32 %v4293, 2
  %vm4295 = vcmp.gt.s32.totalorder 0, %v4294
  %v4296 = vsel %vm4295, 0, %v4294
  %v4297 = vsub.s32 32, %v4296
  %v4298 = vshll.u32 %v4289, %v4296
  %v4299 = vshrl.u32 %v4281, %v4297
  %v4300 = vor.u32 %v4298, %v4299
  %v4301 = vsub.s32 4294967266, %v4296
  %v4302 = vadd.s32 %v4301, 127
  %v4303 = vshll.u32 %v4302, 23
  %v4304 = vor.u32 4788187, %v4303
  %v4305 = vand.u32 2147483647, %v4304
  %v4307 = vcvt.s32.f32 %v4300
  %v4308 = vmul.f32 %v4307, %v4305
  %v4309 = vxor.u32 %v4308, 2147483648
  %v4310 = vsel %vm4227, %v4309, %v4308
  %v4311 = vsub.s32 4, %v4287
  %v4312 = vsel %vm4227, %v4311, %v4287
  %v4313 = vsel %vm4226, %v3699, %v4310
  %v4314 = vsel %vm4226, 0, %v4312
  %v4315 = vcosq.f32.pop %v4313
  %v4316 = vsinq.f32.pop %v4313
  %vm4317 = vweird.f32 %v3699
  %v4318 = vand.u32 %v4314, 3
  %vm4319 = vcmp.lt.s32.totalorder %v4318, 2
  %vm4320 = vcmp.eq.s32.totalorder %v4318, 0
  %v4321 = vxor.u32 %v4316, 2147483648
  %v4322 = vsel %vm4320, %v4315, %v4321
  %vm4323 = vcmp.eq.s32.totalorder %v4318, 2
  %v4324 = vxor.u32 %v4315, 2147483648
  %v4325 = vsel %vm4323, %v4324, %v4316
  %v4326 = vsel %vm4319, %v4322, %v4325
  %v4327 = vsel %vm4317, nan, %v4326
  %v4328 = vand.u32 2147483647, %v3700
  %vm4329 = vcmp.le.f32.partialorder %v4328, 0.7853982
  %vm4330 = vcmp.lt.s32.totalorder %v3700, 0
  %v4331 = vand.u32 %v3700, 2139095040
  %v4332 = vshrl.u32 %v4331, 23
  %v4333 = vsub.s32 %v4332, 127
  %v4334 = vand.u32 2147483647, %v3700
  %v4335 = vand.u32 %v4334, 8388607
  %v4336 = vor.u32 %v4335, 8388608
  %v4337 = vsub.s32 0, %v4336
  %v4338 = vadd.s32 %v4333, 1
  %vm4339 = vcmp.gt.s32.totalorder %v4338, 0
  %v4340 = vsel %vm4339, %v4338, 0
  %v4341 = vshrl.u32 %v4340, 5
  %v4342 = vand.u32 %v4340, 31
  %v4343 = vsub.s32 32, %v4342
  %v4344 = vshrl.u32 683565275, %v4343
  %v4345 = vshll.u32 683565275, %v4342
  %v4346 = vshrl.u32 2475754826, %v4343
  %v4347 = vor.u32 %v4345, %v4346
  %v4348 = vshll.u32 2475754826, %v4342
  %v4349 = vshrl.u32 2131351028, %v4343
  %v4350 = vor.u32 %v4348, %v4349
  %v4351 = vshll.u32 2131351028, %v4342
  %v4352 = vshrl.u32 2102212464, %v4343
  %v4353 = vor.u32 %v4351, %v4352
  %v4354 = vshll.u32 2102212464, %v4342
  %v4355 = vshrl.u32 920167782, %v4343
  %v4356 = vor.u32 %v4354, %v4355
  %v4357 = vshll.u32 920167782, %v4342
  %v4358 = vshrl.u32 1326507024, %v4343
  %v4359 = vor.u32 %v4357, %v4358
  %vm4360 = vcmp.lt.s32.totalorder %v4341, 1
  %vm4361 = vcmp.lt.s32.totalorder %v4341, 2
  %vm4362 = vcmp.lt.s32.totalorder %v4341, 3
  %vm4363 = vcmp.lt.s32.totalorder %v4341, 4
  %v4364 = vsel %vm4360, %v4344, %v4347
  %v4365 = vsel %vm4363, %v4353, 2102212464
  %v4366 = vsel %vm4362, %v4350, %v4365
  %v4367 = vsel %vm4361, %v4364, %v4366
  %v4368 = vsel %vm4360, %v4347, %v4350
  %v4369 = vsel %vm4363, %v4356, 920167782
  %v4370 = vsel %vm4362, %v4353, %v4369
  %v4371 = vsel %vm4361, %v4368, %v4370
  %v4372 = vsel %vm4360, %v4350, %v4353
  %v4373 = vsel %vm4363, %v4359, 1326507024
  %v4374 = vsel %vm4362, %v4356, %v4373
  %v4375 = vsel %vm4361, %v4372, %v4374
  %v4376 = vshll.u32 %v4336, 8
  %v4377 = vmul.u32.u64.compose %v4376, %v4375
  %v4378 = vextract.low.u32 %v4377
  %v4379 = vextract.high.u32 %v4377
  %v4380 = vmul.u32.u64.compose %v4376, %v4371
  %v4381 = vextract.low.u32 %v4380
  %v4382 = vextract.high.u32 %v4380
  %v4383 = vmul.u32 %v4376, %v4367
  %v4384 = vadd.s32 %v4379, %v4381
  %vm4385 = vc.u32 %v4379, %v4381
  %v4386 = vadd.s32 %v4382, 1
  %v4387 = vsel %vm4385, %v4386, %v4382
  %v4388 = vadd.s32 %v4383, %v4387
  %v4389 = vadd.s32 %v4388, 536870912
  %v4390 = vshrl.u32 %v4389, 30
  %v4391 = vshll.u32 %v4390, 30
  %v4392 = vsub.s32 %v4388, %v4391
  %vm4393 = vcmp.lt.s32.totalorder %v4392, 0
  %v4394 = vsub.s32 0, %v4392
  %v4395 = vsel %vm4393, %v4394, %v4392
  %v4396 = vclz %v4395
  %v4397 = vsub.s32 %v4396, 2
  %vm4398 = vcmp.gt.s32.totalorder 0, %v4397
  %v4399 = vsel %vm4398, 0, %v4397
  %v4400 = vsub.s32 32, %v4399
  %v4401 = vshll.u32 %v4392, %v4399
  %v4402 = vshrl.u32 %v4384, %v4400
  %v4403 = vor.u32 %v4401, %v4402
  %v4404 = vsub.s32 4294967266, %v4399
  %v4405 = vadd.s32 %v4404, 127
  %v4406 = vshll.u32 %v4405, 23
  %v4407 = vor.u32 4788187, %v4406
  %v4408 = vand.u32 2147483647, %v4407
  %v4410 = vcvt.s32.f32 %v4403
  %v4411 = vmul.f32 %v4410, %v4408
  %v4412 = vxor.u32 %v4411, 2147483648
  %v4413 = vsel %vm4330, %v4412, %v4411
  %v4414 = vsub.s32 4, %v4390
  %v4415 = vsel %vm4330, %v4414, %v4390
  %v4416 = vsel %vm4329, %v3700, %v4413
  %v4417 = vsel %vm4329, 0, %v4415
  %v4418 = vcosq.f32.pop %v4416
  %v4419 = vsinq.f32.pop %v4416
  %vm4420 = vweird.f32 %v3700
  %v4421 = vand.u32 %v4417, 3
  %vm4422 = vcmp.lt.s32.totalorder %v4421, 2
  %vm4423 = vcmp.eq.s32.totalorder %v4421, 0
  %v4424 = vxor.u32 %v4419, 2147483648
  %v4425 = vsel %vm4423, %v4418, %v4424
  %vm4426 = vcmp.eq.s32.totalorder %v4421, 2
  %v4427 = vxor.u32 %v4418, 2147483648
  %v4428 = vsel %vm4426, %v4427, %v4419
  %v4429 = vsel %vm4422, %v4425, %v4428
  %v4430 = vsel %vm4420, nan, %v4429
  %v4431 = vand.u32 2147483647, %v3701
  %vm4432 = vcmp.le.f32.partialorder %v4431, 0.7853982
  %vm4433 = vcmp.lt.s32.totalorder %v3701, 0
  %v4434 = vand.u32 %v3701, 2139095040
  %v4435 = vshrl.u32 %v4434, 23
  %v4436 = vsub.s32 %v4435, 127
  %v4437 = vand.u32 2147483647, %v3701
  %v4438 = vand.u32 %v4437, 8388607
  %v4439 = vor.u32 %v4438, 8388608
  %v4440 = vsub.s32 0, %v4439
  %v4441 = vadd.s32 %v4436, 1
  %vm4442 = vcmp.gt.s32.totalorder %v4441, 0
  %v4443 = vsel %vm4442, %v4441, 0
  %v4444 = vshrl.u32 %v4443, 5
  %v4445 = vand.u32 %v4443, 31
  %v4446 = vsub.s32 32, %v4445
  %v4447 = vshrl.u32 683565275, %v4446
  %v4448 = vshll.u32 683565275, %v4445
  %v4449 = vshrl.u32 2475754826, %v4446
  %v4450 = vor.u32 %v4448, %v4449
  %v4451 = vshll.u32 2475754826, %v4445
  %v4452 = vshrl.u32 2131351028, %v4446
  %v4453 = vor.u32 %v4451, %v4452
  %v4454 = vshll.u32 2131351028, %v4445
  %v4455 = vshrl.u32 2102212464, %v4446
  %v4456 = vor.u32 %v4454, %v4455
  %v4457 = vshll.u32 2102212464, %v4445
  %v4458 = vshrl.u32 920167782, %v4446
  %v4459 = vor.u32 %v4457, %v4458
  %v4460 = vshll.u32 920167782, %v4445
  %v4461 = vshrl.u32 1326507024, %v4446
  %v4462 = vor.u32 %v4460, %v4461
  %vm4463 = vcmp.lt.s32.totalorder %v4444, 1
  %vm4464 = vcmp.lt.s32.totalorder %v4444, 2
  %vm4465 = vcmp.lt.s32.totalorder %v4444, 3
  %vm4466 = vcmp.lt.s32.totalorder %v4444, 4
  %v4467 = vsel %vm4463, %v4447, %v4450
  %v4468 = vsel %vm4466, %v4456, 2102212464
  %v4469 = vsel %vm4465, %v4453, %v4468
  %v4470 = vsel %vm4464, %v4467, %v4469
  %v4471 = vsel %vm4463, %v4450, %v4453
  %v4472 = vsel %vm4466, %v4459, 920167782
  %v4473 = vsel %vm4465, %v4456, %v4472
  %v4474 = vsel %vm4464, %v4471, %v4473
  %v4475 = vsel %vm4463, %v4453, %v4456
  %v4476 = vsel %vm4466, %v4462, 1326507024
  %v4477 = vsel %vm4465, %v4459, %v4476
  %v4478 = vsel %vm4464, %v4475, %v4477
  %v4479 = vshll.u32 %v4439, 8
  %v4480 = vmul.u32.u64.compose %v4479, %v4478
  %v4481 = vextract.low.u32 %v4480
  %v4482 = vextract.high.u32 %v4480
  %v4483 = vmul.u32.u64.compose %v4479, %v4474
  %v4484 = vextract.low.u32 %v4483
  %v4485 = vextract.high.u32 %v4483
  %v4486 = vmul.u32 %v4479, %v4470
  %v4487 = vadd.s32 %v4482, %v4484
  %vm4488 = vc.u32 %v4482, %v4484
  %v4489 = vadd.s32 %v4485, 1
  %v4490 = vsel %vm4488, %v4489, %v4485
  %v4491 = vadd.s32 %v4486, %v4490
  %v4492 = vadd.s32 %v4491, 536870912
  %v4493 = vshrl.u32 %v4492, 30
  %v4494 = vshll.u32 %v4493, 30
  %v4495 = vsub.s32 %v4491, %v4494
  %vm4496 = vcmp.lt.s32.totalorder %v4495, 0
  %v4497 = vsub.s32 0, %v4495
  %v4498 = vsel %vm4496, %v4497, %v4495
  %v4499 = vclz %v4498
  %v4500 = vsub.s32 %v4499, 2
  %vm4501 = vcmp.gt.s32.totalorder 0, %v4500
  %v4502 = vsel %vm4501, 0, %v4500
  %v4503 = vsub.s32 32, %v4502
  %v4504 = vshll.u32 %v4495, %v4502
  %v4505 = vshrl.u32 %v4487, %v4503
  %v4506 = vor.u32 %v4504, %v4505
  %v4507 = vsub.s32 4294967266, %v4502
  %v4508 = vadd.s32 %v4507, 127
  %v4509 = vshll.u32 %v4508, 23
  %v4510 = vor.u32 4788187, %v4509
  %v4511 = vand.u32 2147483647, %v4510
  %v4513 = vcvt.s32.f32 %v4506
  %v4514 = vmul.f32 %v4513, %v4511
  %v4515 = vxor.u32 %v4514, 2147483648
  %v4516 = vsel %vm4433, %v4515, %v4514
  %v4517 = vsub.s32 4, %v4493
  %v4518 = vsel %vm4433, %v4517, %v4493
  %v4519 = vsel %vm4432, %v3701, %v4516
  %v4520 = vsel %vm4432, 0, %v4518
  %v4521 = vcosq.f32.pop %v4519
  %v4522 = vsinq.f32.pop %v4519
  %vm4523 = vweird.f32 %v3701
  %v4524 = vand.u32 %v4520, 3
  %vm4525 = vcmp.lt.s32.totalorder %v4524, 2
  %vm4526 = vcmp.eq.s32.totalorder %v4524, 0
  %v4527 = vxor.u32 %v4522, 2147483648
  %v4528 = vsel %vm4526, %v4521, %v4527
  %vm4529 = vcmp.eq.s32.totalorder %v4524, 2
  %v4530 = vxor.u32 %v4521, 2147483648
  %v4531 = vsel %vm4529, %v4530, %v4522
  %v4532 = vsel %vm4525, %v4528, %v4531
  %v4533 = vsel %vm4523, nan, %v4532
  %v4534 = vand.u32 2147483647, %v3702
  %vm4535 = vcmp.le.f32.partialorder %v4534, 0.7853982
  %vm4536 = vcmp.lt.s32.totalorder %v3702, 0
  %v4537 = vand.u32 %v3702, 2139095040
  %v4538 = vshrl.u32 %v4537, 23
  %v4539 = vsub.s32 %v4538, 127
  %v4540 = vand.u32 2147483647, %v3702
  %v4541 = vand.u32 %v4540, 8388607
  %v4542 = vor.u32 %v4541, 8388608
  %v4543 = vsub.s32 0, %v4542
  %v4544 = vadd.s32 %v4539, 1
  %vm4545 = vcmp.gt.s32.totalorder %v4544, 0
  %v4546 = vsel %vm4545, %v4544, 0
  %v4547 = vshrl.u32 %v4546, 5
  %v4548 = vand.u32 %v4546, 31
  %v4549 = vsub.s32 32, %v4548
  %v4550 = vshrl.u32 683565275, %v4549
  %v4551 = vshll.u32 683565275, %v4548
  %v4552 = vshrl.u32 2475754826, %v4549
  %v4553 = vor.u32 %v4551, %v4552
  %v4554 = vshll.u32 2475754826, %v4548
  %v4555 = vshrl.u32 2131351028, %v4549
  %v4556 = vor.u32 %v4554, %v4555
  %v4557 = vshll.u32 2131351028, %v4548
  %v4558 = vshrl.u32 2102212464, %v4549
  %v4559 = vor.u32 %v4557, %v4558
  %v4560 = vshll.u32 2102212464, %v4548
  %v4561 = vshrl.u32 920167782, %v4549
  %v4562 = vor.u32 %v4560, %v4561
  %v4563 = vshll.u32 920167782, %v4548
  %v4564 = vshrl.u32 1326507024, %v4549
  %v4565 = vor.u32 %v4563, %v4564
  %vm4566 = vcmp.lt.s32.totalorder %v4547, 1
  %vm4567 = vcmp.lt.s32.totalorder %v4547, 2
  %vm4568 = vcmp.lt.s32.totalorder %v4547, 3
  %vm4569 = vcmp.lt.s32.totalorder %v4547, 4
  %v4570 = vsel %vm4566, %v4550, %v4553
  %v4571 = vsel %vm4569, %v4559, 2102212464
  %v4572 = vsel %vm4568, %v4556, %v4571
  %v4573 = vsel %vm4567, %v4570, %v4572
  %v4574 = vsel %vm4566, %v4553, %v4556
  %v4575 = vsel %vm4569, %v4562, 920167782
  %v4576 = vsel %vm4568, %v4559, %v4575
  %v4577 = vsel %vm4567, %v4574, %v4576
  %v4578 = vsel %vm4566, %v4556, %v4559
  %v4579 = vsel %vm4569, %v4565, 1326507024
  %v4580 = vsel %vm4568, %v4562, %v4579
  %v4581 = vsel %vm4567, %v4578, %v4580
  %v4582 = vshll.u32 %v4542, 8
  %v4583 = vmul.u32.u64.compose %v4582, %v4581
  %v4584 = vextract.low.u32 %v4583
  %v4585 = vextract.high.u32 %v4583
  %v4586 = vmul.u32.u64.compose %v4582, %v4577
  %v4587 = vextract.low.u32 %v4586
  %v4588 = vextract.high.u32 %v4586
  %v4589 = vmul.u32 %v4582, %v4573
  %v4590 = vadd.s32 %v4585, %v4587
  %vm4591 = vc.u32 %v4585, %v4587
  %v4592 = vadd.s32 %v4588, 1
  %v4593 = vsel %vm4591, %v4592, %v4588
  %v4594 = vadd.s32 %v4589, %v4593
  %v4595 = vadd.s32 %v4594, 536870912
  %v4596 = vshrl.u32 %v4595, 30
  %v4597 = vshll.u32 %v4596, 30
  %v4598 = vsub.s32 %v4594, %v4597
  %vm4599 = vcmp.lt.s32.totalorder %v4598, 0
  %v4600 = vsub.s32 0, %v4598
  %v4601 = vsel %vm4599, %v4600, %v4598
  %v4602 = vclz %v4601
  %v4603 = vsub.s32 %v4602, 2
  %vm4604 = vcmp.gt.s32.totalorder 0, %v4603
  %v4605 = vsel %vm4604, 0, %v4603
  %v4606 = vsub.s32 32, %v4605
  %v4607 = vshll.u32 %v4598, %v4605
  %v4608 = vshrl.u32 %v4590, %v4606
  %v4609 = vor.u32 %v4607, %v4608
  %v4610 = vsub.s32 4294967266, %v4605
  %v4611 = vadd.s32 %v4610, 127
  %v4612 = vshll.u32 %v4611, 23
  %v4613 = vor.u32 4788187, %v4612
  %v4614 = vand.u32 2147483647, %v4613
  %v4616 = vcvt.s32.f32 %v4609
  %v4617 = vmul.f32 %v4616, %v4614
  %v4618 = vxor.u32 %v4617, 2147483648
  %v4619 = vsel %vm4536, %v4618, %v4617
  %v4620 = vsub.s32 4, %v4596
  %v4621 = vsel %vm4536, %v4620, %v4596
  %v4622 = vsel %vm4535, %v3702, %v4619
  %v4623 = vsel %vm4535, 0, %v4621
  %v4624 = vcosq.f32.pop %v4622
  %v4625 = vsinq.f32.pop %v4622
  %vm4626 = vweird.f32 %v3702
  %v4627 = vand.u32 %v4623, 3
  %vm4628 = vcmp.lt.s32.totalorder %v4627, 2
  %vm4629 = vcmp.eq.s32.totalorder %v4627, 0
  %v4630 = vxor.u32 %v4625, 2147483648
  %v4631 = vsel %vm4629, %v4624, %v4630
  %vm4632 = vcmp.eq.s32.totalorder %v4627, 2
  %v4633 = vxor.u32 %v4624, 2147483648
  %v4634 = vsel %vm4632, %v4633, %v4625
  %v4635 = vsel %vm4628, %v4631, %v4634
  %v4636 = vsel %vm4626, nan, %v4635
  %v4637 = vand.u32 2147483647, %v3703
  %vm4638 = vcmp.le.f32.partialorder %v4637, 0.7853982
  %vm4639 = vcmp.lt.s32.totalorder %v3703, 0
  %v4640 = vand.u32 %v3703, 2139095040
  %v4641 = vshrl.u32 %v4640, 23
  %v4642 = vsub.s32 %v4641, 127
  %v4643 = vand.u32 2147483647, %v3703
  %v4644 = vand.u32 %v4643, 8388607
  %v4645 = vor.u32 %v4644, 8388608
  %v4646 = vsub.s32 0, %v4645
  %v4647 = vadd.s32 %v4642, 1
  %vm4648 = vcmp.gt.s32.totalorder %v4647, 0
  %v4649 = vsel %vm4648, %v4647, 0
  %v4650 = vshrl.u32 %v4649, 5
  %v4651 = vand.u32 %v4649, 31
  %v4652 = vsub.s32 32, %v4651
  %v4653 = vshrl.u32 683565275, %v4652
  %v4654 = vshll.u32 683565275, %v4651
  %v4655 = vshrl.u32 2475754826, %v4652
  %v4656 = vor.u32 %v4654, %v4655
  %v4657 = vshll.u32 2475754826, %v4651
  %v4658 = vshrl.u32 2131351028, %v4652
  %v4659 = vor.u32 %v4657, %v4658
  %v4660 = vshll.u32 2131351028, %v4651
  %v4661 = vshrl.u32 2102212464, %v4652
  %v4662 = vor.u32 %v4660, %v4661
  %v4663 = vshll.u32 2102212464, %v4651
  %v4664 = vshrl.u32 920167782, %v4652
  %v4665 = vor.u32 %v4663, %v4664
  %v4666 = vshll.u32 920167782, %v4651
  %v4667 = vshrl.u32 1326507024, %v4652
  %v4668 = vor.u32 %v4666, %v4667
  %vm4669 = vcmp.lt.s32.totalorder %v4650, 1
  %vm4670 = vcmp.lt.s32.totalorder %v4650, 2
  %vm4671 = vcmp.lt.s32.totalorder %v4650, 3
  %vm4672 = vcmp.lt.s32.totalorder %v4650, 4
  %v4673 = vsel %vm4669, %v4653, %v4656
  %v4674 = vsel %vm4672, %v4662, 2102212464
  %v4675 = vsel %vm4671, %v4659, %v4674
  %v4676 = vsel %vm4670, %v4673, %v4675
  %v4677 = vsel %vm4669, %v4656, %v4659
  %v4678 = vsel %vm4672, %v4665, 920167782
  %v4679 = vsel %vm4671, %v4662, %v4678
  %v4680 = vsel %vm4670, %v4677, %v4679
  %v4681 = vsel %vm4669, %v4659, %v4662
  %v4682 = vsel %vm4672, %v4668, 1326507024
  %v4683 = vsel %vm4671, %v4665, %v4682
  %v4684 = vsel %vm4670, %v4681, %v4683
  %v4685 = vshll.u32 %v4645, 8
  %v4686 = vmul.u32.u64.compose %v4685, %v4684
  %v4687 = vextract.low.u32 %v4686
  %v4688 = vextract.high.u32 %v4686
  %v4689 = vmul.u32.u64.compose %v4685, %v4680
  %v4690 = vextract.low.u32 %v4689
  %v4691 = vextract.high.u32 %v4689
  %v4692 = vmul.u32 %v4685, %v4676
  %v4693 = vadd.s32 %v4688, %v4690
  %vm4694 = vc.u32 %v4688, %v4690
  %v4695 = vadd.s32 %v4691, 1
  %v4696 = vsel %vm4694, %v4695, %v4691
  %v4697 = vadd.s32 %v4692, %v4696
  %v4698 = vadd.s32 %v4697, 536870912
  %v4699 = vshrl.u32 %v4698, 30
  %v4700 = vshll.u32 %v4699, 30
  %v4701 = vsub.s32 %v4697, %v4700
  %vm4702 = vcmp.lt.s32.totalorder %v4701, 0
  %v4703 = vsub.s32 0, %v4701
  %v4704 = vsel %vm4702, %v4703, %v4701
  %v4705 = vclz %v4704
  %v4706 = vsub.s32 %v4705, 2
  %vm4707 = vcmp.gt.s32.totalorder 0, %v4706
  %v4708 = vsel %vm4707, 0, %v4706
  %v4709 = vsub.s32 32, %v4708
  %v4710 = vshll.u32 %v4701, %v4708
  %v4711 = vshrl.u32 %v4693, %v4709
  %v4712 = vor.u32 %v4710, %v4711
  %v4713 = vsub.s32 4294967266, %v4708
  %v4714 = vadd.s32 %v4713, 127
  %v4715 = vshll.u32 %v4714, 23
  %v4716 = vor.u32 4788187, %v4715
  %v4717 = vand.u32 2147483647, %v4716
  %v4719 = vcvt.s32.f32 %v4712
  %v4720 = vmul.f32 %v4719, %v4717
  %v4721 = vxor.u32 %v4720, 2147483648
  %v4722 = vsel %vm4639, %v4721, %v4720
  %v4723 = vsub.s32 4, %v4699
  %v4724 = vsel %vm4639, %v4723, %v4699
  %v4725 = vsel %vm4638, %v3703, %v4722
  %v4726 = vsel %vm4638, 0, %v4724
  %v4727 = vcosq.f32.pop %v4725
  %v4728 = vsinq.f32.pop %v4725
  %vm4729 = vweird.f32 %v3703
  %v4730 = vand.u32 %v4726, 3
  %vm4731 = vcmp.lt.s32.totalorder %v4730, 2
  %vm4732 = vcmp.eq.s32.totalorder %v4730, 0
  %v4733 = vxor.u32 %v4728, 2147483648
  %v4734 = vsel %vm4732, %v4727, %v4733
  %vm4735 = vcmp.eq.s32.totalorder %v4730, 2
  %v4736 = vxor.u32 %v4727, 2147483648
  %v4737 = vsel %vm4735, %v4736, %v4728
  %v4738 = vsel %vm4731, %v4734, %v4737
  %v4739 = vsel %vm4729, nan, %v4738
  %v4740 = vand.u32 2147483647, %v3704
  %vm4741 = vcmp.le.f32.partialorder %v4740, 0.7853982
  %vm4742 = vcmp.lt.s32.totalorder %v3704, 0
  %v4743 = vand.u32 %v3704, 2139095040
  %v4744 = vshrl.u32 %v4743, 23
  %v4745 = vsub.s32 %v4744, 127
  %v4746 = vand.u32 2147483647, %v3704
  %v4747 = vand.u32 %v4746, 8388607
  %v4748 = vor.u32 %v4747, 8388608
  %v4749 = vsub.s32 0, %v4748
  %v4750 = vadd.s32 %v4745, 1
  %vm4751 = vcmp.gt.s32.totalorder %v4750, 0
  %v4752 = vsel %vm4751, %v4750, 0
  %v4753 = vshrl.u32 %v4752, 5
  %v4754 = vand.u32 %v4752, 31
  %v4755 = vsub.s32 32, %v4754
  %v4756 = vshrl.u32 683565275, %v4755
  %v4757 = vshll.u32 683565275, %v4754
  %v4758 = vshrl.u32 2475754826, %v4755
  %v4759 = vor.u32 %v4757, %v4758
  %v4760 = vshll.u32 2475754826, %v4754
  %v4761 = vshrl.u32 2131351028, %v4755
  %v4762 = vor.u32 %v4760, %v4761
  %v4763 = vshll.u32 2131351028, %v4754
  %v4764 = vshrl.u32 2102212464, %v4755
  %v4765 = vor.u32 %v4763, %v4764
  %v4766 = vshll.u32 2102212464, %v4754
  %v4767 = vshrl.u32 920167782, %v4755
  %v4768 = vor.u32 %v4766, %v4767
  %v4769 = vshll.u32 920167782, %v4754
  %v4770 = vshrl.u32 1326507024, %v4755
  %v4771 = vor.u32 %v4769, %v4770
  %vm4772 = vcmp.lt.s32.totalorder %v4753, 1
  %vm4773 = vcmp.lt.s32.totalorder %v4753, 2
  %vm4774 = vcmp.lt.s32.totalorder %v4753, 3
  %vm4775 = vcmp.lt.s32.totalorder %v4753, 4
  %v4776 = vsel %vm4772, %v4756, %v4759
  %v4777 = vsel %vm4775, %v4765, 2102212464
  %v4778 = vsel %vm4774, %v4762, %v4777
  %v4779 = vsel %vm4773, %v4776, %v4778
  %v4780 = vsel %vm4772, %v4759, %v4762
  %v4781 = vsel %vm4775, %v4768, 920167782
  %v4782 = vsel %vm4774, %v4765, %v4781
  %v4783 = vsel %vm4773, %v4780, %v4782
  %v4784 = vsel %vm4772, %v4762, %v4765
  %v4785 = vsel %vm4775, %v4771, 1326507024
  %v4786 = vsel %vm4774, %v4768, %v4785
  %v4787 = vsel %vm4773, %v4784, %v4786
  %v4788 = vshll.u32 %v4748, 8
  %v4789 = vmul.u32.u64.compose %v4788, %v4787
  %v4790 = vextract.low.u32 %v4789
  %v4791 = vextract.high.u32 %v4789
  %v4792 = vmul.u32.u64.compose %v4788, %v4783
  %v4793 = vextract.low.u32 %v4792
  %v4794 = vextract.high.u32 %v4792
  %v4795 = vmul.u32 %v4788, %v4779
  %v4796 = vadd.s32 %v4791, %v4793
  %vm4797 = vc.u32 %v4791, %v4793
  %v4798 = vadd.s32 %v4794, 1
  %v4799 = vsel %vm4797, %v4798, %v4794
  %v4800 = vadd.s32 %v4795, %v4799
  %v4801 = vadd.s32 %v4800, 536870912
  %v4802 = vshrl.u32 %v4801, 30
  %v4803 = vshll.u32 %v4802, 30
  %v4804 = vsub.s32 %v4800, %v4803
  %vm4805 = vcmp.lt.s32.totalorder %v4804, 0
  %v4806 = vsub.s32 0, %v4804
  %v4807 = vsel %vm4805, %v4806, %v4804
  %v4808 = vclz %v4807
  %v4809 = vsub.s32 %v4808, 2
  %vm4810 = vcmp.gt.s32.totalorder 0, %v4809
  %v4811 = vsel %vm4810, 0, %v4809
  %v4812 = vsub.s32 32, %v4811
  %v4813 = vshll.u32 %v4804, %v4811
  %v4814 = vshrl.u32 %v4796, %v4812
  %v4815 = vor.u32 %v4813, %v4814
  %v4816 = vsub.s32 4294967266, %v4811
  %v4817 = vadd.s32 %v4816, 127
  %v4818 = vshll.u32 %v4817, 23
  %v4819 = vor.u32 4788187, %v4818
  %v4820 = vand.u32 2147483647, %v4819
  %v4822 = vcvt.s32.f32 %v4815
  %v4823 = vmul.f32 %v4822, %v4820
  %v4824 = vxor.u32 %v4823, 2147483648
  %v4825 = vsel %vm4742, %v4824, %v4823
  %v4826 = vsub.s32 4, %v4802
  %v4827 = vsel %vm4742, %v4826, %v4802
  %v4828 = vsel %vm4741, %v3704, %v4825
  %v4829 = vsel %vm4741, 0, %v4827
  %v4830 = vcosq.f32.pop %v4828
  %v4831 = vsinq.f32.pop %v4828
  %vm4832 = vweird.f32 %v3704
  %v4833 = vand.u32 %v4829, 3
  %vm4834 = vcmp.lt.s32.totalorder %v4833, 2
  %vm4835 = vcmp.eq.s32.totalorder %v4833, 0
  %v4836 = vxor.u32 %v4831, 2147483648
  %v4837 = vsel %vm4835, %v4830, %v4836
  %vm4838 = vcmp.eq.s32.totalorder %v4833, 2
  %v4839 = vxor.u32 %v4830, 2147483648
  %v4840 = vsel %vm4838, %v4839, %v4831
  %v4841 = vsel %vm4834, %v4837, %v4840
  %v4842 = vsel %vm4832, nan, %v4841
  %v4843 = vand.u32 2147483647, %v3705
  %vm4844 = vcmp.le.f32.partialorder %v4843, 0.7853982
  %vm4845 = vcmp.lt.s32.totalorder %v3705, 0
  %v4846 = vand.u32 %v3705, 2139095040
  %v4847 = vshrl.u32 %v4846, 23
  %v4848 = vsub.s32 %v4847, 127
  %v4849 = vand.u32 2147483647, %v3705
  %v4850 = vand.u32 %v4849, 8388607
  %v4851 = vor.u32 %v4850, 8388608
  %v4852 = vsub.s32 0, %v4851
  %v4853 = vadd.s32 %v4848, 1
  %vm4854 = vcmp.gt.s32.totalorder %v4853, 0
  %v4855 = vsel %vm4854, %v4853, 0
  %v4856 = vshrl.u32 %v4855, 5
  %v4857 = vand.u32 %v4855, 31
  %v4858 = vsub.s32 32, %v4857
  %v4859 = vshrl.u32 683565275, %v4858
  %v4860 = vshll.u32 683565275, %v4857
  %v4861 = vshrl.u32 2475754826, %v4858
  %v4862 = vor.u32 %v4860, %v4861
  %v4863 = vshll.u32 2475754826, %v4857
  %v4864 = vshrl.u32 2131351028, %v4858
  %v4865 = vor.u32 %v4863, %v4864
  %v4866 = vshll.u32 2131351028, %v4857
  %v4867 = vshrl.u32 2102212464, %v4858
  %v4868 = vor.u32 %v4866, %v4867
  %v4869 = vshll.u32 2102212464, %v4857
  %v4870 = vshrl.u32 920167782, %v4858
  %v4871 = vor.u32 %v4869, %v4870
  %v4872 = vshll.u32 920167782, %v4857
  %v4873 = vshrl.u32 1326507024, %v4858
  %v4874 = vor.u32 %v4872, %v4873
  %vm4875 = vcmp.lt.s32.totalorder %v4856, 1
  %vm4876 = vcmp.lt.s32.totalorder %v4856, 2
  %vm4877 = vcmp.lt.s32.totalorder %v4856, 3
  %vm4878 = vcmp.lt.s32.totalorder %v4856, 4
  %v4879 = vsel %vm4875, %v4859, %v4862
  %v4880 = vsel %vm4878, %v4868, 2102212464
  %v4881 = vsel %vm4877, %v4865, %v4880
  %v4882 = vsel %vm4876, %v4879, %v4881
  %v4883 = vsel %vm4875, %v4862, %v4865
  %v4884 = vsel %vm4878, %v4871, 920167782
  %v4885 = vsel %vm4877, %v4868, %v4884
  %v4886 = vsel %vm4876, %v4883, %v4885
  %v4887 = vsel %vm4875, %v4865, %v4868
  %v4888 = vsel %vm4878, %v4874, 1326507024
  %v4889 = vsel %vm4877, %v4871, %v4888
  %v4890 = vsel %vm4876, %v4887, %v4889
  %v4891 = vshll.u32 %v4851, 8
  %v4892 = vmul.u32.u64.compose %v4891, %v4890
  %v4893 = vextract.low.u32 %v4892
  %v4894 = vextract.high.u32 %v4892
  %v4895 = vmul.u32.u64.compose %v4891, %v4886
  %v4896 = vextract.low.u32 %v4895
  %v4897 = vextract.high.u32 %v4895
  %v4898 = vmul.u32 %v4891, %v4882
  %v4899 = vadd.s32 %v4894, %v4896
  %vm4900 = vc.u32 %v4894, %v4896
  %v4901 = vadd.s32 %v4897, 1
  %v4902 = vsel %vm4900, %v4901, %v4897
  %v4903 = vadd.s32 %v4898, %v4902
  %v4904 = vadd.s32 %v4903, 536870912
  %v4905 = vshrl.u32 %v4904, 30
  %v4906 = vshll.u32 %v4905, 30
  %v4907 = vsub.s32 %v4903, %v4906
  %vm4908 = vcmp.lt.s32.totalorder %v4907, 0
  %v4909 = vsub.s32 0, %v4907
  %v4910 = vsel %vm4908, %v4909, %v4907
  %v4911 = vclz %v4910
  %v4912 = vsub.s32 %v4911, 2
  %vm4913 = vcmp.gt.s32.totalorder 0, %v4912
  %v4914 = vsel %vm4913, 0, %v4912
  %v4915 = vsub.s32 32, %v4914
  %v4916 = vshll.u32 %v4907, %v4914
  %v4917 = vshrl.u32 %v4899, %v4915
  %v4918 = vor.u32 %v4916, %v4917
  %v4919 = vsub.s32 4294967266, %v4914
  %v4920 = vadd.s32 %v4919, 127
  %v4921 = vshll.u32 %v4920, 23
  %v4922 = vor.u32 4788187, %v4921
  %v4923 = vand.u32 2147483647, %v4922
  %v4925 = vcvt.s32.f32 %v4918
  %v4926 = vmul.f32 %v4925, %v4923
  %v4927 = vxor.u32 %v4926, 2147483648
  %v4928 = vsel %vm4845, %v4927, %v4926
  %v4929 = vsub.s32 4, %v4905
  %v4930 = vsel %vm4845, %v4929, %v4905
  %v4931 = vsel %vm4844, %v3705, %v4928
  %v4932 = vsel %vm4844, 0, %v4930
  %v4933 = vcosq.f32.pop %v4931
  %v4934 = vsinq.f32.pop %v4931
  %vm4935 = vweird.f32 %v3705
  %v4936 = vand.u32 %v4932, 3
  %vm4937 = vcmp.lt.s32.totalorder %v4936, 2
  %vm4938 = vcmp.eq.s32.totalorder %v4936, 0
  %v4939 = vxor.u32 %v4934, 2147483648
  %v4940 = vsel %vm4938, %v4933, %v4939
  %vm4941 = vcmp.eq.s32.totalorder %v4936, 2
  %v4942 = vxor.u32 %v4933, 2147483648
  %v4943 = vsel %vm4941, %v4942, %v4934
  %v4944 = vsel %vm4937, %v4940, %v4943
  %v4945 = vsel %vm4935, nan, %v4944
  %v4946 = vand.u32 2147483647, %v3706
  %vm4947 = vcmp.le.f32.partialorder %v4946, 0.7853982
  %vm4948 = vcmp.lt.s32.totalorder %v3706, 0
  %v4949 = vand.u32 %v3706, 2139095040
  %v4950 = vshrl.u32 %v4949, 23
  %v4951 = vsub.s32 %v4950, 127
  %v4952 = vand.u32 2147483647, %v3706
  %v4953 = vand.u32 %v4952, 8388607
  %v4954 = vor.u32 %v4953, 8388608
  %v4955 = vsub.s32 0, %v4954
  %v4956 = vadd.s32 %v4951, 1
  %vm4957 = vcmp.gt.s32.totalorder %v4956, 0
  %v4958 = vsel %vm4957, %v4956, 0
  %v4959 = vshrl.u32 %v4958, 5
  %v4960 = vand.u32 %v4958, 31
  %v4961 = vsub.s32 32, %v4960
  %v4962 = vshrl.u32 683565275, %v4961
  %v4963 = vshll.u32 683565275, %v4960
  %v4964 = vshrl.u32 2475754826, %v4961
  %v4965 = vor.u32 %v4963, %v4964
  %v4966 = vshll.u32 2475754826, %v4960
  %v4967 = vshrl.u32 2131351028, %v4961
  %v4968 = vor.u32 %v4966, %v4967
  %v4969 = vshll.u32 2131351028, %v4960
  %v4970 = vshrl.u32 2102212464, %v4961
  %v4971 = vor.u32 %v4969, %v4970
  %v4972 = vshll.u32 2102212464, %v4960
  %v4973 = vshrl.u32 920167782, %v4961
  %v4974 = vor.u32 %v4972, %v4973
  %v4975 = vshll.u32 920167782, %v4960
  %v4976 = vshrl.u32 1326507024, %v4961
  %v4977 = vor.u32 %v4975, %v4976
  %vm4978 = vcmp.lt.s32.totalorder %v4959, 1
  %vm4979 = vcmp.lt.s32.totalorder %v4959, 2
  %vm4980 = vcmp.lt.s32.totalorder %v4959, 3
  %vm4981 = vcmp.lt.s32.totalorder %v4959, 4
  %v4982 = vsel %vm4978, %v4962, %v4965
  %v4983 = vsel %vm4981, %v4971, 2102212464
  %v4984 = vsel %vm4980, %v4968, %v4983
  %v4985 = vsel %vm4979, %v4982, %v4984
  %v4986 = vsel %vm4978, %v4965, %v4968
  %v4987 = vsel %vm4981, %v4974, 920167782
  %v4988 = vsel %vm4980, %v4971, %v4987
  %v4989 = vsel %vm4979, %v4986, %v4988
  %v4990 = vsel %vm4978, %v4968, %v4971
  %v4991 = vsel %vm4981, %v4977, 1326507024
  %v4992 = vsel %vm4980, %v4974, %v4991
  %v4993 = vsel %vm4979, %v4990, %v4992
  %v4994 = vshll.u32 %v4954, 8
  %v4995 = vmul.u32.u64.compose %v4994, %v4993
  %v4996 = vextract.low.u32 %v4995
  %v4997 = vextract.high.u32 %v4995
  %v4998 = vmul.u32.u64.compose %v4994, %v4989
  %v4999 = vextract.low.u32 %v4998
  %v5000 = vextract.high.u32 %v4998
  %v5001 = vmul.u32 %v4994, %v4985
  %v5002 = vadd.s32 %v4997, %v4999
  %vm5003 = vc.u32 %v4997, %v4999
  %v5004 = vadd.s32 %v5000, 1
  %v5005 = vsel %vm5003, %v5004, %v5000
  %v5006 = vadd.s32 %v5001, %v5005
  %v5007 = vadd.s32 %v5006, 536870912
  %v5008 = vshrl.u32 %v5007, 30
  %v5009 = vshll.u32 %v5008, 30
  %v5010 = vsub.s32 %v5006, %v5009
  %vm5011 = vcmp.lt.s32.totalorder %v5010, 0
  %v5012 = vsub.s32 0, %v5010
  %v5013 = vsel %vm5011, %v5012, %v5010
  %v5014 = vclz %v5013
  %v5015 = vsub.s32 %v5014, 2
  %vm5016 = vcmp.gt.s32.totalorder 0, %v5015
  %v5017 = vsel %vm5016, 0, %v5015
  %v5018 = vsub.s32 32, %v5017
  %v5019 = vshll.u32 %v5010, %v5017
  %v5020 = vshrl.u32 %v5002, %v5018
  %v5021 = vor.u32 %v5019, %v5020
  %v5022 = vsub.s32 4294967266, %v5017
  %v5023 = vadd.s32 %v5022, 127
  %v5024 = vshll.u32 %v5023, 23
  %v5025 = vor.u32 4788187, %v5024
  %v5026 = vand.u32 2147483647, %v5025
  %v5028 = vcvt.s32.f32 %v5021
  %v5029 = vmul.f32 %v5028, %v5026
  %v5030 = vxor.u32 %v5029, 2147483648
  %v5031 = vsel %vm4948, %v5030, %v5029
  %v5032 = vsub.s32 4, %v5008
  %v5033 = vsel %vm4948, %v5032, %v5008
  %v5034 = vsel %vm4947, %v3706, %v5031
  %v5035 = vsel %vm4947, 0, %v5033
  %v5036 = vcosq.f32.pop %v5034
  %v5037 = vsinq.f32.pop %v5034
  %vm5038 = vweird.f32 %v3706
  %v5039 = vand.u32 %v5035, 3
  %vm5040 = vcmp.lt.s32.totalorder %v5039, 2
  %vm5041 = vcmp.eq.s32.totalorder %v5039, 0
  %v5042 = vxor.u32 %v5037, 2147483648
  %v5043 = vsel %vm5041, %v5036, %v5042
  %vm5044 = vcmp.eq.s32.totalorder %v5039, 2
  %v5045 = vxor.u32 %v5036, 2147483648
  %v5046 = vsel %vm5044, %v5045, %v5037
  %v5047 = vsel %vm5040, %v5043, %v5046
  %v5048 = vsel %vm5038, nan, %v5047
  %v5049 = vand.u32 2147483647, %v3707
  %vm5050 = vcmp.le.f32.partialorder %v5049, 0.7853982
  %vm5051 = vcmp.lt.s32.totalorder %v3707, 0
  %v5052 = vand.u32 %v3707, 2139095040
  %v5053 = vshrl.u32 %v5052, 23
  %v5054 = vsub.s32 %v5053, 127
  %v5055 = vand.u32 2147483647, %v3707
  %v5056 = vand.u32 %v5055, 8388607
  %v5057 = vor.u32 %v5056, 8388608
  %v5058 = vsub.s32 0, %v5057
  %v5059 = vadd.s32 %v5054, 1
  %vm5060 = vcmp.gt.s32.totalorder %v5059, 0
  %v5061 = vsel %vm5060, %v5059, 0
  %v5062 = vshrl.u32 %v5061, 5
  %v5063 = vand.u32 %v5061, 31
  %v5064 = vsub.s32 32, %v5063
  %v5065 = vshrl.u32 683565275, %v5064
  %v5066 = vshll.u32 683565275, %v5063
  %v5067 = vshrl.u32 2475754826, %v5064
  %v5068 = vor.u32 %v5066, %v5067
  %v5069 = vshll.u32 2475754826, %v5063
  %v5070 = vshrl.u32 2131351028, %v5064
  %v5071 = vor.u32 %v5069, %v5070
  %v5072 = vshll.u32 2131351028, %v5063
  %v5073 = vshrl.u32 2102212464, %v5064
  %v5074 = vor.u32 %v5072, %v5073
  %v5075 = vshll.u32 2102212464, %v5063
  %v5076 = vshrl.u32 920167782, %v5064
  %v5077 = vor.u32 %v5075, %v5076
  %v5078 = vshll.u32 920167782, %v5063
  %v5079 = vshrl.u32 1326507024, %v5064
  %v5080 = vor.u32 %v5078, %v5079
  %vm5081 = vcmp.lt.s32.totalorder %v5062, 1
  %vm5082 = vcmp.lt.s32.totalorder %v5062, 2
  %vm5083 = vcmp.lt.s32.totalorder %v5062, 3
  %vm5084 = vcmp.lt.s32.totalorder %v5062, 4
  %v5085 = vsel %vm5081, %v5065, %v5068
  %v5086 = vsel %vm5084, %v5074, 2102212464
  %v5087 = vsel %vm5083, %v5071, %v5086
  %v5088 = vsel %vm5082, %v5085, %v5087
  %v5089 = vsel %vm5081, %v5068, %v5071
  %v5090 = vsel %vm5084, %v5077, 920167782
  %v5091 = vsel %vm5083, %v5074, %v5090
  %v5092 = vsel %vm5082, %v5089, %v5091
  %v5093 = vsel %vm5081, %v5071, %v5074
  %v5094 = vsel %vm5084, %v5080, 1326507024
  %v5095 = vsel %vm5083, %v5077, %v5094
  %v5096 = vsel %vm5082, %v5093, %v5095
  %v5097 = vshll.u32 %v5057, 8
  %v5098 = vmul.u32.u64.compose %v5097, %v5096
  %v5099 = vextract.low.u32 %v5098
  %v5100 = vextract.high.u32 %v5098
  %v5101 = vmul.u32.u64.compose %v5097, %v5092
  %v5102 = vextract.low.u32 %v5101
  %v5103 = vextract.high.u32 %v5101
  %v5104 = vmul.u32 %v5097, %v5088
  %v5105 = vadd.s32 %v5100, %v5102
  %vm5106 = vc.u32 %v5100, %v5102
  %v5107 = vadd.s32 %v5103, 1
  %v5108 = vsel %vm5106, %v5107, %v5103
  %v5109 = vadd.s32 %v5104, %v5108
  %v5110 = vadd.s32 %v5109, 536870912
  %v5111 = vshrl.u32 %v5110, 30
  %v5112 = vshll.u32 %v5111, 30
  %v5113 = vsub.s32 %v5109, %v5112
  %vm5114 = vcmp.lt.s32.totalorder %v5113, 0
  %v5115 = vsub.s32 0, %v5113
  %v5116 = vsel %vm5114, %v5115, %v5113
  %v5117 = vclz %v5116
  %v5118 = vsub.s32 %v5117, 2
  %vm5119 = vcmp.gt.s32.totalorder 0, %v5118
  %v5120 = vsel %vm5119, 0, %v5118
  %v5121 = vsub.s32 32, %v5120
  %v5122 = vshll.u32 %v5113, %v5120
  %v5123 = vshrl.u32 %v5105, %v5121
  %v5124 = vor.u32 %v5122, %v5123
  %v5125 = vsub.s32 4294967266, %v5120
  %v5126 = vadd.s32 %v5125, 127
  %v5127 = vshll.u32 %v5126, 23
  %v5128 = vor.u32 4788187, %v5127
  %v5129 = vand.u32 2147483647, %v5128
  %v5131 = vcvt.s32.f32 %v5124
  %v5132 = vmul.f32 %v5131, %v5129
  %v5133 = vxor.u32 %v5132, 2147483648
  %v5134 = vsel %vm5051, %v5133, %v5132
  %v5135 = vsub.s32 4, %v5111
  %v5136 = vsel %vm5051, %v5135, %v5111
  %v5137 = vsel %vm5050, %v3707, %v5134
  %v5138 = vsel %vm5050, 0, %v5136
  %v5139 = vcosq.f32.pop %v5137
  %v5140 = vsinq.f32.pop %v5137
  %vm5141 = vweird.f32 %v3707
  %v5142 = vand.u32 %v5138, 3
  %vm5143 = vcmp.lt.s32.totalorder %v5142, 2
  %vm5144 = vcmp.eq.s32.totalorder %v5142, 0
  %v5145 = vxor.u32 %v5140, 2147483648
  %v5146 = vsel %vm5144, %v5139, %v5145
  %vm5147 = vcmp.eq.s32.totalorder %v5142, 2
  %v5148 = vxor.u32 %v5139, 2147483648
  %v5149 = vsel %vm5147, %v5148, %v5140
  %v5150 = vsel %vm5143, %v5146, %v5149
  %v5151 = vsel %vm5141, nan, %v5150
  %v5152 = vand.u32 2147483647, %v3708
  %vm5153 = vcmp.le.f32.partialorder %v5152, 0.7853982
  %vm5154 = vcmp.lt.s32.totalorder %v3708, 0
  %v5155 = vand.u32 %v3708, 2139095040
  %v5156 = vshrl.u32 %v5155, 23
  %v5157 = vsub.s32 %v5156, 127
  %v5158 = vand.u32 2147483647, %v3708
  %v5159 = vand.u32 %v5158, 8388607
  %v5160 = vor.u32 %v5159, 8388608
  %v5161 = vsub.s32 0, %v5160
  %v5162 = vadd.s32 %v5157, 1
  %vm5163 = vcmp.gt.s32.totalorder %v5162, 0
  %v5164 = vsel %vm5163, %v5162, 0
  %v5165 = vshrl.u32 %v5164, 5
  %v5166 = vand.u32 %v5164, 31
  %v5167 = vsub.s32 32, %v5166
  %v5168 = vshrl.u32 683565275, %v5167
  %v5169 = vshll.u32 683565275, %v5166
  %v5170 = vshrl.u32 2475754826, %v5167
  %v5171 = vor.u32 %v5169, %v5170
  %v5172 = vshll.u32 2475754826, %v5166
  %v5173 = vshrl.u32 2131351028, %v5167
  %v5174 = vor.u32 %v5172, %v5173
  %v5175 = vshll.u32 2131351028, %v5166
  %v5176 = vshrl.u32 2102212464, %v5167
  %v5177 = vor.u32 %v5175, %v5176
  %v5178 = vshll.u32 2102212464, %v5166
  %v5179 = vshrl.u32 920167782, %v5167
  %v5180 = vor.u32 %v5178, %v5179
  %v5181 = vshll.u32 920167782, %v5166
  %v5182 = vshrl.u32 1326507024, %v5167
  %v5183 = vor.u32 %v5181, %v5182
  %vm5184 = vcmp.lt.s32.totalorder %v5165, 1
  %vm5185 = vcmp.lt.s32.totalorder %v5165, 2
  %vm5186 = vcmp.lt.s32.totalorder %v5165, 3
  %vm5187 = vcmp.lt.s32.totalorder %v5165, 4
  %v5188 = vsel %vm5184, %v5168, %v5171
  %v5189 = vsel %vm5187, %v5177, 2102212464
  %v5190 = vsel %vm5186, %v5174, %v5189
  %v5191 = vsel %vm5185, %v5188, %v5190
  %v5192 = vsel %vm5184, %v5171, %v5174
  %v5193 = vsel %vm5187, %v5180, 920167782
  %v5194 = vsel %vm5186, %v5177, %v5193
  %v5195 = vsel %vm5185, %v5192, %v5194
  %v5196 = vsel %vm5184, %v5174, %v5177
  %v5197 = vsel %vm5187, %v5183, 1326507024
  %v5198 = vsel %vm5186, %v5180, %v5197
  %v5199 = vsel %vm5185, %v5196, %v5198
  %v5200 = vshll.u32 %v5160, 8
  %v5201 = vmul.u32.u64.compose %v5200, %v5199
  %v5202 = vextract.low.u32 %v5201
  %v5203 = vextract.high.u32 %v5201
  %v5204 = vmul.u32.u64.compose %v5200, %v5195
  %v5205 = vextract.low.u32 %v5204
  %v5206 = vextract.high.u32 %v5204
  %v5207 = vmul.u32 %v5200, %v5191
  %v5208 = vadd.s32 %v5203, %v5205
  %vm5209 = vc.u32 %v5203, %v5205
  %v5210 = vadd.s32 %v5206, 1
  %v5211 = vsel %vm5209, %v5210, %v5206
  %v5212 = vadd.s32 %v5207, %v5211
  %v5213 = vadd.s32 %v5212, 536870912
  %v5214 = vshrl.u32 %v5213, 30
  %v5215 = vshll.u32 %v5214, 30
  %v5216 = vsub.s32 %v5212, %v5215
  %vm5217 = vcmp.lt.s32.totalorder %v5216, 0
  %v5218 = vsub.s32 0, %v5216
  %v5219 = vsel %vm5217, %v5218, %v5216
  %v5220 = vclz %v5219
  %v5221 = vsub.s32 %v5220, 2
  %vm5222 = vcmp.gt.s32.totalorder 0, %v5221
  %v5223 = vsel %vm5222, 0, %v5221
  %v5224 = vsub.s32 32, %v5223
  %v5225 = vshll.u32 %v5216, %v5223
  %v5226 = vshrl.u32 %v5208, %v5224
  %v5227 = vor.u32 %v5225, %v5226
  %v5228 = vsub.s32 4294967266, %v5223
  %v5229 = vadd.s32 %v5228, 127
  %v5230 = vshll.u32 %v5229, 23
  %v5231 = vor.u32 4788187, %v5230
  %v5232 = vand.u32 2147483647, %v5231
  %v5234 = vcvt.s32.f32 %v5227
  %v5235 = vmul.f32 %v5234, %v5232
  %v5236 = vxor.u32 %v5235, 2147483648
  %v5237 = vsel %vm5154, %v5236, %v5235
  %v5238 = vsub.s32 4, %v5214
  %v5239 = vsel %vm5154, %v5238, %v5214
  %v5240 = vsel %vm5153, %v3708, %v5237
  %v5241 = vsel %vm5153, 0, %v5239
  %v5242 = vcosq.f32.pop %v5240
  %v5243 = vsinq.f32.pop %v5240
  %vm5244 = vweird.f32 %v3708
  %v5245 = vand.u32 %v5241, 3
  %vm5246 = vcmp.lt.s32.totalorder %v5245, 2
  %vm5247 = vcmp.eq.s32.totalorder %v5245, 0
  %v5248 = vxor.u32 %v5243, 2147483648
  %v5249 = vsel %vm5247, %v5242, %v5248
  %vm5250 = vcmp.eq.s32.totalorder %v5245, 2
  %v5251 = vxor.u32 %v5242, 2147483648
  %v5252 = vsel %vm5250, %v5251, %v5243
  %v5253 = vsel %vm5246, %v5249, %v5252
  %v5254 = vsel %vm5244, nan, %v5253
  %v5255 = vand.u32 2147483647, %v3709
  %vm5256 = vcmp.le.f32.partialorder %v5255, 0.7853982
  %vm5257 = vcmp.lt.s32.totalorder %v3709, 0
  %v5258 = vand.u32 %v3709, 2139095040
  %v5259 = vshrl.u32 %v5258, 23
  %v5260 = vsub.s32 %v5259, 127
  %v5261 = vand.u32 2147483647, %v3709
  %v5262 = vand.u32 %v5261, 8388607
  %v5263 = vor.u32 %v5262, 8388608
  %v5264 = vsub.s32 0, %v5263
  %v5265 = vadd.s32 %v5260, 1
  %vm5266 = vcmp.gt.s32.totalorder %v5265, 0
  %v5267 = vsel %vm5266, %v5265, 0
  %v5268 = vshrl.u32 %v5267, 5
  %v5269 = vand.u32 %v5267, 31
  %v5270 = vsub.s32 32, %v5269
  %v5271 = vshrl.u32 683565275, %v5270
  %v5272 = vshll.u32 683565275, %v5269
  %v5273 = vshrl.u32 2475754826, %v5270
  %v5274 = vor.u32 %v5272, %v5273
  %v5275 = vshll.u32 2475754826, %v5269
  %v5276 = vshrl.u32 2131351028, %v5270
  %v5277 = vor.u32 %v5275, %v5276
  %v5278 = vshll.u32 2131351028, %v5269
  %v5279 = vshrl.u32 2102212464, %v5270
  %v5280 = vor.u32 %v5278, %v5279
  %v5281 = vshll.u32 2102212464, %v5269
  %v5282 = vshrl.u32 920167782, %v5270
  %v5283 = vor.u32 %v5281, %v5282
  %v5284 = vshll.u32 920167782, %v5269
  %v5285 = vshrl.u32 1326507024, %v5270
  %v5286 = vor.u32 %v5284, %v5285
  %vm5287 = vcmp.lt.s32.totalorder %v5268, 1
  %vm5288 = vcmp.lt.s32.totalorder %v5268, 2
  %vm5289 = vcmp.lt.s32.totalorder %v5268, 3
  %vm5290 = vcmp.lt.s32.totalorder %v5268, 4
  %v5291 = vsel %vm5287, %v5271, %v5274
  %v5292 = vsel %vm5290, %v5280, 2102212464
  %v5293 = vsel %vm5289, %v5277, %v5292
  %v5294 = vsel %vm5288, %v5291, %v5293
  %v5295 = vsel %vm5287, %v5274, %v5277
  %v5296 = vsel %vm5290, %v5283, 920167782
  %v5297 = vsel %vm5289, %v5280, %v5296
  %v5298 = vsel %vm5288, %v5295, %v5297
  %v5299 = vsel %vm5287, %v5277, %v5280
  %v5300 = vsel %vm5290, %v5286, 1326507024
  %v5301 = vsel %vm5289, %v5283, %v5300
  %v5302 = vsel %vm5288, %v5299, %v5301
  %v5303 = vshll.u32 %v5263, 8
  %v5304 = vmul.u32.u64.compose %v5303, %v5302
  %v5305 = vextract.low.u32 %v5304
  %v5306 = vextract.high.u32 %v5304
  %v5307 = vmul.u32.u64.compose %v5303, %v5298
  %v5308 = vextract.low.u32 %v5307
  %v5309 = vextract.high.u32 %v5307
  %v5310 = vmul.u32 %v5303, %v5294
  %v5311 = vadd.s32 %v5306, %v5308
  %vm5312 = vc.u32 %v5306, %v5308
  %v5313 = vadd.s32 %v5309, 1
  %v5314 = vsel %vm5312, %v5313, %v5309
  %v5315 = vadd.s32 %v5310, %v5314
  %v5316 = vadd.s32 %v5315, 536870912
  %v5317 = vshrl.u32 %v5316, 30
  %v5318 = vshll.u32 %v5317, 30
  %v5319 = vsub.s32 %v5315, %v5318
  %vm5320 = vcmp.lt.s32.totalorder %v5319, 0
  %v5321 = vsub.s32 0, %v5319
  %v5322 = vsel %vm5320, %v5321, %v5319
  %v5323 = vclz %v5322
  %v5324 = vsub.s32 %v5323, 2
  %vm5325 = vcmp.gt.s32.totalorder 0, %v5324
  %v5326 = vsel %vm5325, 0, %v5324
  %v5327 = vsub.s32 32, %v5326
  %v5328 = vshll.u32 %v5319, %v5326
  %v5329 = vshrl.u32 %v5311, %v5327
  %v5330 = vor.u32 %v5328, %v5329
  %v5331 = vsub.s32 4294967266, %v5326
  %v5332 = vadd.s32 %v5331, 127
  %v5333 = vshll.u32 %v5332, 23
  %v5334 = vor.u32 4788187, %v5333
  %v5335 = vand.u32 2147483647, %v5334
  %v5337 = vcvt.s32.f32 %v5330
  %v5338 = vmul.f32 %v5337, %v5335
  %v5339 = vxor.u32 %v5338, 2147483648
  %v5340 = vsel %vm5257, %v5339, %v5338
  %v5341 = vsub.s32 4, %v5317
  %v5342 = vsel %vm5257, %v5341, %v5317
  %v5343 = vsel %vm5256, %v3709, %v5340
  %v5344 = vsel %vm5256, 0, %v5342
  %v5345 = vcosq.f32.pop %v5343
  %v5346 = vsinq.f32.pop %v5343
  %vm5347 = vweird.f32 %v3709
  %v5348 = vand.u32 %v5344, 3
  %vm5349 = vcmp.lt.s32.totalorder %v5348, 2
  %vm5350 = vcmp.eq.s32.totalorder %v5348, 0
  %v5351 = vxor.u32 %v5346, 2147483648
  %v5352 = vsel %vm5350, %v5345, %v5351
  %vm5353 = vcmp.eq.s32.totalorder %v5348, 2
  %v5354 = vxor.u32 %v5345, 2147483648
  %v5355 = vsel %vm5353, %v5354, %v5346
  %v5356 = vsel %vm5349, %v5352, %v5355
  %v5357 = vsel %vm5347, nan, %v5356
  %v5358 = vpack.c.bf16 %v3915, %v3812
  %v5359 = vpack.c.bf16 %v4121, %v4018
  %v5360 = vpack.c.bf16 %v4327, %v4224
  %v5361 = vpack.c.bf16 %v4533, %v4430
  %v5362 = vpack.c.bf16 %v4739, %v4636
  %v5363 = vpack.c.bf16 %v4945, %v4842
  %v5364 = vpack.c.bf16 %v5151, %v5048
  %v5365 = vpack.c.bf16 %v5357, %v5254
  %v5367 = vsel %vm1711, %v5358, 0
  %v5370 = vsel %vm1711, %v5359, 0
  %v5373 = vsel %vm1711, %v5360, 0
  %v5376 = vsel %vm1711, %v5361, 0
  %v5379 = vsel %vm1711, %v5362, 0
  %v5382 = vsel %vm1711, %v5363, 0
  %v5385 = vsel %vm1711, %v5364, 0
  %v5388 = vsel %vm1711, %v5365, 0
  %5390 = vmatprep.subr.bf16.mxu0 0
  %5391 = vmatpush1.bf16.msra.mxu0 %v1738
  %5392 = vmatprep.subr.bf16.mxu0 0
  %5393 = vmatpush1.bf16.msra.mxu0 0
  %5394 = vmatprep.subr.bf16.mxu0 0
  %5395 = vmatpush1.bf16.msra.mxu0 0
  %5396 = vmatprep.subr.bf16.mxu0 0
  %5397 = vmatpush1.bf16.msra.mxu0 0
  %5398 = vmatprep.subr.bf16.mxu0 0
  %5399 = vmatpush1.bf16.msra.mxu0 0
  %5400 = vmatprep.subr.bf16.mxu0 0
  %5401 = vmatpush1.bf16.msra.mxu0 0
  %5402 = vmatprep.subr.bf16.mxu0 0
  %5403 = vmatpush1.bf16.msra.mxu0 0
  %5404 = vmatprep.subr.bf16.mxu0 0
  %5405 = vmatpush1.bf16.msra.mxu0 0
  %5406 = vmatprep.subr.bf16.mxu0 0
  %5407 = vmatpush1.bf16.msra.mxu0 0
  %5408 = vmatprep.subr.bf16.mxu0 0
  %5409 = vmatpush1.bf16.msra.mxu0 0
  %5410 = vmatprep.subr.bf16.mxu0 0
  %5411 = vmatpush1.bf16.msra.mxu0 0
  %5412 = vmatprep.subr.bf16.mxu0 0
  %5413 = vmatpush1.bf16.msra.mxu0 0
  %5414 = vmatprep.subr.bf16.mxu0 0
  %5415 = vmatpush1.bf16.msra.mxu0 0
  %5416 = vmatprep.subr.bf16.mxu0 0
  %5417 = vmatpush1.bf16.msra.mxu0 0
  %5418 = vmatprep.subr.bf16.mxu0 0
  %5419 = vmatpush1.bf16.msra.mxu0 0
  %5420 = vmatprep.subr.bf16.mxu0 0
  %5421 = vmatpush1.bf16.msra.mxu0 0
  %5422 = vmatprep.mubr.bf16.mxu0 0
  %5423 = vmatmul.mubr.bf16.gmra.mrb[0].mxu0 %v5367
  %v5424 = vpop.f32.mrb[0].mxu0
  %v5425 = vadd.f32 %v21, %v5424
  %v5426 = vpop.f32.mrb[0].mxu0
  %v5427 = vpop.f32.mrb[0].mxu0
  %v5428 = vadd.f32 %v21, %v5427
  %v5429 = vpop.f32.mrb[0].mxu0
  %5430 = vmatprep.mubr.bf16.mxu0 0
  %5431 = vmatmul.mubr.bf16.gmra.mrb[0].mxu0 %v5370
  %v5432 = vpop.f32.mrb[0].mxu0
  %v5433 = vadd.f32 %v21, %v5432
  %v5434 = vpop.f32.mrb[0].mxu0
  %v5435 = vpop.f32.mrb[0].mxu0
  %v5436 = vadd.f32 %v21, %v5435
  %v5437 = vpop.f32.mrb[0].mxu0
  %5438 = vmatprep.mubr.bf16.mxu0 0
  %5439 = vmatmul.mubr.bf16.gmra.mrb[0].mxu0 %v5373
  %v5440 = vpop.f32.mrb[0].mxu0
  %v5441 = vadd.f32 %v21, %v5440
  %v5442 = vpop.f32.mrb[0].mxu0
  %v5443 = vpop.f32.mrb[0].mxu0
  %v5444 = vadd.f32 %v21, %v5443
  %v5445 = vpop.f32.mrb[0].mxu0
  %5446 = vmatprep.mubr.bf16.mxu0 0
  %5447 = vmatmul.mubr.bf16.gmra.mrb[0].mxu0 %v5376
  %v5448 = vpop.f32.mrb[0].mxu0
  %v5449 = vadd.f32 %v21, %v5448
  %v5450 = vpop.f32.mrb[0].mxu0
  %v5451 = vpop.f32.mrb[0].mxu0
  %v5452 = vadd.f32 %v21, %v5451
  %v5453 = vpop.f32.mrb[0].mxu0
  %5454 = vmatprep.mubr.bf16.mxu0 0
  %5455 = vmatmul.mubr.bf16.gmra.mrb[0].mxu0 %v5379
  %v5456 = vpop.f32.mrb[0].mxu0
  %v5457 = vadd.f32 %v21, %v5456
  %v5458 = vpop.f32.mrb[0].mxu0
  %v5459 = vpop.f32.mrb[0].mxu0
  %v5460 = vadd.f32 %v21, %v5459
  %v5461 = vpop.f32.mrb[0].mxu0
  %5462 = vmatprep.mubr.bf16.mxu0 0
  %5463 = vmatmul.mubr.bf16.gmra.mrb[0].mxu0 %v5382
  %v5464 = vpop.f32.mrb[0].mxu0
  %v5465 = vadd.f32 %v21, %v5464
  %v5466 = vpop.f32.mrb[0].mxu0
  %v5467 = vpop.f32.mrb[0].mxu0
  %v5468 = vadd.f32 %v21, %v5467
  %v5469 = vpop.f32.mrb[0].mxu0
  %5470 = vmatprep.mubr.bf16.mxu0 0
  %5471 = vmatmul.mubr.bf16.gmra.mrb[0].mxu0 %v5385
  %v5472 = vpop.f32.mrb[0].mxu0
  %v5473 = vadd.f32 %v21, %v5472
  %v5474 = vpop.f32.mrb[0].mxu0
  %v5475 = vpop.f32.mrb[0].mxu0
  %v5476 = vadd.f32 %v21, %v5475
  %v5477 = vpop.f32.mrb[0].mxu0
  %5478 = vmatprep.mubr.bf16.mxu0 0
  %5479 = vmatmul.mubr.bf16.gmra.mrb[0].mxu0 %v5388
  %v5480 = vpop.f32.mrb[0].mxu0
  %v5481 = vadd.f32 %v21, %v5480
  %v5482 = vpop.f32.mrb[0].mxu0
  %v5483 = vpop.f32.mrb[0].mxu0
  %v5484 = vadd.f32 %v21, %v5483
  %v5485 = vpop.f32.mrb[0].mxu0
  %5486 = vdwg.mxu0
  %5487 = vst [vmem:[%s3 + $0x100] sm:$0xff] %v5425
  %5488 = vst [vmem:[%s3 + $0x108] sm:$0xff] %v5428
  %5489 = vst [vmem:[%s3 + $0x110] sm:$0xff] %v5433
  %5490 = vst [vmem:[%s3 + $0x118] sm:$0xff] %v5436
  %5491 = vst [vmem:[%s3 + $0x120] sm:$0xff] %v5441
  %5492 = vst [vmem:[%s3 + $0x128] sm:$0xff] %v5444
  %5493 = vst [vmem:[%s3 + $0x130] sm:$0xff] %v5449
  %5494 = vst [vmem:[%s3 + $0x138] sm:$0xff] %v5452
  %5495 = vst [vmem:[%s3 + $0x140] sm:$0xff] %v5457
  %5496 = vst [vmem:[%s3 + $0x148] sm:$0xff] %v5460
  %5497 = vst [vmem:[%s3 + $0x150] sm:$0xff] %v5465
  %5498 = vst [vmem:[%s3 + $0x158] sm:$0xff] %v5468
  %5499 = vst [vmem:[%s3 + $0x160] sm:$0xff] %v5473
  %5500 = vst [vmem:[%s3 + $0x168] sm:$0xff] %v5476
  %5501 = vst [vmem:[%s3 + $0x170] sm:$0xff] %v5481
  %5502 = vst [vmem:[%s3 + $0x178] sm:$0xff] %v5484
  %v5503 = vld [vmem:[%s0 + $0xc0] sm:$0xf]
  %v5504 = vld [vmem:[%s0 + $0xc4] sm:$0xf]
  %v5505 = vld [vmem:[%s0 + $0xc8] sm:$0xf]
  %v5506 = vld [vmem:[%s0 + $0xcc] sm:$0xf]
  %v5507 = vld [vmem:[%s0 + $0xd0] sm:$0xf]
  %v5508 = vld [vmem:[%s0 + $0xd4] sm:$0xf]
  %v5509 = vld [vmem:[%s0 + $0xd8] sm:$0xf]
  %v5510 = vld [vmem:[%s0 + $0xdc] sm:$0xf]
  %v5511 = vld [vmem:[%s0 + $0xe0] sm:$0xf]
  %v5512 = vld [vmem:[%s0 + $0xe4] sm:$0xf]
  %v5513 = vld [vmem:[%s0 + $0xe8] sm:$0xf]
  %v5514 = vld [vmem:[%s0 + $0xec] sm:$0xf]
  %v5515 = vld [vmem:[%s0 + $0xf0] sm:$0xf]
  %v5516 = vld [vmem:[%s0 + $0xf4] sm:$0xf]
  %v5517 = vld [vmem:[%s0 + $0xf8] sm:$0xf]
  %v5518 = vld [vmem:[%s0 + $0xfc] sm:$0xf]
  %v5519 = vunpack.c.l.bf16 %v5503
  %v5520 = vunpack.c.l.bf16 %v5504
  %v5521 = vunpack.c.l.bf16 %v5505
  %v5522 = vunpack.c.l.bf16 %v5506
  %v5523 = vunpack.c.l.bf16 %v5507
  %v5524 = vunpack.c.l.bf16 %v5508
  %v5525 = vunpack.c.l.bf16 %v5509
  %v5526 = vunpack.c.l.bf16 %v5510
  %v5527 = vunpack.c.l.bf16 %v5511
  %v5528 = vunpack.c.l.bf16 %v5512
  %v5529 = vunpack.c.l.bf16 %v5513
  %v5530 = vunpack.c.l.bf16 %v5514
  %v5531 = vunpack.c.l.bf16 %v5515
  %v5532 = vunpack.c.l.bf16 %v5516
  %v5533 = vunpack.c.l.bf16 %v5517
  %v5534 = vunpack.c.l.bf16 %v5518
  %v5535 = vand.u32 2147483647, %v5519
  %vm5536 = vcmp.le.f32.partialorder %v5535, 0.7853982
  %vm5537 = vcmp.lt.s32.totalorder %v5519, 0
  %v5538 = vand.u32 %v5519, 2139095040
  %v5539 = vshrl.u32 %v5538, 23
  %v5540 = vsub.s32 %v5539, 127
  %v5541 = vand.u32 2147483647, %v5519
  %v5542 = vand.u32 %v5541, 8388607
  %v5543 = vor.u32 %v5542, 8388608
  %v5544 = vsub.s32 0, %v5543
  %v5545 = vadd.s32 %v5540, 1
  %vm5546 = vcmp.gt.s32.totalorder %v5545, 0
  %v5547 = vsel %vm5546, %v5545, 0
  %v5548 = vshrl.u32 %v5547, 5
  %v5549 = vand.u32 %v5547, 31
  %v5550 = vsub.s32 32, %v5549
  %v5551 = vshrl.u32 683565275, %v5550
  %v5552 = vshll.u32 683565275, %v5549
  %v5553 = vshrl.u32 2475754826, %v5550
  %v5554 = vor.u32 %v5552, %v5553
  %v5555 = vshll.u32 2475754826, %v5549
  %v5556 = vshrl.u32 2131351028, %v5550
  %v5557 = vor.u32 %v5555, %v5556
  %v5558 = vshll.u32 2131351028, %v5549
  %v5559 = vshrl.u32 2102212464, %v5550
  %v5560 = vor.u32 %v5558, %v5559
  %v5561 = vshll.u32 2102212464, %v5549
  %v5562 = vshrl.u32 920167782, %v5550
  %v5563 = vor.u32 %v5561, %v5562
  %v5564 = vshll.u32 920167782, %v5549
  %v5565 = vshrl.u32 1326507024, %v5550
  %v5566 = vor.u32 %v5564, %v5565
  %vm5567 = vcmp.lt.s32.totalorder %v5548, 1
  %vm5568 = vcmp.lt.s32.totalorder %v5548, 2
  %vm5569 = vcmp.lt.s32.totalorder %v5548, 3
  %vm5570 = vcmp.lt.s32.totalorder %v5548, 4
  %v5571 = vsel %vm5567, %v5551, %v5554
  %v5572 = vsel %vm5570, %v5560, 2102212464
  %v5573 = vsel %vm5569, %v5557, %v5572
  %v5574 = vsel %vm5568, %v5571, %v5573
  %v5575 = vsel %vm5567, %v5554, %v5557
  %v5576 = vsel %vm5570, %v5563, 920167782
  %v5577 = vsel %vm5569, %v5560, %v5576
  %v5578 = vsel %vm5568, %v5575, %v5577
  %v5579 = vsel %vm5567, %v5557, %v5560
  %v5580 = vsel %vm5570, %v5566, 1326507024
  %v5581 = vsel %vm5569, %v5563, %v5580
  %v5582 = vsel %vm5568, %v5579, %v5581
  %v5583 = vshll.u32 %v5543, 8
  %v5584 = vmul.u32.u64.compose %v5583, %v5582
  %v5585 = vextract.low.u32 %v5584
  %v5586 = vextract.high.u32 %v5584
  %v5587 = vmul.u32.u64.compose %v5583, %v5578
  %v5588 = vextract.low.u32 %v5587
  %v5589 = vextract.high.u32 %v5587
  %v5590 = vmul.u32 %v5583, %v5574
  %v5591 = vadd.s32 %v5586, %v5588
  %vm5592 = vc.u32 %v5586, %v5588
  %v5593 = vadd.s32 %v5589, 1
  %v5594 = vsel %vm5592, %v5593, %v5589
  %v5595 = vadd.s32 %v5590, %v5594
  %v5596 = vadd.s32 %v5595, 536870912
  %v5597 = vshrl.u32 %v5596, 30
  %v5598 = vshll.u32 %v5597, 30
  %v5599 = vsub.s32 %v5595, %v5598
  %vm5600 = vcmp.lt.s32.totalorder %v5599, 0
  %v5601 = vsub.s32 0, %v5599
  %v5602 = vsel %vm5600, %v5601, %v5599
  %v5603 = vclz %v5602
  %v5604 = vsub.s32 %v5603, 2
  %vm5605 = vcmp.gt.s32.totalorder 0, %v5604
  %v5606 = vsel %vm5605, 0, %v5604
  %v5607 = vsub.s32 32, %v5606
  %v5608 = vshll.u32 %v5599, %v5606
  %v5609 = vshrl.u32 %v5591, %v5607
  %v5610 = vor.u32 %v5608, %v5609
  %v5611 = vsub.s32 4294967266, %v5606
  %v5612 = vadd.s32 %v5611, 127
  %v5613 = vshll.u32 %v5612, 23
  %v5614 = vor.u32 4788187, %v5613
  %v5615 = vand.u32 2147483647, %v5614
  %v5617 = vcvt.s32.f32 %v5610
  %v5618 = vmul.f32 %v5617, %v5615
  %v5619 = vxor.u32 %v5618, 2147483648
  %v5620 = vsel %vm5537, %v5619, %v5618
  %v5621 = vsub.s32 4, %v5597
  %v5622 = vsel %vm5537, %v5621, %v5597
  %v5623 = vsel %vm5536, %v5519, %v5620
  %v5624 = vsel %vm5536, 0, %v5622
  %v5625 = vcosq.f32.pop %v5623
  %v5626 = vsinq.f32.pop %v5623
  %vm5627 = vweird.f32 %v5519
  %v5628 = vand.u32 %v5624, 3
  %vm5629 = vcmp.lt.s32.totalorder %v5628, 2
  %vm5630 = vcmp.eq.s32.totalorder %v5628, 0
  %v5631 = vxor.u32 %v5626, 2147483648
  %v5632 = vsel %vm5630, %v5625, %v5631
  %vm5633 = vcmp.eq.s32.totalorder %v5628, 2
  %v5634 = vxor.u32 %v5625, 2147483648
  %v5635 = vsel %vm5633, %v5634, %v5626
  %v5636 = vsel %vm5629, %v5632, %v5635
  %v5637 = vsel %vm5627, nan, %v5636
  %v5638 = vand.u32 2147483647, %v5520
  %vm5639 = vcmp.le.f32.partialorder %v5638, 0.7853982
  %vm5640 = vcmp.lt.s32.totalorder %v5520, 0
  %v5641 = vand.u32 %v5520, 2139095040
  %v5642 = vshrl.u32 %v5641, 23
  %v5643 = vsub.s32 %v5642, 127
  %v5644 = vand.u32 2147483647, %v5520
  %v5645 = vand.u32 %v5644, 8388607
  %v5646 = vor.u32 %v5645, 8388608
  %v5647 = vsub.s32 0, %v5646
  %v5648 = vadd.s32 %v5643, 1
  %vm5649 = vcmp.gt.s32.totalorder %v5648, 0
  %v5650 = vsel %vm5649, %v5648, 0
  %v5651 = vshrl.u32 %v5650, 5
  %v5652 = vand.u32 %v5650, 31
  %v5653 = vsub.s32 32, %v5652
  %v5654 = vshrl.u32 683565275, %v5653
  %v5655 = vshll.u32 683565275, %v5652
  %v5656 = vshrl.u32 2475754826, %v5653
  %v5657 = vor.u32 %v5655, %v5656
  %v5658 = vshll.u32 2475754826, %v5652
  %v5659 = vshrl.u32 2131351028, %v5653
  %v5660 = vor.u32 %v5658, %v5659
  %v5661 = vshll.u32 2131351028, %v5652
  %v5662 = vshrl.u32 2102212464, %v5653
  %v5663 = vor.u32 %v5661, %v5662
  %v5664 = vshll.u32 2102212464, %v5652
  %v5665 = vshrl.u32 920167782, %v5653
  %v5666 = vor.u32 %v5664, %v5665
  %v5667 = vshll.u32 920167782, %v5652
  %v5668 = vshrl.u32 1326507024, %v5653
  %v5669 = vor.u32 %v5667, %v5668
  %vm5670 = vcmp.lt.s32.totalorder %v5651, 1
  %vm5671 = vcmp.lt.s32.totalorder %v5651, 2
  %vm5672 = vcmp.lt.s32.totalorder %v5651, 3
  %vm5673 = vcmp.lt.s32.totalorder %v5651, 4
  %v5674 = vsel %vm5670, %v5654, %v5657
  %v5675 = vsel %vm5673, %v5663, 2102212464
  %v5676 = vsel %vm5672, %v5660, %v5675
  %v5677 = vsel %vm5671, %v5674, %v5676
  %v5678 = vsel %vm5670, %v5657, %v5660
  %v5679 = vsel %vm5673, %v5666, 920167782
  %v5680 = vsel %vm5672, %v5663, %v5679
  %v5681 = vsel %vm5671, %v5678, %v5680
  %v5682 = vsel %vm5670, %v5660, %v5663
  %v5683 = vsel %vm5673, %v5669, 1326507024
  %v5684 = vsel %vm5672, %v5666, %v5683
  %v5685 = vsel %vm5671, %v5682, %v5684
  %v5686 = vshll.u32 %v5646, 8
  %v5687 = vmul.u32.u64.compose %v5686, %v5685
  %v5688 = vextract.low.u32 %v5687
  %v5689 = vextract.high.u32 %v5687
  %v5690 = vmul.u32.u64.compose %v5686, %v5681
  %v5691 = vextract.low.u32 %v5690
  %v5692 = vextract.high.u32 %v5690
  %v5693 = vmul.u32 %v5686, %v5677
  %v5694 = vadd.s32 %v5689, %v5691
  %vm5695 = vc.u32 %v5689, %v5691
  %v5696 = vadd.s32 %v5692, 1
  %v5697 = vsel %vm5695, %v5696, %v5692
  %v5698 = vadd.s32 %v5693, %v5697
  %v5699 = vadd.s32 %v5698, 536870912
  %v5700 = vshrl.u32 %v5699, 30
  %v5701 = vshll.u32 %v5700, 30
  %v5702 = vsub.s32 %v5698, %v5701
  %vm5703 = vcmp.lt.s32.totalorder %v5702, 0
  %v5704 = vsub.s32 0, %v5702
  %v5705 = vsel %vm5703, %v5704, %v5702
  %v5706 = vclz %v5705
  %v5707 = vsub.s32 %v5706, 2
  %vm5708 = vcmp.gt.s32.totalorder 0, %v5707
  %v5709 = vsel %vm5708, 0, %v5707
  %v5710 = vsub.s32 32, %v5709
  %v5711 = vshll.u32 %v5702, %v5709
  %v5712 = vshrl.u32 %v5694, %v5710
  %v5713 = vor.u32 %v5711, %v5712
  %v5714 = vsub.s32 4294967266, %v5709
  %v5715 = vadd.s32 %v5714, 127
  %v5716 = vshll.u32 %v5715, 23
  %v5717 = vor.u32 4788187, %v5716
  %v5718 = vand.u32 2147483647, %v5717
  %v5720 = vcvt.s32.f32 %v5713
  %v5721 = vmul.f32 %v5720, %v5718
  %v5722 = vxor.u32 %v5721, 2147483648
  %v5723 = vsel %vm5640, %v5722, %v5721
  %v5724 = vsub.s32 4, %v5700
  %v5725 = vsel %vm5640, %v5724, %v5700
  %v5726 = vsel %vm5639, %v5520, %v5723
  %v5727 = vsel %vm5639, 0, %v5725
  %v5728 = vcosq.f32.pop %v5726
  %v5729 = vsinq.f32.pop %v5726
  %vm5730 = vweird.f32 %v5520
  %v5731 = vand.u32 %v5727, 3
  %vm5732 = vcmp.lt.s32.totalorder %v5731, 2
  %vm5733 = vcmp.eq.s32.totalorder %v5731, 0
  %v5734 = vxor.u32 %v5729, 2147483648
  %v5735 = vsel %vm5733, %v5728, %v5734
  %vm5736 = vcmp.eq.s32.totalorder %v5731, 2
  %v5737 = vxor.u32 %v5728, 2147483648
  %v5738 = vsel %vm5736, %v5737, %v5729
  %v5739 = vsel %vm5732, %v5735, %v5738
  %v5740 = vsel %vm5730, nan, %v5739
  %v5741 = vand.u32 2147483647, %v5521
  %vm5742 = vcmp.le.f32.partialorder %v5741, 0.7853982
  %vm5743 = vcmp.lt.s32.totalorder %v5521, 0
  %v5744 = vand.u32 %v5521, 2139095040
  %v5745 = vshrl.u32 %v5744, 23
  %v5746 = vsub.s32 %v5745, 127
  %v5747 = vand.u32 2147483647, %v5521
  %v5748 = vand.u32 %v5747, 8388607
  %v5749 = vor.u32 %v5748, 8388608
  %v5750 = vsub.s32 0, %v5749
  %v5751 = vadd.s32 %v5746, 1
  %vm5752 = vcmp.gt.s32.totalorder %v5751, 0
  %v5753 = vsel %vm5752, %v5751, 0
  %v5754 = vshrl.u32 %v5753, 5
  %v5755 = vand.u32 %v5753, 31
  %v5756 = vsub.s32 32, %v5755
  %v5757 = vshrl.u32 683565275, %v5756
  %v5758 = vshll.u32 683565275, %v5755
  %v5759 = vshrl.u32 2475754826, %v5756
  %v5760 = vor.u32 %v5758, %v5759
  %v5761 = vshll.u32 2475754826, %v5755
  %v5762 = vshrl.u32 2131351028, %v5756
  %v5763 = vor.u32 %v5761, %v5762
  %v5764 = vshll.u32 2131351028, %v5755
  %v5765 = vshrl.u32 2102212464, %v5756
  %v5766 = vor.u32 %v5764, %v5765
  %v5767 = vshll.u32 2102212464, %v5755
  %v5768 = vshrl.u32 920167782, %v5756
  %v5769 = vor.u32 %v5767, %v5768
  %v5770 = vshll.u32 920167782, %v5755
  %v5771 = vshrl.u32 1326507024, %v5756
  %v5772 = vor.u32 %v5770, %v5771
  %vm5773 = vcmp.lt.s32.totalorder %v5754, 1
  %vm5774 = vcmp.lt.s32.totalorder %v5754, 2
  %vm5775 = vcmp.lt.s32.totalorder %v5754, 3
  %vm5776 = vcmp.lt.s32.totalorder %v5754, 4
  %v5777 = vsel %vm5773, %v5757, %v5760
  %v5778 = vsel %vm5776, %v5766, 2102212464
  %v5779 = vsel %vm5775, %v5763, %v5778
  %v5780 = vsel %vm5774, %v5777, %v5779
  %v5781 = vsel %vm5773, %v5760, %v5763
  %v5782 = vsel %vm5776, %v5769, 920167782
  %v5783 = vsel %vm5775, %v5766, %v5782
  %v5784 = vsel %vm5774, %v5781, %v5783
  %v5785 = vsel %vm5773, %v5763, %v5766
  %v5786 = vsel %vm5776, %v5772, 1326507024
  %v5787 = vsel %vm5775, %v5769, %v5786
  %v5788 = vsel %vm5774, %v5785, %v5787
  %v5789 = vshll.u32 %v5749, 8
  %v5790 = vmul.u32.u64.compose %v5789, %v5788
  %v5791 = vextract.low.u32 %v5790
  %v5792 = vextract.high.u32 %v5790
  %v5793 = vmul.u32.u64.compose %v5789, %v5784
  %v5794 = vextract.low.u32 %v5793
  %v5795 = vextract.high.u32 %v5793
  %v5796 = vmul.u32 %v5789, %v5780
  %v5797 = vadd.s32 %v5792, %v5794
  %vm5798 = vc.u32 %v5792, %v5794
  %v5799 = vadd.s32 %v5795, 1
  %v5800 = vsel %vm5798, %v5799, %v5795
  %v5801 = vadd.s32 %v5796, %v5800
  %v5802 = vadd.s32 %v5801, 536870912
  %v5803 = vshrl.u32 %v5802, 30
  %v5804 = vshll.u32 %v5803, 30
  %v5805 = vsub.s32 %v5801, %v5804
  %vm5806 = vcmp.lt.s32.totalorder %v5805, 0
  %v5807 = vsub.s32 0, %v5805
  %v5808 = vsel %vm5806, %v5807, %v5805
  %v5809 = vclz %v5808
  %v5810 = vsub.s32 %v5809, 2
  %vm5811 = vcmp.gt.s32.totalorder 0, %v5810
  %v5812 = vsel %vm5811, 0, %v5810
  %v5813 = vsub.s32 32, %v5812
  %v5814 = vshll.u32 %v5805, %v5812
  %v5815 = vshrl.u32 %v5797, %v5813
  %v5816 = vor.u32 %v5814, %v5815
  %v5817 = vsub.s32 4294967266, %v5812
  %v5818 = vadd.s32 %v5817, 127
  %v5819 = vshll.u32 %v5818, 23
  %v5820 = vor.u32 4788187, %v5819
  %v5821 = vand.u32 2147483647, %v5820
  %v5823 = vcvt.s32.f32 %v5816
  %v5824 = vmul.f32 %v5823, %v5821
  %v5825 = vxor.u32 %v5824, 2147483648
  %v5826 = vsel %vm5743, %v5825, %v5824
  %v5827 = vsub.s32 4, %v5803
  %v5828 = vsel %vm5743, %v5827, %v5803
  %v5829 = vsel %vm5742, %v5521, %v5826
  %v5830 = vsel %vm5742, 0, %v5828
  %v5831 = vcosq.f32.pop %v5829
  %v5832 = vsinq.f32.pop %v5829
  %vm5833 = vweird.f32 %v5521
  %v5834 = vand.u32 %v5830, 3
  %vm5835 = vcmp.lt.s32.totalorder %v5834, 2
  %vm5836 = vcmp.eq.s32.totalorder %v5834, 0
  %v5837 = vxor.u32 %v5832, 2147483648
  %v5838 = vsel %vm5836, %v5831, %v5837
  %vm5839 = vcmp.eq.s32.totalorder %v5834, 2
  %v5840 = vxor.u32 %v5831, 2147483648
  %v5841 = vsel %vm5839, %v5840, %v5832
  %v5842 = vsel %vm5835, %v5838, %v5841
  %v5843 = vsel %vm5833, nan, %v5842
  %v5844 = vand.u32 2147483647, %v5522
  %vm5845 = vcmp.le.f32.partialorder %v5844, 0.7853982
  %vm5846 = vcmp.lt.s32.totalorder %v5522, 0
  %v5847 = vand.u32 %v5522, 2139095040
  %v5848 = vshrl.u32 %v5847, 23
  %v5849 = vsub.s32 %v5848, 127
  %v5850 = vand.u32 2147483647, %v5522
  %v5851 = vand.u32 %v5850, 8388607
  %v5852 = vor.u32 %v5851, 8388608
  %v5853 = vsub.s32 0, %v5852
  %v5854 = vadd.s32 %v5849, 1
  %vm5855 = vcmp.gt.s32.totalorder %v5854, 0
  %v5856 = vsel %vm5855, %v5854, 0
  %v5857 = vshrl.u32 %v5856, 5
  %v5858 = vand.u32 %v5856, 31
  %v5859 = vsub.s32 32, %v5858
  %v5860 = vshrl.u32 683565275, %v5859
  %v5861 = vshll.u32 683565275, %v5858
  %v5862 = vshrl.u32 2475754826, %v5859
  %v5863 = vor.u32 %v5861, %v5862
  %v5864 = vshll.u32 2475754826, %v5858
  %v5865 = vshrl.u32 2131351028, %v5859
  %v5866 = vor.u32 %v5864, %v5865
  %v5867 = vshll.u32 2131351028, %v5858
  %v5868 = vshrl.u32 2102212464, %v5859
  %v5869 = vor.u32 %v5867, %v5868
  %v5870 = vshll.u32 2102212464, %v5858
  %v5871 = vshrl.u32 920167782, %v5859
  %v5872 = vor.u32 %v5870, %v5871
  %v5873 = vshll.u32 920167782, %v5858
  %v5874 = vshrl.u32 1326507024, %v5859
  %v5875 = vor.u32 %v5873, %v5874
  %vm5876 = vcmp.lt.s32.totalorder %v5857, 1
  %vm5877 = vcmp.lt.s32.totalorder %v5857, 2
  %vm5878 = vcmp.lt.s32.totalorder %v5857, 3
  %vm5879 = vcmp.lt.s32.totalorder %v5857, 4
  %v5880 = vsel %vm5876, %v5860, %v5863
  %v5881 = vsel %vm5879, %v5869, 2102212464
  %v5882 = vsel %vm5878, %v5866, %v5881
  %v5883 = vsel %vm5877, %v5880, %v5882
  %v5884 = vsel %vm5876, %v5863, %v5866
  %v5885 = vsel %vm5879, %v5872, 920167782
  %v5886 = vsel %vm5878, %v5869, %v5885
  %v5887 = vsel %vm5877, %v5884, %v5886
  %v5888 = vsel %vm5876, %v5866, %v5869
  %v5889 = vsel %vm5879, %v5875, 1326507024
  %v5890 = vsel %vm5878, %v5872, %v5889
  %v5891 = vsel %vm5877, %v5888, %v5890
  %v5892 = vshll.u32 %v5852, 8
  %v5893 = vmul.u32.u64.compose %v5892, %v5891
  %v5894 = vextract.low.u32 %v5893
  %v5895 = vextract.high.u32 %v5893
  %v5896 = vmul.u32.u64.compose %v5892, %v5887
  %v5897 = vextract.low.u32 %v5896
  %v5898 = vextract.high.u32 %v5896
  %v5899 = vmul.u32 %v5892, %v5883
  %v5900 = vadd.s32 %v5895, %v5897
  %vm5901 = vc.u32 %v5895, %v5897
  %v5902 = vadd.s32 %v5898, 1
  %v5903 = vsel %vm5901, %v5902, %v5898
  %v5904 = vadd.s32 %v5899, %v5903
  %v5905 = vadd.s32 %v5904, 536870912
  %v5906 = vshrl.u32 %v5905, 30
  %v5907 = vshll.u32 %v5906, 30
  %v5908 = vsub.s32 %v5904, %v5907
  %vm5909 = vcmp.lt.s32.totalorder %v5908, 0
  %v5910 = vsub.s32 0, %v5908
  %v5911 = vsel %vm5909, %v5910, %v5908
  %v5912 = vclz %v5911
  %v5913 = vsub.s32 %v5912, 2
  %vm5914 = vcmp.gt.s32.totalorder 0, %v5913
  %v5915 = vsel %vm5914, 0, %v5913
  %v5916 = vsub.s32 32, %v5915
  %v5917 = vshll.u32 %v5908, %v5915
  %v5918 = vshrl.u32 %v5900, %v5916
  %v5919 = vor.u32 %v5917, %v5918
  %v5920 = vsub.s32 4294967266, %v5915
  %v5921 = vadd.s32 %v5920, 127
  %v5922 = vshll.u32 %v5921, 23
  %v5923 = vor.u32 4788187, %v5922
  %v5924 = vand.u32 2147483647, %v5923
  %v5926 = vcvt.s32.f32 %v5919
  %v5927 = vmul.f32 %v5926, %v5924
  %v5928 = vxor.u32 %v5927, 2147483648
  %v5929 = vsel %vm5846, %v5928, %v5927
  %v5930 = vsub.s32 4, %v5906
  %v5931 = vsel %vm5846, %v5930, %v5906
  %v5932 = vsel %vm5845, %v5522, %v5929
  %v5933 = vsel %vm5845, 0, %v5931
  %v5934 = vcosq.f32.pop %v5932
  %v5935 = vsinq.f32.pop %v5932
  %vm5936 = vweird.f32 %v5522
  %v5937 = vand.u32 %v5933, 3
  %vm5938 = vcmp.lt.s32.totalorder %v5937, 2
  %vm5939 = vcmp.eq.s32.totalorder %v5937, 0
  %v5940 = vxor.u32 %v5935, 2147483648
  %v5941 = vsel %vm5939, %v5934, %v5940
  %vm5942 = vcmp.eq.s32.totalorder %v5937, 2
  %v5943 = vxor.u32 %v5934, 2147483648
  %v5944 = vsel %vm5942, %v5943, %v5935
  %v5945 = vsel %vm5938, %v5941, %v5944
  %v5946 = vsel %vm5936, nan, %v5945
  %v5947 = vand.u32 2147483647, %v5523
  %vm5948 = vcmp.le.f32.partialorder %v5947, 0.7853982
  %vm5949 = vcmp.lt.s32.totalorder %v5523, 0
  %v5950 = vand.u32 %v5523, 2139095040
  %v5951 = vshrl.u32 %v5950, 23
  %v5952 = vsub.s32 %v5951, 127
  %v5953 = vand.u32 2147483647, %v5523
  %v5954 = vand.u32 %v5953, 8388607
  %v5955 = vor.u32 %v5954, 8388608
  %v5956 = vsub.s32 0, %v5955
  %v5957 = vadd.s32 %v5952, 1
  %vm5958 = vcmp.gt.s32.totalorder %v5957, 0
  %v5959 = vsel %vm5958, %v5957, 0
  %v5960 = vshrl.u32 %v5959, 5
  %v5961 = vand.u32 %v5959, 31
  %v5962 = vsub.s32 32, %v5961
  %v5963 = vshrl.u32 683565275, %v5962
  %v5964 = vshll.u32 683565275, %v5961
  %v5965 = vshrl.u32 2475754826, %v5962
  %v5966 = vor.u32 %v5964, %v5965
  %v5967 = vshll.u32 2475754826, %v5961
  %v5968 = vshrl.u32 2131351028, %v5962
  %v5969 = vor.u32 %v5967, %v5968
  %v5970 = vshll.u32 2131351028, %v5961
  %v5971 = vshrl.u32 2102212464, %v5962
  %v5972 = vor.u32 %v5970, %v5971
  %v5973 = vshll.u32 2102212464, %v5961
  %v5974 = vshrl.u32 920167782, %v5962
  %v5975 = vor.u32 %v5973, %v5974
  %v5976 = vshll.u32 920167782, %v5961
  %v5977 = vshrl.u32 1326507024, %v5962
  %v5978 = vor.u32 %v5976, %v5977
  %vm5979 = vcmp.lt.s32.totalorder %v5960, 1
  %vm5980 = vcmp.lt.s32.totalorder %v5960, 2
  %vm5981 = vcmp.lt.s32.totalorder %v5960, 3
  %vm5982 = vcmp.lt.s32.totalorder %v5960, 4
  %v5983 = vsel %vm5979, %v5963, %v5966
  %v5984 = vsel %vm5982, %v5972, 2102212464
  %v5985 = vsel %vm5981, %v5969, %v5984
  %v5986 = vsel %vm5980, %v5983, %v5985
  %v5987 = vsel %vm5979, %v5966, %v5969
  %v5988 = vsel %vm5982, %v5975, 920167782
  %v5989 = vsel %vm5981, %v5972, %v5988
  %v5990 = vsel %vm5980, %v5987, %v5989
  %v5991 = vsel %vm5979, %v5969, %v5972
  %v5992 = vsel %vm5982, %v5978, 1326507024
  %v5993 = vsel %vm5981, %v5975, %v5992
  %v5994 = vsel %vm5980, %v5991, %v5993
  %v5995 = vshll.u32 %v5955, 8
  %v5996 = vmul.u32.u64.compose %v5995, %v5994
  %v5997 = vextract.low.u32 %v5996
  %v5998 = vextract.high.u32 %v5996
  %v5999 = vmul.u32.u64.compose %v5995, %v5990
  %v6000 = vextract.low.u32 %v5999
  %v6001 = vextract.high.u32 %v5999
  %v6002 = vmul.u32 %v5995, %v5986
  %v6003 = vadd.s32 %v5998, %v6000
  %vm6004 = vc.u32 %v5998, %v6000
  %v6005 = vadd.s32 %v6001, 1
  %v6006 = vsel %vm6004, %v6005, %v6001
  %v6007 = vadd.s32 %v6002, %v6006
  %v6008 = vadd.s32 %v6007, 536870912
  %v6009 = vshrl.u32 %v6008, 30
  %v6010 = vshll.u32 %v6009, 30
  %v6011 = vsub.s32 %v6007, %v6010
  %vm6012 = vcmp.lt.s32.totalorder %v6011, 0
  %v6013 = vsub.s32 0, %v6011
  %v6014 = vsel %vm6012, %v6013, %v6011
  %v6015 = vclz %v6014
  %v6016 = vsub.s32 %v6015, 2
  %vm6017 = vcmp.gt.s32.totalorder 0, %v6016
  %v6018 = vsel %vm6017, 0, %v6016
  %v6019 = vsub.s32 32, %v6018
  %v6020 = vshll.u32 %v6011, %v6018
  %v6021 = vshrl.u32 %v6003, %v6019
  %v6022 = vor.u32 %v6020, %v6021
  %v6023 = vsub.s32 4294967266, %v6018
  %v6024 = vadd.s32 %v6023, 127
  %v6025 = vshll.u32 %v6024, 23
  %v6026 = vor.u32 4788187, %v6025
  %v6027 = vand.u32 2147483647, %v6026
  %v6029 = vcvt.s32.f32 %v6022
  %v6030 = vmul.f32 %v6029, %v6027
  %v6031 = vxor.u32 %v6030, 2147483648
  %v6032 = vsel %vm5949, %v6031, %v6030
  %v6033 = vsub.s32 4, %v6009
  %v6034 = vsel %vm5949, %v6033, %v6009
  %v6035 = vsel %vm5948, %v5523, %v6032
  %v6036 = vsel %vm5948, 0, %v6034
  %v6037 = vcosq.f32.pop %v6035
  %v6038 = vsinq.f32.pop %v6035
  %vm6039 = vweird.f32 %v5523
  %v6040 = vand.u32 %v6036, 3
  %vm6041 = vcmp.lt.s32.totalorder %v6040, 2
  %vm6042 = vcmp.eq.s32.totalorder %v6040, 0
  %v6043 = vxor.u32 %v6038, 2147483648
  %v6044 = vsel %vm6042, %v6037, %v6043
  %vm6045 = vcmp.eq.s32.totalorder %v6040, 2
  %v6046 = vxor.u32 %v6037, 2147483648
  %v6047 = vsel %vm6045, %v6046, %v6038
  %v6048 = vsel %vm6041, %v6044, %v6047
  %v6049 = vsel %vm6039, nan, %v6048
  %v6050 = vand.u32 2147483647, %v5524
  %vm6051 = vcmp.le.f32.partialorder %v6050, 0.7853982
  %vm6052 = vcmp.lt.s32.totalorder %v5524, 0
  %v6053 = vand.u32 %v5524, 2139095040
  %v6054 = vshrl.u32 %v6053, 23
  %v6055 = vsub.s32 %v6054, 127
  %v6056 = vand.u32 2147483647, %v5524
  %v6057 = vand.u32 %v6056, 8388607
  %v6058 = vor.u32 %v6057, 8388608
  %v6059 = vsub.s32 0, %v6058
  %v6060 = vadd.s32 %v6055, 1
  %vm6061 = vcmp.gt.s32.totalorder %v6060, 0
  %v6062 = vsel %vm6061, %v6060, 0
  %v6063 = vshrl.u32 %v6062, 5
  %v6064 = vand.u32 %v6062, 31
  %v6065 = vsub.s32 32, %v6064
  %v6066 = vshrl.u32 683565275, %v6065
  %v6067 = vshll.u32 683565275, %v6064
  %v6068 = vshrl.u32 2475754826, %v6065
  %v6069 = vor.u32 %v6067, %v6068
  %v6070 = vshll.u32 2475754826, %v6064
  %v6071 = vshrl.u32 2131351028, %v6065
  %v6072 = vor.u32 %v6070, %v6071
  %v6073 = vshll.u32 2131351028, %v6064
  %v6074 = vshrl.u32 2102212464, %v6065
  %v6075 = vor.u32 %v6073, %v6074
  %v6076 = vshll.u32 2102212464, %v6064
  %v6077 = vshrl.u32 920167782, %v6065
  %v6078 = vor.u32 %v6076, %v6077
  %v6079 = vshll.u32 920167782, %v6064
  %v6080 = vshrl.u32 1326507024, %v6065
  %v6081 = vor.u32 %v6079, %v6080
  %vm6082 = vcmp.lt.s32.totalorder %v6063, 1
  %vm6083 = vcmp.lt.s32.totalorder %v6063, 2
  %vm6084 = vcmp.lt.s32.totalorder %v6063, 3
  %vm6085 = vcmp.lt.s32.totalorder %v6063, 4
  %v6086 = vsel %vm6082, %v6066, %v6069
  %v6087 = vsel %vm6085, %v6075, 2102212464
  %v6088 = vsel %vm6084, %v6072, %v6087
  %v6089 = vsel %vm6083, %v6086, %v6088
  %v6090 = vsel %vm6082, %v6069, %v6072
  %v6091 = vsel %vm6085, %v6078, 920167782
  %v6092 = vsel %vm6084, %v6075, %v6091
  %v6093 = vsel %vm6083, %v6090, %v6092
  %v6094 = vsel %vm6082, %v6072, %v6075
  %v6095 = vsel %vm6085, %v6081, 1326507024
  %v6096 = vsel %vm6084, %v6078, %v6095
  %v6097 = vsel %vm6083, %v6094, %v6096
  %v6098 = vshll.u32 %v6058, 8
  %v6099 = vmul.u32.u64.compose %v6098, %v6097
  %v6100 = vextract.low.u32 %v6099
  %v6101 = vextract.high.u32 %v6099
  %v6102 = vmul.u32.u64.compose %v6098, %v6093
  %v6103 = vextract.low.u32 %v6102
  %v6104 = vextract.high.u32 %v6102
  %v6105 = vmul.u32 %v6098, %v6089
  %v6106 = vadd.s32 %v6101, %v6103
  %vm6107 = vc.u32 %v6101, %v6103
  %v6108 = vadd.s32 %v6104, 1
  %v6109 = vsel %vm6107, %v6108, %v6104
  %v6110 = vadd.s32 %v6105, %v6109
  %v6111 = vadd.s32 %v6110, 536870912
  %v6112 = vshrl.u32 %v6111, 30
  %v6113 = vshll.u32 %v6112, 30
  %v6114 = vsub.s32 %v6110, %v6113
  %vm6115 = vcmp.lt.s32.totalorder %v6114, 0
  %v6116 = vsub.s32 0, %v6114
  %v6117 = vsel %vm6115, %v6116, %v6114
  %v6118 = vclz %v6117
  %v6119 = vsub.s32 %v6118, 2
  %vm6120 = vcmp.gt.s32.totalorder 0, %v6119
  %v6121 = vsel %vm6120, 0, %v6119
  %v6122 = vsub.s32 32, %v6121
  %v6123 = vshll.u32 %v6114, %v6121
  %v6124 = vshrl.u32 %v6106, %v6122
  %v6125 = vor.u32 %v6123, %v6124
  %v6126 = vsub.s32 4294967266, %v6121
  %v6127 = vadd.s32 %v6126, 127
  %v6128 = vshll.u32 %v6127, 23
  %v6129 = vor.u32 4788187, %v6128
  %v6130 = vand.u32 2147483647, %v6129
  %v6132 = vcvt.s32.f32 %v6125
  %v6133 = vmul.f32 %v6132, %v6130
  %v6134 = vxor.u32 %v6133, 2147483648
  %v6135 = vsel %vm6052, %v6134, %v6133
  %v6136 = vsub.s32 4, %v6112
  %v6137 = vsel %vm6052, %v6136, %v6112
  %v6138 = vsel %vm6051, %v5524, %v6135
  %v6139 = vsel %vm6051, 0, %v6137
  %v6140 = vcosq.f32.pop %v6138
  %v6141 = vsinq.f32.pop %v6138
  %vm6142 = vweird.f32 %v5524
  %v6143 = vand.u32 %v6139, 3
  %vm6144 = vcmp.lt.s32.totalorder %v6143, 2
  %vm6145 = vcmp.eq.s32.totalorder %v6143, 0
  %v6146 = vxor.u32 %v6141, 2147483648
  %v6147 = vsel %vm6145, %v6140, %v6146
  %vm6148 = vcmp.eq.s32.totalorder %v6143, 2
  %v6149 = vxor.u32 %v6140, 2147483648
  %v6150 = vsel %vm6148, %v6149, %v6141
  %v6151 = vsel %vm6144, %v6147, %v6150
  %v6152 = vsel %vm6142, nan, %v6151
  %v6153 = vand.u32 2147483647, %v5525
  %vm6154 = vcmp.le.f32.partialorder %v6153, 0.7853982
  %vm6155 = vcmp.lt.s32.totalorder %v5525, 0
  %v6156 = vand.u32 %v5525, 2139095040
  %v6157 = vshrl.u32 %v6156, 23
  %v6158 = vsub.s32 %v6157, 127
  %v6159 = vand.u32 2147483647, %v5525
  %v6160 = vand.u32 %v6159, 8388607
  %v6161 = vor.u32 %v6160, 8388608
  %v6162 = vsub.s32 0, %v6161
  %v6163 = vadd.s32 %v6158, 1
  %vm6164 = vcmp.gt.s32.totalorder %v6163, 0
  %v6165 = vsel %vm6164, %v6163, 0
  %v6166 = vshrl.u32 %v6165, 5
  %v6167 = vand.u32 %v6165, 31
  %v6168 = vsub.s32 32, %v6167
  %v6169 = vshrl.u32 683565275, %v6168
  %v6170 = vshll.u32 683565275, %v6167
  %v6171 = vshrl.u32 2475754826, %v6168
  %v6172 = vor.u32 %v6170, %v6171
  %v6173 = vshll.u32 2475754826, %v6167
  %v6174 = vshrl.u32 2131351028, %v6168
  %v6175 = vor.u32 %v6173, %v6174
  %v6176 = vshll.u32 2131351028, %v6167
  %v6177 = vshrl.u32 2102212464, %v6168
  %v6178 = vor.u32 %v6176, %v6177
  %v6179 = vshll.u32 2102212464, %v6167
  %v6180 = vshrl.u32 920167782, %v6168
  %v6181 = vor.u32 %v6179, %v6180
  %v6182 = vshll.u32 920167782, %v6167
  %v6183 = vshrl.u32 1326507024, %v6168
  %v6184 = vor.u32 %v6182, %v6183
  %vm6185 = vcmp.lt.s32.totalorder %v6166, 1
  %vm6186 = vcmp.lt.s32.totalorder %v6166, 2
  %vm6187 = vcmp.lt.s32.totalorder %v6166, 3
  %vm6188 = vcmp.lt.s32.totalorder %v6166, 4
  %v6189 = vsel %vm6185, %v6169, %v6172
  %v6190 = vsel %vm6188, %v6178, 2102212464
  %v6191 = vsel %vm6187, %v6175, %v6190
  %v6192 = vsel %vm6186, %v6189, %v6191
  %v6193 = vsel %vm6185, %v6172, %v6175
  %v6194 = vsel %vm6188, %v6181, 920167782
  %v6195 = vsel %vm6187, %v6178, %v6194
  %v6196 = vsel %vm6186, %v6193, %v6195
  %v6197 = vsel %vm6185, %v6175, %v6178
  %v6198 = vsel %vm6188, %v6184, 1326507024
  %v6199 = vsel %vm6187, %v6181, %v6198
  %v6200 = vsel %vm6186, %v6197, %v6199
  %v6201 = vshll.u32 %v6161, 8
  %v6202 = vmul.u32.u64.compose %v6201, %v6200
  %v6203 = vextract.low.u32 %v6202
  %v6204 = vextract.high.u32 %v6202
  %v6205 = vmul.u32.u64.compose %v6201, %v6196
  %v6206 = vextract.low.u32 %v6205
  %v6207 = vextract.high.u32 %v6205
  %v6208 = vmul.u32 %v6201, %v6192
  %v6209 = vadd.s32 %v6204, %v6206
  %vm6210 = vc.u32 %v6204, %v6206
  %v6211 = vadd.s32 %v6207, 1
  %v6212 = vsel %vm6210, %v6211, %v6207
  %v6213 = vadd.s32 %v6208, %v6212
  %v6214 = vadd.s32 %v6213, 536870912
  %v6215 = vshrl.u32 %v6214, 30
  %v6216 = vshll.u32 %v6215, 30
  %v6217 = vsub.s32 %v6213, %v6216
  %vm6218 = vcmp.lt.s32.totalorder %v6217, 0
  %v6219 = vsub.s32 0, %v6217
  %v6220 = vsel %vm6218, %v6219, %v6217
  %v6221 = vclz %v6220
  %v6222 = vsub.s32 %v6221, 2
  %vm6223 = vcmp.gt.s32.totalorder 0, %v6222
  %v6224 = vsel %vm6223, 0, %v6222
  %v6225 = vsub.s32 32, %v6224
  %v6226 = vshll.u32 %v6217, %v6224
  %v6227 = vshrl.u32 %v6209, %v6225
  %v6228 = vor.u32 %v6226, %v6227
  %v6229 = vsub.s32 4294967266, %v6224
  %v6230 = vadd.s32 %v6229, 127
  %v6231 = vshll.u32 %v6230, 23
  %v6232 = vor.u32 4788187, %v6231
  %v6233 = vand.u32 2147483647, %v6232
  %v6235 = vcvt.s32.f32 %v6228
  %v6236 = vmul.f32 %v6235, %v6233
  %v6237 = vxor.u32 %v6236, 2147483648
  %v6238 = vsel %vm6155, %v6237, %v6236
  %v6239 = vsub.s32 4, %v6215
  %v6240 = vsel %vm6155, %v6239, %v6215
  %v6241 = vsel %vm6154, %v5525, %v6238
  %v6242 = vsel %vm6154, 0, %v6240
  %v6243 = vcosq.f32.pop %v6241
  %v6244 = vsinq.f32.pop %v6241
  %vm6245 = vweird.f32 %v5525
  %v6246 = vand.u32 %v6242, 3
  %vm6247 = vcmp.lt.s32.totalorder %v6246, 2
  %vm6248 = vcmp.eq.s32.totalorder %v6246, 0
  %v6249 = vxor.u32 %v6244, 2147483648
  %v6250 = vsel %vm6248, %v6243, %v6249
  %vm6251 = vcmp.eq.s32.totalorder %v6246, 2
  %v6252 = vxor.u32 %v6243, 2147483648
  %v6253 = vsel %vm6251, %v6252, %v6244
  %v6254 = vsel %vm6247, %v6250, %v6253
  %v6255 = vsel %vm6245, nan, %v6254
  %v6256 = vand.u32 2147483647, %v5526
  %vm6257 = vcmp.le.f32.partialorder %v6256, 0.7853982
  %vm6258 = vcmp.lt.s32.totalorder %v5526, 0
  %v6259 = vand.u32 %v5526, 2139095040
  %v6260 = vshrl.u32 %v6259, 23
  %v6261 = vsub.s32 %v6260, 127
  %v6262 = vand.u32 2147483647, %v5526
  %v6263 = vand.u32 %v6262, 8388607
  %v6264 = vor.u32 %v6263, 8388608
  %v6265 = vsub.s32 0, %v6264
  %v6266 = vadd.s32 %v6261, 1
  %vm6267 = vcmp.gt.s32.totalorder %v6266, 0
  %v6268 = vsel %vm6267, %v6266, 0
  %v6269 = vshrl.u32 %v6268, 5
  %v6270 = vand.u32 %v6268, 31
  %v6271 = vsub.s32 32, %v6270
  %v6272 = vshrl.u32 683565275, %v6271
  %v6273 = vshll.u32 683565275, %v6270
  %v6274 = vshrl.u32 2475754826, %v6271
  %v6275 = vor.u32 %v6273, %v6274
  %v6276 = vshll.u32 2475754826, %v6270
  %v6277 = vshrl.u32 2131351028, %v6271
  %v6278 = vor.u32 %v6276, %v6277
  %v6279 = vshll.u32 2131351028, %v6270
  %v6280 = vshrl.u32 2102212464, %v6271
  %v6281 = vor.u32 %v6279, %v6280
  %v6282 = vshll.u32 2102212464, %v6270
  %v6283 = vshrl.u32 920167782, %v6271
  %v6284 = vor.u32 %v6282, %v6283
  %v6285 = vshll.u32 920167782, %v6270
  %v6286 = vshrl.u32 1326507024, %v6271
  %v6287 = vor.u32 %v6285, %v6286
  %vm6288 = vcmp.lt.s32.totalorder %v6269, 1
  %vm6289 = vcmp.lt.s32.totalorder %v6269, 2
  %vm6290 = vcmp.lt.s32.totalorder %v6269, 3
  %vm6291 = vcmp.lt.s32.totalorder %v6269, 4
  %v6292 = vsel %vm6288, %v6272, %v6275
  %v6293 = vsel %vm6291, %v6281, 2102212464
  %v6294 = vsel %vm6290, %v6278, %v6293
  %v6295 = vsel %vm6289, %v6292, %v6294
  %v6296 = vsel %vm6288, %v6275, %v6278
  %v6297 = vsel %vm6291, %v6284, 920167782
  %v6298 = vsel %vm6290, %v6281, %v6297
  %v6299 = vsel %vm6289, %v6296, %v6298
  %v6300 = vsel %vm6288, %v6278, %v6281
  %v6301 = vsel %vm6291, %v6287, 1326507024
  %v6302 = vsel %vm6290, %v6284, %v6301
  %v6303 = vsel %vm6289, %v6300, %v6302
  %v6304 = vshll.u32 %v6264, 8
  %v6305 = vmul.u32.u64.compose %v6304, %v6303
  %v6306 = vextract.low.u32 %v6305
  %v6307 = vextract.high.u32 %v6305
  %v6308 = vmul.u32.u64.compose %v6304, %v6299
  %v6309 = vextract.low.u32 %v6308
  %v6310 = vextract.high.u32 %v6308
  %v6311 = vmul.u32 %v6304, %v6295
  %v6312 = vadd.s32 %v6307, %v6309
  %vm6313 = vc.u32 %v6307, %v6309
  %v6314 = vadd.s32 %v6310, 1
  %v6315 = vsel %vm6313, %v6314, %v6310
  %v6316 = vadd.s32 %v6311, %v6315
  %v6317 = vadd.s32 %v6316, 536870912
  %v6318 = vshrl.u32 %v6317, 30
  %v6319 = vshll.u32 %v6318, 30
  %v6320 = vsub.s32 %v6316, %v6319
  %vm6321 = vcmp.lt.s32.totalorder %v6320, 0
  %v6322 = vsub.s32 0, %v6320
  %v6323 = vsel %vm6321, %v6322, %v6320
  %v6324 = vclz %v6323
  %v6325 = vsub.s32 %v6324, 2
  %vm6326 = vcmp.gt.s32.totalorder 0, %v6325
  %v6327 = vsel %vm6326, 0, %v6325
  %v6328 = vsub.s32 32, %v6327
  %v6329 = vshll.u32 %v6320, %v6327
  %v6330 = vshrl.u32 %v6312, %v6328
  %v6331 = vor.u32 %v6329, %v6330
  %v6332 = vsub.s32 4294967266, %v6327
  %v6333 = vadd.s32 %v6332, 127
  %v6334 = vshll.u32 %v6333, 23
  %v6335 = vor.u32 4788187, %v6334
  %v6336 = vand.u32 2147483647, %v6335
  %v6338 = vcvt.s32.f32 %v6331
  %v6339 = vmul.f32 %v6338, %v6336
  %v6340 = vxor.u32 %v6339, 2147483648
  %v6341 = vsel %vm6258, %v6340, %v6339
  %v6342 = vsub.s32 4, %v6318
  %v6343 = vsel %vm6258, %v6342, %v6318
  %v6344 = vsel %vm6257, %v5526, %v6341
  %v6345 = vsel %vm6257, 0, %v6343
  %v6346 = vcosq.f32.pop %v6344
  %v6347 = vsinq.f32.pop %v6344
  %vm6348 = vweird.f32 %v5526
  %v6349 = vand.u32 %v6345, 3
  %vm6350 = vcmp.lt.s32.totalorder %v6349, 2
  %vm6351 = vcmp.eq.s32.totalorder %v6349, 0
  %v6352 = vxor.u32 %v6347, 2147483648
  %v6353 = vsel %vm6351, %v6346, %v6352
  %vm6354 = vcmp.eq.s32.totalorder %v6349, 2
  %v6355 = vxor.u32 %v6346, 2147483648
  %v6356 = vsel %vm6354, %v6355, %v6347
  %v6357 = vsel %vm6350, %v6353, %v6356
  %v6358 = vsel %vm6348, nan, %v6357
  %v6359 = vand.u32 2147483647, %v5527
  %vm6360 = vcmp.le.f32.partialorder %v6359, 0.7853982
  %vm6361 = vcmp.lt.s32.totalorder %v5527, 0
  %v6362 = vand.u32 %v5527, 2139095040
  %v6363 = vshrl.u32 %v6362, 23
  %v6364 = vsub.s32 %v6363, 127
  %v6365 = vand.u32 2147483647, %v5527
  %v6366 = vand.u32 %v6365, 8388607
  %v6367 = vor.u32 %v6366, 8388608
  %v6368 = vsub.s32 0, %v6367
  %v6369 = vadd.s32 %v6364, 1
  %vm6370 = vcmp.gt.s32.totalorder %v6369, 0
  %v6371 = vsel %vm6370, %v6369, 0
  %v6372 = vshrl.u32 %v6371, 5
  %v6373 = vand.u32 %v6371, 31
  %v6374 = vsub.s32 32, %v6373
  %v6375 = vshrl.u32 683565275, %v6374
  %v6376 = vshll.u32 683565275, %v6373
  %v6377 = vshrl.u32 2475754826, %v6374
  %v6378 = vor.u32 %v6376, %v6377
  %v6379 = vshll.u32 2475754826, %v6373
  %v6380 = vshrl.u32 2131351028, %v6374
  %v6381 = vor.u32 %v6379, %v6380
  %v6382 = vshll.u32 2131351028, %v6373
  %v6383 = vshrl.u32 2102212464, %v6374
  %v6384 = vor.u32 %v6382, %v6383
  %v6385 = vshll.u32 2102212464, %v6373
  %v6386 = vshrl.u32 920167782, %v6374
  %v6387 = vor.u32 %v6385, %v6386
  %v6388 = vshll.u32 920167782, %v6373
  %v6389 = vshrl.u32 1326507024, %v6374
  %v6390 = vor.u32 %v6388, %v6389
  %vm6391 = vcmp.lt.s32.totalorder %v6372, 1
  %vm6392 = vcmp.lt.s32.totalorder %v6372, 2
  %vm6393 = vcmp.lt.s32.totalorder %v6372, 3
  %vm6394 = vcmp.lt.s32.totalorder %v6372, 4
  %v6395 = vsel %vm6391, %v6375, %v6378
  %v6396 = vsel %vm6394, %v6384, 2102212464
  %v6397 = vsel %vm6393, %v6381, %v6396
  %v6398 = vsel %vm6392, %v6395, %v6397
  %v6399 = vsel %vm6391, %v6378, %v6381
  %v6400 = vsel %vm6394, %v6387, 920167782
  %v6401 = vsel %vm6393, %v6384, %v6400
  %v6402 = vsel %vm6392, %v6399, %v6401
  %v6403 = vsel %vm6391, %v6381, %v6384
  %v6404 = vsel %vm6394, %v6390, 1326507024
  %v6405 = vsel %vm6393, %v6387, %v6404
  %v6406 = vsel %vm6392, %v6403, %v6405
  %v6407 = vshll.u32 %v6367, 8
  %v6408 = vmul.u32.u64.compose %v6407, %v6406
  %v6409 = vextract.low.u32 %v6408
  %v6410 = vextract.high.u32 %v6408
  %v6411 = vmul.u32.u64.compose %v6407, %v6402
  %v6412 = vextract.low.u32 %v6411
  %v6413 = vextract.high.u32 %v6411
  %v6414 = vmul.u32 %v6407, %v6398
  %v6415 = vadd.s32 %v6410, %v6412
  %vm6416 = vc.u32 %v6410, %v6412
  %v6417 = vadd.s32 %v6413, 1
  %v6418 = vsel %vm6416, %v6417, %v6413
  %v6419 = vadd.s32 %v6414, %v6418
  %v6420 = vadd.s32 %v6419, 536870912
  %v6421 = vshrl.u32 %v6420, 30
  %v6422 = vshll.u32 %v6421, 30
  %v6423 = vsub.s32 %v6419, %v6422
  %vm6424 = vcmp.lt.s32.totalorder %v6423, 0
  %v6425 = vsub.s32 0, %v6423
  %v6426 = vsel %vm6424, %v6425, %v6423
  %v6427 = vclz %v6426
  %v6428 = vsub.s32 %v6427, 2
  %vm6429 = vcmp.gt.s32.totalorder 0, %v6428
  %v6430 = vsel %vm6429, 0, %v6428
  %v6431 = vsub.s32 32, %v6430
  %v6432 = vshll.u32 %v6423, %v6430
  %v6433 = vshrl.u32 %v6415, %v6431
  %v6434 = vor.u32 %v6432, %v6433
  %v6435 = vsub.s32 4294967266, %v6430
  %v6436 = vadd.s32 %v6435, 127
  %v6437 = vshll.u32 %v6436, 23
  %v6438 = vor.u32 4788187, %v6437
  %v6439 = vand.u32 2147483647, %v6438
  %v6441 = vcvt.s32.f32 %v6434
  %v6442 = vmul.f32 %v6441, %v6439
  %v6443 = vxor.u32 %v6442, 2147483648
  %v6444 = vsel %vm6361, %v6443, %v6442
  %v6445 = vsub.s32 4, %v6421
  %v6446 = vsel %vm6361, %v6445, %v6421
  %v6447 = vsel %vm6360, %v5527, %v6444
  %v6448 = vsel %vm6360, 0, %v6446
  %v6449 = vcosq.f32.pop %v6447
  %v6450 = vsinq.f32.pop %v6447
  %vm6451 = vweird.f32 %v5527
  %v6452 = vand.u32 %v6448, 3
  %vm6453 = vcmp.lt.s32.totalorder %v6452, 2
  %vm6454 = vcmp.eq.s32.totalorder %v6452, 0
  %v6455 = vxor.u32 %v6450, 2147483648
  %v6456 = vsel %vm6454, %v6449, %v6455
  %vm6457 = vcmp.eq.s32.totalorder %v6452, 2
  %v6458 = vxor.u32 %v6449, 2147483648
  %v6459 = vsel %vm6457, %v6458, %v6450
  %v6460 = vsel %vm6453, %v6456, %v6459
  %v6461 = vsel %vm6451, nan, %v6460
  %v6462 = vand.u32 2147483647, %v5528
  %vm6463 = vcmp.le.f32.partialorder %v6462, 0.7853982
  %vm6464 = vcmp.lt.s32.totalorder %v5528, 0
  %v6465 = vand.u32 %v5528, 2139095040
  %v6466 = vshrl.u32 %v6465, 23
  %v6467 = vsub.s32 %v6466, 127
  %v6468 = vand.u32 2147483647, %v5528
  %v6469 = vand.u32 %v6468, 8388607
  %v6470 = vor.u32 %v6469, 8388608
  %v6471 = vsub.s32 0, %v6470
  %v6472 = vadd.s32 %v6467, 1
  %vm6473 = vcmp.gt.s32.totalorder %v6472, 0
  %v6474 = vsel %vm6473, %v6472, 0
  %v6475 = vshrl.u32 %v6474, 5
  %v6476 = vand.u32 %v6474, 31
  %v6477 = vsub.s32 32, %v6476
  %v6478 = vshrl.u32 683565275, %v6477
  %v6479 = vshll.u32 683565275, %v6476
  %v6480 = vshrl.u32 2475754826, %v6477
  %v6481 = vor.u32 %v6479, %v6480
  %v6482 = vshll.u32 2475754826, %v6476
  %v6483 = vshrl.u32 2131351028, %v6477
  %v6484 = vor.u32 %v6482, %v6483
  %v6485 = vshll.u32 2131351028, %v6476
  %v6486 = vshrl.u32 2102212464, %v6477
  %v6487 = vor.u32 %v6485, %v6486
  %v6488 = vshll.u32 2102212464, %v6476
  %v6489 = vshrl.u32 920167782, %v6477
  %v6490 = vor.u32 %v6488, %v6489
  %v6491 = vshll.u32 920167782, %v6476
  %v6492 = vshrl.u32 1326507024, %v6477
  %v6493 = vor.u32 %v6491, %v6492
  %vm6494 = vcmp.lt.s32.totalorder %v6475, 1
  %vm6495 = vcmp.lt.s32.totalorder %v6475, 2
  %vm6496 = vcmp.lt.s32.totalorder %v6475, 3
  %vm6497 = vcmp.lt.s32.totalorder %v6475, 4
  %v6498 = vsel %vm6494, %v6478, %v6481
  %v6499 = vsel %vm6497, %v6487, 2102212464
  %v6500 = vsel %vm6496, %v6484, %v6499
  %v6501 = vsel %vm6495, %v6498, %v6500
  %v6502 = vsel %vm6494, %v6481, %v6484
  %v6503 = vsel %vm6497, %v6490, 920167782
  %v6504 = vsel %vm6496, %v6487, %v6503
  %v6505 = vsel %vm6495, %v6502, %v6504
  %v6506 = vsel %vm6494, %v6484, %v6487
  %v6507 = vsel %vm6497, %v6493, 1326507024
  %v6508 = vsel %vm6496, %v6490, %v6507
  %v6509 = vsel %vm6495, %v6506, %v6508
  %v6510 = vshll.u32 %v6470, 8
  %v6511 = vmul.u32.u64.compose %v6510, %v6509
  %v6512 = vextract.low.u32 %v6511
  %v6513 = vextract.high.u32 %v6511
  %v6514 = vmul.u32.u64.compose %v6510, %v6505
  %v6515 = vextract.low.u32 %v6514
  %v6516 = vextract.high.u32 %v6514
  %v6517 = vmul.u32 %v6510, %v6501
  %v6518 = vadd.s32 %v6513, %v6515
  %vm6519 = vc.u32 %v6513, %v6515
  %v6520 = vadd.s32 %v6516, 1
  %v6521 = vsel %vm6519, %v6520, %v6516
  %v6522 = vadd.s32 %v6517, %v6521
  %v6523 = vadd.s32 %v6522, 536870912
  %v6524 = vshrl.u32 %v6523, 30
  %v6525 = vshll.u32 %v6524, 30
  %v6526 = vsub.s32 %v6522, %v6525
  %vm6527 = vcmp.lt.s32.totalorder %v6526, 0
  %v6528 = vsub.s32 0, %v6526
  %v6529 = vsel %vm6527, %v6528, %v6526
  %v6530 = vclz %v6529
  %v6531 = vsub.s32 %v6530, 2
  %vm6532 = vcmp.gt.s32.totalorder 0, %v6531
  %v6533 = vsel %vm6532, 0, %v6531
  %v6534 = vsub.s32 32, %v6533
  %v6535 = vshll.u32 %v6526, %v6533
  %v6536 = vshrl.u32 %v6518, %v6534
  %v6537 = vor.u32 %v6535, %v6536
  %v6538 = vsub.s32 4294967266, %v6533
  %v6539 = vadd.s32 %v6538, 127
  %v6540 = vshll.u32 %v6539, 23
  %v6541 = vor.u32 4788187, %v6540
  %v6542 = vand.u32 2147483647, %v6541
  %v6544 = vcvt.s32.f32 %v6537
  %v6545 = vmul.f32 %v6544, %v6542
  %v6546 = vxor.u32 %v6545, 2147483648
  %v6547 = vsel %vm6464, %v6546, %v6545
  %v6548 = vsub.s32 4, %v6524
  %v6549 = vsel %vm6464, %v6548, %v6524
  %v6550 = vsel %vm6463, %v5528, %v6547
  %v6551 = vsel %vm6463, 0, %v6549
  %v6552 = vcosq.f32.pop %v6550
  %v6553 = vsinq.f32.pop %v6550
  %vm6554 = vweird.f32 %v5528
  %v6555 = vand.u32 %v6551, 3
  %vm6556 = vcmp.lt.s32.totalorder %v6555, 2
  %vm6557 = vcmp.eq.s32.totalorder %v6555, 0
  %v6558 = vxor.u32 %v6553, 2147483648
  %v6559 = vsel %vm6557, %v6552, %v6558
  %vm6560 = vcmp.eq.s32.totalorder %v6555, 2
  %v6561 = vxor.u32 %v6552, 2147483648
  %v6562 = vsel %vm6560, %v6561, %v6553
  %v6563 = vsel %vm6556, %v6559, %v6562
  %v6564 = vsel %vm6554, nan, %v6563
  %v6565 = vand.u32 2147483647, %v5529
  %vm6566 = vcmp.le.f32.partialorder %v6565, 0.7853982
  %vm6567 = vcmp.lt.s32.totalorder %v5529, 0
  %v6568 = vand.u32 %v5529, 2139095040
  %v6569 = vshrl.u32 %v6568, 23
  %v6570 = vsub.s32 %v6569, 127
  %v6571 = vand.u32 2147483647, %v5529
  %v6572 = vand.u32 %v6571, 8388607
  %v6573 = vor.u32 %v6572, 8388608
  %v6574 = vsub.s32 0, %v6573
  %v6575 = vadd.s32 %v6570, 1
  %vm6576 = vcmp.gt.s32.totalorder %v6575, 0
  %v6577 = vsel %vm6576, %v6575, 0
  %v6578 = vshrl.u32 %v6577, 5
  %v6579 = vand.u32 %v6577, 31
  %v6580 = vsub.s32 32, %v6579
  %v6581 = vshrl.u32 683565275, %v6580
  %v6582 = vshll.u32 683565275, %v6579
  %v6583 = vshrl.u32 2475754826, %v6580
  %v6584 = vor.u32 %v6582, %v6583
  %v6585 = vshll.u32 2475754826, %v6579
  %v6586 = vshrl.u32 2131351028, %v6580
  %v6587 = vor.u32 %v6585, %v6586
  %v6588 = vshll.u32 2131351028, %v6579
  %v6589 = vshrl.u32 2102212464, %v6580
  %v6590 = vor.u32 %v6588, %v6589
  %v6591 = vshll.u32 2102212464, %v6579
  %v6592 = vshrl.u32 920167782, %v6580
  %v6593 = vor.u32 %v6591, %v6592
  %v6594 = vshll.u32 920167782, %v6579
  %v6595 = vshrl.u32 1326507024, %v6580
  %v6596 = vor.u32 %v6594, %v6595
  %vm6597 = vcmp.lt.s32.totalorder %v6578, 1
  %vm6598 = vcmp.lt.s32.totalorder %v6578, 2
  %vm6599 = vcmp.lt.s32.totalorder %v6578, 3
  %vm6600 = vcmp.lt.s32.totalorder %v6578, 4
  %v6601 = vsel %vm6597, %v6581, %v6584
  %v6602 = vsel %vm6600, %v6590, 2102212464
  %v6603 = vsel %vm6599, %v6587, %v6602
  %v6604 = vsel %vm6598, %v6601, %v6603
  %v6605 = vsel %vm6597, %v6584, %v6587
  %v6606 = vsel %vm6600, %v6593, 920167782
  %v6607 = vsel %vm6599, %v6590, %v6606
  %v6608 = vsel %vm6598, %v6605, %v6607
  %v6609 = vsel %vm6597, %v6587, %v6590
  %v6610 = vsel %vm6600, %v6596, 1326507024
  %v6611 = vsel %vm6599, %v6593, %v6610
  %v6612 = vsel %vm6598, %v6609, %v6611
  %v6613 = vshll.u32 %v6573, 8
  %v6614 = vmul.u32.u64.compose %v6613, %v6612
  %v6615 = vextract.low.u32 %v6614
  %v6616 = vextract.high.u32 %v6614
  %v6617 = vmul.u32.u64.compose %v6613, %v6608
  %v6618 = vextract.low.u32 %v6617
  %v6619 = vextract.high.u32 %v6617
  %v6620 = vmul.u32 %v6613, %v6604
  %v6621 = vadd.s32 %v6616, %v6618
  %vm6622 = vc.u32 %v6616, %v6618
  %v6623 = vadd.s32 %v6619, 1
  %v6624 = vsel %vm6622, %v6623, %v6619
  %v6625 = vadd.s32 %v6620, %v6624
  %v6626 = vadd.s32 %v6625, 536870912
  %v6627 = vshrl.u32 %v6626, 30
  %v6628 = vshll.u32 %v6627, 30
  %v6629 = vsub.s32 %v6625, %v6628
  %vm6630 = vcmp.lt.s32.totalorder %v6629, 0
  %v6631 = vsub.s32 0, %v6629
  %v6632 = vsel %vm6630, %v6631, %v6629
  %v6633 = vclz %v6632
  %v6634 = vsub.s32 %v6633, 2
  %vm6635 = vcmp.gt.s32.totalorder 0, %v6634
  %v6636 = vsel %vm6635, 0, %v6634
  %v6637 = vsub.s32 32, %v6636
  %v6638 = vshll.u32 %v6629, %v6636
  %v6639 = vshrl.u32 %v6621, %v6637
  %v6640 = vor.u32 %v6638, %v6639
  %v6641 = vsub.s32 4294967266, %v6636
  %v6642 = vadd.s32 %v6641, 127
  %v6643 = vshll.u32 %v6642, 23
  %v6644 = vor.u32 4788187, %v6643
  %v6645 = vand.u32 2147483647, %v6644
  %v6647 = vcvt.s32.f32 %v6640
  %v6648 = vmul.f32 %v6647, %v6645
  %v6649 = vxor.u32 %v6648, 2147483648
  %v6650 = vsel %vm6567, %v6649, %v6648
  %v6651 = vsub.s32 4, %v6627
  %v6652 = vsel %vm6567, %v6651, %v6627
  %v6653 = vsel %vm6566, %v5529, %v6650
  %v6654 = vsel %vm6566, 0, %v6652
  %v6655 = vcosq.f32.pop %v6653
  %v6656 = vsinq.f32.pop %v6653
  %vm6657 = vweird.f32 %v5529
  %v6658 = vand.u32 %v6654, 3
  %vm6659 = vcmp.lt.s32.totalorder %v6658, 2
  %vm6660 = vcmp.eq.s32.totalorder %v6658, 0
  %v6661 = vxor.u32 %v6656, 2147483648
  %v6662 = vsel %vm6660, %v6655, %v6661
  %vm6663 = vcmp.eq.s32.totalorder %v6658, 2
  %v6664 = vxor.u32 %v6655, 2147483648
  %v6665 = vsel %vm6663, %v6664, %v6656
  %v6666 = vsel %vm6659, %v6662, %v6665
  %v6667 = vsel %vm6657, nan, %v6666
  %v6668 = vand.u32 2147483647, %v5530
  %vm6669 = vcmp.le.f32.partialorder %v6668, 0.7853982
  %vm6670 = vcmp.lt.s32.totalorder %v5530, 0
  %v6671 = vand.u32 %v5530, 2139095040
  %v6672 = vshrl.u32 %v6671, 23
  %v6673 = vsub.s32 %v6672, 127
  %v6674 = vand.u32 2147483647, %v5530
  %v6675 = vand.u32 %v6674, 8388607
  %v6676 = vor.u32 %v6675, 8388608
  %v6677 = vsub.s32 0, %v6676
  %v6678 = vadd.s32 %v6673, 1
  %vm6679 = vcmp.gt.s32.totalorder %v6678, 0
  %v6680 = vsel %vm6679, %v6678, 0
  %v6681 = vshrl.u32 %v6680, 5
  %v6682 = vand.u32 %v6680, 31
  %v6683 = vsub.s32 32, %v6682
  %v6684 = vshrl.u32 683565275, %v6683
  %v6685 = vshll.u32 683565275, %v6682
  %v6686 = vshrl.u32 2475754826, %v6683
  %v6687 = vor.u32 %v6685, %v6686
  %v6688 = vshll.u32 2475754826, %v6682
  %v6689 = vshrl.u32 2131351028, %v6683
  %v6690 = vor.u32 %v6688, %v6689
  %v6691 = vshll.u32 2131351028, %v6682
  %v6692 = vshrl.u32 2102212464, %v6683
  %v6693 = vor.u32 %v6691, %v6692
  %v6694 = vshll.u32 2102212464, %v6682
  %v6695 = vshrl.u32 920167782, %v6683
  %v6696 = vor.u32 %v6694, %v6695
  %v6697 = vshll.u32 920167782, %v6682
  %v6698 = vshrl.u32 1326507024, %v6683
  %v6699 = vor.u32 %v6697, %v6698
  %vm6700 = vcmp.lt.s32.totalorder %v6681, 1
  %vm6701 = vcmp.lt.s32.totalorder %v6681, 2
  %vm6702 = vcmp.lt.s32.totalorder %v6681, 3
  %vm6703 = vcmp.lt.s32.totalorder %v6681, 4
  %v6704 = vsel %vm6700, %v6684, %v6687
  %v6705 = vsel %vm6703, %v6693, 2102212464
  %v6706 = vsel %vm6702, %v6690, %v6705
  %v6707 = vsel %vm6701, %v6704, %v6706
  %v6708 = vsel %vm6700, %v6687, %v6690
  %v6709 = vsel %vm6703, %v6696, 920167782
  %v6710 = vsel %vm6702, %v6693, %v6709
  %v6711 = vsel %vm6701, %v6708, %v6710
  %v6712 = vsel %vm6700, %v6690, %v6693
  %v6713 = vsel %vm6703, %v6699, 1326507024
  %v6714 = vsel %vm6702, %v6696, %v6713
  %v6715 = vsel %vm6701, %v6712, %v6714
  %v6716 = vshll.u32 %v6676, 8
  %v6717 = vmul.u32.u64.compose %v6716, %v6715
  %v6718 = vextract.low.u32 %v6717
  %v6719 = vextract.high.u32 %v6717
  %v6720 = vmul.u32.u64.compose %v6716, %v6711
  %v6721 = vextract.low.u32 %v6720
  %v6722 = vextract.high.u32 %v6720
  %v6723 = vmul.u32 %v6716, %v6707
  %v6724 = vadd.s32 %v6719, %v6721
  %vm6725 = vc.u32 %v6719, %v6721
  %v6726 = vadd.s32 %v6722, 1
  %v6727 = vsel %vm6725, %v6726, %v6722
  %v6728 = vadd.s32 %v6723, %v6727
  %v6729 = vadd.s32 %v6728, 536870912
  %v6730 = vshrl.u32 %v6729, 30
  %v6731 = vshll.u32 %v6730, 30
  %v6732 = vsub.s32 %v6728, %v6731
  %vm6733 = vcmp.lt.s32.totalorder %v6732, 0
  %v6734 = vsub.s32 0, %v6732
  %v6735 = vsel %vm6733, %v6734, %v6732
  %v6736 = vclz %v6735
  %v6737 = vsub.s32 %v6736, 2
  %vm6738 = vcmp.gt.s32.totalorder 0, %v6737
  %v6739 = vsel %vm6738, 0, %v6737
  %v6740 = vsub.s32 32, %v6739
  %v6741 = vshll.u32 %v6732, %v6739
  %v6742 = vshrl.u32 %v6724, %v6740
  %v6743 = vor.u32 %v6741, %v6742
  %v6744 = vsub.s32 4294967266, %v6739
  %v6745 = vadd.s32 %v6744, 127
  %v6746 = vshll.u32 %v6745, 23
  %v6747 = vor.u32 4788187, %v6746
  %v6748 = vand.u32 2147483647, %v6747
  %v6750 = vcvt.s32.f32 %v6743
  %v6751 = vmul.f32 %v6750, %v6748
  %v6752 = vxor.u32 %v6751, 2147483648
  %v6753 = vsel %vm6670, %v6752, %v6751
  %v6754 = vsub.s32 4, %v6730
  %v6755 = vsel %vm6670, %v6754, %v6730
  %v6756 = vsel %vm6669, %v5530, %v6753
  %v6757 = vsel %vm6669, 0, %v6755
  %v6758 = vcosq.f32.pop %v6756
  %v6759 = vsinq.f32.pop %v6756
  %vm6760 = vweird.f32 %v5530
  %v6761 = vand.u32 %v6757, 3
  %vm6762 = vcmp.lt.s32.totalorder %v6761, 2
  %vm6763 = vcmp.eq.s32.totalorder %v6761, 0
  %v6764 = vxor.u32 %v6759, 2147483648
  %v6765 = vsel %vm6763, %v6758, %v6764
  %vm6766 = vcmp.eq.s32.totalorder %v6761, 2
  %v6767 = vxor.u32 %v6758, 2147483648
  %v6768 = vsel %vm6766, %v6767, %v6759
  %v6769 = vsel %vm6762, %v6765, %v6768
  %v6770 = vsel %vm6760, nan, %v6769
  %v6771 = vand.u32 2147483647, %v5531
  %vm6772 = vcmp.le.f32.partialorder %v6771, 0.7853982
  %vm6773 = vcmp.lt.s32.totalorder %v5531, 0
  %v6774 = vand.u32 %v5531, 2139095040
  %v6775 = vshrl.u32 %v6774, 23
  %v6776 = vsub.s32 %v6775, 127
  %v6777 = vand.u32 2147483647, %v5531
  %v6778 = vand.u32 %v6777, 8388607
  %v6779 = vor.u32 %v6778, 8388608
  %v6780 = vsub.s32 0, %v6779
  %v6781 = vadd.s32 %v6776, 1
  %vm6782 = vcmp.gt.s32.totalorder %v6781, 0
  %v6783 = vsel %vm6782, %v6781, 0
  %v6784 = vshrl.u32 %v6783, 5
  %v6785 = vand.u32 %v6783, 31
  %v6786 = vsub.s32 32, %v6785
  %v6787 = vshrl.u32 683565275, %v6786
  %v6788 = vshll.u32 683565275, %v6785
  %v6789 = vshrl.u32 2475754826, %v6786
  %v6790 = vor.u32 %v6788, %v6789
  %v6791 = vshll.u32 2475754826, %v6785
  %v6792 = vshrl.u32 2131351028, %v6786
  %v6793 = vor.u32 %v6791, %v6792
  %v6794 = vshll.u32 2131351028, %v6785
  %v6795 = vshrl.u32 2102212464, %v6786
  %v6796 = vor.u32 %v6794, %v6795
  %v6797 = vshll.u32 2102212464, %v6785
  %v6798 = vshrl.u32 920167782, %v6786
  %v6799 = vor.u32 %v6797, %v6798
  %v6800 = vshll.u32 920167782, %v6785
  %v6801 = vshrl.u32 1326507024, %v6786
  %v6802 = vor.u32 %v6800, %v6801
  %vm6803 = vcmp.lt.s32.totalorder %v6784, 1
  %vm6804 = vcmp.lt.s32.totalorder %v6784, 2
  %vm6805 = vcmp.lt.s32.totalorder %v6784, 3
  %vm6806 = vcmp.lt.s32.totalorder %v6784, 4
  %v6807 = vsel %vm6803, %v6787, %v6790
  %v6808 = vsel %vm6806, %v6796, 2102212464
  %v6809 = vsel %vm6805, %v6793, %v6808
  %v6810 = vsel %vm6804, %v6807, %v6809
  %v6811 = vsel %vm6803, %v6790, %v6793
  %v6812 = vsel %vm6806, %v6799, 920167782
  %v6813 = vsel %vm6805, %v6796, %v6812
  %v6814 = vsel %vm6804, %v6811, %v6813
  %v6815 = vsel %vm6803, %v6793, %v6796
  %v6816 = vsel %vm6806, %v6802, 1326507024
  %v6817 = vsel %vm6805, %v6799, %v6816
  %v6818 = vsel %vm6804, %v6815, %v6817
  %v6819 = vshll.u32 %v6779, 8
  %v6820 = vmul.u32.u64.compose %v6819, %v6818
  %v6821 = vextract.low.u32 %v6820
  %v6822 = vextract.high.u32 %v6820
  %v6823 = vmul.u32.u64.compose %v6819, %v6814
  %v6824 = vextract.low.u32 %v6823
  %v6825 = vextract.high.u32 %v6823
  %v6826 = vmul.u32 %v6819, %v6810
  %v6827 = vadd.s32 %v6822, %v6824
  %vm6828 = vc.u32 %v6822, %v6824
  %v6829 = vadd.s32 %v6825, 1
  %v6830 = vsel %vm6828, %v6829, %v6825
  %v6831 = vadd.s32 %v6826, %v6830
  %v6832 = vadd.s32 %v6831, 536870912
  %v6833 = vshrl.u32 %v6832, 30
  %v6834 = vshll.u32 %v6833, 30
  %v6835 = vsub.s32 %v6831, %v6834
  %vm6836 = vcmp.lt.s32.totalorder %v6835, 0
  %v6837 = vsub.s32 0, %v6835
  %v6838 = vsel %vm6836, %v6837, %v6835
  %v6839 = vclz %v6838
  %v6840 = vsub.s32 %v6839, 2
  %vm6841 = vcmp.gt.s32.totalorder 0, %v6840
  %v6842 = vsel %vm6841, 0, %v6840
  %v6843 = vsub.s32 32, %v6842
  %v6844 = vshll.u32 %v6835, %v6842
  %v6845 = vshrl.u32 %v6827, %v6843
  %v6846 = vor.u32 %v6844, %v6845
  %v6847 = vsub.s32 4294967266, %v6842
  %v6848 = vadd.s32 %v6847, 127
  %v6849 = vshll.u32 %v6848, 23
  %v6850 = vor.u32 4788187, %v6849
  %v6851 = vand.u32 2147483647, %v6850
  %v6853 = vcvt.s32.f32 %v6846
  %v6854 = vmul.f32 %v6853, %v6851
  %v6855 = vxor.u32 %v6854, 2147483648
  %v6856 = vsel %vm6773, %v6855, %v6854
  %v6857 = vsub.s32 4, %v6833
  %v6858 = vsel %vm6773, %v6857, %v6833
  %v6859 = vsel %vm6772, %v5531, %v6856
  %v6860 = vsel %vm6772, 0, %v6858
  %v6861 = vcosq.f32.pop %v6859
  %v6862 = vsinq.f32.pop %v6859
  %vm6863 = vweird.f32 %v5531
  %v6864 = vand.u32 %v6860, 3
  %vm6865 = vcmp.lt.s32.totalorder %v6864, 2
  %vm6866 = vcmp.eq.s32.totalorder %v6864, 0
  %v6867 = vxor.u32 %v6862, 2147483648
  %v6868 = vsel %vm6866, %v6861, %v6867
  %vm6869 = vcmp.eq.s32.totalorder %v6864, 2
  %v6870 = vxor.u32 %v6861, 2147483648
  %v6871 = vsel %vm6869, %v6870, %v6862
  %v6872 = vsel %vm6865, %v6868, %v6871
  %v6873 = vsel %vm6863, nan, %v6872
  %v6874 = vand.u32 2147483647, %v5532
  %vm6875 = vcmp.le.f32.partialorder %v6874, 0.7853982
  %vm6876 = vcmp.lt.s32.totalorder %v5532, 0
  %v6877 = vand.u32 %v5532, 2139095040
  %v6878 = vshrl.u32 %v6877, 23
  %v6879 = vsub.s32 %v6878, 127
  %v6880 = vand.u32 2147483647, %v5532
  %v6881 = vand.u32 %v6880, 8388607
  %v6882 = vor.u32 %v6881, 8388608
  %v6883 = vsub.s32 0, %v6882
  %v6884 = vadd.s32 %v6879, 1
  %vm6885 = vcmp.gt.s32.totalorder %v6884, 0
  %v6886 = vsel %vm6885, %v6884, 0
  %v6887 = vshrl.u32 %v6886, 5
  %v6888 = vand.u32 %v6886, 31
  %v6889 = vsub.s32 32, %v6888
  %v6890 = vshrl.u32 683565275, %v6889
  %v6891 = vshll.u32 683565275, %v6888
  %v6892 = vshrl.u32 2475754826, %v6889
  %v6893 = vor.u32 %v6891, %v6892
  %v6894 = vshll.u32 2475754826, %v6888
  %v6895 = vshrl.u32 2131351028, %v6889
  %v6896 = vor.u32 %v6894, %v6895
  %v6897 = vshll.u32 2131351028, %v6888
  %v6898 = vshrl.u32 2102212464, %v6889
  %v6899 = vor.u32 %v6897, %v6898
  %v6900 = vshll.u32 2102212464, %v6888
  %v6901 = vshrl.u32 920167782, %v6889
  %v6902 = vor.u32 %v6900, %v6901
  %v6903 = vshll.u32 920167782, %v6888
  %v6904 = vshrl.u32 1326507024, %v6889
  %v6905 = vor.u32 %v6903, %v6904
  %vm6906 = vcmp.lt.s32.totalorder %v6887, 1
  %vm6907 = vcmp.lt.s32.totalorder %v6887, 2
  %vm6908 = vcmp.lt.s32.totalorder %v6887, 3
  %vm6909 = vcmp.lt.s32.totalorder %v6887, 4
  %v6910 = vsel %vm6906, %v6890, %v6893
  %v6911 = vsel %vm6909, %v6899, 2102212464
  %v6912 = vsel %vm6908, %v6896, %v6911
  %v6913 = vsel %vm6907, %v6910, %v6912
  %v6914 = vsel %vm6906, %v6893, %v6896
  %v6915 = vsel %vm6909, %v6902, 920167782
  %v6916 = vsel %vm6908, %v6899, %v6915
  %v6917 = vsel %vm6907, %v6914, %v6916
  %v6918 = vsel %vm6906, %v6896, %v6899
  %v6919 = vsel %vm6909, %v6905, 1326507024
  %v6920 = vsel %vm6908, %v6902, %v6919
  %v6921 = vsel %vm6907, %v6918, %v6920
  %v6922 = vshll.u32 %v6882, 8
  %v6923 = vmul.u32.u64.compose %v6922, %v6921
  %v6924 = vextract.low.u32 %v6923
  %v6925 = vextract.high.u32 %v6923
  %v6926 = vmul.u32.u64.compose %v6922, %v6917
  %v6927 = vextract.low.u32 %v6926
  %v6928 = vextract.high.u32 %v6926
  %v6929 = vmul.u32 %v6922, %v6913
  %v6930 = vadd.s32 %v6925, %v6927
  %vm6931 = vc.u32 %v6925, %v6927
  %v6932 = vadd.s32 %v6928, 1
  %v6933 = vsel %vm6931, %v6932, %v6928
  %v6934 = vadd.s32 %v6929, %v6933
  %v6935 = vadd.s32 %v6934, 536870912
  %v6936 = vshrl.u32 %v6935, 30
  %v6937 = vshll.u32 %v6936, 30
  %v6938 = vsub.s32 %v6934, %v6937
  %vm6939 = vcmp.lt.s32.totalorder %v6938, 0
  %v6940 = vsub.s32 0, %v6938
  %v6941 = vsel %vm6939, %v6940, %v6938
  %v6942 = vclz %v6941
  %v6943 = vsub.s32 %v6942, 2
  %vm6944 = vcmp.gt.s32.totalorder 0, %v6943
  %v6945 = vsel %vm6944, 0, %v6943
  %v6946 = vsub.s32 32, %v6945
  %v6947 = vshll.u32 %v6938, %v6945
  %v6948 = vshrl.u32 %v6930, %v6946
  %v6949 = vor.u32 %v6947, %v6948
  %v6950 = vsub.s32 4294967266, %v6945
  %v6951 = vadd.s32 %v6950, 127
  %v6952 = vshll.u32 %v6951, 23
  %v6953 = vor.u32 4788187, %v6952
  %v6954 = vand.u32 2147483647, %v6953
  %v6956 = vcvt.s32.f32 %v6949
  %v6957 = vmul.f32 %v6956, %v6954
  %v6958 = vxor.u32 %v6957, 2147483648
  %v6959 = vsel %vm6876, %v6958, %v6957
  %v6960 = vsub.s32 4, %v6936
  %v6961 = vsel %vm6876, %v6960, %v6936
  %v6962 = vsel %vm6875, %v5532, %v6959
  %v6963 = vsel %vm6875, 0, %v6961
  %v6964 = vcosq.f32.pop %v6962
  %v6965 = vsinq.f32.pop %v6962
  %vm6966 = vweird.f32 %v5532
  %v6967 = vand.u32 %v6963, 3
  %vm6968 = vcmp.lt.s32.totalorder %v6967, 2
  %vm6969 = vcmp.eq.s32.totalorder %v6967, 0
  %v6970 = vxor.u32 %v6965, 2147483648
  %v6971 = vsel %vm6969, %v6964, %v6970
  %vm6972 = vcmp.eq.s32.totalorder %v6967, 2
  %v6973 = vxor.u32 %v6964, 2147483648
  %v6974 = vsel %vm6972, %v6973, %v6965
  %v6975 = vsel %vm6968, %v6971, %v6974
  %v6976 = vsel %vm6966, nan, %v6975
  %v6977 = vand.u32 2147483647, %v5533
  %vm6978 = vcmp.le.f32.partialorder %v6977, 0.7853982
  %vm6979 = vcmp.lt.s32.totalorder %v5533, 0
  %v6980 = vand.u32 %v5533, 2139095040
  %v6981 = vshrl.u32 %v6980, 23
  %v6982 = vsub.s32 %v6981, 127
  %v6983 = vand.u32 2147483647, %v5533
  %v6984 = vand.u32 %v6983, 8388607
  %v6985 = vor.u32 %v6984, 8388608
  %v6986 = vsub.s32 0, %v6985
  %v6987 = vadd.s32 %v6982, 1
  %vm6988 = vcmp.gt.s32.totalorder %v6987, 0
  %v6989 = vsel %vm6988, %v6987, 0
  %v6990 = vshrl.u32 %v6989, 5
  %v6991 = vand.u32 %v6989, 31
  %v6992 = vsub.s32 32, %v6991
  %v6993 = vshrl.u32 683565275, %v6992
  %v6994 = vshll.u32 683565275, %v6991
  %v6995 = vshrl.u32 2475754826, %v6992
  %v6996 = vor.u32 %v6994, %v6995
  %v6997 = vshll.u32 2475754826, %v6991
  %v6998 = vshrl.u32 2131351028, %v6992
  %v6999 = vor.u32 %v6997, %v6998
  %v7000 = vshll.u32 2131351028, %v6991
  %v7001 = vshrl.u32 2102212464, %v6992
  %v7002 = vor.u32 %v7000, %v7001
  %v7003 = vshll.u32 2102212464, %v6991
  %v7004 = vshrl.u32 920167782, %v6992
  %v7005 = vor.u32 %v7003, %v7004
  %v7006 = vshll.u32 920167782, %v6991
  %v7007 = vshrl.u32 1326507024, %v6992
  %v7008 = vor.u32 %v7006, %v7007
  %vm7009 = vcmp.lt.s32.totalorder %v6990, 1
  %vm7010 = vcmp.lt.s32.totalorder %v6990, 2
  %vm7011 = vcmp.lt.s32.totalorder %v6990, 3
  %vm7012 = vcmp.lt.s32.totalorder %v6990, 4
  %v7013 = vsel %vm7009, %v6993, %v6996
  %v7014 = vsel %vm7012, %v7002, 2102212464
  %v7015 = vsel %vm7011, %v6999, %v7014
  %v7016 = vsel %vm7010, %v7013, %v7015
  %v7017 = vsel %vm7009, %v6996, %v6999
  %v7018 = vsel %vm7012, %v7005, 920167782
  %v7019 = vsel %vm7011, %v7002, %v7018
  %v7020 = vsel %vm7010, %v7017, %v7019
  %v7021 = vsel %vm7009, %v6999, %v7002
  %v7022 = vsel %vm7012, %v7008, 1326507024
  %v7023 = vsel %vm7011, %v7005, %v7022
  %v7024 = vsel %vm7010, %v7021, %v7023
  %v7025 = vshll.u32 %v6985, 8
  %v7026 = vmul.u32.u64.compose %v7025, %v7024
  %v7027 = vextract.low.u32 %v7026
  %v7028 = vextract.high.u32 %v7026
  %v7029 = vmul.u32.u64.compose %v7025, %v7020
  %v7030 = vextract.low.u32 %v7029
  %v7031 = vextract.high.u32 %v7029
  %v7032 = vmul.u32 %v7025, %v7016
  %v7033 = vadd.s32 %v7028, %v7030
  %vm7034 = vc.u32 %v7028, %v7030
  %v7035 = vadd.s32 %v7031, 1
  %v7036 = vsel %vm7034, %v7035, %v7031
  %v7037 = vadd.s32 %v7032, %v7036
  %v7038 = vadd.s32 %v7037, 536870912
  %v7039 = vshrl.u32 %v7038, 30
  %v7040 = vshll.u32 %v7039, 30
  %v7041 = vsub.s32 %v7037, %v7040
  %vm7042 = vcmp.lt.s32.totalorder %v7041, 0
  %v7043 = vsub.s32 0, %v7041
  %v7044 = vsel %vm7042, %v7043, %v7041
  %v7045 = vclz %v7044
  %v7046 = vsub.s32 %v7045, 2
  %vm7047 = vcmp.gt.s32.totalorder 0, %v7046
  %v7048 = vsel %vm7047, 0, %v7046
  %v7049 = vsub.s32 32, %v7048
  %v7050 = vshll.u32 %v7041, %v7048
  %v7051 = vshrl.u32 %v7033, %v7049
  %v7052 = vor.u32 %v7050, %v7051
  %v7053 = vsub.s32 4294967266, %v7048
  %v7054 = vadd.s32 %v7053, 127
  %v7055 = vshll.u32 %v7054, 23
  %v7056 = vor.u32 4788187, %v7055
  %v7057 = vand.u32 2147483647, %v7056
  %v7059 = vcvt.s32.f32 %v7052
  %v7060 = vmul.f32 %v7059, %v7057
  %v7061 = vxor.u32 %v7060, 2147483648
  %v7062 = vsel %vm6979, %v7061, %v7060
  %v7063 = vsub.s32 4, %v7039
  %v7064 = vsel %vm6979, %v7063, %v7039
  %v7065 = vsel %vm6978, %v5533, %v7062
  %v7066 = vsel %vm6978, 0, %v7064
  %v7067 = vcosq.f32.pop %v7065
  %v7068 = vsinq.f32.pop %v7065
  %vm7069 = vweird.f32 %v5533
  %v7070 = vand.u32 %v7066, 3
  %vm7071 = vcmp.lt.s32.totalorder %v7070, 2
  %vm7072 = vcmp.eq.s32.totalorder %v7070, 0
  %v7073 = vxor.u32 %v7068, 2147483648
  %v7074 = vsel %vm7072, %v7067, %v7073
  %vm7075 = vcmp.eq.s32.totalorder %v7070, 2
  %v7076 = vxor.u32 %v7067, 2147483648
  %v7077 = vsel %vm7075, %v7076, %v7068
  %v7078 = vsel %vm7071, %v7074, %v7077
  %v7079 = vsel %vm7069, nan, %v7078
  %v7080 = vand.u32 2147483647, %v5534
  %vm7081 = vcmp.le.f32.partialorder %v7080, 0.7853982
  %vm7082 = vcmp.lt.s32.totalorder %v5534, 0
  %v7083 = vand.u32 %v5534, 2139095040
  %v7084 = vshrl.u32 %v7083, 23
  %v7085 = vsub.s32 %v7084, 127
  %v7086 = vand.u32 2147483647, %v5534
  %v7087 = vand.u32 %v7086, 8388607
  %v7088 = vor.u32 %v7087, 8388608
  %v7089 = vsub.s32 0, %v7088
  %v7090 = vadd.s32 %v7085, 1
  %vm7091 = vcmp.gt.s32.totalorder %v7090, 0
  %v7092 = vsel %vm7091, %v7090, 0
  %v7093 = vshrl.u32 %v7092, 5
  %v7094 = vand.u32 %v7092, 31
  %v7095 = vsub.s32 32, %v7094
  %v7096 = vshrl.u32 683565275, %v7095
  %v7097 = vshll.u32 683565275, %v7094
  %v7098 = vshrl.u32 2475754826, %v7095
  %v7099 = vor.u32 %v7097, %v7098
  %v7100 = vshll.u32 2475754826, %v7094
  %v7101 = vshrl.u32 2131351028, %v7095
  %v7102 = vor.u32 %v7100, %v7101
  %v7103 = vshll.u32 2131351028, %v7094
  %v7104 = vshrl.u32 2102212464, %v7095
  %v7105 = vor.u32 %v7103, %v7104
  %v7106 = vshll.u32 2102212464, %v7094
  %v7107 = vshrl.u32 920167782, %v7095
  %v7108 = vor.u32 %v7106, %v7107
  %v7109 = vshll.u32 920167782, %v7094
  %v7110 = vshrl.u32 1326507024, %v7095
  %v7111 = vor.u32 %v7109, %v7110
  %vm7112 = vcmp.lt.s32.totalorder %v7093, 1
  %vm7113 = vcmp.lt.s32.totalorder %v7093, 2
  %vm7114 = vcmp.lt.s32.totalorder %v7093, 3
  %vm7115 = vcmp.lt.s32.totalorder %v7093, 4
  %v7116 = vsel %vm7112, %v7096, %v7099
  %v7117 = vsel %vm7115, %v7105, 2102212464
  %v7118 = vsel %vm7114, %v7102, %v7117
  %v7119 = vsel %vm7113, %v7116, %v7118
  %v7120 = vsel %vm7112, %v7099, %v7102
  %v7121 = vsel %vm7115, %v7108, 920167782
  %v7122 = vsel %vm7114, %v7105, %v7121
  %v7123 = vsel %vm7113, %v7120, %v7122
  %v7124 = vsel %vm7112, %v7102, %v7105
  %v7125 = vsel %vm7115, %v7111, 1326507024
  %v7126 = vsel %vm7114, %v7108, %v7125
  %v7127 = vsel %vm7113, %v7124, %v7126
  %v7128 = vshll.u32 %v7088, 8
  %v7129 = vmul.u32.u64.compose %v7128, %v7127
  %v7130 = vextract.low.u32 %v7129
  %v7131 = vextract.high.u32 %v7129
  %v7132 = vmul.u32.u64.compose %v7128, %v7123
  %v7133 = vextract.low.u32 %v7132
  %v7134 = vextract.high.u32 %v7132
  %v7135 = vmul.u32 %v7128, %v7119
  %v7136 = vadd.s32 %v7131, %v7133
  %vm7137 = vc.u32 %v7131, %v7133
  %v7138 = vadd.s32 %v7134, 1
  %v7139 = vsel %vm7137, %v7138, %v7134
  %v7140 = vadd.s32 %v7135, %v7139
  %v7141 = vadd.s32 %v7140, 536870912
  %v7142 = vshrl.u32 %v7141, 30
  %v7143 = vshll.u32 %v7142, 30
  %v7144 = vsub.s32 %v7140, %v7143
  %vm7145 = vcmp.lt.s32.totalorder %v7144, 0
  %v7146 = vsub.s32 0, %v7144
  %v7147 = vsel %vm7145, %v7146, %v7144
  %v7148 = vclz %v7147
  %v7149 = vsub.s32 %v7148, 2
  %vm7150 = vcmp.gt.s32.totalorder 0, %v7149
  %v7151 = vsel %vm7150, 0, %v7149
  %v7152 = vsub.s32 32, %v7151
  %v7153 = vshll.u32 %v7144, %v7151
  %v7154 = vshrl.u32 %v7136, %v7152
  %v7155 = vor.u32 %v7153, %v7154
  %v7156 = vsub.s32 4294967266, %v7151
  %v7157 = vadd.s32 %v7156, 127
  %v7158 = vshll.u32 %v7157, 23
  %v7159 = vor.u32 4788187, %v7158
  %v7160 = vand.u32 2147483647, %v7159
  %v7162 = vcvt.s32.f32 %v7155
  %v7163 = vmul.f32 %v7162, %v7160
  %v7164 = vxor.u32 %v7163, 2147483648
  %v7165 = vsel %vm7082, %v7164, %v7163
  %v7166 = vsub.s32 4, %v7142
  %v7167 = vsel %vm7082, %v7166, %v7142
  %v7168 = vsel %vm7081, %v5534, %v7165
  %v7169 = vsel %vm7081, 0, %v7167
  %v7170 = vcosq.f32.pop %v7168
  %v7171 = vsinq.f32.pop %v7168
  %vm7172 = vweird.f32 %v5534
  %v7173 = vand.u32 %v7169, 3
  %vm7174 = vcmp.lt.s32.totalorder %v7173, 2
  %vm7175 = vcmp.eq.s32.totalorder %v7173, 0
  %v7176 = vxor.u32 %v7171, 2147483648
  %v7177 = vsel %vm7175, %v7170, %v7176
  %vm7178 = vcmp.eq.s32.totalorder %v7173, 2
  %v7179 = vxor.u32 %v7170, 2147483648
  %v7180 = vsel %vm7178, %v7179, %v7171
  %v7181 = vsel %vm7174, %v7177, %v7180
  %v7182 = vsel %vm7172, nan, %v7181
  %v7183 = vpack.c.bf16 %v5740, %v5637
  %v7184 = vpack.c.bf16 %v5946, %v5843
  %v7185 = vpack.c.bf16 %v6152, %v6049
  %v7186 = vpack.c.bf16 %v6358, %v6255
  %v7187 = vpack.c.bf16 %v6564, %v6461
  %v7188 = vpack.c.bf16 %v6770, %v6667
  %v7189 = vpack.c.bf16 %v6976, %v6873
  %v7190 = vpack.c.bf16 %v7182, %v7079
  %v7192 = vsel %vm1711, %v7183, 0
  %v7195 = vsel %vm1711, %v7184, 0
  %v7198 = vsel %vm1711, %v7185, 0
  %v7201 = vsel %vm1711, %v7186, 0
  %v7204 = vsel %vm1711, %v7187, 0
  %v7207 = vsel %vm1711, %v7188, 0
  %v7210 = vsel %vm1711, %v7189, 0
  %v7213 = vsel %vm1711, %v7190, 0
  %7215 = vmatprep.subr.bf16.mxu0 0
  %7216 = vmatpush1.bf16.msra.mxu0 %v1738
  %7217 = vmatprep.subr.bf16.mxu0 0
  %7218 = vmatpush1.bf16.msra.mxu0 0
  %7219 = vmatprep.subr.bf16.mxu0 0
  %7220 = vmatpush1.bf16.msra.mxu0 0
  %7221 = vmatprep.subr.bf16.mxu0 0
  %7222 = vmatpush1.bf16.msra.mxu0 0
  %7223 = vmatprep.subr.bf16.mxu0 0
  %7224 = vmatpush1.bf16.msra.mxu0 0
  %7225 = vmatprep.subr.bf16.mxu0 0
  %7226 = vmatpush1.bf16.msra.mxu0 0
  %7227 = vmatprep.subr.bf16.mxu0 0
  %7228 = vmatpush1.bf16.msra.mxu0 0
  %7229 = vmatprep.subr.bf16.mxu0 0
  %7230 = vmatpush1.bf16.msra.mxu0 0
  %7231 = vmatprep.subr.bf16.mxu0 0
  %7232 = vmatpush1.bf16.msra.mxu0 0
  %7233 = vmatprep.subr.bf16.mxu0 0
  %7234 = vmatpush1.bf16.msra.mxu0 0
  %7235 = vmatprep.subr.bf16.mxu0 0
  %7236 = vmatpush1.bf16.msra.mxu0 0
  %7237 = vmatprep.subr.bf16.mxu0 0
  %7238 = vmatpush1.bf16.msra.mxu0 0
  %7239 = vmatprep.subr.bf16.mxu0 0
  %7240 = vmatpush1.bf16.msra.mxu0 0
  %7241 = vmatprep.subr.bf16.mxu0 0
  %7242 = vmatpush1.bf16.msra.mxu0 0
  %7243 = vmatprep.subr.bf16.mxu0 0
  %7244 = vmatpush1.bf16.msra.mxu0 0
  %7245 = vmatprep.subr.bf16.mxu0 0
  %7246 = vmatpush1.bf16.msra.mxu0 0
  %7247 = vmatprep.mubr.bf16.mxu0 0
  %7248 = vmatmul.mubr.bf16.gmra.mrb[0].mxu0 %v7192
  %v7249 = vpop.f32.mrb[0].mxu0
  %v7250 = vadd.f32 %v21, %v7249
  %v7251 = vpop.f32.mrb[0].mxu0
  %v7252 = vpop.f32.mrb[0].mxu0
  %v7253 = vadd.f32 %v21, %v7252
  %v7254 = vpop.f32.mrb[0].mxu0
  %7255 = vmatprep.mubr.bf16.mxu0 0
  %7256 = vmatmul.mubr.bf16.gmra.mrb[0].mxu0 %v7195
  %v7257 = vpop.f32.mrb[0].mxu0
  %v7258 = vadd.f32 %v21, %v7257
  %v7259 = vpop.f32.mrb[0].mxu0
  %v7260 = vpop.f32.mrb[0].mxu0
  %v7261 = vadd.f32 %v21, %v7260
  %v7262 = vpop.f32.mrb[0].mxu0
  %7263 = vmatprep.mubr.bf16.mxu0 0
  %7264 = vmatmul.mubr.bf16.gmra.mrb[0].mxu0 %v7198
  %v7265 = vpop.f32.mrb[0].mxu0
  %v7266 = vadd.f32 %v21, %v7265
  %v7267 = vpop.f32.mrb[0].mxu0
  %v7268 = vpop.f32.mrb[0].mxu0
  %v7269 = vadd.f32 %v21, %v7268
  %v7270 = vpop.f32.mrb[0].mxu0
  %7271 = vmatprep.mubr.bf16.mxu0 0
  %7272 = vmatmul.mubr.bf16.gmra.mrb[0].mxu0 %v7201
  %v7273 = vpop.f32.mrb[0].mxu0
  %v7274 = vadd.f32 %v21, %v7273
  %v7275 = vpop.f32.mrb[0].mxu0
  %v7276 = vpop.f32.mrb[0].mxu0
  %v7277 = vadd.f32 %v21, %v7276
  %v7278 = vpop.f32.mrb[0].mxu0
  %7279 = vmatprep.mubr.bf16.mxu0 0
  %7280 = vmatmul.mubr.bf16.gmra.mrb[0].mxu0 %v7204
  %v7281 = vpop.f32.mrb[0].mxu0
  %v7282 = vadd.f32 %v21, %v7281
  %v7283 = vpop.f32.mrb[0].mxu0
  %v7284 = vpop.f32.mrb[0].mxu0
  %v7285 = vadd.f32 %v21, %v7284
  %v7286 = vpop.f32.mrb[0].mxu0
  %7287 = vmatprep.mubr.bf16.mxu0 0
  %7288 = vmatmul.mubr.bf16.gmra.mrb[0].mxu0 %v7207
  %v7289 = vpop.f32.mrb[0].mxu0
  %v7290 = vadd.f32 %v21, %v7289
  %v7291 = vpop.f32.mrb[0].mxu0
  %v7292 = vpop.f32.mrb[0].mxu0
  %v7293 = vadd.f32 %v21, %v7292
  %v7294 = vpop.f32.mrb[0].mxu0
  %7295 = vmatprep.mubr.bf16.mxu0 0
  %7296 = vmatmul.mubr.bf16.gmra.mrb[0].mxu0 %v7210
  %v7297 = vpop.f32.mrb[0].mxu0
  %v7298 = vadd.f32 %v21, %v7297
  %v7299 = vpop.f32.mrb[0].mxu0
  %v7300 = vpop.f32.mrb[0].mxu0
  %v7301 = vadd.f32 %v21, %v7300
  %v7302 = vpop.f32.mrb[0].mxu0
  %7303 = vmatprep.mubr.bf16.mxu0 0
  %7304 = vmatmul.mubr.bf16.gmra.mrb[0].mxu0 %v7213
  %v7305 = vpop.f32.mrb[0].mxu0
  %v7306 = vadd.f32 %v21, %v7305
  %v7307 = vpop.f32.mrb[0].mxu0
  %v7308 = vpop.f32.mrb[0].mxu0
  %v7309 = vadd.f32 %v21, %v7308
  %v7310 = vpop.f32.mrb[0].mxu0
  %7311 = vdwg.mxu0
  %7312 = vst [vmem:[%s3 + $0x180] sm:$0xff] %v7250
  %7313 = vst [vmem:[%s3 + $0x188] sm:$0xff] %v7253
  %7314 = vst [vmem:[%s3 + $0x190] sm:$0xff] %v7258
  %7315 = vst [vmem:[%s3 + $0x198] sm:$0xff] %v7261
  %7316 = vst [vmem:[%s3 + $0x1a0] sm:$0xff] %v7266
  %7317 = vst [vmem:[%s3 + $0x1a8] sm:$0xff] %v7269
  %7318 = vst [vmem:[%s3 + $0x1b0] sm:$0xff] %v7274
  %7319 = vst [vmem:[%s3 + $0x1b8] sm:$0xff] %v7277
  %7320 = vst [vmem:[%s3 + $0x1c0] sm:$0xff] %v7282
  %7321 = vst [vmem:[%s3 + $0x1c8] sm:$0xff] %v7285
  %7322 = vst [vmem:[%s3 + $0x1d0] sm:$0xff] %v7290
  %7323 = vst [vmem:[%s3 + $0x1d8] sm:$0xff] %v7293
  %7324 = vst [vmem:[%s3 + $0x1e0] sm:$0xff] %v7298
  %7325 = vst [vmem:[%s3 + $0x1e8] sm:$0xff] %v7301
  %7326 = vst [vmem:[%s3 + $0x1f0] sm:$0xff] %v7306
  %7327 = vst [vmem:[%s3 + $0x1f8] sm:$0xff] %v7309
  // Predicated region
  $region14: #{fan_cos_forward.7} parent=0 // pred_check
    _
  $region15: #{fan_cos_forward.7} parent=0 // pred_check_branch
    %7329 = sbr.rel (0) target = $region17
  $region16: #{fan_cos_forward.7} parent=0 // pred_region
    _
  $region17: #{fan_cos_forward.7} parent=0 // pred_fallthru
    _
  // Predicated region
  $region18: #{fan_cos_forward.7} parent=0 // pred_check
    _
  $region19: #{fan_cos_forward.7} parent=0 // pred_check_branch
    %7331 = sbr.rel (0) target = $region21
  $region20: #{fan_cos_forward.7} parent=0 // pred_region
    _
  $region21: #{fan_cos_forward.7} parent=0 // pred_fallthru
    _

</llo_original>
